<compile_context>
chip_gen: v6e
topology: v6e:2x2x1
jax: 0.10.0
libtpu: 0.0.40
codegen_flags: <defaults>
</compile_context>

<pallas_src>
import jax
import jax.numpy as jnp
from jax.experimental import pallas as pl
from jax.experimental.pallas import tpu as pltpu

MLP_GLOBAL_DIVISOR = 1
MLP_GLOBAL_LN_EPS = 1e-6
MLP_GLOBAL_PER_SQUARE_DIVISOR = 8


# ----------------------------- kernel -------------------------------------- #

def _mlp2_fused_kernel(x_ref, weff_ref, cgr_ref, gamma_ref, beta_ref,
                       w1a_ref, w1b_ref, b1_ref, w2_ref, b2_ref,
                       before_ref, out_ref):
    # x_ref:     (TB, S, D)  bf16 or f32 (cast in-kernel)
    # weff_ref:  (S*D, D)    bf16   composed square-reduce + global-reduce weight
    # cgr_ref:   (1, D)  f32        composed bias
    # gamma/beta:(1, D)  f32        LayerNorm affine
    # w1a_ref:   (D, F)  bf16       linear1 weight acting on x        (pre-transposed)
    # w1b_ref:   (D, F)  bf16       linear1 weight acting on global   (pre-transposed)
    # b1_ref:    (1, F)  f32
    # w2_ref:    (F, O)  bf16       linear2 weight (pre-transposed)
    # b2_ref:    (1, O)  f32
    TB, S, D = x_ref.shape
    F = w1a_ref.shape[1]
    O = w2_ref.shape[1]

    xv = x_ref[...]
    if xv.dtype != jnp.bfloat16:
        xv = xv.astype(jnp.bfloat16)          # VPU cast, free vs. DMA

    # ---- global branch: gr = LayerNorm(ReLU(x_flat @ Weff + cgr)) -------- #
    # In-kernel flatten (row-major, matches torch.flatten composed into Weff).
    x_flat = xv.reshape(TB, S * D)
    gr = jnp.dot(x_flat, weff_ref[...],
                 preferred_element_type=jnp.float32) + cgr_ref[...]        # (TB, D) f32
    gr = jnp.maximum(gr, 0.0)
    mu = jnp.mean(gr, axis=-1, keepdims=True)
    cen = gr - mu
    var = jnp.mean(cen * cen, axis=-1, keepdims=True)                      # biased var (torch LN)
    gr = cen * jax.lax.rsqrt(var + MLP_GLOBAL_LN_EPS) * gamma_ref[...] + beta_ref[...]

    # ---- linear1 on concat([x, broadcast(gr)]) == x@W1a + gr@W1b + b1 ---- #
    x2d = xv.reshape(TB * S, D)                                            # leading-dim merge, free
    h = jnp.dot(x2d, w1a_ref[...], preferred_element_type=jnp.float32)     # (TB*S, F)
    gb = jnp.dot(gr.astype(jnp.bfloat16), w1b_ref[...],
                 preferred_element_type=jnp.float32)                       # (TB, F)
    h = h.reshape(TB, S, F) + gb[:, None, :] + b1_ref[...]

    # ReLU -> before_linear2; cast to bf16 once, reuse for store + linear2 input.
    a_bf = jnp.maximum(h, 0.0).astype(jnp.bfloat16)
    before_ref[...] = a_bf

    # ---- linear2 ---------------------------------------------------------- #
    out = jnp.dot(a_bf.reshape(TB * S, F), w2_ref[...],
                  preferred_element_type=jnp.float32)
    out_ref[...] = (out.reshape(TB, S, O) + b2_ref[...]).astype(out_ref.dtype)


# ----------------------------- wrapper ------------------------------------- #

def _pick_batch_tile(B: int, cap: int = 128) -> int:
    """Largest batch tile that is a multiple of 16 (bf16 sublane packing),
    divides B, is <= cap, preferring >= 2 grid steps (both v7x TensorCores)."""
    def best(step, limit):
        cands = [tb for tb in range(step, min(limit, B) + 1, step) if B % tb == 0]
        return max(cands) if cands else None

    for limit in (min(cap, B // 2), cap):      # first pass: insist on grid >= 2
        tb = best(16, limit)
        if tb is not None:
            return tb
    tb = best(8, cap)                          # fallback: multiples of 8
    return tb if tb is not None else B         # last resort: whole batch, one step


def prepare_kernel_params(p):
    """One-time host-side weight packing: compose + transpose + cast to bf16."""
    hp = jax.lax.Precision.HIGHEST
    P, D = p["wsq"].shape                      # per-square dim, model_dim
    S = 64
    wgr3 = p["wgr"].reshape(D, S, P)           # Wgr[d, s*P + p]
    # Weff[s*D + c, d] = sum_p Wsq[p, c] * Wgr[d, s*P + p]
    weff = jnp.einsum("pc,dsp->scd", p["wsq"], wgr3, precision=hp).reshape(S * D, D)
    # cgr[d] = sum_{s,p} Wgr[d, s*P+p] * bsq[p] + bgr[d]
    cgr = jnp.einsum("dsp,p->d", wgr3, p["bsq"][0], precision=hp) + p["bgr"][0]
    return {
        "weff": weff.astype(jnp.bfloat16),
        "cgr": cgr.reshape(1, D).astype(jnp.float32),
        "gamma": p["gamma"].astype(jnp.float32),
        "beta": p["beta"].astype(jnp.float32),
        "w1a_t": p["w1a"].T.astype(jnp.bfloat16),   # (D, F)
        "w1b_t": p["w1b"].T.astype(jnp.bfloat16),   # (D, F)
        "b1": p["b1"].astype(jnp.float32),
        "w2_t": p["w2"].T.astype(jnp.bfloat16),     # (F, O)
        "b2": p["b2"].astype(jnp.float32),
    }


@jax.jit
def mlp2_forward(x, kp):
    B, S, D = x.shape
    F = kp["w1a_t"].shape[1]
    O = kp["w2_t"].shape[1]
    TB = _pick_batch_tile(B)
    grid = (B // TB,)

    before, out = pl.pallas_call(
        _mlp2_fused_kernel,
        out_shape=(jax.ShapeDtypeStruct((B, S, F), jnp.bfloat16),   # before_linear2
                   jax.ShapeDtypeStruct((B, S, O), jnp.bfloat16)),  # x_out
        grid=grid,
        in_specs=[
            pl.BlockSpec((TB, S, D), lambda b: (b, 0, 0)),          # x (read once)
            pl.BlockSpec((S * D, D), lambda b: (0, 0)),             # Weff
            pl.BlockSpec((1, D), lambda b: (0, 0)),                 # cgr
            pl.BlockSpec((1, D), lambda b: (0, 0)),                 # LN gamma
            pl.BlockSpec((1, D), lambda b: (0, 0)),                 # LN beta
            pl.BlockSpec((D, F), lambda b: (0, 0)),                 # W1a^T
            pl.BlockSpec((D, F), lambda b: (0, 0)),                 # W1b^T
            pl.BlockSpec((1, F), lambda b: (0, 0)),                 # b1
            pl.BlockSpec((F, O), lambda b: (0, 0)),                 # W2^T
            pl.BlockSpec((1, O), lambda b: (0, 0)),                 # b2
        ],
        out_specs=(pl.BlockSpec((TB, S, F), lambda b: (b, 0, 0)),
                   pl.BlockSpec((TB, S, O), lambda b: (b, 0, 0))),
        compiler_params=pltpu.CompilerParams(
            dimension_semantics=("parallel",),
            vmem_limit_bytes=40 * 1024 * 1024),
    )(x, kp["weff"], kp["cgr"], kp["gamma"], kp["beta"],
      kp["w1a_t"], kp["w1b_t"], kp["b1"], kp["w2_t"], kp["b2"])

    return before, out


# ----------------------- reference (plain JAX) ------------------------------ #

def mlp2_reference(x, params):
    hp = jax.lax.Precision.HIGHEST
    g = jnp.einsum("bsc,pc->bsp", x, params["wsq"], precision=hp) + params["bsq"][0]
    gflat = g.reshape(x.shape[0], -1)
    gr = jnp.einsum("bk,dk->bd", gflat, params["wgr"], precision=hp) + params["bgr"][0]
    gr = jax.nn.relu(gr)
    mu = gr.mean(-1, keepdims=True)
    var = ((gr - mu) ** 2).mean(-1, keepdims=True)
    gr = (gr - mu) / jnp.sqrt(var + MLP_GLOBAL_LN_EPS) * params["gamma"][0] + params["beta"][0]
    xc = jnp.concatenate([x, jnp.broadcast_to(gr[:, None, :], x.shape)], axis=-1)
    w1 = jnp.concatenate([params["w1a"], params["w1b"]], axis=1)
    h = jnp.einsum("bsc,fc->bsf", xc, w1, precision=hp) + params["b1"][0]
    a = jax.nn.relu(h)
    out = jnp.einsum("bsf,of->bso", a, params["w2"], precision=hp) + params["b2"][0]
    return a, out


# ------------------------------- main --------------------------------------- #

def _uniform(key, shape, fan_in):
    bound = 1.0 / jnp.sqrt(jnp.float32(fan_in))
    return jax.random.uniform(key, shape, jnp.float32, -bound, bound)


if __name__ == "__main__":
    B = 32                  # batch -> TB=16 (multiple of 16), 2 parallel grid steps
    model_dim = 64          # D
    ffn_inner_dim = 128     # F
    out_dim = 64            # O
    S = 64                  # 64 board squares (fixed by the .expand(-1, 64, -1))
    P = model_dim // MLP_GLOBAL_PER_SQUARE_DIVISOR       # 8
    global_dim = 64 * P                                  # 512

    root = jax.random.PRNGKey(0)
    keys = jax.random.split(root, 10)

    params = {
        # mlpGlobalSquareReduce: Linear(model_dim -> P)
        "wsq": _uniform(keys[0], (P, model_dim), model_dim),
        "bsq": _uniform(keys[1], (1, P), model_dim),
        # mlpGlobalReduce: Linear(64*P -> model_dim)
        "wgr": _uniform(keys[2], (model_dim, global_dim), global_dim),
        "bgr": _uniform(keys[3], (1, model_dim), global_dim),
        # mlpGlobalLN
        "gamma": jnp.ones((1, model_dim), jnp.float32),
        "beta": jnp.zeros((1, model_dim), jnp.float32),
        # linear1: Linear(2*model_dim -> F), split into [x-part | global-part]
        "w1a": _uniform(keys[4], (ffn_inner_dim, model_dim), 2 * model_dim),
        "w1b": _uniform(keys[5], (ffn_inner_dim, model_dim), 2 * model_dim),
        "b1": _uniform(keys[6], (1, ffn_inner_dim), 2 * model_dim),
        # linear2: Linear(F -> out_dim)
        "w2": _uniform(keys[7], (out_dim, ffn_inner_dim), ffn_inner_dim),
        "b2": _uniform(keys[8], (1, out_dim), ffn_inner_dim),
    }

    # Activations arrive in bf16 from the caller (no wrapper-side convert pass).
    x_bf = jax.random.normal(keys[9], (B, S, model_dim), jnp.float32).astype(jnp.bfloat16)
    x_f32 = x_bf.astype(jnp.float32)           # identical values for the reference

    kparams = prepare_kernel_params(params)
    before, x_out = mlp2_forward(x_bf, kparams)
    jax.block_until_ready((before, x_out))

    ref_before, ref_out = mlp2_reference(x_f32, params)
    assert before.shape == (B, S, ffn_inner_dim) and x_out.shape == (B, S, out_dim)
    before_f32 = before.astype(jnp.float32)
    out_f32 = x_out.astype(jnp.float32)
    assert bool(jnp.all(jnp.isfinite(before_f32)))
    assert bool(jnp.all(jnp.isfinite(out_f32)))
    assert jnp.allclose(before_f32, ref_before, rtol=3e-2, atol=3e-2)
    assert jnp.allclose(out_f32, ref_out, rtol=3e-2, atol=3e-2)

    print("KERNEL_OK")
</pallas_src>

<mosaic_0001>
module attributes {stable_mosaic.version = 11 : i64} {
  func.func @_mlp2_fused_kernel(%arg0: i32, %arg1: memref<16x64x64xbf16, #tpu.memory_space<vmem>>, %arg2: memref<4096x64xbf16, #tpu.memory_space<vmem>>, %arg3: memref<1x64xf32, #tpu.memory_space<vmem>>, %arg4: memref<1x64xf32, #tpu.memory_space<vmem>>, %arg5: memref<1x64xf32, #tpu.memory_space<vmem>>, %arg6: memref<64x128xbf16, #tpu.memory_space<vmem>>, %arg7: memref<64x128xbf16, #tpu.memory_space<vmem>>, %arg8: memref<1x128xf32, #tpu.memory_space<vmem>>, %arg9: memref<128x64xbf16, #tpu.memory_space<vmem>>, %arg10: memref<1x64xf32, #tpu.memory_space<vmem>>, %arg11: memref<16x64x128xbf16, #tpu.memory_space<vmem>>, %arg12: memref<16x64x64xbf16, #tpu.memory_space<vmem>>) attributes {dimension_semantics = [#tpu.dimension_semantics<parallel>], iteration_bounds = array<i64: 2>, scalar_prefetch = 0 : i64, scratch_operands = 0 : i64, tpu.core_type = #tpu.core_type<tc>, window_params = [{transform_indices = @transform_0, window_bounds = array<i64: 16, 64, 64>}, {pipeline_mode = #tpu.pipeline_mode<synchronous>, transform_indices = @transform_1, window_bounds = array<i64: 4096, 64>}, {pipeline_mode = #tpu.pipeline_mode<synchronous>, transform_indices = @transform_2, window_bounds = array<i64: 1, 64>}, {pipeline_mode = #tpu.pipeline_mode<synchronous>, transform_indices = @transform_3, window_bounds = array<i64: 1, 64>}, {pipeline_mode = #tpu.pipeline_mode<synchronous>, transform_indices = @transform_4, window_bounds = array<i64: 1, 64>}, {pipeline_mode = #tpu.pipeline_mode<synchronous>, transform_indices = @transform_5, window_bounds = array<i64: 64, 128>}, {pipeline_mode = #tpu.pipeline_mode<synchronous>, transform_indices = @transform_6, window_bounds = array<i64: 64, 128>}, {pipeline_mode = #tpu.pipeline_mode<synchronous>, transform_indices = @transform_7, window_bounds = array<i64: 1, 128>}, {pipeline_mode = #tpu.pipeline_mode<synchronous>, transform_indices = @transform_8, window_bounds = array<i64: 128, 64>}, {pipeline_mode = #tpu.pipeline_mode<synchronous>, transform_indices = @transform_9, window_bounds = array<i64: 1, 64>}, {transform_indices = @transform_10, window_bounds = array<i64: 16, 64, 128>}, {transform_indices = @transform_11, window_bounds = array<i64: 16, 64, 64>}]} {
    %c0 = arith.constant 0 : index
    %c0_0 = arith.constant 0 : index
    %c0_1 = arith.constant 0 : index
    %0 = vector.load %arg1[%c0, %c0_0, %c0_1] : memref<16x64x64xbf16, #tpu.memory_space<vmem>>, vector<16x64x64xbf16>
    %1 = vector.shape_cast %0 : vector<16x64x64xbf16> to vector<16x4096xbf16>
    %c0_2 = arith.constant 0 : index
    %c0_3 = arith.constant 0 : index
    %2 = vector.load %arg2[%c0_2, %c0_3] : memref<4096x64xbf16, #tpu.memory_space<vmem>>, vector<4096x64xbf16>
    %cst = arith.constant dense<0.000000e+00> : vector<16x64xf32>
    %3 = tpu.matmul %1, %2, %cst {dimension_numbers = #tpu.dot_dimension_numbers<[1], [0], [0], [1], [0, 0, 1, 1], [], []>} : vector<16x4096xbf16>, vector<4096x64xbf16>, vector<16x64xf32> -> vector<16x64xf32>
    %c0_4 = arith.constant 0 : index
    %c0_5 = arith.constant 0 : index
    %4 = vector.load %arg3[%c0_4, %c0_5] : memref<1x64xf32, #tpu.memory_space<vmem>>, vector<1x64xf32>
    %5 = vector.broadcast %4 : vector<1x64xf32> to vector<16x64xf32>
    %6 = arith.addf %3, %5 : vector<16x64xf32>
    %cst_6 = arith.constant 0.000000e+00 : f32
    %7 = vector.broadcast %cst_6 : f32 to vector<16x64xf32>
    %8 = arith.maximumf %6, %7 : vector<16x64xf32>
    %cst_7 = arith.constant dense<0.000000e+00> : vector<16xf32>
    %9 = vector.multi_reduction <add>, %8, %cst_7 [1] : vector<16x64xf32> to vector<16xf32>
    %10 = vector.shape_cast %9 : vector<16xf32> to vector<16x1xf32>
    %cst_8 = arith.constant 6.400000e+01 : f32
    %11 = vector.broadcast %cst_8 : f32 to vector<16x1xf32>
    %12 = arith.divf %10, %11 : vector<16x1xf32>
    %13 = vector.broadcast %12 : vector<16x1xf32> to vector<16x64xf32>
    %14 = arith.subf %8, %13 : vector<16x64xf32>
    %15 = arith.mulf %14, %14 : vector<16x64xf32>
    %cst_9 = arith.constant dense<0.000000e+00> : vector<16xf32>
    %16 = vector.multi_reduction <add>, %15, %cst_9 [1] : vector<16x64xf32> to vector<16xf32>
    %17 = vector.shape_cast %16 : vector<16xf32> to vector<16x1xf32>
    %cst_10 = arith.constant 6.400000e+01 : f32
    %18 = vector.broadcast %cst_10 : f32 to vector<16x1xf32>
    %19 = arith.divf %17, %18 : vector<16x1xf32>
    %cst_11 = arith.constant 9.99999997E-7 : f32
    %20 = vector.broadcast %cst_11 : f32 to vector<16x1xf32>
    %21 = arith.addf %19, %20 : vector<16x1xf32>
    %22 = math.rsqrt %21 : vector<16x1xf32>
    %23 = vector.broadcast %22 : vector<16x1xf32> to vector<16x64xf32>
    %24 = arith.mulf %14, %23 : vector<16x64xf32>
    %c0_12 = arith.constant 0 : index
    %c0_13 = arith.constant 0 : index
    %25 = vector.load %arg4[%c0_12, %c0_13] : memref<1x64xf32, #tpu.memory_space<vmem>>, vector<1x64xf32>
    %26 = vector.broadcast %25 : vector<1x64xf32> to vector<16x64xf32>
    %27 = arith.mulf %24, %26 : vector<16x64xf32>
    %c0_14 = arith.constant 0 : index
    %c0_15 = arith.constant 0 : index
    %28 = vector.load %arg5[%c0_14, %c0_15] : memref<1x64xf32, #tpu.memory_space<vmem>>, vector<1x64xf32>
    %29 = vector.broadcast %28 : vector<1x64xf32> to vector<16x64xf32>
    %30 = arith.addf %27, %29 : vector<16x64xf32>
    %31 = vector.shape_cast %0 : vector<16x64x64xbf16> to vector<1024x64xbf16>
    %c0_16 = arith.constant 0 : index
    %c0_17 = arith.constant 0 : index
    %32 = vector.load %arg6[%c0_16, %c0_17] : memref<64x128xbf16, #tpu.memory_space<vmem>>, vector<64x128xbf16>
    %cst_18 = arith.constant dense<0.000000e+00> : vector<1024x128xf32>
    %33 = tpu.matmul %31, %32, %cst_18 {dimension_numbers = #tpu.dot_dimension_numbers<[1], [0], [0], [1], [0, 0, 1, 1], [], []>} : vector<1024x64xbf16>, vector<64x128xbf16>, vector<1024x128xf32> -> vector<1024x128xf32>
    %34 = arith.truncf %30 : vector<16x64xf32> to vector<16x64xbf16>
    %c0_19 = arith.constant 0 : index
    %c0_20 = arith.constant 0 : index
    %35 = vector.load %arg7[%c0_19, %c0_20] : memref<64x128xbf16, #tpu.memory_space<vmem>>, vector<64x128xbf16>
    %cst_21 = arith.constant dense<0.000000e+00> : vector<16x128xf32>
    %36 = tpu.matmul %34, %35, %cst_21 {dimension_numbers = #tpu.dot_dimension_numbers<[1], [0], [0], [1], [0, 0, 1, 1], [], []>} : vector<16x64xbf16>, vector<64x128xbf16>, vector<16x128xf32> -> vector<16x128xf32>
    %37 = vector.shape_cast %33 : vector<1024x128xf32> to vector<16x64x128xf32>
    %38 = vector.shape_cast %36 : vector<16x128xf32> to vector<16x1x128xf32>
    %39 = vector.broadcast %38 : vector<16x1x128xf32> to vector<16x64x128xf32>
    %40 = arith.addf %37, %39 : vector<16x64x128xf32>
    %c0_22 = arith.constant 0 : index
    %c0_23 = arith.constant 0 : index
    %41 = vector.load %arg8[%c0_22, %c0_23] : memref<1x128xf32, #tpu.memory_space<vmem>>, vector<1x128xf32>
    %42 = vector.shape_cast %41 : vector<1x128xf32> to vector<1x1x128xf32>
    %43 = vector.broadcast %42 : vector<1x1x128xf32> to vector<16x64x128xf32>
    %44 = arith.addf %40, %43 : vector<16x64x128xf32>
    %cst_24 = arith.constant 0.000000e+00 : f32
    %45 = vector.broadcast %cst_24 : f32 to vector<16x64x128xf32>
    %46 = arith.maximumf %44, %45 : vector<16x64x128xf32>
    %47 = arith.truncf %46 : vector<16x64x128xf32> to vector<16x64x128xbf16>
    %c0_25 = arith.constant 0 : index
    %c0_26 = arith.constant 0 : index
    %c0_27 = arith.constant 0 : index
    %48 = vector.load %arg11[%c0_25, %c0_26, %c0_27] : memref<16x64x128xbf16, #tpu.memory_space<vmem>>, vector<16x64x128xbf16>
    tpu.vector_store %arg11[%c0_25, %c0_26, %c0_27], %47 {strides = array<i32>} : memref<16x64x128xbf16, #tpu.memory_space<vmem>>, vector<16x64x128xbf16>,
    %49 = vector.shape_cast %47 : vector<16x64x128xbf16> to vector<1024x128xbf16>
    %c0_28 = arith.constant 0 : index
    %c0_29 = arith.constant 0 : index
    %50 = vector.load %arg9[%c0_28, %c0_29] : memref<128x64xbf16, #tpu.memory_space<vmem>>, vector<128x64xbf16>
    %cst_30 = arith.constant dense<0.000000e+00> : vector<1024x64xf32>
    %51 = tpu.matmul %49, %50, %cst_30 {dimension_numbers = #tpu.dot_dimension_numbers<[1], [0], [0], [1], [0, 0, 1, 1], [], []>} : vector<1024x128xbf16>, vector<128x64xbf16>, vector<1024x64xf32> -> vector<1024x64xf32>
    %52 = vector.shape_cast %51 : vector<1024x64xf32> to vector<16x64x64xf32>
    %c0_31 = arith.constant 0 : index
    %c0_32 = arith.constant 0 : index
    %53 = vector.load %arg10[%c0_31, %c0_32] : memref<1x64xf32, #tpu.memory_space<vmem>>, vector<1x64xf32>
    %54 = vector.shape_cast %53 : vector<1x64xf32> to vector<1x1x64xf32>
    %55 = vector.broadcast %54 : vector<1x1x64xf32> to vector<16x64x64xf32>
    %56 = arith.addf %52, %55 : vector<16x64x64xf32>
    %57 = arith.truncf %56 : vector<16x64x64xf32> to vector<16x64x64xbf16>
    %c0_33 = arith.constant 0 : index
    %c0_34 = arith.constant 0 : index
    %c0_35 = arith.constant 0 : index
    %58 = vector.load %arg12[%c0_33, %c0_34, %c0_35] : memref<16x64x64xbf16, #tpu.memory_space<vmem>>, vector<16x64x64xbf16>
    tpu.vector_store %arg12[%c0_33, %c0_34, %c0_35], %57 {strides = array<i32>} : memref<16x64x64xbf16, #tpu.memory_space<vmem>>, vector<16x64x64xbf16>,
    return
  }
  func.func @transform_0(%arg0: i32) -> (i32, i32, i32) {
    %c0_i32 = arith.constant 0 : i32
    %c0_i32_0 = arith.constant 0 : i32
    %c0_i32_1 = arith.constant 0 : i32
    return %arg0, %c0_i32, %c0_i32_0 : i32, i32, i32
  }
  func.func @transform_1(%arg0: i32) -> (i32, i32) {
    %c0_i32 = arith.constant 0 : i32
    %c0_i32_0 = arith.constant 0 : i32
    %c0_i32_1 = arith.constant 0 : i32
    return %c0_i32, %c0_i32_0 : i32, i32
  }
  func.func @transform_2(%arg0: i32) -> (i32, i32) {
    %c0_i32 = arith.constant 0 : i32
    %c0_i32_0 = arith.constant 0 : i32
    %c0_i32_1 = arith.constant 0 : i32
    return %c0_i32, %c0_i32_0 : i32, i32
  }
  func.func @transform_3(%arg0: i32) -> (i32, i32) {
    %c0_i32 = arith.constant 0 : i32
    %c0_i32_0 = arith.constant 0 : i32
    %c0_i32_1 = arith.constant 0 : i32
    return %c0_i32, %c0_i32_0 : i32, i32
  }
  func.func @transform_4(%arg0: i32) -> (i32, i32) {
    %c0_i32 = arith.constant 0 : i32
    %c0_i32_0 = arith.constant 0 : i32
    %c0_i32_1 = arith.constant 0 : i32
    return %c0_i32, %c0_i32_0 : i32, i32
  }
  func.func @transform_5(%arg0: i32) -> (i32, i32) {
    %c0_i32 = arith.constant 0 : i32
    %c0_i32_0 = arith.constant 0 : i32
    %c0_i32_1 = arith.constant 0 : i32
    return %c0_i32, %c0_i32_0 : i32, i32
  }
  func.func @transform_6(%arg0: i32) -> (i32, i32) {
    %c0_i32 = arith.constant 0 : i32
    %c0_i32_0 = arith.constant 0 : i32
    %c0_i32_1 = arith.constant 0 : i32
    return %c0_i32, %c0_i32_0 : i32, i32
  }
  func.func @transform_7(%arg0: i32) -> (i32, i32) {
    %c0_i32 = arith.constant 0 : i32
    %c0_i32_0 = arith.constant 0 : i32
    %c0_i32_1 = arith.constant 0 : i32
    return %c0_i32, %c0_i32_0 : i32, i32
  }
  func.func @transform_8(%arg0: i32) -> (i32, i32) {
    %c0_i32 = arith.constant 0 : i32
    %c0_i32_0 = arith.constant 0 : i32
    %c0_i32_1 = arith.constant 0 : i32
    return %c0_i32, %c0_i32_0 : i32, i32
  }
  func.func @transform_9(%arg0: i32) -> (i32, i32) {
    %c0_i32 = arith.constant 0 : i32
    %c0_i32_0 = arith.constant 0 : i32
    %c0_i32_1 = arith.constant 0 : i32
    return %c0_i32, %c0_i32_0 : i32, i32
  }
  func.func @transform_10(%arg0: i32) -> (i32, i32, i32) {
    %c0_i32 = arith.constant 0 : i32
    %c0_i32_0 = arith.constant 0 : i32
    %c0_i32_1 = arith.constant 0 : i32
    return %arg0, %c0_i32, %c0_i32_0 : i32, i32, i32
  }
  func.func @transform_11(%arg0: i32) -> (i32, i32, i32) {
    %c0_i32 = arith.constant 0 : i32
    %c0_i32_0 = arith.constant 0 : i32
    %c0_i32_1 = arith.constant 0 : i32
    return %arg0, %c0_i32, %c0_i32_0 : i32, i32, i32
  }
}

</mosaic_0001>

<llo_original>
// kernel: mlp2_forward.1
$region0: #{mlp2_forward.1}
  #allocation0 [shape = 'u32[]', space=smem, size = 0x4, offset = 0x4, fixed_abs, tag = 'smem constant byte address 0x4 - core index']
  #allocation1 [shape = 'u32[144,128]{1,0:T(1,128)}', space=vmem, size = 0x12000, scoped, tag = 'internal scratch']
  %s0 = inlined_call_operand.vmem [shape: bf16[32,64,64], index: 0, kind: input, shape index: {}]
  %s1 = inlined_call_operand.vmem [shape: bf16[4096,64], index: 1, kind: input, shape index: {}]
  %s2 = inlined_call_operand.vmem [shape: f32[1,64], index: 2, kind: input, shape index: {}]
  %s3 = inlined_call_operand.vmem [shape: f32[1,64], index: 3, kind: input, shape index: {}]
  %s4 = inlined_call_operand.vmem [shape: f32[1,64], index: 4, kind: input, shape index: {}]
  %s5 = inlined_call_operand.vmem [shape: bf16[64,128], index: 5, kind: input, shape index: {}]
  %s6 = inlined_call_operand.vmem [shape: bf16[64,128], index: 6, kind: input, shape index: {}]
  %s7 = inlined_call_operand.vmem [shape: f32[1,128], index: 7, kind: input, shape index: {}]
  %s8 = inlined_call_operand.vmem [shape: bf16[128,64], index: 8, kind: input, shape index: {}]
  %s9 = inlined_call_operand.vmem [shape: f32[1,64], index: 9, kind: input, shape index: {}]
  %s10 = inlined_call_operand.hbm [shape: bf16[32,64,128], index: 10, kind: output, shape index: {0}]
  %s11 = inlined_call_operand.hbm [shape: bf16[32,64,64], index: 11, kind: output, shape index: {1}]
  %12 = xla_tuple %s10, %s11
  %s13 = sld [smem:[#allocation0]]
  $region81: #{mlp2_forward.1} parent=0
    _
  %s15 = ssub.s32 1, %s13
  %s16 = scalar_select 0, %s15, %s13
  $region1: #{mlp2_forward.1} parent=0
    #allocation2 [shape = 'u8[524288]{0}', space=vmem, size = 0x80000, scoped, tag = 'output window, operand 0']
    #allocation3 [shape = 's32[2]{0}', space=sflag, size = 0x8, scoped, tag = 'scoped memory for mlp2_forward.1']
    #allocation4 [shape = 'u8[524288]{0}', space=vmem, size = 0x80000, scoped, tag = 'output window, operand 1']
    #allocation5 [shape = 's32[2]{0}', space=sflag, size = 0x8, scoped, tag = 'scoped memory for mlp2_forward.1']
    %17 = vsyncpa [#allocation3], 0
    %s18 = scalar_lea.sflag [#allocation3], 1
    %19 = vsyncpa %s18, 0
    %20 = vsyncpa [#allocation5], 0
    %s21 = scalar_lea.sflag [#allocation5], 1
    %22 = vsyncpa %s21, 0
    loop: start=0, step=1, limit=4
    $region2: #{mlp2_forward.1} parent=1 // loop_pre_header
      _
    $region3: #{mlp2_forward.1} parent=1 // loop_header
      %s24 = sphi 0, %s28
      %p25 = scmp.ge.s32.totalorder %s24, 4
      %s34 = sphi 0, %s36
      %s37 = sphi 0, %s34
      %s38 = sphi 0, %s37
      %s54 = sphi 0, %s38
      %s58 = sphi 0, %s58
      %s60 = sphi 0, %s58
      %s61 = sphi 0, %s60
      %s75 = sphi 0, %s61
      %s79 = sphi 0, %s79
      %s81 = sphi 0, %s79
      %s82 = sphi 0, %s81
      %s96 = sphi 0, %s82
      %s100 = sphi 0, %s100
      %s102 = sphi 0, %s100
      %s103 = sphi 0, %s102
      %s117 = sphi 0, %s103
      %s121 = sphi 0, %s121
      %s123 = sphi 0, %s121
      %s124 = sphi 0, %s123
      %s138 = sphi 0, %s124
      %s142 = sphi 0, %s142
      %s144 = sphi 0, %s142
      %s145 = sphi 0, %s144
      %s159 = sphi 0, %s145
      %s163 = sphi 0, %s163
      %s165 = sphi 0, %s163
      %s166 = sphi 0, %s165
      %s180 = sphi 0, %s166
      %s184 = sphi 0, %s184
      %s186 = sphi 0, %s184
      %s187 = sphi 0, %s186
      %s201 = sphi 0, %s187
      %s205 = sphi 0, %s205
      %s207 = sphi 0, %s205
      %s208 = sphi 0, %s207
      %s222 = sphi 0, %s208
      %s226 = sphi 0, %s226
      %s228 = sphi 0, %s226
      %s229 = sphi 0, %s228
      %s243 = sphi 0, %s229
      %s249 = sphi 0, %s251
      %s252 = sphi 0, %s249
      %s253 = sphi 0, %s252
      %s269 = sphi 0, %s253
      %s275 = sphi 0, %s277
      %s278 = sphi 0, %s275
      %s279 = sphi 0, %s278
      %s295 = sphi 0, %s279
    $region4: #{mlp2_forward.1} parent=1 // loop_header_branch
      %27 = sbr.rel (%p25) target = $region8
    $region5: #{mlp2_forward.1} parent=1 // loop_body
      %s29 = ssub.s32 %s24, 1
      %s30 = ssub.s32 %s24, 2
      %s31 = sadd.s32 %s24, 1
      %s32 = ssub.s32 %s24, %s31
      %p33 = scmp.eq.s32.totalorder %s32, 0
      %s35 = sadd.s32 %s34, 1
      %s36 = scalar_select %p33, %s34, %s35
      %p39 = pneg %p33
      %p40 = scmp.eq.s32.totalorder %s24, 1
      %p41 = por %p39, %p40
      %p42 = scmp.ne.s32.totalorder %s34, %s37
      %p43 = scmp.eq.s32.totalorder %s24, 0
      %p44 = por %p42, %p43
      %p45 = scmp.ne.s32.totalorder %s34, %s37
      %p46 = scmp.eq.s32.totalorder %s29, 1
      %p47 = por %p45, %p46
      %p48 = scmp.ne.s32.totalorder %s37, %s38
      %p49 = scmp.eq.s32.totalorder %s29, 0
      %p50 = por %p48, %p49
      %p51 = scmp.ne.s32.totalorder %s37, %s38
      %p52 = scmp.eq.s32.totalorder %s30, 1
      %p53 = por %p51, %p52
      %p55 = scmp.ne.s32.totalorder %s38, %s54
      %p56 = scmp.eq.s32.totalorder %s30, 0
      %p57 = por %p55, %p56
      %s59 = sadd.s32 %s58, 1
      %p62 = scmp.eq.s32.totalorder %s24, 1
      %p63 = scmp.ne.s32.totalorder %s58, %s60
      %p64 = scmp.eq.s32.totalorder %s24, 0
      %p65 = por %p63, %p64
      %p66 = scmp.ne.s32.totalorder %s58, %s60
      %p67 = scmp.eq.s32.totalorder %s29, 1
      %p68 = por %p66, %p67
      %p69 = scmp.ne.s32.totalorder %s60, %s61
      %p70 = scmp.eq.s32.totalorder %s29, 0
      %p71 = por %p69, %p70
      %p72 = scmp.ne.s32.totalorder %s60, %s61
      %p73 = scmp.eq.s32.totalorder %s30, 1
      %p74 = por %p72, %p73
      %p76 = scmp.ne.s32.totalorder %s61, %s75
      %p77 = scmp.eq.s32.totalorder %s30, 0
      %p78 = por %p76, %p77
      %s80 = sadd.s32 %s79, 1
      %p83 = scmp.eq.s32.totalorder %s24, 1
      %p84 = scmp.ne.s32.totalorder %s79, %s81
      %p85 = scmp.eq.s32.totalorder %s24, 0
      %p86 = por %p84, %p85
      %p87 = scmp.ne.s32.totalorder %s79, %s81
      %p88 = scmp.eq.s32.totalorder %s29, 1
      %p89 = por %p87, %p88
      %p90 = scmp.ne.s32.totalorder %s81, %s82
      %p91 = scmp.eq.s32.totalorder %s29, 0
      %p92 = por %p90, %p91
      %p93 = scmp.ne.s32.totalorder %s81, %s82
      %p94 = scmp.eq.s32.totalorder %s30, 1
      %p95 = por %p93, %p94
      %p97 = scmp.ne.s32.totalorder %s82, %s96
      %p98 = scmp.eq.s32.totalorder %s30, 0
      %p99 = por %p97, %p98
      %s101 = sadd.s32 %s100, 1
      %p104 = scmp.eq.s32.totalorder %s24, 1
      %p105 = scmp.ne.s32.totalorder %s100, %s102
      %p106 = scmp.eq.s32.totalorder %s24, 0
      %p107 = por %p105, %p106
      %p108 = scmp.ne.s32.totalorder %s100, %s102
      %p109 = scmp.eq.s32.totalorder %s29, 1
      %p110 = por %p108, %p109
      %p111 = scmp.ne.s32.totalorder %s102, %s103
      %p112 = scmp.eq.s32.totalorder %s29, 0
      %p113 = por %p111, %p112
      %p114 = scmp.ne.s32.totalorder %s102, %s103
      %p115 = scmp.eq.s32.totalorder %s30, 1
      %p116 = por %p114, %p115
      %p118 = scmp.ne.s32.totalorder %s103, %s117
      %p119 = scmp.eq.s32.totalorder %s30, 0
      %p120 = por %p118, %p119
      %s122 = sadd.s32 %s121, 1
      %p125 = scmp.eq.s32.totalorder %s24, 1
      %p126 = scmp.ne.s32.totalorder %s121, %s123
      %p127 = scmp.eq.s32.totalorder %s24, 0
      %p128 = por %p126, %p127
      %p129 = scmp.ne.s32.totalorder %s121, %s123
      %p130 = scmp.eq.s32.totalorder %s29, 1
      %p131 = por %p129, %p130
      %p132 = scmp.ne.s32.totalorder %s123, %s124
      %p133 = scmp.eq.s32.totalorder %s29, 0
      %p134 = por %p132, %p133
      %p135 = scmp.ne.s32.totalorder %s123, %s124
      %p136 = scmp.eq.s32.totalorder %s30, 1
      %p137 = por %p135, %p136
      %p139 = scmp.ne.s32.totalorder %s124, %s138
      %p140 = scmp.eq.s32.totalorder %s30, 0
      %p141 = por %p139, %p140
      %s143 = sadd.s32 %s142, 1
      %p146 = scmp.eq.s32.totalorder %s24, 1
      %p147 = scmp.ne.s32.totalorder %s142, %s144
      %p148 = scmp.eq.s32.totalorder %s24, 0
      %p149 = por %p147, %p148
      %p150 = scmp.ne.s32.totalorder %s142, %s144
      %p151 = scmp.eq.s32.totalorder %s29, 1
      %p152 = por %p150, %p151
      %p153 = scmp.ne.s32.totalorder %s144, %s145
      %p154 = scmp.eq.s32.totalorder %s29, 0
      %p155 = por %p153, %p154
      %p156 = scmp.ne.s32.totalorder %s144, %s145
      %p157 = scmp.eq.s32.totalorder %s30, 1
      %p158 = por %p156, %p157
      %p160 = scmp.ne.s32.totalorder %s145, %s159
      %p161 = scmp.eq.s32.totalorder %s30, 0
      %p162 = por %p160, %p161
      %s164 = sadd.s32 %s163, 1
      %p167 = scmp.eq.s32.totalorder %s24, 1
      %p168 = scmp.ne.s32.totalorder %s163, %s165
      %p169 = scmp.eq.s32.totalorder %s24, 0
      %p170 = por %p168, %p169
      %p171 = scmp.ne.s32.totalorder %s163, %s165
      %p172 = scmp.eq.s32.totalorder %s29, 1
      %p173 = por %p171, %p172
      %p174 = scmp.ne.s32.totalorder %s165, %s166
      %p175 = scmp.eq.s32.totalorder %s29, 0
      %p176 = por %p174, %p175
      %p177 = scmp.ne.s32.totalorder %s165, %s166
      %p178 = scmp.eq.s32.totalorder %s30, 1
      %p179 = por %p177, %p178
      %p181 = scmp.ne.s32.totalorder %s166, %s180
      %p182 = scmp.eq.s32.totalorder %s30, 0
      %p183 = por %p181, %p182
      %s185 = sadd.s32 %s184, 1
      %p188 = scmp.eq.s32.totalorder %s24, 1
      %p189 = scmp.ne.s32.totalorder %s184, %s186
      %p190 = scmp.eq.s32.totalorder %s24, 0
      %p191 = por %p189, %p190
      %p192 = scmp.ne.s32.totalorder %s184, %s186
      %p193 = scmp.eq.s32.totalorder %s29, 1
      %p194 = por %p192, %p193
      %p195 = scmp.ne.s32.totalorder %s186, %s187
      %p196 = scmp.eq.s32.totalorder %s29, 0
      %p197 = por %p195, %p196
      %p198 = scmp.ne.s32.totalorder %s186, %s187
      %p199 = scmp.eq.s32.totalorder %s30, 1
      %p200 = por %p198, %p199
      %p202 = scmp.ne.s32.totalorder %s187, %s201
      %p203 = scmp.eq.s32.totalorder %s30, 0
      %p204 = por %p202, %p203
      %s206 = sadd.s32 %s205, 1
      %p209 = scmp.eq.s32.totalorder %s24, 1
      %p210 = scmp.ne.s32.totalorder %s205, %s207
      %p211 = scmp.eq.s32.totalorder %s24, 0
      %p212 = por %p210, %p211
      %p213 = scmp.ne.s32.totalorder %s205, %s207
      %p214 = scmp.eq.s32.totalorder %s29, 1
      %p215 = por %p213, %p214
      %p216 = scmp.ne.s32.totalorder %s207, %s208
      %p217 = scmp.eq.s32.totalorder %s29, 0
      %p218 = por %p216, %p217
      %p219 = scmp.ne.s32.totalorder %s207, %s208
      %p220 = scmp.eq.s32.totalorder %s30, 1
      %p221 = por %p219, %p220
      %p223 = scmp.ne.s32.totalorder %s208, %s222
      %p224 = scmp.eq.s32.totalorder %s30, 0
      %p225 = por %p223, %p224
      %s227 = sadd.s32 %s226, 1
      %p230 = scmp.eq.s32.totalorder %s24, 1
      %p231 = scmp.ne.s32.totalorder %s226, %s228
      %p232 = scmp.eq.s32.totalorder %s24, 0
      %p233 = por %p231, %p232
      %p234 = scmp.ne.s32.totalorder %s226, %s228
      %p235 = scmp.eq.s32.totalorder %s29, 1
      %p236 = por %p234, %p235
      %p237 = scmp.ne.s32.totalorder %s228, %s229
      %p238 = scmp.eq.s32.totalorder %s29, 0
      %p239 = por %p237, %p238
      %p240 = scmp.ne.s32.totalorder %s228, %s229
      %p241 = scmp.eq.s32.totalorder %s30, 1
      %p242 = por %p240, %p241
      %p244 = scmp.ne.s32.totalorder %s229, %s243
      %p245 = scmp.eq.s32.totalorder %s30, 0
      %p246 = por %p244, %p245
      %s247 = ssub.s32 %s24, %s31
      %p248 = scmp.eq.s32.totalorder %s247, 0
      %s250 = sadd.s32 %s249, 1
      %s251 = scalar_select %p248, %s249, %s250
      %p254 = pneg %p248
      %p255 = scmp.eq.s32.totalorder %s24, 1
      %p256 = por %p254, %p255
      %p257 = scmp.ne.s32.totalorder %s249, %s252
      %p258 = scmp.eq.s32.totalorder %s24, 0
      %p259 = por %p257, %p258
      %p260 = scmp.ne.s32.totalorder %s249, %s252
      %p261 = scmp.eq.s32.totalorder %s29, 1
      %p262 = por %p260, %p261
      %p263 = scmp.ne.s32.totalorder %s252, %s253
      %p264 = scmp.eq.s32.totalorder %s29, 0
      %p265 = por %p263, %p264
      %p266 = scmp.ne.s32.totalorder %s252, %s253
      %p267 = scmp.eq.s32.totalorder %s30, 1
      %p268 = por %p266, %p267
      %p270 = scmp.ne.s32.totalorder %s253, %s269
      %p271 = scmp.eq.s32.totalorder %s30, 0
      %p272 = por %p270, %p271
      %s273 = ssub.s32 %s24, %s31
      %p274 = scmp.eq.s32.totalorder %s273, 0
      %s276 = sadd.s32 %s275, 1
      %s277 = scalar_select %p274, %s275, %s276
      %p280 = pneg %p274
      %p281 = scmp.eq.s32.totalorder %s24, 1
      %p282 = por %p280, %p281
      %p283 = scmp.ne.s32.totalorder %s275, %s278
      %p284 = scmp.eq.s32.totalorder %s24, 0
      %p285 = por %p283, %p284
      %p286 = scmp.ne.s32.totalorder %s275, %s278
      %p287 = scmp.eq.s32.totalorder %s29, 1
      %p288 = por %p286, %p287
      %p289 = scmp.ne.s32.totalorder %s278, %s279
      %p290 = scmp.eq.s32.totalorder %s29, 0
      %p291 = por %p289, %p290
      %p292 = scmp.ne.s32.totalorder %s278, %s279
      %p293 = scmp.eq.s32.totalorder %s30, 1
      %p294 = por %p292, %p293
      %p296 = scmp.ne.s32.totalorder %s279, %s295
      %p297 = scmp.eq.s32.totalorder %s30, 0
      %p298 = por %p296, %p297
      %p299 = scmp.le.s32.totalorder 1, %s24
      %p300 = scmp.lt.s32.totalorder %s24, 3
      %p301 = pnand %p299, %p300
      %p302 = pneg %p301
      // Predicated region
      $region9: #{mlp2_forward.1} parent=5 // pred_check
        _
      $region10: #{mlp2_forward.1} parent=5 // pred_check_branch
        %304 = sbr.rel (%p301) target = $region12
      $region11: #{mlp2_forward.1} parent=5 // pred_region
        %s305 = ssub.s32 %s24, 1
        // Predicated region
        $region13: #{mlp2_forward.1} parent=11 // pred_check
          %p306 = pneg %p71
        $region14: #{mlp2_forward.1} parent=11 // pred_check_branch
          %308 = sbr.rel (%p306) target = $region16
        $region15: #{mlp2_forward.1} parent=11 // pred_region
          _
        $region16: #{mlp2_forward.1} parent=11 // pred_fallthru
          _
        // Predicated region
        $region17: #{mlp2_forward.1} parent=11 // pred_check
          %p309 = pneg %p92
        $region18: #{mlp2_forward.1} parent=11 // pred_check_branch
          %311 = sbr.rel (%p309) target = $region20
        $region19: #{mlp2_forward.1} parent=11 // pred_region
          _
        $region20: #{mlp2_forward.1} parent=11 // pred_fallthru
          _
        // Predicated region
        $region21: #{mlp2_forward.1} parent=11 // pred_check
          %p312 = pneg %p113
        $region22: #{mlp2_forward.1} parent=11 // pred_check_branch
          %314 = sbr.rel (%p312) target = $region24
        $region23: #{mlp2_forward.1} parent=11 // pred_region
          _
        $region24: #{mlp2_forward.1} parent=11 // pred_fallthru
          _
        // Predicated region
        $region25: #{mlp2_forward.1} parent=11 // pred_check
          %p315 = pneg %p134
        $region26: #{mlp2_forward.1} parent=11 // pred_check_branch
          %317 = sbr.rel (%p315) target = $region28
        $region27: #{mlp2_forward.1} parent=11 // pred_region
          _
        $region28: #{mlp2_forward.1} parent=11 // pred_fallthru
          _
        // Predicated region
        $region29: #{mlp2_forward.1} parent=11 // pred_check
          %p318 = pneg %p155
        $region30: #{mlp2_forward.1} parent=11 // pred_check_branch
          %320 = sbr.rel (%p318) target = $region32
        $region31: #{mlp2_forward.1} parent=11 // pred_region
          _
        $region32: #{mlp2_forward.1} parent=11 // pred_fallthru
          _
        // Predicated region
        $region33: #{mlp2_forward.1} parent=11 // pred_check
          %p321 = pneg %p176
        $region34: #{mlp2_forward.1} parent=11 // pred_check_branch
          %323 = sbr.rel (%p321) target = $region36
        $region35: #{mlp2_forward.1} parent=11 // pred_region
          _
        $region36: #{mlp2_forward.1} parent=11 // pred_fallthru
          _
        // Predicated region
        $region37: #{mlp2_forward.1} parent=11 // pred_check
          %p324 = pneg %p197
        $region38: #{mlp2_forward.1} parent=11 // pred_check_branch
          %326 = sbr.rel (%p324) target = $region40
        $region39: #{mlp2_forward.1} parent=11 // pred_region
          _
        $region40: #{mlp2_forward.1} parent=11 // pred_fallthru
          _
        // Predicated region
        $region41: #{mlp2_forward.1} parent=11 // pred_check
          %p327 = pneg %p218
        $region42: #{mlp2_forward.1} parent=11 // pred_check_branch
          %329 = sbr.rel (%p327) target = $region44
        $region43: #{mlp2_forward.1} parent=11 // pred_region
          _
        $region44: #{mlp2_forward.1} parent=11 // pred_fallthru
          _
        // Predicated region
        $region45: #{mlp2_forward.1} parent=11 // pred_check
          %p330 = pneg %p239
        $region46: #{mlp2_forward.1} parent=11 // pred_check_branch
          %332 = sbr.rel (%p330) target = $region48
        $region47: #{mlp2_forward.1} parent=11 // pred_region
          _
        $region48: #{mlp2_forward.1} parent=11 // pred_fallthru
          _
      $region12: #{mlp2_forward.1} parent=5 // pred_fallthru
        _
      %p333 = scmp.lt.s32.totalorder %s24, 2
      // Predicated region
      $region49: #{mlp2_forward.1} parent=5 // pred_check
        %p334 = pneg %p333
      $region50: #{mlp2_forward.1} parent=5 // pred_check_branch
        %336 = sbr.rel (%p334) target = $region52
      $region51: #{mlp2_forward.1} parent=5 // pred_region
        // Predicated region
        $region53: #{mlp2_forward.1} parent=51 // pred_check
          %p337 = pneg %p44
        $region54: #{mlp2_forward.1} parent=51 // pred_check_branch
          %339 = sbr.rel (%p337) target = $region56
        $region55: #{mlp2_forward.1} parent=51 // pred_region
          %s340 = smul.u32 16, %s24
          %p341 = scmp.lt.s32.totalorder %s340, 31
          %s342 = scalar_select %p341, %s340, 31
          %s343 = smul.addr %s342, 8
          %s344 = smul.addr %s343, 4
          %s345 = scalar_lea.vmem %s0, %s344
          %s346 = smul.u32 16, %s24
        $region56: #{mlp2_forward.1} parent=51 // pred_fallthru
          _
      $region52: #{mlp2_forward.1} parent=5 // pred_fallthru
        _
      %p347 = scmp.le.s32.totalorder 1, %s24
      %p348 = scmp.lt.s32.totalorder %s24, 3
      %p349 = pnand %p347, %p348
      %p350 = pneg %p349
      // Predicated region
      $region57: #{mlp2_forward.1} parent=5 // pred_check
        _
      $region58: #{mlp2_forward.1} parent=5 // pred_check_branch
        %352 = sbr.rel (%p349) target = $region60
      $region59: #{mlp2_forward.1} parent=5 // pred_region
        %s353 = ssub.s32 %s24, 1
        %s354 = smul.u32 16, %s29
        %p355 = scmp.lt.s32.totalorder %s354, 31
        %s356 = scalar_select %p355, %s354, 31
        %s357 = smul.addr %s356, 8
        %s358 = smul.addr %s357, 4
        %s359 = scalar_lea.vmem %s0, %s358
        %p360 = pneg %p50
        %p361 = pneg %p47
        %p362 = pneg %p71
        %p363 = pneg %p68
        %p364 = pneg %p92
        %p365 = pneg %p89
        %p366 = pneg %p113
        %p367 = pneg %p110
        %p368 = pneg %p134
        %p369 = pneg %p131
        %p370 = pneg %p155
        %p371 = pneg %p152
        %p372 = pneg %p176
        %p373 = pneg %p173
        %p374 = pneg %p197
        %p375 = pneg %p194
        %p376 = pneg %p218
        %p377 = pneg %p215
        %p378 = pneg %p239
        %p379 = pneg %p236
        %p380 = pneg %p265
        %p381 = pneg %p262
        %s382 = sand.u32 %s252, 1
        %s383 = scalar_lea.sflag [#allocation3], %s382
        %s384 = sand.u32 %s252, 1
        %s385 = smul.addr %s384, 512
        %s386 = scalar_lea.vmem [#allocation2], %s385
        %p387 = pneg %p291
        %p388 = pneg %p288
        %s389 = sand.u32 %s278, 1
        %s390 = scalar_lea.sflag [#allocation5], %s389
        %s391 = sand.u32 %s278, 1
        %s392 = smul.addr %s391, 512
        %s393 = scalar_lea.vmem [#allocation4], %s392
        %s394 = smul.u32 16, %s29
        %p395 = scmp.lt.s32.totalorder %s394, 31
        %s396 = scalar_select %p395, %s394, 31
        %s397 = smul.addr %s396, 8
        %s398 = smul.addr %s397, 4
        %s399 = scalar_lea.vmem %s0, %s398
        %s400 = smul.u32 16, %s29
        %s401 = smul.u32 16, %s29
        %s402 = smul.u32 16, %s29
        %v404 = vld [vmem:[%s399] sm:$0xf]
        %v405 = vld [vmem:[%s399 + $0x4] sm:$0xf]
        %v406 = vld [vmem:[%s399 + $0x8] sm:$0xf]
        %v407 = vld [vmem:[%s399 + $0xc] sm:$0xf]
        %v408 = vld [vmem:[%s399 + $0x10] sm:$0xf]
        %v409 = vld [vmem:[%s399 + $0x14] sm:$0xf]
        %v410 = vld [vmem:[%s399 + $0x18] sm:$0xf]
        %v411 = vld [vmem:[%s399 + $0x1c] sm:$0xf]
        %v412 = vld [vmem:[%s399 + $0x20] sm:$0xf]
        %v413 = vld [vmem:[%s399 + $0x24] sm:$0xf]
        %v414 = vld [vmem:[%s399 + $0x28] sm:$0xf]
        %v415 = vld [vmem:[%s399 + $0x2c] sm:$0xf]
        %v416 = vld [vmem:[%s399 + $0x30] sm:$0xf]
        %v417 = vld [vmem:[%s399 + $0x34] sm:$0xf]
        %v418 = vld [vmem:[%s399 + $0x38] sm:$0xf]
        %v419 = vld [vmem:[%s399 + $0x3c] sm:$0xf]
        %v420 = vld [vmem:[%s399 + $0x40] sm:$0xf]
        %v421 = vld [vmem:[%s399 + $0x44] sm:$0xf]
        %v422 = vld [vmem:[%s399 + $0x48] sm:$0xf]
        %v423 = vld [vmem:[%s399 + $0x4c] sm:$0xf]
        %v424 = vld [vmem:[%s399 + $0x50] sm:$0xf]
        %v425 = vld [vmem:[%s399 + $0x54] sm:$0xf]
        %v426 = vld [vmem:[%s399 + $0x58] sm:$0xf]
        %v427 = vld [vmem:[%s399 + $0x5c] sm:$0xf]
        %v428 = vld [vmem:[%s399 + $0x60] sm:$0xf]
        %v429 = vld [vmem:[%s399 + $0x64] sm:$0xf]
        %v430 = vld [vmem:[%s399 + $0x68] sm:$0xf]
        %v431 = vld [vmem:[%s399 + $0x6c] sm:$0xf]
        %v432 = vld [vmem:[%s399 + $0x70] sm:$0xf]
        %v433 = vld [vmem:[%s399 + $0x74] sm:$0xf]
        %v434 = vld [vmem:[%s399 + $0x78] sm:$0xf]
        %v435 = vld [vmem:[%s399 + $0x7c] sm:$0xf]
        %v436 = vld [vmem:[%s399 + $0x80] sm:$0xf]
        %v437 = vld [vmem:[%s399 + $0x84] sm:$0xf]
        %v438 = vld [vmem:[%s399 + $0x88] sm:$0xf]
        %v439 = vld [vmem:[%s399 + $0x8c] sm:$0xf]
        %v440 = vld [vmem:[%s399 + $0x90] sm:$0xf]
        %v441 = vld [vmem:[%s399 + $0x94] sm:$0xf]
        %v442 = vld [vmem:[%s399 + $0x98] sm:$0xf]
        %v443 = vld [vmem:[%s399 + $0x9c] sm:$0xf]
        %v444 = vld [vmem:[%s399 + $0xa0] sm:$0xf]
        %v445 = vld [vmem:[%s399 + $0xa4] sm:$0xf]
        %v446 = vld [vmem:[%s399 + $0xa8] sm:$0xf]
        %v447 = vld [vmem:[%s399 + $0xac] sm:$0xf]
        %v448 = vld [vmem:[%s399 + $0xb0] sm:$0xf]
        %v449 = vld [vmem:[%s399 + $0xb4] sm:$0xf]
        %v450 = vld [vmem:[%s399 + $0xb8] sm:$0xf]
        %v451 = vld [vmem:[%s399 + $0xbc] sm:$0xf]
        %v452 = vld [vmem:[%s399 + $0xc0] sm:$0xf]
        %v453 = vld [vmem:[%s399 + $0xc4] sm:$0xf]
        %v454 = vld [vmem:[%s399 + $0xc8] sm:$0xf]
        %v455 = vld [vmem:[%s399 + $0xcc] sm:$0xf]
        %v456 = vld [vmem:[%s399 + $0xd0] sm:$0xf]
        %v457 = vld [vmem:[%s399 + $0xd4] sm:$0xf]
        %v458 = vld [vmem:[%s399 + $0xd8] sm:$0xf]
        %v459 = vld [vmem:[%s399 + $0xdc] sm:$0xf]
        %v460 = vld [vmem:[%s399 + $0xe0] sm:$0xf]
        %v461 = vld [vmem:[%s399 + $0xe4] sm:$0xf]
        %v462 = vld [vmem:[%s399 + $0xe8] sm:$0xf]
        %v463 = vld [vmem:[%s399 + $0xec] sm:$0xf]
        %v464 = vld [vmem:[%s399 + $0xf0] sm:$0xf]
        %v465 = vld [vmem:[%s399 + $0xf4] sm:$0xf]
        %v466 = vld [vmem:[%s399 + $0xf8] sm:$0xf]
        %v467 = vld [vmem:[%s399 + $0xfc] sm:$0xf]
        %v468 = vld [vmem:[%s399 + $0x100] sm:$0xf]
        %v469 = vld [vmem:[%s399 + $0x104] sm:$0xf]
        %v470 = vld [vmem:[%s399 + $0x108] sm:$0xf]
        %v471 = vld [vmem:[%s399 + $0x10c] sm:$0xf]
        %v472 = vld [vmem:[%s399 + $0x110] sm:$0xf]
        %v473 = vld [vmem:[%s399 + $0x114] sm:$0xf]
        %v474 = vld [vmem:[%s399 + $0x118] sm:$0xf]
        %v475 = vld [vmem:[%s399 + $0x11c] sm:$0xf]
        %v476 = vld [vmem:[%s399 + $0x120] sm:$0xf]
        %v477 = vld [vmem:[%s399 + $0x124] sm:$0xf]
        %v478 = vld [vmem:[%s399 + $0x128] sm:$0xf]
        %v479 = vld [vmem:[%s399 + $0x12c] sm:$0xf]
        %v480 = vld [vmem:[%s399 + $0x130] sm:$0xf]
        %v481 = vld [vmem:[%s399 + $0x134] sm:$0xf]
        %v482 = vld [vmem:[%s399 + $0x138] sm:$0xf]
        %v483 = vld [vmem:[%s399 + $0x13c] sm:$0xf]
        %v484 = vld [vmem:[%s399 + $0x140] sm:$0xf]
        %v485 = vld [vmem:[%s399 + $0x144] sm:$0xf]
        %v486 = vld [vmem:[%s399 + $0x148] sm:$0xf]
        %v487 = vld [vmem:[%s399 + $0x14c] sm:$0xf]
        %v488 = vld [vmem:[%s399 + $0x150] sm:$0xf]
        %v489 = vld [vmem:[%s399 + $0x154] sm:$0xf]
        %v490 = vld [vmem:[%s399 + $0x158] sm:$0xf]
        %v491 = vld [vmem:[%s399 + $0x15c] sm:$0xf]
        %v492 = vld [vmem:[%s399 + $0x160] sm:$0xf]
        %v493 = vld [vmem:[%s399 + $0x164] sm:$0xf]
        %v494 = vld [vmem:[%s399 + $0x168] sm:$0xf]
        %v495 = vld [vmem:[%s399 + $0x16c] sm:$0xf]
        %v496 = vld [vmem:[%s399 + $0x170] sm:$0xf]
        %v497 = vld [vmem:[%s399 + $0x174] sm:$0xf]
        %v498 = vld [vmem:[%s399 + $0x178] sm:$0xf]
        %v499 = vld [vmem:[%s399 + $0x17c] sm:$0xf]
        %v500 = vld [vmem:[%s399 + $0x180] sm:$0xf]
        %v501 = vld [vmem:[%s399 + $0x184] sm:$0xf]
        %v502 = vld [vmem:[%s399 + $0x188] sm:$0xf]
        %v503 = vld [vmem:[%s399 + $0x18c] sm:$0xf]
        %v504 = vld [vmem:[%s399 + $0x190] sm:$0xf]
        %v505 = vld [vmem:[%s399 + $0x194] sm:$0xf]
        %v506 = vld [vmem:[%s399 + $0x198] sm:$0xf]
        %v507 = vld [vmem:[%s399 + $0x19c] sm:$0xf]
        %v508 = vld [vmem:[%s399 + $0x1a0] sm:$0xf]
        %v509 = vld [vmem:[%s399 + $0x1a4] sm:$0xf]
        %v510 = vld [vmem:[%s399 + $0x1a8] sm:$0xf]
        %v511 = vld [vmem:[%s399 + $0x1ac] sm:$0xf]
        %v512 = vld [vmem:[%s399 + $0x1b0] sm:$0xf]
        %v513 = vld [vmem:[%s399 + $0x1b4] sm:$0xf]
        %v514 = vld [vmem:[%s399 + $0x1b8] sm:$0xf]
        %v515 = vld [vmem:[%s399 + $0x1bc] sm:$0xf]
        %v516 = vld [vmem:[%s399 + $0x1c0] sm:$0xf]
        %v517 = vld [vmem:[%s399 + $0x1c4] sm:$0xf]
        %v518 = vld [vmem:[%s399 + $0x1c8] sm:$0xf]
        %v519 = vld [vmem:[%s399 + $0x1cc] sm:$0xf]
        %v520 = vld [vmem:[%s399 + $0x1d0] sm:$0xf]
        %v521 = vld [vmem:[%s399 + $0x1d4] sm:$0xf]
        %v522 = vld [vmem:[%s399 + $0x1d8] sm:$0xf]
        %v523 = vld [vmem:[%s399 + $0x1dc] sm:$0xf]
        %v524 = vld [vmem:[%s399 + $0x1e0] sm:$0xf]
        %v525 = vld [vmem:[%s399 + $0x1e4] sm:$0xf]
        %v526 = vld [vmem:[%s399 + $0x1e8] sm:$0xf]
        %v527 = vld [vmem:[%s399 + $0x1ec] sm:$0xf]
        %v528 = vld [vmem:[%s399 + $0x1f0] sm:$0xf]
        %v529 = vld [vmem:[%s399 + $0x1f4] sm:$0xf]
        %v530 = vld [vmem:[%s399 + $0x1f8] sm:$0xf]
        %v531 = vld [vmem:[%s399 + $0x1fc] sm:$0xf]
        %v532 = vcombine.low %v404, %v436
        %v534 = vunpack.c.l.s4 1983009808
        %v535 = vunpack.c.0.s8 %v534
        %v536 = vlaneseq
        %v537 = vshrl.u32 %v536, 7
        %v538 = vsub.s32 %v535, %v537
        %v539 = vrot.slane %v532, %v538
        %v540 = vcombine.low %v420, %v452
        %v542 = vunpack.c.l.s4 1983009808
        %v543 = vunpack.c.0.s8 %v542
        %v544 = vlaneseq
        %v545 = vshrl.u32 %v544, 7
        %v546 = vsub.s32 %v543, %v545
        %v547 = vrot.slane %v540, %v546
        %v548 = vcombine.low %v539, %v547
        %v549 = vcombine.high %v539, %v547
        %v551 = vunpack.c.l.s4 1934713408
        %v552 = vunpack.c.0.s8 %v551
        %v553 = vlaneseq
        %v554 = vshrl.u32 %v553, 7
        %v555 = vsub.s32 %v552, %v554
        %v556 = vrot.slane %v548, %v555
        %v558 = vunpack.c.l.s4 1934713408
        %v559 = vunpack.c.0.s8 %v558
        %v560 = vlaneseq
        %v561 = vshrl.u32 %v560, 7
        %v562 = vsub.s32 %v559, %v561
        %v563 = vrot.slane %v549, %v562
        %v564 = vcombine.high %v556, 0
        %v565 = vcombine.high %v563, 0
        %v566 = vcombine.low %v412, %v444
        %v568 = vunpack.c.l.s4 1983009808
        %v569 = vunpack.c.0.s8 %v568
        %v570 = vlaneseq
        %v571 = vshrl.u32 %v570, 7
        %v572 = vsub.s32 %v569, %v571
        %v573 = vrot.slane %v566, %v572
        %v574 = vcombine.low %v428, %v460
        %v576 = vunpack.c.l.s4 1983009808
        %v577 = vunpack.c.0.s8 %v576
        %v578 = vlaneseq
        %v579 = vshrl.u32 %v578, 7
        %v580 = vsub.s32 %v577, %v579
        %v581 = vrot.slane %v574, %v580
        %v582 = vcombine.low %v573, %v581
        %v583 = vcombine.high %v573, %v581
        %v585 = vunpack.c.l.s4 1934713408
        %v586 = vunpack.c.0.s8 %v585
        %v587 = vlaneseq
        %v588 = vshrl.u32 %v587, 7
        %v589 = vsub.s32 %v586, %v588
        %v590 = vrot.slane %v582, %v589
        %v592 = vunpack.c.l.s4 1934713408
        %v593 = vunpack.c.0.s8 %v592
        %v594 = vlaneseq
        %v595 = vshrl.u32 %v594, 7
        %v596 = vsub.s32 %v593, %v595
        %v597 = vrot.slane %v583, %v596
        %v598 = vcombine.high %v590, 0
        %v599 = vcombine.high %v597, 0
        %v600 = vcombine.low %v468, %v500
        %v602 = vunpack.c.l.s4 1983009808
        %v603 = vunpack.c.0.s8 %v602
        %v604 = vlaneseq
        %v605 = vshrl.u32 %v604, 7
        %v606 = vsub.s32 %v603, %v605
        %v607 = vrot.slane %v600, %v606
        %v608 = vcombine.low %v484, %v516
        %v610 = vunpack.c.l.s4 1983009808
        %v611 = vunpack.c.0.s8 %v610
        %v612 = vlaneseq
        %v613 = vshrl.u32 %v612, 7
        %v614 = vsub.s32 %v611, %v613
        %v615 = vrot.slane %v608, %v614
        %v616 = vcombine.low %v607, %v615
        %v617 = vcombine.high %v607, %v615
        %v619 = vunpack.c.l.s4 1934713408
        %v620 = vunpack.c.0.s8 %v619
        %v621 = vlaneseq
        %v622 = vshrl.u32 %v621, 7
        %v623 = vsub.s32 %v620, %v622
        %v624 = vrot.slane %v616, %v623
        %v626 = vunpack.c.l.s4 1934713408
        %v627 = vunpack.c.0.s8 %v626
        %v628 = vlaneseq
        %v629 = vshrl.u32 %v628, 7
        %v630 = vsub.s32 %v627, %v629
        %v631 = vrot.slane %v617, %v630
        %v632 = vcombine.high %v624, 0
        %v633 = vcombine.high %v631, 0
        %v634 = vcombine.low %v476, %v508
        %v636 = vunpack.c.l.s4 1983009808
        %v637 = vunpack.c.0.s8 %v636
        %v638 = vlaneseq
        %v639 = vshrl.u32 %v638, 7
        %v640 = vsub.s32 %v637, %v639
        %v641 = vrot.slane %v634, %v640
        %v642 = vcombine.low %v492, %v524
        %v644 = vunpack.c.l.s4 1983009808
        %v645 = vunpack.c.0.s8 %v644
        %v646 = vlaneseq
        %v647 = vshrl.u32 %v646, 7
        %v648 = vsub.s32 %v645, %v647
        %v649 = vrot.slane %v642, %v648
        %v650 = vcombine.low %v641, %v649
        %v651 = vcombine.high %v641, %v649
        %v653 = vunpack.c.l.s4 1934713408
        %v654 = vunpack.c.0.s8 %v653
        %v655 = vlaneseq
        %v656 = vshrl.u32 %v655, 7
        %v657 = vsub.s32 %v654, %v656
        %v658 = vrot.slane %v650, %v657
        %v660 = vunpack.c.l.s4 1934713408
        %v661 = vunpack.c.0.s8 %v660
        %v662 = vlaneseq
        %v663 = vshrl.u32 %v662, 7
        %v664 = vsub.s32 %v661, %v663
        %v665 = vrot.slane %v651, %v664
        %v666 = vcombine.high %v658, 0
        %v667 = vcombine.high %v665, 0
        %v668 = vcombine.low %v405, %v437
        %v670 = vunpack.c.l.s4 1983009808
        %v671 = vunpack.c.0.s8 %v670
        %v672 = vlaneseq
        %v673 = vshrl.u32 %v672, 7
        %v674 = vsub.s32 %v671, %v673
        %v675 = vrot.slane %v668, %v674
        %v676 = vcombine.low %v421, %v453
        %v678 = vunpack.c.l.s4 1983009808
        %v679 = vunpack.c.0.s8 %v678
        %v680 = vlaneseq
        %v681 = vshrl.u32 %v680, 7
        %v682 = vsub.s32 %v679, %v681
        %v683 = vrot.slane %v676, %v682
        %v684 = vcombine.low %v675, %v683
        %v685 = vcombine.high %v675, %v683
        %v687 = vunpack.c.l.s4 1934713408
        %v688 = vunpack.c.0.s8 %v687
        %v689 = vlaneseq
        %v690 = vshrl.u32 %v689, 7
        %v691 = vsub.s32 %v688, %v690
        %v692 = vrot.slane %v684, %v691
        %v694 = vunpack.c.l.s4 1934713408
        %v695 = vunpack.c.0.s8 %v694
        %v696 = vlaneseq
        %v697 = vshrl.u32 %v696, 7
        %v698 = vsub.s32 %v695, %v697
        %v699 = vrot.slane %v685, %v698
        %v700 = vcombine.high %v692, 0
        %v701 = vcombine.high %v699, 0
        %v702 = vcombine.low %v413, %v445
        %v704 = vunpack.c.l.s4 1983009808
        %v705 = vunpack.c.0.s8 %v704
        %v706 = vlaneseq
        %v707 = vshrl.u32 %v706, 7
        %v708 = vsub.s32 %v705, %v707
        %v709 = vrot.slane %v702, %v708
        %v710 = vcombine.low %v429, %v461
        %v712 = vunpack.c.l.s4 1983009808
        %v713 = vunpack.c.0.s8 %v712
        %v714 = vlaneseq
        %v715 = vshrl.u32 %v714, 7
        %v716 = vsub.s32 %v713, %v715
        %v717 = vrot.slane %v710, %v716
        %v718 = vcombine.low %v709, %v717
        %v719 = vcombine.high %v709, %v717
        %v721 = vunpack.c.l.s4 1934713408
        %v722 = vunpack.c.0.s8 %v721
        %v723 = vlaneseq
        %v724 = vshrl.u32 %v723, 7
        %v725 = vsub.s32 %v722, %v724
        %v726 = vrot.slane %v718, %v725
        %v728 = vunpack.c.l.s4 1934713408
        %v729 = vunpack.c.0.s8 %v728
        %v730 = vlaneseq
        %v731 = vshrl.u32 %v730, 7
        %v732 = vsub.s32 %v729, %v731
        %v733 = vrot.slane %v719, %v732
        %v734 = vcombine.high %v726, 0
        %v735 = vcombine.high %v733, 0
        %v736 = vcombine.low %v469, %v501
        %v738 = vunpack.c.l.s4 1983009808
        %v739 = vunpack.c.0.s8 %v738
        %v740 = vlaneseq
        %v741 = vshrl.u32 %v740, 7
        %v742 = vsub.s32 %v739, %v741
        %v743 = vrot.slane %v736, %v742
        %v744 = vcombine.low %v485, %v517
        %v746 = vunpack.c.l.s4 1983009808
        %v747 = vunpack.c.0.s8 %v746
        %v748 = vlaneseq
        %v749 = vshrl.u32 %v748, 7
        %v750 = vsub.s32 %v747, %v749
        %v751 = vrot.slane %v744, %v750
        %v752 = vcombine.low %v743, %v751
        %v753 = vcombine.high %v743, %v751
        %v755 = vunpack.c.l.s4 1934713408
        %v756 = vunpack.c.0.s8 %v755
        %v757 = vlaneseq
        %v758 = vshrl.u32 %v757, 7
        %v759 = vsub.s32 %v756, %v758
        %v760 = vrot.slane %v752, %v759
        %v762 = vunpack.c.l.s4 1934713408
        %v763 = vunpack.c.0.s8 %v762
        %v764 = vlaneseq
        %v765 = vshrl.u32 %v764, 7
        %v766 = vsub.s32 %v763, %v765
        %v767 = vrot.slane %v753, %v766
        %v768 = vcombine.high %v760, 0
        %v769 = vcombine.high %v767, 0
        %v770 = vcombine.low %v477, %v509
        %v772 = vunpack.c.l.s4 1983009808
        %v773 = vunpack.c.0.s8 %v772
        %v774 = vlaneseq
        %v775 = vshrl.u32 %v774, 7
        %v776 = vsub.s32 %v773, %v775
        %v777 = vrot.slane %v770, %v776
        %v778 = vcombine.low %v493, %v525
        %v780 = vunpack.c.l.s4 1983009808
        %v781 = vunpack.c.0.s8 %v780
        %v782 = vlaneseq
        %v783 = vshrl.u32 %v782, 7
        %v784 = vsub.s32 %v781, %v783
        %v785 = vrot.slane %v778, %v784
        %v786 = vcombine.low %v777, %v785
        %v787 = vcombine.high %v777, %v785
        %v789 = vunpack.c.l.s4 1934713408
        %v790 = vunpack.c.0.s8 %v789
        %v791 = vlaneseq
        %v792 = vshrl.u32 %v791, 7
        %v793 = vsub.s32 %v790, %v792
        %v794 = vrot.slane %v786, %v793
        %v796 = vunpack.c.l.s4 1934713408
        %v797 = vunpack.c.0.s8 %v796
        %v798 = vlaneseq
        %v799 = vshrl.u32 %v798, 7
        %v800 = vsub.s32 %v797, %v799
        %v801 = vrot.slane %v787, %v800
        %v802 = vcombine.high %v794, 0
        %v803 = vcombine.high %v801, 0
        %v804 = vcombine.low %v406, %v438
        %v806 = vunpack.c.l.s4 1983009808
        %v807 = vunpack.c.0.s8 %v806
        %v808 = vlaneseq
        %v809 = vshrl.u32 %v808, 7
        %v810 = vsub.s32 %v807, %v809
        %v811 = vrot.slane %v804, %v810
        %v812 = vcombine.low %v422, %v454
        %v814 = vunpack.c.l.s4 1983009808
        %v815 = vunpack.c.0.s8 %v814
        %v816 = vlaneseq
        %v817 = vshrl.u32 %v816, 7
        %v818 = vsub.s32 %v815, %v817
        %v819 = vrot.slane %v812, %v818
        %v820 = vcombine.low %v811, %v819
        %v821 = vcombine.high %v811, %v819
        %v823 = vunpack.c.l.s4 1934713408
        %v824 = vunpack.c.0.s8 %v823
        %v825 = vlaneseq
        %v826 = vshrl.u32 %v825, 7
        %v827 = vsub.s32 %v824, %v826
        %v828 = vrot.slane %v820, %v827
        %v830 = vunpack.c.l.s4 1934713408
        %v831 = vunpack.c.0.s8 %v830
        %v832 = vlaneseq
        %v833 = vshrl.u32 %v832, 7
        %v834 = vsub.s32 %v831, %v833
        %v835 = vrot.slane %v821, %v834
        %v836 = vcombine.high %v828, 0
        %v837 = vcombine.high %v835, 0
        %v838 = vcombine.low %v414, %v446
        %v840 = vunpack.c.l.s4 1983009808
        %v841 = vunpack.c.0.s8 %v840
        %v842 = vlaneseq
        %v843 = vshrl.u32 %v842, 7
        %v844 = vsub.s32 %v841, %v843
        %v845 = vrot.slane %v838, %v844
        %v846 = vcombine.low %v430, %v462
        %v848 = vunpack.c.l.s4 1983009808
        %v849 = vunpack.c.0.s8 %v848
        %v850 = vlaneseq
        %v851 = vshrl.u32 %v850, 7
        %v852 = vsub.s32 %v849, %v851
        %v853 = vrot.slane %v846, %v852
        %v854 = vcombine.low %v845, %v853
        %v855 = vcombine.high %v845, %v853
        %v857 = vunpack.c.l.s4 1934713408
        %v858 = vunpack.c.0.s8 %v857
        %v859 = vlaneseq
        %v860 = vshrl.u32 %v859, 7
        %v861 = vsub.s32 %v858, %v860
        %v862 = vrot.slane %v854, %v861
        %v864 = vunpack.c.l.s4 1934713408
        %v865 = vunpack.c.0.s8 %v864
        %v866 = vlaneseq
        %v867 = vshrl.u32 %v866, 7
        %v868 = vsub.s32 %v865, %v867
        %v869 = vrot.slane %v855, %v868
        %v870 = vcombine.high %v862, 0
        %v871 = vcombine.high %v869, 0
        %v872 = vcombine.low %v470, %v502
        %v874 = vunpack.c.l.s4 1983009808
        %v875 = vunpack.c.0.s8 %v874
        %v876 = vlaneseq
        %v877 = vshrl.u32 %v876, 7
        %v878 = vsub.s32 %v875, %v877
        %v879 = vrot.slane %v872, %v878
        %v880 = vcombine.low %v486, %v518
        %v882 = vunpack.c.l.s4 1983009808
        %v883 = vunpack.c.0.s8 %v882
        %v884 = vlaneseq
        %v885 = vshrl.u32 %v884, 7
        %v886 = vsub.s32 %v883, %v885
        %v887 = vrot.slane %v880, %v886
        %v888 = vcombine.low %v879, %v887
        %v889 = vcombine.high %v879, %v887
        %v891 = vunpack.c.l.s4 1934713408
        %v892 = vunpack.c.0.s8 %v891
        %v893 = vlaneseq
        %v894 = vshrl.u32 %v893, 7
        %v895 = vsub.s32 %v892, %v894
        %v896 = vrot.slane %v888, %v895
        %v898 = vunpack.c.l.s4 1934713408
        %v899 = vunpack.c.0.s8 %v898
        %v900 = vlaneseq
        %v901 = vshrl.u32 %v900, 7
        %v902 = vsub.s32 %v899, %v901
        %v903 = vrot.slane %v889, %v902
        %v904 = vcombine.high %v896, 0
        %v905 = vcombine.high %v903, 0
        %v906 = vcombine.low %v478, %v510
        %v908 = vunpack.c.l.s4 1983009808
        %v909 = vunpack.c.0.s8 %v908
        %v910 = vlaneseq
        %v911 = vshrl.u32 %v910, 7
        %v912 = vsub.s32 %v909, %v911
        %v913 = vrot.slane %v906, %v912
        %v914 = vcombine.low %v494, %v526
        %v916 = vunpack.c.l.s4 1983009808
        %v917 = vunpack.c.0.s8 %v916
        %v918 = vlaneseq
        %v919 = vshrl.u32 %v918, 7
        %v920 = vsub.s32 %v917, %v919
        %v921 = vrot.slane %v914, %v920
        %v922 = vcombine.low %v913, %v921
        %v923 = vcombine.high %v913, %v921
        %v925 = vunpack.c.l.s4 1934713408
        %v926 = vunpack.c.0.s8 %v925
        %v927 = vlaneseq
        %v928 = vshrl.u32 %v927, 7
        %v929 = vsub.s32 %v926, %v928
        %v930 = vrot.slane %v922, %v929
        %v932 = vunpack.c.l.s4 1934713408
        %v933 = vunpack.c.0.s8 %v932
        %v934 = vlaneseq
        %v935 = vshrl.u32 %v934, 7
        %v936 = vsub.s32 %v933, %v935
        %v937 = vrot.slane %v923, %v936
        %v938 = vcombine.high %v930, 0
        %v939 = vcombine.high %v937, 0
        %v940 = vcombine.low %v407, %v439
        %v942 = vunpack.c.l.s4 1983009808
        %v943 = vunpack.c.0.s8 %v942
        %v944 = vlaneseq
        %v945 = vshrl.u32 %v944, 7
        %v946 = vsub.s32 %v943, %v945
        %v947 = vrot.slane %v940, %v946
        %v948 = vcombine.low %v423, %v455
        %v950 = vunpack.c.l.s4 1983009808
        %v951 = vunpack.c.0.s8 %v950
        %v952 = vlaneseq
        %v953 = vshrl.u32 %v952, 7
        %v954 = vsub.s32 %v951, %v953
        %v955 = vrot.slane %v948, %v954
        %v956 = vcombine.low %v947, %v955
        %v957 = vcombine.high %v947, %v955
        %v959 = vunpack.c.l.s4 1934713408
        %v960 = vunpack.c.0.s8 %v959
        %v961 = vlaneseq
        %v962 = vshrl.u32 %v961, 7
        %v963 = vsub.s32 %v960, %v962
        %v964 = vrot.slane %v956, %v963
        %v966 = vunpack.c.l.s4 1934713408
        %v967 = vunpack.c.0.s8 %v966
        %v968 = vlaneseq
        %v969 = vshrl.u32 %v968, 7
        %v970 = vsub.s32 %v967, %v969
        %v971 = vrot.slane %v957, %v970
        %v972 = vcombine.high %v964, 0
        %v973 = vcombine.high %v971, 0
        %v974 = vcombine.low %v415, %v447
        %v976 = vunpack.c.l.s4 1983009808
        %v977 = vunpack.c.0.s8 %v976
        %v978 = vlaneseq
        %v979 = vshrl.u32 %v978, 7
        %v980 = vsub.s32 %v977, %v979
        %v981 = vrot.slane %v974, %v980
        %v982 = vcombine.low %v431, %v463
        %v984 = vunpack.c.l.s4 1983009808
        %v985 = vunpack.c.0.s8 %v984
        %v986 = vlaneseq
        %v987 = vshrl.u32 %v986, 7
        %v988 = vsub.s32 %v985, %v987
        %v989 = vrot.slane %v982, %v988
        %v990 = vcombine.low %v981, %v989
        %v991 = vcombine.high %v981, %v989
        %v993 = vunpack.c.l.s4 1934713408
        %v994 = vunpack.c.0.s8 %v993
        %v995 = vlaneseq
        %v996 = vshrl.u32 %v995, 7
        %v997 = vsub.s32 %v994, %v996
        %v998 = vrot.slane %v990, %v997
        %v1000 = vunpack.c.l.s4 1934713408
        %v1001 = vunpack.c.0.s8 %v1000
        %v1002 = vlaneseq
        %v1003 = vshrl.u32 %v1002, 7
        %v1004 = vsub.s32 %v1001, %v1003
        %v1005 = vrot.slane %v991, %v1004
        %v1006 = vcombine.high %v998, 0
        %v1007 = vcombine.high %v1005, 0
        %v1008 = vcombine.low %v471, %v503
        %v1010 = vunpack.c.l.s4 1983009808
        %v1011 = vunpack.c.0.s8 %v1010
        %v1012 = vlaneseq
        %v1013 = vshrl.u32 %v1012, 7
        %v1014 = vsub.s32 %v1011, %v1013
        %v1015 = vrot.slane %v1008, %v1014
        %v1016 = vcombine.low %v487, %v519
        %v1018 = vunpack.c.l.s4 1983009808
        %v1019 = vunpack.c.0.s8 %v1018
        %v1020 = vlaneseq
        %v1021 = vshrl.u32 %v1020, 7
        %v1022 = vsub.s32 %v1019, %v1021
        %v1023 = vrot.slane %v1016, %v1022
        %v1024 = vcombine.low %v1015, %v1023
        %v1025 = vcombine.high %v1015, %v1023
        %v1027 = vunpack.c.l.s4 1934713408
        %v1028 = vunpack.c.0.s8 %v1027
        %v1029 = vlaneseq
        %v1030 = vshrl.u32 %v1029, 7
        %v1031 = vsub.s32 %v1028, %v1030
        %v1032 = vrot.slane %v1024, %v1031
        %v1034 = vunpack.c.l.s4 1934713408
        %v1035 = vunpack.c.0.s8 %v1034
        %v1036 = vlaneseq
        %v1037 = vshrl.u32 %v1036, 7
        %v1038 = vsub.s32 %v1035, %v1037
        %v1039 = vrot.slane %v1025, %v1038
        %v1040 = vcombine.high %v1032, 0
        %v1041 = vcombine.high %v1039, 0
        %v1042 = vcombine.low %v479, %v511
        %v1044 = vunpack.c.l.s4 1983009808
        %v1045 = vunpack.c.0.s8 %v1044
        %v1046 = vlaneseq
        %v1047 = vshrl.u32 %v1046, 7
        %v1048 = vsub.s32 %v1045, %v1047
        %v1049 = vrot.slane %v1042, %v1048
        %v1050 = vcombine.low %v495, %v527
        %v1052 = vunpack.c.l.s4 1983009808
        %v1053 = vunpack.c.0.s8 %v1052
        %v1054 = vlaneseq
        %v1055 = vshrl.u32 %v1054, 7
        %v1056 = vsub.s32 %v1053, %v1055
        %v1057 = vrot.slane %v1050, %v1056
        %v1058 = vcombine.low %v1049, %v1057
        %v1059 = vcombine.high %v1049, %v1057
        %v1061 = vunpack.c.l.s4 1934713408
        %v1062 = vunpack.c.0.s8 %v1061
        %v1063 = vlaneseq
        %v1064 = vshrl.u32 %v1063, 7
        %v1065 = vsub.s32 %v1062, %v1064
        %v1066 = vrot.slane %v1058, %v1065
        %v1068 = vunpack.c.l.s4 1934713408
        %v1069 = vunpack.c.0.s8 %v1068
        %v1070 = vlaneseq
        %v1071 = vshrl.u32 %v1070, 7
        %v1072 = vsub.s32 %v1069, %v1071
        %v1073 = vrot.slane %v1059, %v1072
        %v1074 = vcombine.high %v1066, 0
        %v1075 = vcombine.high %v1073, 0
        %v1076 = vcombine.low %v408, %v440
        %v1078 = vunpack.c.l.s4 1983009808
        %v1079 = vunpack.c.0.s8 %v1078
        %v1080 = vlaneseq
        %v1081 = vshrl.u32 %v1080, 7
        %v1082 = vsub.s32 %v1079, %v1081
        %v1083 = vrot.slane %v1076, %v1082
        %v1084 = vcombine.low %v424, %v456
        %v1086 = vunpack.c.l.s4 1983009808
        %v1087 = vunpack.c.0.s8 %v1086
        %v1088 = vlaneseq
        %v1089 = vshrl.u32 %v1088, 7
        %v1090 = vsub.s32 %v1087, %v1089
        %v1091 = vrot.slane %v1084, %v1090
        %v1092 = vcombine.low %v1083, %v1091
        %v1093 = vcombine.high %v1083, %v1091
        %v1095 = vunpack.c.l.s4 1934713408
        %v1096 = vunpack.c.0.s8 %v1095
        %v1097 = vlaneseq
        %v1098 = vshrl.u32 %v1097, 7
        %v1099 = vsub.s32 %v1096, %v1098
        %v1100 = vrot.slane %v1092, %v1099
        %v1102 = vunpack.c.l.s4 1934713408
        %v1103 = vunpack.c.0.s8 %v1102
        %v1104 = vlaneseq
        %v1105 = vshrl.u32 %v1104, 7
        %v1106 = vsub.s32 %v1103, %v1105
        %v1107 = vrot.slane %v1093, %v1106
        %v1108 = vcombine.high %v1100, 0
        %v1109 = vcombine.high %v1107, 0
        %v1110 = vcombine.low %v416, %v448
        %v1112 = vunpack.c.l.s4 1983009808
        %v1113 = vunpack.c.0.s8 %v1112
        %v1114 = vlaneseq
        %v1115 = vshrl.u32 %v1114, 7
        %v1116 = vsub.s32 %v1113, %v1115
        %v1117 = vrot.slane %v1110, %v1116
        %v1118 = vcombine.low %v432, %v464
        %v1120 = vunpack.c.l.s4 1983009808
        %v1121 = vunpack.c.0.s8 %v1120
        %v1122 = vlaneseq
        %v1123 = vshrl.u32 %v1122, 7
        %v1124 = vsub.s32 %v1121, %v1123
        %v1125 = vrot.slane %v1118, %v1124
        %v1126 = vcombine.low %v1117, %v1125
        %v1127 = vcombine.high %v1117, %v1125
        %v1129 = vunpack.c.l.s4 1934713408
        %v1130 = vunpack.c.0.s8 %v1129
        %v1131 = vlaneseq
        %v1132 = vshrl.u32 %v1131, 7
        %v1133 = vsub.s32 %v1130, %v1132
        %v1134 = vrot.slane %v1126, %v1133
        %v1136 = vunpack.c.l.s4 1934713408
        %v1137 = vunpack.c.0.s8 %v1136
        %v1138 = vlaneseq
        %v1139 = vshrl.u32 %v1138, 7
        %v1140 = vsub.s32 %v1137, %v1139
        %v1141 = vrot.slane %v1127, %v1140
        %v1142 = vcombine.high %v1134, 0
        %v1143 = vcombine.high %v1141, 0
        %v1144 = vcombine.low %v472, %v504
        %v1146 = vunpack.c.l.s4 1983009808
        %v1147 = vunpack.c.0.s8 %v1146
        %v1148 = vlaneseq
        %v1149 = vshrl.u32 %v1148, 7
        %v1150 = vsub.s32 %v1147, %v1149
        %v1151 = vrot.slane %v1144, %v1150
        %v1152 = vcombine.low %v488, %v520
        %v1154 = vunpack.c.l.s4 1983009808
        %v1155 = vunpack.c.0.s8 %v1154
        %v1156 = vlaneseq
        %v1157 = vshrl.u32 %v1156, 7
        %v1158 = vsub.s32 %v1155, %v1157
        %v1159 = vrot.slane %v1152, %v1158
        %v1160 = vcombine.low %v1151, %v1159
        %v1161 = vcombine.high %v1151, %v1159
        %v1163 = vunpack.c.l.s4 1934713408
        %v1164 = vunpack.c.0.s8 %v1163
        %v1165 = vlaneseq
        %v1166 = vshrl.u32 %v1165, 7
        %v1167 = vsub.s32 %v1164, %v1166
        %v1168 = vrot.slane %v1160, %v1167
        %v1170 = vunpack.c.l.s4 1934713408
        %v1171 = vunpack.c.0.s8 %v1170
        %v1172 = vlaneseq
        %v1173 = vshrl.u32 %v1172, 7
        %v1174 = vsub.s32 %v1171, %v1173
        %v1175 = vrot.slane %v1161, %v1174
        %v1176 = vcombine.high %v1168, 0
        %v1177 = vcombine.high %v1175, 0
        %v1178 = vcombine.low %v480, %v512
        %v1180 = vunpack.c.l.s4 1983009808
        %v1181 = vunpack.c.0.s8 %v1180
        %v1182 = vlaneseq
        %v1183 = vshrl.u32 %v1182, 7
        %v1184 = vsub.s32 %v1181, %v1183
        %v1185 = vrot.slane %v1178, %v1184
        %v1186 = vcombine.low %v496, %v528
        %v1188 = vunpack.c.l.s4 1983009808
        %v1189 = vunpack.c.0.s8 %v1188
        %v1190 = vlaneseq
        %v1191 = vshrl.u32 %v1190, 7
        %v1192 = vsub.s32 %v1189, %v1191
        %v1193 = vrot.slane %v1186, %v1192
        %v1194 = vcombine.low %v1185, %v1193
        %v1195 = vcombine.high %v1185, %v1193
        %v1197 = vunpack.c.l.s4 1934713408
        %v1198 = vunpack.c.0.s8 %v1197
        %v1199 = vlaneseq
        %v1200 = vshrl.u32 %v1199, 7
        %v1201 = vsub.s32 %v1198, %v1200
        %v1202 = vrot.slane %v1194, %v1201
        %v1204 = vunpack.c.l.s4 1934713408
        %v1205 = vunpack.c.0.s8 %v1204
        %v1206 = vlaneseq
        %v1207 = vshrl.u32 %v1206, 7
        %v1208 = vsub.s32 %v1205, %v1207
        %v1209 = vrot.slane %v1195, %v1208
        %v1210 = vcombine.high %v1202, 0
        %v1211 = vcombine.high %v1209, 0
        %v1212 = vcombine.low %v409, %v441
        %v1214 = vunpack.c.l.s4 1983009808
        %v1215 = vunpack.c.0.s8 %v1214
        %v1216 = vlaneseq
        %v1217 = vshrl.u32 %v1216, 7
        %v1218 = vsub.s32 %v1215, %v1217
        %v1219 = vrot.slane %v1212, %v1218
        %v1220 = vcombine.low %v425, %v457
        %v1222 = vunpack.c.l.s4 1983009808
        %v1223 = vunpack.c.0.s8 %v1222
        %v1224 = vlaneseq
        %v1225 = vshrl.u32 %v1224, 7
        %v1226 = vsub.s32 %v1223, %v1225
        %v1227 = vrot.slane %v1220, %v1226
        %v1228 = vcombine.low %v1219, %v1227
        %v1229 = vcombine.high %v1219, %v1227
        %v1231 = vunpack.c.l.s4 1934713408
        %v1232 = vunpack.c.0.s8 %v1231
        %v1233 = vlaneseq
        %v1234 = vshrl.u32 %v1233, 7
        %v1235 = vsub.s32 %v1232, %v1234
        %v1236 = vrot.slane %v1228, %v1235
        %v1238 = vunpack.c.l.s4 1934713408
        %v1239 = vunpack.c.0.s8 %v1238
        %v1240 = vlaneseq
        %v1241 = vshrl.u32 %v1240, 7
        %v1242 = vsub.s32 %v1239, %v1241
        %v1243 = vrot.slane %v1229, %v1242
        %v1244 = vcombine.high %v1236, 0
        %v1245 = vcombine.high %v1243, 0
        %v1246 = vcombine.low %v417, %v449
        %v1248 = vunpack.c.l.s4 1983009808
        %v1249 = vunpack.c.0.s8 %v1248
        %v1250 = vlaneseq
        %v1251 = vshrl.u32 %v1250, 7
        %v1252 = vsub.s32 %v1249, %v1251
        %v1253 = vrot.slane %v1246, %v1252
        %v1254 = vcombine.low %v433, %v465
        %v1256 = vunpack.c.l.s4 1983009808
        %v1257 = vunpack.c.0.s8 %v1256
        %v1258 = vlaneseq
        %v1259 = vshrl.u32 %v1258, 7
        %v1260 = vsub.s32 %v1257, %v1259
        %v1261 = vrot.slane %v1254, %v1260
        %v1262 = vcombine.low %v1253, %v1261
        %v1263 = vcombine.high %v1253, %v1261
        %v1265 = vunpack.c.l.s4 1934713408
        %v1266 = vunpack.c.0.s8 %v1265
        %v1267 = vlaneseq
        %v1268 = vshrl.u32 %v1267, 7
        %v1269 = vsub.s32 %v1266, %v1268
        %v1270 = vrot.slane %v1262, %v1269
        %v1272 = vunpack.c.l.s4 1934713408
        %v1273 = vunpack.c.0.s8 %v1272
        %v1274 = vlaneseq
        %v1275 = vshrl.u32 %v1274, 7
        %v1276 = vsub.s32 %v1273, %v1275
        %v1277 = vrot.slane %v1263, %v1276
        %v1278 = vcombine.high %v1270, 0
        %v1279 = vcombine.high %v1277, 0
        %v1280 = vcombine.low %v473, %v505
        %v1282 = vunpack.c.l.s4 1983009808
        %v1283 = vunpack.c.0.s8 %v1282
        %v1284 = vlaneseq
        %v1285 = vshrl.u32 %v1284, 7
        %v1286 = vsub.s32 %v1283, %v1285
        %v1287 = vrot.slane %v1280, %v1286
        %v1288 = vcombine.low %v489, %v521
        %v1290 = vunpack.c.l.s4 1983009808
        %v1291 = vunpack.c.0.s8 %v1290
        %v1292 = vlaneseq
        %v1293 = vshrl.u32 %v1292, 7
        %v1294 = vsub.s32 %v1291, %v1293
        %v1295 = vrot.slane %v1288, %v1294
        %v1296 = vcombine.low %v1287, %v1295
        %v1297 = vcombine.high %v1287, %v1295
        %v1299 = vunpack.c.l.s4 1934713408
        %v1300 = vunpack.c.0.s8 %v1299
        %v1301 = vlaneseq
        %v1302 = vshrl.u32 %v1301, 7
        %v1303 = vsub.s32 %v1300, %v1302
        %v1304 = vrot.slane %v1296, %v1303
        %v1306 = vunpack.c.l.s4 1934713408
        %v1307 = vunpack.c.0.s8 %v1306
        %v1308 = vlaneseq
        %v1309 = vshrl.u32 %v1308, 7
        %v1310 = vsub.s32 %v1307, %v1309
        %v1311 = vrot.slane %v1297, %v1310
        %v1312 = vcombine.high %v1304, 0
        %v1313 = vcombine.high %v1311, 0
        %v1314 = vcombine.low %v481, %v513
        %v1316 = vunpack.c.l.s4 1983009808
        %v1317 = vunpack.c.0.s8 %v1316
        %v1318 = vlaneseq
        %v1319 = vshrl.u32 %v1318, 7
        %v1320 = vsub.s32 %v1317, %v1319
        %v1321 = vrot.slane %v1314, %v1320
        %v1322 = vcombine.low %v497, %v529
        %v1324 = vunpack.c.l.s4 1983009808
        %v1325 = vunpack.c.0.s8 %v1324
        %v1326 = vlaneseq
        %v1327 = vshrl.u32 %v1326, 7
        %v1328 = vsub.s32 %v1325, %v1327
        %v1329 = vrot.slane %v1322, %v1328
        %v1330 = vcombine.low %v1321, %v1329
        %v1331 = vcombine.high %v1321, %v1329
        %v1333 = vunpack.c.l.s4 1934713408
        %v1334 = vunpack.c.0.s8 %v1333
        %v1335 = vlaneseq
        %v1336 = vshrl.u32 %v1335, 7
        %v1337 = vsub.s32 %v1334, %v1336
        %v1338 = vrot.slane %v1330, %v1337
        %v1340 = vunpack.c.l.s4 1934713408
        %v1341 = vunpack.c.0.s8 %v1340
        %v1342 = vlaneseq
        %v1343 = vshrl.u32 %v1342, 7
        %v1344 = vsub.s32 %v1341, %v1343
        %v1345 = vrot.slane %v1331, %v1344
        %v1346 = vcombine.high %v1338, 0
        %v1347 = vcombine.high %v1345, 0
        %v1348 = vcombine.low %v410, %v442
        %v1350 = vunpack.c.l.s4 1983009808
        %v1351 = vunpack.c.0.s8 %v1350
        %v1352 = vlaneseq
        %v1353 = vshrl.u32 %v1352, 7
        %v1354 = vsub.s32 %v1351, %v1353
        %v1355 = vrot.slane %v1348, %v1354
        %v1356 = vcombine.low %v426, %v458
        %v1358 = vunpack.c.l.s4 1983009808
        %v1359 = vunpack.c.0.s8 %v1358
        %v1360 = vlaneseq
        %v1361 = vshrl.u32 %v1360, 7
        %v1362 = vsub.s32 %v1359, %v1361
        %v1363 = vrot.slane %v1356, %v1362
        %v1364 = vcombine.low %v1355, %v1363
        %v1365 = vcombine.high %v1355, %v1363
        %v1367 = vunpack.c.l.s4 1934713408
        %v1368 = vunpack.c.0.s8 %v1367
        %v1369 = vlaneseq
        %v1370 = vshrl.u32 %v1369, 7
        %v1371 = vsub.s32 %v1368, %v1370
        %v1372 = vrot.slane %v1364, %v1371
        %v1374 = vunpack.c.l.s4 1934713408
        %v1375 = vunpack.c.0.s8 %v1374
        %v1376 = vlaneseq
        %v1377 = vshrl.u32 %v1376, 7
        %v1378 = vsub.s32 %v1375, %v1377
        %v1379 = vrot.slane %v1365, %v1378
        %v1380 = vcombine.high %v1372, 0
        %v1381 = vcombine.high %v1379, 0
        %v1382 = vcombine.low %v418, %v450
        %v1384 = vunpack.c.l.s4 1983009808
        %v1385 = vunpack.c.0.s8 %v1384
        %v1386 = vlaneseq
        %v1387 = vshrl.u32 %v1386, 7
        %v1388 = vsub.s32 %v1385, %v1387
        %v1389 = vrot.slane %v1382, %v1388
        %v1390 = vcombine.low %v434, %v466
        %v1392 = vunpack.c.l.s4 1983009808
        %v1393 = vunpack.c.0.s8 %v1392
        %v1394 = vlaneseq
        %v1395 = vshrl.u32 %v1394, 7
        %v1396 = vsub.s32 %v1393, %v1395
        %v1397 = vrot.slane %v1390, %v1396
        %v1398 = vcombine.low %v1389, %v1397
        %v1399 = vcombine.high %v1389, %v1397
        %v1401 = vunpack.c.l.s4 1934713408
        %v1402 = vunpack.c.0.s8 %v1401
        %v1403 = vlaneseq
        %v1404 = vshrl.u32 %v1403, 7
        %v1405 = vsub.s32 %v1402, %v1404
        %v1406 = vrot.slane %v1398, %v1405
        %v1408 = vunpack.c.l.s4 1934713408
        %v1409 = vunpack.c.0.s8 %v1408
        %v1410 = vlaneseq
        %v1411 = vshrl.u32 %v1410, 7
        %v1412 = vsub.s32 %v1409, %v1411
        %v1413 = vrot.slane %v1399, %v1412
        %v1414 = vcombine.high %v1406, 0
        %v1415 = vcombine.high %v1413, 0
        %v1416 = vcombine.low %v474, %v506
        %v1418 = vunpack.c.l.s4 1983009808
        %v1419 = vunpack.c.0.s8 %v1418
        %v1420 = vlaneseq
        %v1421 = vshrl.u32 %v1420, 7
        %v1422 = vsub.s32 %v1419, %v1421
        %v1423 = vrot.slane %v1416, %v1422
        %v1424 = vcombine.low %v490, %v522
        %v1426 = vunpack.c.l.s4 1983009808
        %v1427 = vunpack.c.0.s8 %v1426
        %v1428 = vlaneseq
        %v1429 = vshrl.u32 %v1428, 7
        %v1430 = vsub.s32 %v1427, %v1429
        %v1431 = vrot.slane %v1424, %v1430
        %v1432 = vcombine.low %v1423, %v1431
        %v1433 = vcombine.high %v1423, %v1431
        %v1435 = vunpack.c.l.s4 1934713408
        %v1436 = vunpack.c.0.s8 %v1435
        %v1437 = vlaneseq
        %v1438 = vshrl.u32 %v1437, 7
        %v1439 = vsub.s32 %v1436, %v1438
        %v1440 = vrot.slane %v1432, %v1439
        %v1442 = vunpack.c.l.s4 1934713408
        %v1443 = vunpack.c.0.s8 %v1442
        %v1444 = vlaneseq
        %v1445 = vshrl.u32 %v1444, 7
        %v1446 = vsub.s32 %v1443, %v1445
        %v1447 = vrot.slane %v1433, %v1446
        %v1448 = vcombine.high %v1440, 0
        %v1449 = vcombine.high %v1447, 0
        %v1450 = vcombine.low %v482, %v514
        %v1452 = vunpack.c.l.s4 1983009808
        %v1453 = vunpack.c.0.s8 %v1452
        %v1454 = vlaneseq
        %v1455 = vshrl.u32 %v1454, 7
        %v1456 = vsub.s32 %v1453, %v1455
        %v1457 = vrot.slane %v1450, %v1456
        %v1458 = vcombine.low %v498, %v530
        %v1460 = vunpack.c.l.s4 1983009808
        %v1461 = vunpack.c.0.s8 %v1460
        %v1462 = vlaneseq
        %v1463 = vshrl.u32 %v1462, 7
        %v1464 = vsub.s32 %v1461, %v1463
        %v1465 = vrot.slane %v1458, %v1464
        %v1466 = vcombine.low %v1457, %v1465
        %v1467 = vcombine.high %v1457, %v1465
        %v1469 = vunpack.c.l.s4 1934713408
        %v1470 = vunpack.c.0.s8 %v1469
        %v1471 = vlaneseq
        %v1472 = vshrl.u32 %v1471, 7
        %v1473 = vsub.s32 %v1470, %v1472
        %v1474 = vrot.slane %v1466, %v1473
        %v1476 = vunpack.c.l.s4 1934713408
        %v1477 = vunpack.c.0.s8 %v1476
        %v1478 = vlaneseq
        %v1479 = vshrl.u32 %v1478, 7
        %v1480 = vsub.s32 %v1477, %v1479
        %v1481 = vrot.slane %v1467, %v1480
        %v1482 = vcombine.high %v1474, 0
        %v1483 = vcombine.high %v1481, 0
        %v1484 = vcombine.low %v411, %v443
        %v1486 = vunpack.c.l.s4 1983009808
        %v1487 = vunpack.c.0.s8 %v1486
        %v1488 = vlaneseq
        %v1489 = vshrl.u32 %v1488, 7
        %v1490 = vsub.s32 %v1487, %v1489
        %v1491 = vrot.slane %v1484, %v1490
        %v1492 = vcombine.low %v427, %v459
        %v1494 = vunpack.c.l.s4 1983009808
        %v1495 = vunpack.c.0.s8 %v1494
        %v1496 = vlaneseq
        %v1497 = vshrl.u32 %v1496, 7
        %v1498 = vsub.s32 %v1495, %v1497
        %v1499 = vrot.slane %v1492, %v1498
        %v1500 = vcombine.low %v1491, %v1499
        %v1501 = vcombine.high %v1491, %v1499
        %v1503 = vunpack.c.l.s4 1934713408
        %v1504 = vunpack.c.0.s8 %v1503
        %v1505 = vlaneseq
        %v1506 = vshrl.u32 %v1505, 7
        %v1507 = vsub.s32 %v1504, %v1506
        %v1508 = vrot.slane %v1500, %v1507
        %v1510 = vunpack.c.l.s4 1934713408
        %v1511 = vunpack.c.0.s8 %v1510
        %v1512 = vlaneseq
        %v1513 = vshrl.u32 %v1512, 7
        %v1514 = vsub.s32 %v1511, %v1513
        %v1515 = vrot.slane %v1501, %v1514
        %v1516 = vcombine.high %v1508, 0
        %v1517 = vcombine.high %v1515, 0
        %v1518 = vcombine.low %v419, %v451
        %v1520 = vunpack.c.l.s4 1983009808
        %v1521 = vunpack.c.0.s8 %v1520
        %v1522 = vlaneseq
        %v1523 = vshrl.u32 %v1522, 7
        %v1524 = vsub.s32 %v1521, %v1523
        %v1525 = vrot.slane %v1518, %v1524
        %v1526 = vcombine.low %v435, %v467
        %v1528 = vunpack.c.l.s4 1983009808
        %v1529 = vunpack.c.0.s8 %v1528
        %v1530 = vlaneseq
        %v1531 = vshrl.u32 %v1530, 7
        %v1532 = vsub.s32 %v1529, %v1531
        %v1533 = vrot.slane %v1526, %v1532
        %v1534 = vcombine.low %v1525, %v1533
        %v1535 = vcombine.high %v1525, %v1533
        %v1537 = vunpack.c.l.s4 1934713408
        %v1538 = vunpack.c.0.s8 %v1537
        %v1539 = vlaneseq
        %v1540 = vshrl.u32 %v1539, 7
        %v1541 = vsub.s32 %v1538, %v1540
        %v1542 = vrot.slane %v1534, %v1541
        %v1544 = vunpack.c.l.s4 1934713408
        %v1545 = vunpack.c.0.s8 %v1544
        %v1546 = vlaneseq
        %v1547 = vshrl.u32 %v1546, 7
        %v1548 = vsub.s32 %v1545, %v1547
        %v1549 = vrot.slane %v1535, %v1548
        %v1550 = vcombine.high %v1542, 0
        %v1551 = vcombine.high %v1549, 0
        %v1552 = vcombine.low %v475, %v507
        %v1554 = vunpack.c.l.s4 1983009808
        %v1555 = vunpack.c.0.s8 %v1554
        %v1556 = vlaneseq
        %v1557 = vshrl.u32 %v1556, 7
        %v1558 = vsub.s32 %v1555, %v1557
        %v1559 = vrot.slane %v1552, %v1558
        %v1560 = vcombine.low %v491, %v523
        %v1562 = vunpack.c.l.s4 1983009808
        %v1563 = vunpack.c.0.s8 %v1562
        %v1564 = vlaneseq
        %v1565 = vshrl.u32 %v1564, 7
        %v1566 = vsub.s32 %v1563, %v1565
        %v1567 = vrot.slane %v1560, %v1566
        %v1568 = vcombine.low %v1559, %v1567
        %v1569 = vcombine.high %v1559, %v1567
        %v1571 = vunpack.c.l.s4 1934713408
        %v1572 = vunpack.c.0.s8 %v1571
        %v1573 = vlaneseq
        %v1574 = vshrl.u32 %v1573, 7
        %v1575 = vsub.s32 %v1572, %v1574
        %v1576 = vrot.slane %v1568, %v1575
        %v1578 = vunpack.c.l.s4 1934713408
        %v1579 = vunpack.c.0.s8 %v1578
        %v1580 = vlaneseq
        %v1581 = vshrl.u32 %v1580, 7
        %v1582 = vsub.s32 %v1579, %v1581
        %v1583 = vrot.slane %v1569, %v1582
        %v1584 = vcombine.high %v1576, 0
        %v1585 = vcombine.high %v1583, 0
        %v1586 = vcombine.low %v483, %v515
        %v1588 = vunpack.c.l.s4 1983009808
        %v1589 = vunpack.c.0.s8 %v1588
        %v1590 = vlaneseq
        %v1591 = vshrl.u32 %v1590, 7
        %v1592 = vsub.s32 %v1589, %v1591
        %v1593 = vrot.slane %v1586, %v1592
        %v1594 = vcombine.low %v499, %v531
        %v1596 = vunpack.c.l.s4 1983009808
        %v1597 = vunpack.c.0.s8 %v1596
        %v1598 = vlaneseq
        %v1599 = vshrl.u32 %v1598, 7
        %v1600 = vsub.s32 %v1597, %v1599
        %v1601 = vrot.slane %v1594, %v1600
        %v1602 = vcombine.low %v1593, %v1601
        %v1603 = vcombine.high %v1593, %v1601
        %v1605 = vunpack.c.l.s4 1934713408
        %v1606 = vunpack.c.0.s8 %v1605
        %v1607 = vlaneseq
        %v1608 = vshrl.u32 %v1607, 7
        %v1609 = vsub.s32 %v1606, %v1608
        %v1610 = vrot.slane %v1602, %v1609
        %v1612 = vunpack.c.l.s4 1934713408
        %v1613 = vunpack.c.0.s8 %v1612
        %v1614 = vlaneseq
        %v1615 = vshrl.u32 %v1614, 7
        %v1616 = vsub.s32 %v1613, %v1615
        %v1617 = vrot.slane %v1603, %v1616
        %v1618 = vcombine.high %v1610, 0
        %v1619 = vcombine.high %v1617, 0
        %v1622 = vpack.i.b16 %v590, %v556
        %v1623 = vshrl.u32 %v556, 16
        %v1624 = vshrl.u32 %v590, 16
        %v1625 = vpack.i.b16 %v1624, %v1623
        %v1628 = vpack.i.b16 %v598, %v564
        %v1629 = vshrl.u32 %v564, 16
        %v1630 = vshrl.u32 %v598, 16
        %v1631 = vpack.i.b16 %v1630, %v1629
        %v1634 = vpack.i.b16 %v597, %v563
        %v1635 = vshrl.u32 %v563, 16
        %v1636 = vshrl.u32 %v597, 16
        %v1637 = vpack.i.b16 %v1636, %v1635
        %v1640 = vpack.i.b16 %v599, %v565
        %v1641 = vshrl.u32 %v565, 16
        %v1642 = vshrl.u32 %v599, 16
        %v1643 = vpack.i.b16 %v1642, %v1641
        %v1646 = vpack.i.b16 %v726, %v692
        %v1647 = vshrl.u32 %v692, 16
        %v1648 = vshrl.u32 %v726, 16
        %v1649 = vpack.i.b16 %v1648, %v1647
        %v1652 = vpack.i.b16 %v734, %v700
        %v1653 = vshrl.u32 %v700, 16
        %v1654 = vshrl.u32 %v734, 16
        %v1655 = vpack.i.b16 %v1654, %v1653
        %v1658 = vpack.i.b16 %v733, %v699
        %v1659 = vshrl.u32 %v699, 16
        %v1660 = vshrl.u32 %v733, 16
        %v1661 = vpack.i.b16 %v1660, %v1659
        %v1664 = vpack.i.b16 %v735, %v701
        %v1665 = vshrl.u32 %v701, 16
        %v1666 = vshrl.u32 %v735, 16
        %v1667 = vpack.i.b16 %v1666, %v1665
        %v1670 = vpack.i.b16 %v862, %v828
        %v1671 = vshrl.u32 %v828, 16
        %v1672 = vshrl.u32 %v862, 16
        %v1673 = vpack.i.b16 %v1672, %v1671
        %v1676 = vpack.i.b16 %v870, %v836
        %v1677 = vshrl.u32 %v836, 16
        %v1678 = vshrl.u32 %v870, 16
        %v1679 = vpack.i.b16 %v1678, %v1677
        %v1682 = vpack.i.b16 %v869, %v835
        %v1683 = vshrl.u32 %v835, 16
        %v1684 = vshrl.u32 %v869, 16
        %v1685 = vpack.i.b16 %v1684, %v1683
        %v1688 = vpack.i.b16 %v871, %v837
        %v1689 = vshrl.u32 %v837, 16
        %v1690 = vshrl.u32 %v871, 16
        %v1691 = vpack.i.b16 %v1690, %v1689
        %v1694 = vpack.i.b16 %v998, %v964
        %v1695 = vshrl.u32 %v964, 16
        %v1696 = vshrl.u32 %v998, 16
        %v1697 = vpack.i.b16 %v1696, %v1695
        %v1700 = vpack.i.b16 %v1006, %v972
        %v1701 = vshrl.u32 %v972, 16
        %v1702 = vshrl.u32 %v1006, 16
        %v1703 = vpack.i.b16 %v1702, %v1701
        %v1706 = vpack.i.b16 %v1005, %v971
        %v1707 = vshrl.u32 %v971, 16
        %v1708 = vshrl.u32 %v1005, 16
        %v1709 = vpack.i.b16 %v1708, %v1707
        %v1712 = vpack.i.b16 %v1007, %v973
        %v1713 = vshrl.u32 %v973, 16
        %v1714 = vshrl.u32 %v1007, 16
        %v1715 = vpack.i.b16 %v1714, %v1713
        %v1718 = vpack.i.b16 %v1134, %v1100
        %v1719 = vshrl.u32 %v1100, 16
        %v1720 = vshrl.u32 %v1134, 16
        %v1721 = vpack.i.b16 %v1720, %v1719
        %v1724 = vpack.i.b16 %v1142, %v1108
        %v1725 = vshrl.u32 %v1108, 16
        %v1726 = vshrl.u32 %v1142, 16
        %v1727 = vpack.i.b16 %v1726, %v1725
        %v1730 = vpack.i.b16 %v1141, %v1107
        %v1731 = vshrl.u32 %v1107, 16
        %v1732 = vshrl.u32 %v1141, 16
        %v1733 = vpack.i.b16 %v1732, %v1731
        %v1736 = vpack.i.b16 %v1143, %v1109
        %v1737 = vshrl.u32 %v1109, 16
        %v1738 = vshrl.u32 %v1143, 16
        %v1739 = vpack.i.b16 %v1738, %v1737
        %v1742 = vpack.i.b16 %v1270, %v1236
        %v1743 = vshrl.u32 %v1236, 16
        %v1744 = vshrl.u32 %v1270, 16
        %v1745 = vpack.i.b16 %v1744, %v1743
        %v1748 = vpack.i.b16 %v1278, %v1244
        %v1749 = vshrl.u32 %v1244, 16
        %v1750 = vshrl.u32 %v1278, 16
        %v1751 = vpack.i.b16 %v1750, %v1749
        %v1754 = vpack.i.b16 %v1277, %v1243
        %v1755 = vshrl.u32 %v1243, 16
        %v1756 = vshrl.u32 %v1277, 16
        %v1757 = vpack.i.b16 %v1756, %v1755
        %v1760 = vpack.i.b16 %v1279, %v1245
        %v1761 = vshrl.u32 %v1245, 16
        %v1762 = vshrl.u32 %v1279, 16
        %v1763 = vpack.i.b16 %v1762, %v1761
        %v1766 = vpack.i.b16 %v1406, %v1372
        %v1767 = vshrl.u32 %v1372, 16
        %v1768 = vshrl.u32 %v1406, 16
        %v1769 = vpack.i.b16 %v1768, %v1767
        %v1772 = vpack.i.b16 %v1414, %v1380
        %v1773 = vshrl.u32 %v1380, 16
        %v1774 = vshrl.u32 %v1414, 16
        %v1775 = vpack.i.b16 %v1774, %v1773
        %v1778 = vpack.i.b16 %v1413, %v1379
        %v1779 = vshrl.u32 %v1379, 16
        %v1780 = vshrl.u32 %v1413, 16
        %v1781 = vpack.i.b16 %v1780, %v1779
        %v1784 = vpack.i.b16 %v1415, %v1381
        %v1785 = vshrl.u32 %v1381, 16
        %v1786 = vshrl.u32 %v1415, 16
        %v1787 = vpack.i.b16 %v1786, %v1785
        %v1790 = vpack.i.b16 %v1542, %v1508
        %v1791 = vshrl.u32 %v1508, 16
        %v1792 = vshrl.u32 %v1542, 16
        %v1793 = vpack.i.b16 %v1792, %v1791
        %v1796 = vpack.i.b16 %v1550, %v1516
        %v1797 = vshrl.u32 %v1516, 16
        %v1798 = vshrl.u32 %v1550, 16
        %v1799 = vpack.i.b16 %v1798, %v1797
        %v1802 = vpack.i.b16 %v1549, %v1515
        %v1803 = vshrl.u32 %v1515, 16
        %v1804 = vshrl.u32 %v1549, 16
        %v1805 = vpack.i.b16 %v1804, %v1803
        %v1808 = vpack.i.b16 %v1551, %v1517
        %v1809 = vshrl.u32 %v1517, 16
        %v1810 = vshrl.u32 %v1551, 16
        %v1811 = vpack.i.b16 %v1810, %v1809
        %v1814 = vpack.i.b16 %v658, %v624
        %v1815 = vshrl.u32 %v624, 16
        %v1816 = vshrl.u32 %v658, 16
        %v1817 = vpack.i.b16 %v1816, %v1815
        %v1820 = vpack.i.b16 %v666, %v632
        %v1821 = vshrl.u32 %v632, 16
        %v1822 = vshrl.u32 %v666, 16
        %v1823 = vpack.i.b16 %v1822, %v1821
        %v1826 = vpack.i.b16 %v665, %v631
        %v1827 = vshrl.u32 %v631, 16
        %v1828 = vshrl.u32 %v665, 16
        %v1829 = vpack.i.b16 %v1828, %v1827
        %v1832 = vpack.i.b16 %v667, %v633
        %v1833 = vshrl.u32 %v633, 16
        %v1834 = vshrl.u32 %v667, 16
        %v1835 = vpack.i.b16 %v1834, %v1833
        %v1838 = vpack.i.b16 %v794, %v760
        %v1839 = vshrl.u32 %v760, 16
        %v1840 = vshrl.u32 %v794, 16
        %v1841 = vpack.i.b16 %v1840, %v1839
        %v1844 = vpack.i.b16 %v802, %v768
        %v1845 = vshrl.u32 %v768, 16
        %v1846 = vshrl.u32 %v802, 16
        %v1847 = vpack.i.b16 %v1846, %v1845
        %v1850 = vpack.i.b16 %v801, %v767
        %v1851 = vshrl.u32 %v767, 16
        %v1852 = vshrl.u32 %v801, 16
        %v1853 = vpack.i.b16 %v1852, %v1851
        %v1856 = vpack.i.b16 %v803, %v769
        %v1857 = vshrl.u32 %v769, 16
        %v1858 = vshrl.u32 %v803, 16
        %v1859 = vpack.i.b16 %v1858, %v1857
        %v1862 = vpack.i.b16 %v930, %v896
        %v1863 = vshrl.u32 %v896, 16
        %v1864 = vshrl.u32 %v930, 16
        %v1865 = vpack.i.b16 %v1864, %v1863
        %v1868 = vpack.i.b16 %v938, %v904
        %v1869 = vshrl.u32 %v904, 16
        %v1870 = vshrl.u32 %v938, 16
        %v1871 = vpack.i.b16 %v1870, %v1869
        %v1874 = vpack.i.b16 %v937, %v903
        %v1875 = vshrl.u32 %v903, 16
        %v1876 = vshrl.u32 %v937, 16
        %v1877 = vpack.i.b16 %v1876, %v1875
        %v1880 = vpack.i.b16 %v939, %v905
        %v1881 = vshrl.u32 %v905, 16
        %v1882 = vshrl.u32 %v939, 16
        %v1883 = vpack.i.b16 %v1882, %v1881
        %v1886 = vpack.i.b16 %v1066, %v1032
        %v1887 = vshrl.u32 %v1032, 16
        %v1888 = vshrl.u32 %v1066, 16
        %v1889 = vpack.i.b16 %v1888, %v1887
        %v1892 = vpack.i.b16 %v1074, %v1040
        %v1893 = vshrl.u32 %v1040, 16
        %v1894 = vshrl.u32 %v1074, 16
        %v1895 = vpack.i.b16 %v1894, %v1893
        %v1898 = vpack.i.b16 %v1073, %v1039
        %v1899 = vshrl.u32 %v1039, 16
        %v1900 = vshrl.u32 %v1073, 16
        %v1901 = vpack.i.b16 %v1900, %v1899
        %v1904 = vpack.i.b16 %v1075, %v1041
        %v1905 = vshrl.u32 %v1041, 16
        %v1906 = vshrl.u32 %v1075, 16
        %v1907 = vpack.i.b16 %v1906, %v1905
        %v1910 = vpack.i.b16 %v1202, %v1168
        %v1911 = vshrl.u32 %v1168, 16
        %v1912 = vshrl.u32 %v1202, 16
        %v1913 = vpack.i.b16 %v1912, %v1911
        %v1916 = vpack.i.b16 %v1210, %v1176
        %v1917 = vshrl.u32 %v1176, 16
        %v1918 = vshrl.u32 %v1210, 16
        %v1919 = vpack.i.b16 %v1918, %v1917
        %v1922 = vpack.i.b16 %v1209, %v1175
        %v1923 = vshrl.u32 %v1175, 16
        %v1924 = vshrl.u32 %v1209, 16
        %v1925 = vpack.i.b16 %v1924, %v1923
        %v1928 = vpack.i.b16 %v1211, %v1177
        %v1929 = vshrl.u32 %v1177, 16
        %v1930 = vshrl.u32 %v1211, 16
        %v1931 = vpack.i.b16 %v1930, %v1929
        %v1934 = vpack.i.b16 %v1338, %v1304
        %v1935 = vshrl.u32 %v1304, 16
        %v1936 = vshrl.u32 %v1338, 16
        %v1937 = vpack.i.b16 %v1936, %v1935
        %v1940 = vpack.i.b16 %v1346, %v1312
        %v1941 = vshrl.u32 %v1312, 16
        %v1942 = vshrl.u32 %v1346, 16
        %v1943 = vpack.i.b16 %v1942, %v1941
        %v1946 = vpack.i.b16 %v1345, %v1311
        %v1947 = vshrl.u32 %v1311, 16
        %v1948 = vshrl.u32 %v1345, 16
        %v1949 = vpack.i.b16 %v1948, %v1947
        %v1952 = vpack.i.b16 %v1347, %v1313
        %v1953 = vshrl.u32 %v1313, 16
        %v1954 = vshrl.u32 %v1347, 16
        %v1955 = vpack.i.b16 %v1954, %v1953
        %v1958 = vpack.i.b16 %v1474, %v1440
        %v1959 = vshrl.u32 %v1440, 16
        %v1960 = vshrl.u32 %v1474, 16
        %v1961 = vpack.i.b16 %v1960, %v1959
        %v1964 = vpack.i.b16 %v1482, %v1448
        %v1965 = vshrl.u32 %v1448, 16
        %v1966 = vshrl.u32 %v1482, 16
        %v1967 = vpack.i.b16 %v1966, %v1965
        %v1970 = vpack.i.b16 %v1481, %v1447
        %v1971 = vshrl.u32 %v1447, 16
        %v1972 = vshrl.u32 %v1481, 16
        %v1973 = vpack.i.b16 %v1972, %v1971
        %v1976 = vpack.i.b16 %v1483, %v1449
        %v1977 = vshrl.u32 %v1449, 16
        %v1978 = vshrl.u32 %v1483, 16
        %v1979 = vpack.i.b16 %v1978, %v1977
        %v1982 = vpack.i.b16 %v1610, %v1576
        %v1983 = vshrl.u32 %v1576, 16
        %v1984 = vshrl.u32 %v1610, 16
        %v1985 = vpack.i.b16 %v1984, %v1983
        %v1988 = vpack.i.b16 %v1618, %v1584
        %v1989 = vshrl.u32 %v1584, 16
        %v1990 = vshrl.u32 %v1618, 16
        %v1991 = vpack.i.b16 %v1990, %v1989
        %v1994 = vpack.i.b16 %v1617, %v1583
        %v1995 = vshrl.u32 %v1583, 16
        %v1996 = vshrl.u32 %v1617, 16
        %v1997 = vpack.i.b16 %v1996, %v1995
        %v2000 = vpack.i.b16 %v1619, %v1585
        %v2001 = vshrl.u32 %v1585, 16
        %v2002 = vshrl.u32 %v1619, 16
        %v2003 = vpack.i.b16 %v2002, %v2001
        %v2004 = vunpack.c.l.b16 %v1622
        %v2005 = vunpack.c.l.b16 %v1814
        %v2006 = vpack.c.b16 %v2005, %v2004
        %v2007 = vunpack.c.l.b16 %v1625
        %v2008 = vunpack.c.l.b16 %v1817
        %v2009 = vpack.c.b16 %v2008, %v2007
        %2010 = vrot.lane.b32.xlu0 %v2009, 64
        %v2011 = vpop.permute.xlu0 %2010
        %v2012 = vunpack.c.l.b16 %v1628
        %v2013 = vunpack.c.l.b16 %v1820
        %v2014 = vpack.c.b16 %v2013, %v2012
        %v2015 = vunpack.c.l.b16 %v1631
        %v2016 = vunpack.c.l.b16 %v1823
        %v2017 = vpack.c.b16 %v2016, %v2015
        %2018 = vrot.lane.b32.xlu0 %v2017, 64
        %v2019 = vpop.permute.xlu0 %2018
        %v2020 = vunpack.c.l.b16 %v1634
        %v2021 = vunpack.c.l.b16 %v1826
        %v2022 = vpack.c.b16 %v2021, %v2020
        %v2023 = vunpack.c.l.b16 %v1637
        %v2024 = vunpack.c.l.b16 %v1829
        %v2025 = vpack.c.b16 %v2024, %v2023
        %2026 = vrot.lane.b32.xlu0 %v2025, 64
        %v2027 = vpop.permute.xlu0 %2026
        %v2028 = vunpack.c.l.b16 %v1640
        %v2029 = vunpack.c.l.b16 %v1832
        %v2030 = vpack.c.b16 %v2029, %v2028
        %v2031 = vunpack.c.l.b16 %v1643
        %v2032 = vunpack.c.l.b16 %v1835
        %v2033 = vpack.c.b16 %v2032, %v2031
        %2034 = vrot.lane.b32.xlu0 %v2033, 64
        %v2035 = vpop.permute.xlu0 %2034
        %v2036 = vunpack.c.l.b16 %v1646
        %v2037 = vunpack.c.l.b16 %v1838
        %v2038 = vpack.c.b16 %v2037, %v2036
        %v2039 = vunpack.c.l.b16 %v1649
        %v2040 = vunpack.c.l.b16 %v1841
        %v2041 = vpack.c.b16 %v2040, %v2039
        %2042 = vrot.lane.b32.xlu0 %v2041, 64
        %v2043 = vpop.permute.xlu0 %2042
        %v2044 = vunpack.c.l.b16 %v1652
        %v2045 = vunpack.c.l.b16 %v1844
        %v2046 = vpack.c.b16 %v2045, %v2044
        %v2047 = vunpack.c.l.b16 %v1655
        %v2048 = vunpack.c.l.b16 %v1847
        %v2049 = vpack.c.b16 %v2048, %v2047
        %2050 = vrot.lane.b32.xlu0 %v2049, 64
        %v2051 = vpop.permute.xlu0 %2050
        %v2052 = vunpack.c.l.b16 %v1658
        %v2053 = vunpack.c.l.b16 %v1850
        %v2054 = vpack.c.b16 %v2053, %v2052
        %v2055 = vunpack.c.l.b16 %v1661
        %v2056 = vunpack.c.l.b16 %v1853
        %v2057 = vpack.c.b16 %v2056, %v2055
        %2058 = vrot.lane.b32.xlu0 %v2057, 64
        %v2059 = vpop.permute.xlu0 %2058
        %v2060 = vunpack.c.l.b16 %v1664
        %v2061 = vunpack.c.l.b16 %v1856
        %v2062 = vpack.c.b16 %v2061, %v2060
        %v2063 = vunpack.c.l.b16 %v1667
        %v2064 = vunpack.c.l.b16 %v1859
        %v2065 = vpack.c.b16 %v2064, %v2063
        %2066 = vrot.lane.b32.xlu0 %v2065, 64
        %v2067 = vpop.permute.xlu0 %2066
        %v2068 = vunpack.c.l.b16 %v1670
        %v2069 = vunpack.c.l.b16 %v1862
        %v2070 = vpack.c.b16 %v2069, %v2068
        %v2071 = vunpack.c.l.b16 %v1673
        %v2072 = vunpack.c.l.b16 %v1865
        %v2073 = vpack.c.b16 %v2072, %v2071
        %2074 = vrot.lane.b32.xlu0 %v2073, 64
        %v2075 = vpop.permute.xlu0 %2074
        %v2076 = vunpack.c.l.b16 %v1676
        %v2077 = vunpack.c.l.b16 %v1868
        %v2078 = vpack.c.b16 %v2077, %v2076
        %v2079 = vunpack.c.l.b16 %v1679
        %v2080 = vunpack.c.l.b16 %v1871
        %v2081 = vpack.c.b16 %v2080, %v2079
        %2082 = vrot.lane.b32.xlu0 %v2081, 64
        %v2083 = vpop.permute.xlu0 %2082
        %v2084 = vunpack.c.l.b16 %v1682
        %v2085 = vunpack.c.l.b16 %v1874
        %v2086 = vpack.c.b16 %v2085, %v2084
        %v2087 = vunpack.c.l.b16 %v1685
        %v2088 = vunpack.c.l.b16 %v1877
        %v2089 = vpack.c.b16 %v2088, %v2087
        %2090 = vrot.lane.b32.xlu0 %v2089, 64
        %v2091 = vpop.permute.xlu0 %2090
        %v2092 = vunpack.c.l.b16 %v1688
        %v2093 = vunpack.c.l.b16 %v1880
        %v2094 = vpack.c.b16 %v2093, %v2092
        %v2095 = vunpack.c.l.b16 %v1691
        %v2096 = vunpack.c.l.b16 %v1883
        %v2097 = vpack.c.b16 %v2096, %v2095
        %2098 = vrot.lane.b32.xlu0 %v2097, 64
        %v2099 = vpop.permute.xlu0 %2098
        %v2100 = vunpack.c.l.b16 %v1694
        %v2101 = vunpack.c.l.b16 %v1886
        %v2102 = vpack.c.b16 %v2101, %v2100
        %v2103 = vunpack.c.l.b16 %v1697
        %v2104 = vunpack.c.l.b16 %v1889
        %v2105 = vpack.c.b16 %v2104, %v2103
        %2106 = vrot.lane.b32.xlu0 %v2105, 64
        %v2107 = vpop.permute.xlu0 %2106
        %v2108 = vunpack.c.l.b16 %v1700
        %v2109 = vunpack.c.l.b16 %v1892
        %v2110 = vpack.c.b16 %v2109, %v2108
        %v2111 = vunpack.c.l.b16 %v1703
        %v2112 = vunpack.c.l.b16 %v1895
        %v2113 = vpack.c.b16 %v2112, %v2111
        %2114 = vrot.lane.b32.xlu0 %v2113, 64
        %v2115 = vpop.permute.xlu0 %2114
        %v2116 = vunpack.c.l.b16 %v1706
        %v2117 = vunpack.c.l.b16 %v1898
        %v2118 = vpack.c.b16 %v2117, %v2116
        %v2119 = vunpack.c.l.b16 %v1709
        %v2120 = vunpack.c.l.b16 %v1901
        %v2121 = vpack.c.b16 %v2120, %v2119
        %2122 = vrot.lane.b32.xlu0 %v2121, 64
        %v2123 = vpop.permute.xlu0 %2122
        %v2124 = vunpack.c.l.b16 %v1712
        %v2125 = vunpack.c.l.b16 %v1904
        %v2126 = vpack.c.b16 %v2125, %v2124
        %v2127 = vunpack.c.l.b16 %v1715
        %v2128 = vunpack.c.l.b16 %v1907
        %v2129 = vpack.c.b16 %v2128, %v2127
        %2130 = vrot.lane.b32.xlu0 %v2129, 64
        %v2131 = vpop.permute.xlu0 %2130
        %v2132 = vunpack.c.l.b16 %v1718
        %v2133 = vunpack.c.l.b16 %v1910
        %v2134 = vpack.c.b16 %v2133, %v2132
        %v2135 = vunpack.c.l.b16 %v1721
        %v2136 = vunpack.c.l.b16 %v1913
        %v2137 = vpack.c.b16 %v2136, %v2135
        %2138 = vrot.lane.b32.xlu0 %v2137, 64
        %v2139 = vpop.permute.xlu0 %2138
        %v2140 = vunpack.c.l.b16 %v1724
        %v2141 = vunpack.c.l.b16 %v1916
        %v2142 = vpack.c.b16 %v2141, %v2140
        %v2143 = vunpack.c.l.b16 %v1727
        %v2144 = vunpack.c.l.b16 %v1919
        %v2145 = vpack.c.b16 %v2144, %v2143
        %2146 = vrot.lane.b32.xlu0 %v2145, 64
        %v2147 = vpop.permute.xlu0 %2146
        %v2148 = vunpack.c.l.b16 %v1730
        %v2149 = vunpack.c.l.b16 %v1922
        %v2150 = vpack.c.b16 %v2149, %v2148
        %v2151 = vunpack.c.l.b16 %v1733
        %v2152 = vunpack.c.l.b16 %v1925
        %v2153 = vpack.c.b16 %v2152, %v2151
        %2154 = vrot.lane.b32.xlu0 %v2153, 64
        %v2155 = vpop.permute.xlu0 %2154
        %v2156 = vunpack.c.l.b16 %v1736
        %v2157 = vunpack.c.l.b16 %v1928
        %v2158 = vpack.c.b16 %v2157, %v2156
        %v2159 = vunpack.c.l.b16 %v1739
        %v2160 = vunpack.c.l.b16 %v1931
        %v2161 = vpack.c.b16 %v2160, %v2159
        %2162 = vrot.lane.b32.xlu0 %v2161, 64
        %v2163 = vpop.permute.xlu0 %2162
        %v2164 = vunpack.c.l.b16 %v1742
        %v2165 = vunpack.c.l.b16 %v1934
        %v2166 = vpack.c.b16 %v2165, %v2164
        %v2167 = vunpack.c.l.b16 %v1745
        %v2168 = vunpack.c.l.b16 %v1937
        %v2169 = vpack.c.b16 %v2168, %v2167
        %2170 = vrot.lane.b32.xlu0 %v2169, 64
        %v2171 = vpop.permute.xlu0 %2170
        %v2172 = vunpack.c.l.b16 %v1748
        %v2173 = vunpack.c.l.b16 %v1940
        %v2174 = vpack.c.b16 %v2173, %v2172
        %v2175 = vunpack.c.l.b16 %v1751
        %v2176 = vunpack.c.l.b16 %v1943
        %v2177 = vpack.c.b16 %v2176, %v2175
        %2178 = vrot.lane.b32.xlu0 %v2177, 64
        %v2179 = vpop.permute.xlu0 %2178
        %v2180 = vunpack.c.l.b16 %v1754
        %v2181 = vunpack.c.l.b16 %v1946
        %v2182 = vpack.c.b16 %v2181, %v2180
        %v2183 = vunpack.c.l.b16 %v1757
        %v2184 = vunpack.c.l.b16 %v1949
        %v2185 = vpack.c.b16 %v2184, %v2183
        %2186 = vrot.lane.b32.xlu0 %v2185, 64
        %v2187 = vpop.permute.xlu0 %2186
        %v2188 = vunpack.c.l.b16 %v1760
        %v2189 = vunpack.c.l.b16 %v1952
        %v2190 = vpack.c.b16 %v2189, %v2188
        %v2191 = vunpack.c.l.b16 %v1763
        %v2192 = vunpack.c.l.b16 %v1955
        %v2193 = vpack.c.b16 %v2192, %v2191
        %2194 = vrot.lane.b32.xlu0 %v2193, 64
        %v2195 = vpop.permute.xlu0 %2194
        %v2196 = vunpack.c.l.b16 %v1766
        %v2197 = vunpack.c.l.b16 %v1958
        %v2198 = vpack.c.b16 %v2197, %v2196
        %v2199 = vunpack.c.l.b16 %v1769
        %v2200 = vunpack.c.l.b16 %v1961
        %v2201 = vpack.c.b16 %v2200, %v2199
        %2202 = vrot.lane.b32.xlu0 %v2201, 64
        %v2203 = vpop.permute.xlu0 %2202
        %v2204 = vunpack.c.l.b16 %v1772
        %v2205 = vunpack.c.l.b16 %v1964
        %v2206 = vpack.c.b16 %v2205, %v2204
        %v2207 = vunpack.c.l.b16 %v1775
        %v2208 = vunpack.c.l.b16 %v1967
        %v2209 = vpack.c.b16 %v2208, %v2207
        %2210 = vrot.lane.b32.xlu0 %v2209, 64
        %v2211 = vpop.permute.xlu0 %2210
        %v2212 = vunpack.c.l.b16 %v1778
        %v2213 = vunpack.c.l.b16 %v1970
        %v2214 = vpack.c.b16 %v2213, %v2212
        %v2215 = vunpack.c.l.b16 %v1781
        %v2216 = vunpack.c.l.b16 %v1973
        %v2217 = vpack.c.b16 %v2216, %v2215
        %2218 = vrot.lane.b32.xlu0 %v2217, 64
        %v2219 = vpop.permute.xlu0 %2218
        %v2220 = vunpack.c.l.b16 %v1784
        %v2221 = vunpack.c.l.b16 %v1976
        %v2222 = vpack.c.b16 %v2221, %v2220
        %v2223 = vunpack.c.l.b16 %v1787
        %v2224 = vunpack.c.l.b16 %v1979
        %v2225 = vpack.c.b16 %v2224, %v2223
        %2226 = vrot.lane.b32.xlu0 %v2225, 64
        %v2227 = vpop.permute.xlu0 %2226
        %v2228 = vunpack.c.l.b16 %v1790
        %v2229 = vunpack.c.l.b16 %v1982
        %v2230 = vpack.c.b16 %v2229, %v2228
        %v2231 = vunpack.c.l.b16 %v1793
        %v2232 = vunpack.c.l.b16 %v1985
        %v2233 = vpack.c.b16 %v2232, %v2231
        %2234 = vrot.lane.b32.xlu0 %v2233, 64
        %v2235 = vpop.permute.xlu0 %2234
        %v2236 = vunpack.c.l.b16 %v1796
        %v2237 = vunpack.c.l.b16 %v1988
        %v2238 = vpack.c.b16 %v2237, %v2236
        %v2239 = vunpack.c.l.b16 %v1799
        %v2240 = vunpack.c.l.b16 %v1991
        %v2241 = vpack.c.b16 %v2240, %v2239
        %2242 = vrot.lane.b32.xlu0 %v2241, 64
        %v2243 = vpop.permute.xlu0 %2242
        %v2244 = vunpack.c.l.b16 %v1802
        %v2245 = vunpack.c.l.b16 %v1994
        %v2246 = vpack.c.b16 %v2245, %v2244
        %v2247 = vunpack.c.l.b16 %v1805
        %v2248 = vunpack.c.l.b16 %v1997
        %v2249 = vpack.c.b16 %v2248, %v2247
        %2250 = vrot.lane.b32.xlu0 %v2249, 64
        %v2251 = vpop.permute.xlu0 %2250
        %v2252 = vunpack.c.l.b16 %v1808
        %v2253 = vunpack.c.l.b16 %v2000
        %v2254 = vpack.c.b16 %v2253, %v2252
        %v2255 = vunpack.c.l.b16 %v1811
        %v2256 = vunpack.c.l.b16 %v2003
        %v2257 = vpack.c.b16 %v2256, %v2255
        %2258 = vrot.lane.b32.xlu0 %v2257, 64
        %v2259 = vpop.permute.xlu0 %2258
        %vm2260 = vcmask 523264
        %v2263 = vsel %vm2260, %v2006, %v2011
        %v2267 = vsel %vm2260, %v2014, %v2019
        %v2271 = vsel %vm2260, %v2022, %v2027
        %v2275 = vsel %vm2260, %v2030, %v2035
        %v2279 = vsel %vm2260, %v2038, %v2043
        %v2283 = vsel %vm2260, %v2046, %v2051
        %v2287 = vsel %vm2260, %v2054, %v2059
        %v2291 = vsel %vm2260, %v2062, %v2067
        %v2295 = vsel %vm2260, %v2070, %v2075
        %v2299 = vsel %vm2260, %v2078, %v2083
        %v2303 = vsel %vm2260, %v2086, %v2091
        %v2307 = vsel %vm2260, %v2094, %v2099
        %v2311 = vsel %vm2260, %v2102, %v2107
        %v2315 = vsel %vm2260, %v2110, %v2115
        %v2319 = vsel %vm2260, %v2118, %v2123
        %v2323 = vsel %vm2260, %v2126, %v2131
        %v2327 = vsel %vm2260, %v2134, %v2139
        %v2331 = vsel %vm2260, %v2142, %v2147
        %v2335 = vsel %vm2260, %v2150, %v2155
        %v2339 = vsel %vm2260, %v2158, %v2163
        %v2343 = vsel %vm2260, %v2166, %v2171
        %v2347 = vsel %vm2260, %v2174, %v2179
        %v2351 = vsel %vm2260, %v2182, %v2187
        %v2355 = vsel %vm2260, %v2190, %v2195
        %v2359 = vsel %vm2260, %v2198, %v2203
        %v2363 = vsel %vm2260, %v2206, %v2211
        %v2367 = vsel %vm2260, %v2214, %v2219
        %v2371 = vsel %vm2260, %v2222, %v2227
        %v2375 = vsel %vm2260, %v2230, %v2235
        %v2379 = vsel %vm2260, %v2238, %v2243
        %v2383 = vsel %vm2260, %v2246, %v2251
        %v2387 = vsel %vm2260, %v2254, %v2259
        %v2389 = vld [vmem:[%s1] sm:$0xf]
        %v2390 = vld [vmem:[%s1 + $0x4] sm:$0xf]
        %v2391 = vld [vmem:[%s1 + $0x8] sm:$0xf]
        %v2392 = vld [vmem:[%s1 + $0xc] sm:$0xf]
        %v2393 = vld [vmem:[%s1 + $0x10] sm:$0xf]
        %v2394 = vld [vmem:[%s1 + $0x14] sm:$0xf]
        %v2395 = vld [vmem:[%s1 + $0x18] sm:$0xf]
        %v2396 = vld [vmem:[%s1 + $0x1c] sm:$0xf]
        %v2397 = vld [vmem:[%s1 + $0x20] sm:$0xf]
        %v2398 = vld [vmem:[%s1 + $0x24] sm:$0xf]
        %v2399 = vld [vmem:[%s1 + $0x28] sm:$0xf]
        %v2400 = vld [vmem:[%s1 + $0x2c] sm:$0xf]
        %v2401 = vld [vmem:[%s1 + $0x30] sm:$0xf]
        %v2402 = vld [vmem:[%s1 + $0x34] sm:$0xf]
        %v2403 = vld [vmem:[%s1 + $0x38] sm:$0xf]
        %v2404 = vld [vmem:[%s1 + $0x3c] sm:$0xf]
        %v2405 = vld [vmem:[%s1 + $0x40] sm:$0xf]
        %v2406 = vld [vmem:[%s1 + $0x44] sm:$0xf]
        %v2407 = vld [vmem:[%s1 + $0x48] sm:$0xf]
        %v2408 = vld [vmem:[%s1 + $0x4c] sm:$0xf]
        %v2409 = vld [vmem:[%s1 + $0x50] sm:$0xf]
        %v2410 = vld [vmem:[%s1 + $0x54] sm:$0xf]
        %v2411 = vld [vmem:[%s1 + $0x58] sm:$0xf]
        %v2412 = vld [vmem:[%s1 + $0x5c] sm:$0xf]
        %v2413 = vld [vmem:[%s1 + $0x60] sm:$0xf]
        %v2414 = vld [vmem:[%s1 + $0x64] sm:$0xf]
        %v2415 = vld [vmem:[%s1 + $0x68] sm:$0xf]
        %v2416 = vld [vmem:[%s1 + $0x6c] sm:$0xf]
        %v2417 = vld [vmem:[%s1 + $0x70] sm:$0xf]
        %v2418 = vld [vmem:[%s1 + $0x74] sm:$0xf]
        %v2419 = vld [vmem:[%s1 + $0x78] sm:$0xf]
        %v2420 = vld [vmem:[%s1 + $0x7c] sm:$0xf]
        %v2421 = vld [vmem:[%s1 + $0x80] sm:$0xf]
        %v2422 = vld [vmem:[%s1 + $0x84] sm:$0xf]
        %v2423 = vld [vmem:[%s1 + $0x88] sm:$0xf]
        %v2424 = vld [vmem:[%s1 + $0x8c] sm:$0xf]
        %v2425 = vld [vmem:[%s1 + $0x90] sm:$0xf]
        %v2426 = vld [vmem:[%s1 + $0x94] sm:$0xf]
        %v2427 = vld [vmem:[%s1 + $0x98] sm:$0xf]
        %v2428 = vld [vmem:[%s1 + $0x9c] sm:$0xf]
        %v2429 = vld [vmem:[%s1 + $0xa0] sm:$0xf]
        %v2430 = vld [vmem:[%s1 + $0xa4] sm:$0xf]
        %v2431 = vld [vmem:[%s1 + $0xa8] sm:$0xf]
        %v2432 = vld [vmem:[%s1 + $0xac] sm:$0xf]
        %v2433 = vld [vmem:[%s1 + $0xb0] sm:$0xf]
        %v2434 = vld [vmem:[%s1 + $0xb4] sm:$0xf]
        %v2435 = vld [vmem:[%s1 + $0xb8] sm:$0xf]
        %v2436 = vld [vmem:[%s1 + $0xbc] sm:$0xf]
        %v2437 = vld [vmem:[%s1 + $0xc0] sm:$0xf]
        %v2438 = vld [vmem:[%s1 + $0xc4] sm:$0xf]
        %v2439 = vld [vmem:[%s1 + $0xc8] sm:$0xf]
        %v2440 = vld [vmem:[%s1 + $0xcc] sm:$0xf]
        %v2441 = vld [vmem:[%s1 + $0xd0] sm:$0xf]
        %v2442 = vld [vmem:[%s1 + $0xd4] sm:$0xf]
        %v2443 = vld [vmem:[%s1 + $0xd8] sm:$0xf]
        %v2444 = vld [vmem:[%s1 + $0xdc] sm:$0xf]
        %v2445 = vld [vmem:[%s1 + $0xe0] sm:$0xf]
        %v2446 = vld [vmem:[%s1 + $0xe4] sm:$0xf]
        %v2447 = vld [vmem:[%s1 + $0xe8] sm:$0xf]
        %v2448 = vld [vmem:[%s1 + $0xec] sm:$0xf]
        %v2449 = vld [vmem:[%s1 + $0xf0] sm:$0xf]
        %v2450 = vld [vmem:[%s1 + $0xf4] sm:$0xf]
        %v2451 = vld [vmem:[%s1 + $0xf8] sm:$0xf]
        %v2452 = vld [vmem:[%s1 + $0xfc] sm:$0xf]
        %v2453 = vld [vmem:[%s1 + $0x100] sm:$0xf]
        %v2454 = vld [vmem:[%s1 + $0x104] sm:$0xf]
        %v2455 = vld [vmem:[%s1 + $0x108] sm:$0xf]
        %v2456 = vld [vmem:[%s1 + $0x10c] sm:$0xf]
        %v2457 = vld [vmem:[%s1 + $0x110] sm:$0xf]
        %v2458 = vld [vmem:[%s1 + $0x114] sm:$0xf]
        %v2459 = vld [vmem:[%s1 + $0x118] sm:$0xf]
        %v2460 = vld [vmem:[%s1 + $0x11c] sm:$0xf]
        %v2461 = vld [vmem:[%s1 + $0x120] sm:$0xf]
        %v2462 = vld [vmem:[%s1 + $0x124] sm:$0xf]
        %v2463 = vld [vmem:[%s1 + $0x128] sm:$0xf]
        %v2464 = vld [vmem:[%s1 + $0x12c] sm:$0xf]
        %v2465 = vld [vmem:[%s1 + $0x130] sm:$0xf]
        %v2466 = vld [vmem:[%s1 + $0x134] sm:$0xf]
        %v2467 = vld [vmem:[%s1 + $0x138] sm:$0xf]
        %v2468 = vld [vmem:[%s1 + $0x13c] sm:$0xf]
        %v2469 = vld [vmem:[%s1 + $0x140] sm:$0xf]
        %v2470 = vld [vmem:[%s1 + $0x144] sm:$0xf]
        %v2471 = vld [vmem:[%s1 + $0x148] sm:$0xf]
        %v2472 = vld [vmem:[%s1 + $0x14c] sm:$0xf]
        %v2473 = vld [vmem:[%s1 + $0x150] sm:$0xf]
        %v2474 = vld [vmem:[%s1 + $0x154] sm:$0xf]
        %v2475 = vld [vmem:[%s1 + $0x158] sm:$0xf]
        %v2476 = vld [vmem:[%s1 + $0x15c] sm:$0xf]
        %v2477 = vld [vmem:[%s1 + $0x160] sm:$0xf]
        %v2478 = vld [vmem:[%s1 + $0x164] sm:$0xf]
        %v2479 = vld [vmem:[%s1 + $0x168] sm:$0xf]
        %v2480 = vld [vmem:[%s1 + $0x16c] sm:$0xf]
        %v2481 = vld [vmem:[%s1 + $0x170] sm:$0xf]
        %v2482 = vld [vmem:[%s1 + $0x174] sm:$0xf]
        %v2483 = vld [vmem:[%s1 + $0x178] sm:$0xf]
        %v2484 = vld [vmem:[%s1 + $0x17c] sm:$0xf]
        %v2485 = vld [vmem:[%s1 + $0x180] sm:$0xf]
        %v2486 = vld [vmem:[%s1 + $0x184] sm:$0xf]
        %v2487 = vld [vmem:[%s1 + $0x188] sm:$0xf]
        %v2488 = vld [vmem:[%s1 + $0x18c] sm:$0xf]
        %v2489 = vld [vmem:[%s1 + $0x190] sm:$0xf]
        %v2490 = vld [vmem:[%s1 + $0x194] sm:$0xf]
        %v2491 = vld [vmem:[%s1 + $0x198] sm:$0xf]
        %v2492 = vld [vmem:[%s1 + $0x19c] sm:$0xf]
        %v2493 = vld [vmem:[%s1 + $0x1a0] sm:$0xf]
        %v2494 = vld [vmem:[%s1 + $0x1a4] sm:$0xf]
        %v2495 = vld [vmem:[%s1 + $0x1a8] sm:$0xf]
        %v2496 = vld [vmem:[%s1 + $0x1ac] sm:$0xf]
        %v2497 = vld [vmem:[%s1 + $0x1b0] sm:$0xf]
        %v2498 = vld [vmem:[%s1 + $0x1b4] sm:$0xf]
        %v2499 = vld [vmem:[%s1 + $0x1b8] sm:$0xf]
        %v2500 = vld [vmem:[%s1 + $0x1bc] sm:$0xf]
        %v2501 = vld [vmem:[%s1 + $0x1c0] sm:$0xf]
        %v2502 = vld [vmem:[%s1 + $0x1c4] sm:$0xf]
        %v2503 = vld [vmem:[%s1 + $0x1c8] sm:$0xf]
        %v2504 = vld [vmem:[%s1 + $0x1cc] sm:$0xf]
        %v2505 = vld [vmem:[%s1 + $0x1d0] sm:$0xf]
        %v2506 = vld [vmem:[%s1 + $0x1d4] sm:$0xf]
        %v2507 = vld [vmem:[%s1 + $0x1d8] sm:$0xf]
        %v2508 = vld [vmem:[%s1 + $0x1dc] sm:$0xf]
        %v2509 = vld [vmem:[%s1 + $0x1e0] sm:$0xf]
        %v2510 = vld [vmem:[%s1 + $0x1e4] sm:$0xf]
        %v2511 = vld [vmem:[%s1 + $0x1e8] sm:$0xf]
        %v2512 = vld [vmem:[%s1 + $0x1ec] sm:$0xf]
        %v2513 = vld [vmem:[%s1 + $0x1f0] sm:$0xf]
        %v2514 = vld [vmem:[%s1 + $0x1f4] sm:$0xf]
        %v2515 = vld [vmem:[%s1 + $0x1f8] sm:$0xf]
        %v2516 = vld [vmem:[%s1 + $0x1fc] sm:$0xf]
        %v2517 = vld [vmem:[%s1 + $0x200] sm:$0xf]
        %v2518 = vld [vmem:[%s1 + $0x204] sm:$0xf]
        %v2519 = vld [vmem:[%s1 + $0x208] sm:$0xf]
        %v2520 = vld [vmem:[%s1 + $0x20c] sm:$0xf]
        %v2521 = vld [vmem:[%s1 + $0x210] sm:$0xf]
        %v2522 = vld [vmem:[%s1 + $0x214] sm:$0xf]
        %v2523 = vld [vmem:[%s1 + $0x218] sm:$0xf]
        %v2524 = vld [vmem:[%s1 + $0x21c] sm:$0xf]
        %v2525 = vld [vmem:[%s1 + $0x220] sm:$0xf]
        %v2526 = vld [vmem:[%s1 + $0x224] sm:$0xf]
        %v2527 = vld [vmem:[%s1 + $0x228] sm:$0xf]
        %v2528 = vld [vmem:[%s1 + $0x22c] sm:$0xf]
        %v2529 = vld [vmem:[%s1 + $0x230] sm:$0xf]
        %v2530 = vld [vmem:[%s1 + $0x234] sm:$0xf]
        %v2531 = vld [vmem:[%s1 + $0x238] sm:$0xf]
        %v2532 = vld [vmem:[%s1 + $0x23c] sm:$0xf]
        %v2533 = vld [vmem:[%s1 + $0x240] sm:$0xf]
        %v2534 = vld [vmem:[%s1 + $0x244] sm:$0xf]
        %v2535 = vld [vmem:[%s1 + $0x248] sm:$0xf]
        %v2536 = vld [vmem:[%s1 + $0x24c] sm:$0xf]
        %v2537 = vld [vmem:[%s1 + $0x250] sm:$0xf]
        %v2538 = vld [vmem:[%s1 + $0x254] sm:$0xf]
        %v2539 = vld [vmem:[%s1 + $0x258] sm:$0xf]
        %v2540 = vld [vmem:[%s1 + $0x25c] sm:$0xf]
        %v2541 = vld [vmem:[%s1 + $0x260] sm:$0xf]
        %v2542 = vld [vmem:[%s1 + $0x264] sm:$0xf]
        %v2543 = vld [vmem:[%s1 + $0x268] sm:$0xf]
        %v2544 = vld [vmem:[%s1 + $0x26c] sm:$0xf]
        %v2545 = vld [vmem:[%s1 + $0x270] sm:$0xf]
        %v2546 = vld [vmem:[%s1 + $0x274] sm:$0xf]
        %v2547 = vld [vmem:[%s1 + $0x278] sm:$0xf]
        %v2548 = vld [vmem:[%s1 + $0x27c] sm:$0xf]
        %v2549 = vld [vmem:[%s1 + $0x280] sm:$0xf]
        %v2550 = vld [vmem:[%s1 + $0x284] sm:$0xf]
        %v2551 = vld [vmem:[%s1 + $0x288] sm:$0xf]
        %v2552 = vld [vmem:[%s1 + $0x28c] sm:$0xf]
        %v2553 = vld [vmem:[%s1 + $0x290] sm:$0xf]
        %v2554 = vld [vmem:[%s1 + $0x294] sm:$0xf]
        %v2555 = vld [vmem:[%s1 + $0x298] sm:$0xf]
        %v2556 = vld [vmem:[%s1 + $0x29c] sm:$0xf]
        %v2557 = vld [vmem:[%s1 + $0x2a0] sm:$0xf]
        %v2558 = vld [vmem:[%s1 + $0x2a4] sm:$0xf]
        %v2559 = vld [vmem:[%s1 + $0x2a8] sm:$0xf]
        %v2560 = vld [vmem:[%s1 + $0x2ac] sm:$0xf]
        %v2561 = vld [vmem:[%s1 + $0x2b0] sm:$0xf]
        %v2562 = vld [vmem:[%s1 + $0x2b4] sm:$0xf]
        %v2563 = vld [vmem:[%s1 + $0x2b8] sm:$0xf]
        %v2564 = vld [vmem:[%s1 + $0x2bc] sm:$0xf]
        %v2565 = vld [vmem:[%s1 + $0x2c0] sm:$0xf]
        %v2566 = vld [vmem:[%s1 + $0x2c4] sm:$0xf]
        %v2567 = vld [vmem:[%s1 + $0x2c8] sm:$0xf]
        %v2568 = vld [vmem:[%s1 + $0x2cc] sm:$0xf]
        %v2569 = vld [vmem:[%s1 + $0x2d0] sm:$0xf]
        %v2570 = vld [vmem:[%s1 + $0x2d4] sm:$0xf]
        %v2571 = vld [vmem:[%s1 + $0x2d8] sm:$0xf]
        %v2572 = vld [vmem:[%s1 + $0x2dc] sm:$0xf]
        %v2573 = vld [vmem:[%s1 + $0x2e0] sm:$0xf]
        %v2574 = vld [vmem:[%s1 + $0x2e4] sm:$0xf]
        %v2575 = vld [vmem:[%s1 + $0x2e8] sm:$0xf]
        %v2576 = vld [vmem:[%s1 + $0x2ec] sm:$0xf]
        %v2577 = vld [vmem:[%s1 + $0x2f0] sm:$0xf]
        %v2578 = vld [vmem:[%s1 + $0x2f4] sm:$0xf]
        %v2579 = vld [vmem:[%s1 + $0x2f8] sm:$0xf]
        %v2580 = vld [vmem:[%s1 + $0x2fc] sm:$0xf]
        %v2581 = vld [vmem:[%s1 + $0x300] sm:$0xf]
        %v2582 = vld [vmem:[%s1 + $0x304] sm:$0xf]
        %v2583 = vld [vmem:[%s1 + $0x308] sm:$0xf]
        %v2584 = vld [vmem:[%s1 + $0x30c] sm:$0xf]
        %v2585 = vld [vmem:[%s1 + $0x310] sm:$0xf]
        %v2586 = vld [vmem:[%s1 + $0x314] sm:$0xf]
        %v2587 = vld [vmem:[%s1 + $0x318] sm:$0xf]
        %v2588 = vld [vmem:[%s1 + $0x31c] sm:$0xf]
        %v2589 = vld [vmem:[%s1 + $0x320] sm:$0xf]
        %v2590 = vld [vmem:[%s1 + $0x324] sm:$0xf]
        %v2591 = vld [vmem:[%s1 + $0x328] sm:$0xf]
        %v2592 = vld [vmem:[%s1 + $0x32c] sm:$0xf]
        %v2593 = vld [vmem:[%s1 + $0x330] sm:$0xf]
        %v2594 = vld [vmem:[%s1 + $0x334] sm:$0xf]
        %v2595 = vld [vmem:[%s1 + $0x338] sm:$0xf]
        %v2596 = vld [vmem:[%s1 + $0x33c] sm:$0xf]
        %v2597 = vld [vmem:[%s1 + $0x340] sm:$0xf]
        %v2598 = vld [vmem:[%s1 + $0x344] sm:$0xf]
        %v2599 = vld [vmem:[%s1 + $0x348] sm:$0xf]
        %v2600 = vld [vmem:[%s1 + $0x34c] sm:$0xf]
        %v2601 = vld [vmem:[%s1 + $0x350] sm:$0xf]
        %v2602 = vld [vmem:[%s1 + $0x354] sm:$0xf]
        %v2603 = vld [vmem:[%s1 + $0x358] sm:$0xf]
        %v2604 = vld [vmem:[%s1 + $0x35c] sm:$0xf]
        %v2605 = vld [vmem:[%s1 + $0x360] sm:$0xf]
        %v2606 = vld [vmem:[%s1 + $0x364] sm:$0xf]
        %v2607 = vld [vmem:[%s1 + $0x368] sm:$0xf]
        %v2608 = vld [vmem:[%s1 + $0x36c] sm:$0xf]
        %v2609 = vld [vmem:[%s1 + $0x370] sm:$0xf]
        %v2610 = vld [vmem:[%s1 + $0x374] sm:$0xf]
        %v2611 = vld [vmem:[%s1 + $0x378] sm:$0xf]
        %v2612 = vld [vmem:[%s1 + $0x37c] sm:$0xf]
        %v2613 = vld [vmem:[%s1 + $0x380] sm:$0xf]
        %v2614 = vld [vmem:[%s1 + $0x384] sm:$0xf]
        %v2615 = vld [vmem:[%s1 + $0x388] sm:$0xf]
        %v2616 = vld [vmem:[%s1 + $0x38c] sm:$0xf]
        %v2617 = vld [vmem:[%s1 + $0x390] sm:$0xf]
        %v2618 = vld [vmem:[%s1 + $0x394] sm:$0xf]
        %v2619 = vld [vmem:[%s1 + $0x398] sm:$0xf]
        %v2620 = vld [vmem:[%s1 + $0x39c] sm:$0xf]
        %v2621 = vld [vmem:[%s1 + $0x3a0] sm:$0xf]
        %v2622 = vld [vmem:[%s1 + $0x3a4] sm:$0xf]
        %v2623 = vld [vmem:[%s1 + $0x3a8] sm:$0xf]
        %v2624 = vld [vmem:[%s1 + $0x3ac] sm:$0xf]
        %v2625 = vld [vmem:[%s1 + $0x3b0] sm:$0xf]
        %v2626 = vld [vmem:[%s1 + $0x3b4] sm:$0xf]
        %v2627 = vld [vmem:[%s1 + $0x3b8] sm:$0xf]
        %v2628 = vld [vmem:[%s1 + $0x3bc] sm:$0xf]
        %v2629 = vld [vmem:[%s1 + $0x3c0] sm:$0xf]
        %v2630 = vld [vmem:[%s1 + $0x3c4] sm:$0xf]
        %v2631 = vld [vmem:[%s1 + $0x3c8] sm:$0xf]
        %v2632 = vld [vmem:[%s1 + $0x3cc] sm:$0xf]
        %v2633 = vld [vmem:[%s1 + $0x3d0] sm:$0xf]
        %v2634 = vld [vmem:[%s1 + $0x3d4] sm:$0xf]
        %v2635 = vld [vmem:[%s1 + $0x3d8] sm:$0xf]
        %v2636 = vld [vmem:[%s1 + $0x3dc] sm:$0xf]
        %v2637 = vld [vmem:[%s1 + $0x3e0] sm:$0xf]
        %v2638 = vld [vmem:[%s1 + $0x3e4] sm:$0xf]
        %v2639 = vld [vmem:[%s1 + $0x3e8] sm:$0xf]
        %v2640 = vld [vmem:[%s1 + $0x3ec] sm:$0xf]
        %v2641 = vld [vmem:[%s1 + $0x3f0] sm:$0xf]
        %v2642 = vld [vmem:[%s1 + $0x3f4] sm:$0xf]
        %v2643 = vld [vmem:[%s1 + $0x3f8] sm:$0xf]
        %v2644 = vld [vmem:[%s1 + $0x3fc] sm:$0xf]
        %v2645 = vld [vmem:[%s1 + $0x400] sm:$0xf]
        %v2646 = vld [vmem:[%s1 + $0x404] sm:$0xf]
        %v2647 = vld [vmem:[%s1 + $0x408] sm:$0xf]
        %v2648 = vld [vmem:[%s1 + $0x40c] sm:$0xf]
        %v2649 = vld [vmem:[%s1 + $0x410] sm:$0xf]
        %v2650 = vld [vmem:[%s1 + $0x414] sm:$0xf]
        %v2651 = vld [vmem:[%s1 + $0x418] sm:$0xf]
        %v2652 = vld [vmem:[%s1 + $0x41c] sm:$0xf]
        %v2653 = vld [vmem:[%s1 + $0x420] sm:$0xf]
        %v2654 = vld [vmem:[%s1 + $0x424] sm:$0xf]
        %v2655 = vld [vmem:[%s1 + $0x428] sm:$0xf]
        %v2656 = vld [vmem:[%s1 + $0x42c] sm:$0xf]
        %v2657 = vld [vmem:[%s1 + $0x430] sm:$0xf]
        %v2658 = vld [vmem:[%s1 + $0x434] sm:$0xf]
        %v2659 = vld [vmem:[%s1 + $0x438] sm:$0xf]
        %v2660 = vld [vmem:[%s1 + $0x43c] sm:$0xf]
        %v2661 = vld [vmem:[%s1 + $0x440] sm:$0xf]
        %v2662 = vld [vmem:[%s1 + $0x444] sm:$0xf]
        %v2663 = vld [vmem:[%s1 + $0x448] sm:$0xf]
        %v2664 = vld [vmem:[%s1 + $0x44c] sm:$0xf]
        %v2665 = vld [vmem:[%s1 + $0x450] sm:$0xf]
        %v2666 = vld [vmem:[%s1 + $0x454] sm:$0xf]
        %v2667 = vld [vmem:[%s1 + $0x458] sm:$0xf]
        %v2668 = vld [vmem:[%s1 + $0x45c] sm:$0xf]
        %v2669 = vld [vmem:[%s1 + $0x460] sm:$0xf]
        %v2670 = vld [vmem:[%s1 + $0x464] sm:$0xf]
        %v2671 = vld [vmem:[%s1 + $0x468] sm:$0xf]
        %v2672 = vld [vmem:[%s1 + $0x46c] sm:$0xf]
        %v2673 = vld [vmem:[%s1 + $0x470] sm:$0xf]
        %v2674 = vld [vmem:[%s1 + $0x474] sm:$0xf]
        %v2675 = vld [vmem:[%s1 + $0x478] sm:$0xf]
        %v2676 = vld [vmem:[%s1 + $0x47c] sm:$0xf]
        %v2677 = vld [vmem:[%s1 + $0x480] sm:$0xf]
        %v2678 = vld [vmem:[%s1 + $0x484] sm:$0xf]
        %v2679 = vld [vmem:[%s1 + $0x488] sm:$0xf]
        %v2680 = vld [vmem:[%s1 + $0x48c] sm:$0xf]
        %v2681 = vld [vmem:[%s1 + $0x490] sm:$0xf]
        %v2682 = vld [vmem:[%s1 + $0x494] sm:$0xf]
        %v2683 = vld [vmem:[%s1 + $0x498] sm:$0xf]
        %v2684 = vld [vmem:[%s1 + $0x49c] sm:$0xf]
        %v2685 = vld [vmem:[%s1 + $0x4a0] sm:$0xf]
        %v2686 = vld [vmem:[%s1 + $0x4a4] sm:$0xf]
        %v2687 = vld [vmem:[%s1 + $0x4a8] sm:$0xf]
        %v2688 = vld [vmem:[%s1 + $0x4ac] sm:$0xf]
        %v2689 = vld [vmem:[%s1 + $0x4b0] sm:$0xf]
        %v2690 = vld [vmem:[%s1 + $0x4b4] sm:$0xf]
        %v2691 = vld [vmem:[%s1 + $0x4b8] sm:$0xf]
        %v2692 = vld [vmem:[%s1 + $0x4bc] sm:$0xf]
        %v2693 = vld [vmem:[%s1 + $0x4c0] sm:$0xf]
        %v2694 = vld [vmem:[%s1 + $0x4c4] sm:$0xf]
        %v2695 = vld [vmem:[%s1 + $0x4c8] sm:$0xf]
        %v2696 = vld [vmem:[%s1 + $0x4cc] sm:$0xf]
        %v2697 = vld [vmem:[%s1 + $0x4d0] sm:$0xf]
        %v2698 = vld [vmem:[%s1 + $0x4d4] sm:$0xf]
        %v2699 = vld [vmem:[%s1 + $0x4d8] sm:$0xf]
        %v2700 = vld [vmem:[%s1 + $0x4dc] sm:$0xf]
        %v2701 = vld [vmem:[%s1 + $0x4e0] sm:$0xf]
        %v2702 = vld [vmem:[%s1 + $0x4e4] sm:$0xf]
        %v2703 = vld [vmem:[%s1 + $0x4e8] sm:$0xf]
        %v2704 = vld [vmem:[%s1 + $0x4ec] sm:$0xf]
        %v2705 = vld [vmem:[%s1 + $0x4f0] sm:$0xf]
        %v2706 = vld [vmem:[%s1 + $0x4f4] sm:$0xf]
        %v2707 = vld [vmem:[%s1 + $0x4f8] sm:$0xf]
        %v2708 = vld [vmem:[%s1 + $0x4fc] sm:$0xf]
        %v2709 = vld [vmem:[%s1 + $0x500] sm:$0xf]
        %v2710 = vld [vmem:[%s1 + $0x504] sm:$0xf]
        %v2711 = vld [vmem:[%s1 + $0x508] sm:$0xf]
        %v2712 = vld [vmem:[%s1 + $0x50c] sm:$0xf]
        %v2713 = vld [vmem:[%s1 + $0x510] sm:$0xf]
        %v2714 = vld [vmem:[%s1 + $0x514] sm:$0xf]
        %v2715 = vld [vmem:[%s1 + $0x518] sm:$0xf]
        %v2716 = vld [vmem:[%s1 + $0x51c] sm:$0xf]
        %v2717 = vld [vmem:[%s1 + $0x520] sm:$0xf]
        %v2718 = vld [vmem:[%s1 + $0x524] sm:$0xf]
        %v2719 = vld [vmem:[%s1 + $0x528] sm:$0xf]
        %v2720 = vld [vmem:[%s1 + $0x52c] sm:$0xf]
        %v2721 = vld [vmem:[%s1 + $0x530] sm:$0xf]
        %v2722 = vld [vmem:[%s1 + $0x534] sm:$0xf]
        %v2723 = vld [vmem:[%s1 + $0x538] sm:$0xf]
        %v2724 = vld [vmem:[%s1 + $0x53c] sm:$0xf]
        %v2725 = vld [vmem:[%s1 + $0x540] sm:$0xf]
        %v2726 = vld [vmem:[%s1 + $0x544] sm:$0xf]
        %v2727 = vld [vmem:[%s1 + $0x548] sm:$0xf]
        %v2728 = vld [vmem:[%s1 + $0x54c] sm:$0xf]
        %v2729 = vld [vmem:[%s1 + $0x550] sm:$0xf]
        %v2730 = vld [vmem:[%s1 + $0x554] sm:$0xf]
        %v2731 = vld [vmem:[%s1 + $0x558] sm:$0xf]
        %v2732 = vld [vmem:[%s1 + $0x55c] sm:$0xf]
        %v2733 = vld [vmem:[%s1 + $0x560] sm:$0xf]
        %v2734 = vld [vmem:[%s1 + $0x564] sm:$0xf]
        %v2735 = vld [vmem:[%s1 + $0x568] sm:$0xf]
        %v2736 = vld [vmem:[%s1 + $0x56c] sm:$0xf]
        %v2737 = vld [vmem:[%s1 + $0x570] sm:$0xf]
        %v2738 = vld [vmem:[%s1 + $0x574] sm:$0xf]
        %v2739 = vld [vmem:[%s1 + $0x578] sm:$0xf]
        %v2740 = vld [vmem:[%s1 + $0x57c] sm:$0xf]
        %v2741 = vld [vmem:[%s1 + $0x580] sm:$0xf]
        %v2742 = vld [vmem:[%s1 + $0x584] sm:$0xf]
        %v2743 = vld [vmem:[%s1 + $0x588] sm:$0xf]
        %v2744 = vld [vmem:[%s1 + $0x58c] sm:$0xf]
        %v2745 = vld [vmem:[%s1 + $0x590] sm:$0xf]
        %v2746 = vld [vmem:[%s1 + $0x594] sm:$0xf]
        %v2747 = vld [vmem:[%s1 + $0x598] sm:$0xf]
        %v2748 = vld [vmem:[%s1 + $0x59c] sm:$0xf]
        %v2749 = vld [vmem:[%s1 + $0x5a0] sm:$0xf]
        %v2750 = vld [vmem:[%s1 + $0x5a4] sm:$0xf]
        %v2751 = vld [vmem:[%s1 + $0x5a8] sm:$0xf]
        %v2752 = vld [vmem:[%s1 + $0x5ac] sm:$0xf]
        %v2753 = vld [vmem:[%s1 + $0x5b0] sm:$0xf]
        %v2754 = vld [vmem:[%s1 + $0x5b4] sm:$0xf]
        %v2755 = vld [vmem:[%s1 + $0x5b8] sm:$0xf]
        %v2756 = vld [vmem:[%s1 + $0x5bc] sm:$0xf]
        %v2757 = vld [vmem:[%s1 + $0x5c0] sm:$0xf]
        %v2758 = vld [vmem:[%s1 + $0x5c4] sm:$0xf]
        %v2759 = vld [vmem:[%s1 + $0x5c8] sm:$0xf]
        %v2760 = vld [vmem:[%s1 + $0x5cc] sm:$0xf]
        %v2761 = vld [vmem:[%s1 + $0x5d0] sm:$0xf]
        %v2762 = vld [vmem:[%s1 + $0x5d4] sm:$0xf]
        %v2763 = vld [vmem:[%s1 + $0x5d8] sm:$0xf]
        %v2764 = vld [vmem:[%s1 + $0x5dc] sm:$0xf]
        %v2765 = vld [vmem:[%s1 + $0x5e0] sm:$0xf]
        %v2766 = vld [vmem:[%s1 + $0x5e4] sm:$0xf]
        %v2767 = vld [vmem:[%s1 + $0x5e8] sm:$0xf]
        %v2768 = vld [vmem:[%s1 + $0x5ec] sm:$0xf]
        %v2769 = vld [vmem:[%s1 + $0x5f0] sm:$0xf]
        %v2770 = vld [vmem:[%s1 + $0x5f4] sm:$0xf]
        %v2771 = vld [vmem:[%s1 + $0x5f8] sm:$0xf]
        %v2772 = vld [vmem:[%s1 + $0x5fc] sm:$0xf]
        %v2773 = vld [vmem:[%s1 + $0x600] sm:$0xf]
        %v2774 = vld [vmem:[%s1 + $0x604] sm:$0xf]
        %v2775 = vld [vmem:[%s1 + $0x608] sm:$0xf]
        %v2776 = vld [vmem:[%s1 + $0x60c] sm:$0xf]
        %v2777 = vld [vmem:[%s1 + $0x610] sm:$0xf]
        %v2778 = vld [vmem:[%s1 + $0x614] sm:$0xf]
        %v2779 = vld [vmem:[%s1 + $0x618] sm:$0xf]
        %v2780 = vld [vmem:[%s1 + $0x61c] sm:$0xf]
        %v2781 = vld [vmem:[%s1 + $0x620] sm:$0xf]
        %v2782 = vld [vmem:[%s1 + $0x624] sm:$0xf]
        %v2783 = vld [vmem:[%s1 + $0x628] sm:$0xf]
        %v2784 = vld [vmem:[%s1 + $0x62c] sm:$0xf]
        %v2785 = vld [vmem:[%s1 + $0x630] sm:$0xf]
        %v2786 = vld [vmem:[%s1 + $0x634] sm:$0xf]
        %v2787 = vld [vmem:[%s1 + $0x638] sm:$0xf]
        %v2788 = vld [vmem:[%s1 + $0x63c] sm:$0xf]
        %v2789 = vld [vmem:[%s1 + $0x640] sm:$0xf]
        %v2790 = vld [vmem:[%s1 + $0x644] sm:$0xf]
        %v2791 = vld [vmem:[%s1 + $0x648] sm:$0xf]
        %v2792 = vld [vmem:[%s1 + $0x64c] sm:$0xf]
        %v2793 = vld [vmem:[%s1 + $0x650] sm:$0xf]
        %v2794 = vld [vmem:[%s1 + $0x654] sm:$0xf]
        %v2795 = vld [vmem:[%s1 + $0x658] sm:$0xf]
        %v2796 = vld [vmem:[%s1 + $0x65c] sm:$0xf]
        %v2797 = vld [vmem:[%s1 + $0x660] sm:$0xf]
        %v2798 = vld [vmem:[%s1 + $0x664] sm:$0xf]
        %v2799 = vld [vmem:[%s1 + $0x668] sm:$0xf]
        %v2800 = vld [vmem:[%s1 + $0x66c] sm:$0xf]
        %v2801 = vld [vmem:[%s1 + $0x670] sm:$0xf]
        %v2802 = vld [vmem:[%s1 + $0x674] sm:$0xf]
        %v2803 = vld [vmem:[%s1 + $0x678] sm:$0xf]
        %v2804 = vld [vmem:[%s1 + $0x67c] sm:$0xf]
        %v2805 = vld [vmem:[%s1 + $0x680] sm:$0xf]
        %v2806 = vld [vmem:[%s1 + $0x684] sm:$0xf]
        %v2807 = vld [vmem:[%s1 + $0x688] sm:$0xf]
        %v2808 = vld [vmem:[%s1 + $0x68c] sm:$0xf]
        %v2809 = vld [vmem:[%s1 + $0x690] sm:$0xf]
        %v2810 = vld [vmem:[%s1 + $0x694] sm:$0xf]
        %v2811 = vld [vmem:[%s1 + $0x698] sm:$0xf]
        %v2812 = vld [vmem:[%s1 + $0x69c] sm:$0xf]
        %v2813 = vld [vmem:[%s1 + $0x6a0] sm:$0xf]
        %v2814 = vld [vmem:[%s1 + $0x6a4] sm:$0xf]
        %v2815 = vld [vmem:[%s1 + $0x6a8] sm:$0xf]
        %v2816 = vld [vmem:[%s1 + $0x6ac] sm:$0xf]
        %v2817 = vld [vmem:[%s1 + $0x6b0] sm:$0xf]
        %v2818 = vld [vmem:[%s1 + $0x6b4] sm:$0xf]
        %v2819 = vld [vmem:[%s1 + $0x6b8] sm:$0xf]
        %v2820 = vld [vmem:[%s1 + $0x6bc] sm:$0xf]
        %v2821 = vld [vmem:[%s1 + $0x6c0] sm:$0xf]
        %v2822 = vld [vmem:[%s1 + $0x6c4] sm:$0xf]
        %v2823 = vld [vmem:[%s1 + $0x6c8] sm:$0xf]
        %v2824 = vld [vmem:[%s1 + $0x6cc] sm:$0xf]
        %v2825 = vld [vmem:[%s1 + $0x6d0] sm:$0xf]
        %v2826 = vld [vmem:[%s1 + $0x6d4] sm:$0xf]
        %v2827 = vld [vmem:[%s1 + $0x6d8] sm:$0xf]
        %v2828 = vld [vmem:[%s1 + $0x6dc] sm:$0xf]
        %v2829 = vld [vmem:[%s1 + $0x6e0] sm:$0xf]
        %v2830 = vld [vmem:[%s1 + $0x6e4] sm:$0xf]
        %v2831 = vld [vmem:[%s1 + $0x6e8] sm:$0xf]
        %v2832 = vld [vmem:[%s1 + $0x6ec] sm:$0xf]
        %v2833 = vld [vmem:[%s1 + $0x6f0] sm:$0xf]
        %v2834 = vld [vmem:[%s1 + $0x6f4] sm:$0xf]
        %v2835 = vld [vmem:[%s1 + $0x6f8] sm:$0xf]
        %v2836 = vld [vmem:[%s1 + $0x6fc] sm:$0xf]
        %v2837 = vld [vmem:[%s1 + $0x700] sm:$0xf]
        %v2838 = vld [vmem:[%s1 + $0x704] sm:$0xf]
        %v2839 = vld [vmem:[%s1 + $0x708] sm:$0xf]
        %v2840 = vld [vmem:[%s1 + $0x70c] sm:$0xf]
        %v2841 = vld [vmem:[%s1 + $0x710] sm:$0xf]
        %v2842 = vld [vmem:[%s1 + $0x714] sm:$0xf]
        %v2843 = vld [vmem:[%s1 + $0x718] sm:$0xf]
        %v2844 = vld [vmem:[%s1 + $0x71c] sm:$0xf]
        %v2845 = vld [vmem:[%s1 + $0x720] sm:$0xf]
        %v2846 = vld [vmem:[%s1 + $0x724] sm:$0xf]
        %v2847 = vld [vmem:[%s1 + $0x728] sm:$0xf]
        %v2848 = vld [vmem:[%s1 + $0x72c] sm:$0xf]
        %v2849 = vld [vmem:[%s1 + $0x730] sm:$0xf]
        %v2850 = vld [vmem:[%s1 + $0x734] sm:$0xf]
        %v2851 = vld [vmem:[%s1 + $0x738] sm:$0xf]
        %v2852 = vld [vmem:[%s1 + $0x73c] sm:$0xf]
        %v2853 = vld [vmem:[%s1 + $0x740] sm:$0xf]
        %v2854 = vld [vmem:[%s1 + $0x744] sm:$0xf]
        %v2855 = vld [vmem:[%s1 + $0x748] sm:$0xf]
        %v2856 = vld [vmem:[%s1 + $0x74c] sm:$0xf]
        %v2857 = vld [vmem:[%s1 + $0x750] sm:$0xf]
        %v2858 = vld [vmem:[%s1 + $0x754] sm:$0xf]
        %v2859 = vld [vmem:[%s1 + $0x758] sm:$0xf]
        %v2860 = vld [vmem:[%s1 + $0x75c] sm:$0xf]
        %v2861 = vld [vmem:[%s1 + $0x760] sm:$0xf]
        %v2862 = vld [vmem:[%s1 + $0x764] sm:$0xf]
        %v2863 = vld [vmem:[%s1 + $0x768] sm:$0xf]
        %v2864 = vld [vmem:[%s1 + $0x76c] sm:$0xf]
        %v2865 = vld [vmem:[%s1 + $0x770] sm:$0xf]
        %v2866 = vld [vmem:[%s1 + $0x774] sm:$0xf]
        %v2867 = vld [vmem:[%s1 + $0x778] sm:$0xf]
        %v2868 = vld [vmem:[%s1 + $0x77c] sm:$0xf]
        %v2869 = vld [vmem:[%s1 + $0x780] sm:$0xf]
        %v2870 = vld [vmem:[%s1 + $0x784] sm:$0xf]
        %v2871 = vld [vmem:[%s1 + $0x788] sm:$0xf]
        %v2872 = vld [vmem:[%s1 + $0x78c] sm:$0xf]
        %v2873 = vld [vmem:[%s1 + $0x790] sm:$0xf]
        %v2874 = vld [vmem:[%s1 + $0x794] sm:$0xf]
        %v2875 = vld [vmem:[%s1 + $0x798] sm:$0xf]
        %v2876 = vld [vmem:[%s1 + $0x79c] sm:$0xf]
        %v2877 = vld [vmem:[%s1 + $0x7a0] sm:$0xf]
        %v2878 = vld [vmem:[%s1 + $0x7a4] sm:$0xf]
        %v2879 = vld [vmem:[%s1 + $0x7a8] sm:$0xf]
        %v2880 = vld [vmem:[%s1 + $0x7ac] sm:$0xf]
        %v2881 = vld [vmem:[%s1 + $0x7b0] sm:$0xf]
        %v2882 = vld [vmem:[%s1 + $0x7b4] sm:$0xf]
        %v2883 = vld [vmem:[%s1 + $0x7b8] sm:$0xf]
        %v2884 = vld [vmem:[%s1 + $0x7bc] sm:$0xf]
        %v2885 = vld [vmem:[%s1 + $0x7c0] sm:$0xf]
        %v2886 = vld [vmem:[%s1 + $0x7c4] sm:$0xf]
        %v2887 = vld [vmem:[%s1 + $0x7c8] sm:$0xf]
        %v2888 = vld [vmem:[%s1 + $0x7cc] sm:$0xf]
        %v2889 = vld [vmem:[%s1 + $0x7d0] sm:$0xf]
        %v2890 = vld [vmem:[%s1 + $0x7d4] sm:$0xf]
        %v2891 = vld [vmem:[%s1 + $0x7d8] sm:$0xf]
        %v2892 = vld [vmem:[%s1 + $0x7dc] sm:$0xf]
        %v2893 = vld [vmem:[%s1 + $0x7e0] sm:$0xf]
        %v2894 = vld [vmem:[%s1 + $0x7e4] sm:$0xf]
        %v2895 = vld [vmem:[%s1 + $0x7e8] sm:$0xf]
        %v2896 = vld [vmem:[%s1 + $0x7ec] sm:$0xf]
        %v2897 = vld [vmem:[%s1 + $0x7f0] sm:$0xf]
        %v2898 = vld [vmem:[%s1 + $0x7f4] sm:$0xf]
        %v2899 = vld [vmem:[%s1 + $0x7f8] sm:$0xf]
        %v2900 = vld [vmem:[%s1 + $0x7fc] sm:$0xf]
        %v2901 = vld [vmem:[%s2] sm:$0x1]
        %v2903 = vlaneseq
        %v2904 = vshrl.u32 %v2903, 7
        %v2905 = vsub.s32 0, %v2904
        %v2906 = vrot.slane %v2901, %v2905
        %v3420 = vunpack.c.l.b16 %v2389
        %v3421 = vunpack.c.l.b16 %v2390
        %v3422 = vunpack.c.l.b16 %v2391
        %v3423 = vunpack.c.l.b16 %v2392
        %v3424 = vunpack.c.l.b16 %v2393
        %v3425 = vunpack.c.l.b16 %v2394
        %v3426 = vunpack.c.l.b16 %v2395
        %v3427 = vunpack.c.l.b16 %v2396
        %v3428 = vunpack.c.l.b16 %v2397
        %v3429 = vunpack.c.l.b16 %v2398
        %v3430 = vunpack.c.l.b16 %v2399
        %v3431 = vunpack.c.l.b16 %v2400
        %v3432 = vunpack.c.l.b16 %v2401
        %v3433 = vunpack.c.l.b16 %v2402
        %v3434 = vunpack.c.l.b16 %v2403
        %v3435 = vunpack.c.l.b16 %v2404
        %v3436 = vunpack.c.l.b16 %v2405
        %v3437 = vunpack.c.l.b16 %v2406
        %v3438 = vunpack.c.l.b16 %v2407
        %v3439 = vunpack.c.l.b16 %v2408
        %v3440 = vunpack.c.l.b16 %v2409
        %v3441 = vunpack.c.l.b16 %v2410
        %v3442 = vunpack.c.l.b16 %v2411
        %v3443 = vunpack.c.l.b16 %v2412
        %v3444 = vunpack.c.l.b16 %v2413
        %v3445 = vunpack.c.l.b16 %v2414
        %v3446 = vunpack.c.l.b16 %v2415
        %v3447 = vunpack.c.l.b16 %v2416
        %v3448 = vunpack.c.l.b16 %v2417
        %v3449 = vunpack.c.l.b16 %v2418
        %v3450 = vunpack.c.l.b16 %v2419
        %v3451 = vunpack.c.l.b16 %v2420
        %v3452 = vunpack.c.l.b16 %v2421
        %v3453 = vunpack.c.l.b16 %v2422
        %v3454 = vunpack.c.l.b16 %v2423
        %v3455 = vunpack.c.l.b16 %v2424
        %v3456 = vunpack.c.l.b16 %v2425
        %v3457 = vunpack.c.l.b16 %v2426
        %v3458 = vunpack.c.l.b16 %v2427
        %v3459 = vunpack.c.l.b16 %v2428
        %v3460 = vunpack.c.l.b16 %v2429
        %v3461 = vunpack.c.l.b16 %v2430
        %v3462 = vunpack.c.l.b16 %v2431
        %v3463 = vunpack.c.l.b16 %v2432
        %v3464 = vunpack.c.l.b16 %v2433
        %v3465 = vunpack.c.l.b16 %v2434
        %v3466 = vunpack.c.l.b16 %v2435
        %v3467 = vunpack.c.l.b16 %v2436
        %v3468 = vunpack.c.l.b16 %v2437
        %v3469 = vunpack.c.l.b16 %v2438
        %v3470 = vunpack.c.l.b16 %v2439
        %v3471 = vunpack.c.l.b16 %v2440
        %v3472 = vunpack.c.l.b16 %v2441
        %v3473 = vunpack.c.l.b16 %v2442
        %v3474 = vunpack.c.l.b16 %v2443
        %v3475 = vunpack.c.l.b16 %v2444
        %v3476 = vunpack.c.l.b16 %v2445
        %v3477 = vunpack.c.l.b16 %v2446
        %v3478 = vunpack.c.l.b16 %v2447
        %v3479 = vunpack.c.l.b16 %v2448
        %v3480 = vunpack.c.l.b16 %v2449
        %v3481 = vunpack.c.l.b16 %v2450
        %v3482 = vunpack.c.l.b16 %v2451
        %v3483 = vunpack.c.l.b16 %v2452
        %v3484 = vunpack.c.l.b16 %v2453
        %v3485 = vunpack.c.l.b16 %v2454
        %v3486 = vunpack.c.l.b16 %v2455
        %v3487 = vunpack.c.l.b16 %v2456
        %v3488 = vunpack.c.l.b16 %v2457
        %v3489 = vunpack.c.l.b16 %v2458
        %v3490 = vunpack.c.l.b16 %v2459
        %v3491 = vunpack.c.l.b16 %v2460
        %v3492 = vunpack.c.l.b16 %v2461
        %v3493 = vunpack.c.l.b16 %v2462
        %v3494 = vunpack.c.l.b16 %v2463
        %v3495 = vunpack.c.l.b16 %v2464
        %v3496 = vunpack.c.l.b16 %v2465
        %v3497 = vunpack.c.l.b16 %v2466
        %v3498 = vunpack.c.l.b16 %v2467
        %v3499 = vunpack.c.l.b16 %v2468
        %v3500 = vunpack.c.l.b16 %v2469
        %v3501 = vunpack.c.l.b16 %v2470
        %v3502 = vunpack.c.l.b16 %v2471
        %v3503 = vunpack.c.l.b16 %v2472
        %v3504 = vunpack.c.l.b16 %v2473
        %v3505 = vunpack.c.l.b16 %v2474
        %v3506 = vunpack.c.l.b16 %v2475
        %v3507 = vunpack.c.l.b16 %v2476
        %v3508 = vunpack.c.l.b16 %v2477
        %v3509 = vunpack.c.l.b16 %v2478
        %v3510 = vunpack.c.l.b16 %v2479
        %v3511 = vunpack.c.l.b16 %v2480
        %v3512 = vunpack.c.l.b16 %v2481
        %v3513 = vunpack.c.l.b16 %v2482
        %v3514 = vunpack.c.l.b16 %v2483
        %v3515 = vunpack.c.l.b16 %v2484
        %v3516 = vunpack.c.l.b16 %v2485
        %v3517 = vunpack.c.l.b16 %v2486
        %v3518 = vunpack.c.l.b16 %v2487
        %v3519 = vunpack.c.l.b16 %v2488
        %v3520 = vunpack.c.l.b16 %v2489
        %v3521 = vunpack.c.l.b16 %v2490
        %v3522 = vunpack.c.l.b16 %v2491
        %v3523 = vunpack.c.l.b16 %v2492
        %v3524 = vunpack.c.l.b16 %v2493
        %v3525 = vunpack.c.l.b16 %v2494
        %v3526 = vunpack.c.l.b16 %v2495
        %v3527 = vunpack.c.l.b16 %v2496
        %v3528 = vunpack.c.l.b16 %v2497
        %v3529 = vunpack.c.l.b16 %v2498
        %v3530 = vunpack.c.l.b16 %v2499
        %v3531 = vunpack.c.l.b16 %v2500
        %v3532 = vunpack.c.l.b16 %v2501
        %v3533 = vunpack.c.l.b16 %v2502
        %v3534 = vunpack.c.l.b16 %v2503
        %v3535 = vunpack.c.l.b16 %v2504
        %v3536 = vunpack.c.l.b16 %v2505
        %v3537 = vunpack.c.l.b16 %v2506
        %v3538 = vunpack.c.l.b16 %v2507
        %v3539 = vunpack.c.l.b16 %v2508
        %v3540 = vunpack.c.l.b16 %v2509
        %v3541 = vunpack.c.l.b16 %v2510
        %v3542 = vunpack.c.l.b16 %v2511
        %v3543 = vunpack.c.l.b16 %v2512
        %v3544 = vunpack.c.l.b16 %v2513
        %v3545 = vunpack.c.l.b16 %v2514
        %v3546 = vunpack.c.l.b16 %v2515
        %v3547 = vunpack.c.l.b16 %v2516
        %v3548 = vunpack.c.l.b16 %v2517
        %v3549 = vunpack.c.l.b16 %v2518
        %v3550 = vunpack.c.l.b16 %v2519
        %v3551 = vunpack.c.l.b16 %v2520
        %v3552 = vunpack.c.l.b16 %v2521
        %v3553 = vunpack.c.l.b16 %v2522
        %v3554 = vunpack.c.l.b16 %v2523
        %v3555 = vunpack.c.l.b16 %v2524
        %v3556 = vunpack.c.l.b16 %v2525
        %v3557 = vunpack.c.l.b16 %v2526
        %v3558 = vunpack.c.l.b16 %v2527
        %v3559 = vunpack.c.l.b16 %v2528
        %v3560 = vunpack.c.l.b16 %v2529
        %v3561 = vunpack.c.l.b16 %v2530
        %v3562 = vunpack.c.l.b16 %v2531
        %v3563 = vunpack.c.l.b16 %v2532
        %v3564 = vunpack.c.l.b16 %v2533
        %v3565 = vunpack.c.l.b16 %v2534
        %v3566 = vunpack.c.l.b16 %v2535
        %v3567 = vunpack.c.l.b16 %v2536
        %v3568 = vunpack.c.l.b16 %v2537
        %v3569 = vunpack.c.l.b16 %v2538
        %v3570 = vunpack.c.l.b16 %v2539
        %v3571 = vunpack.c.l.b16 %v2540
        %v3572 = vunpack.c.l.b16 %v2541
        %v3573 = vunpack.c.l.b16 %v2542
        %v3574 = vunpack.c.l.b16 %v2543
        %v3575 = vunpack.c.l.b16 %v2544
        %v3576 = vunpack.c.l.b16 %v2545
        %v3577 = vunpack.c.l.b16 %v2546
        %v3578 = vunpack.c.l.b16 %v2547
        %v3579 = vunpack.c.l.b16 %v2548
        %v3580 = vunpack.c.l.b16 %v2549
        %v3581 = vunpack.c.l.b16 %v2550
        %v3582 = vunpack.c.l.b16 %v2551
        %v3583 = vunpack.c.l.b16 %v2552
        %v3584 = vunpack.c.l.b16 %v2553
        %v3585 = vunpack.c.l.b16 %v2554
        %v3586 = vunpack.c.l.b16 %v2555
        %v3587 = vunpack.c.l.b16 %v2556
        %v3588 = vunpack.c.l.b16 %v2557
        %v3589 = vunpack.c.l.b16 %v2558
        %v3590 = vunpack.c.l.b16 %v2559
        %v3591 = vunpack.c.l.b16 %v2560
        %v3592 = vunpack.c.l.b16 %v2561
        %v3593 = vunpack.c.l.b16 %v2562
        %v3594 = vunpack.c.l.b16 %v2563
        %v3595 = vunpack.c.l.b16 %v2564
        %v3596 = vunpack.c.l.b16 %v2565
        %v3597 = vunpack.c.l.b16 %v2566
        %v3598 = vunpack.c.l.b16 %v2567
        %v3599 = vunpack.c.l.b16 %v2568
        %v3600 = vunpack.c.l.b16 %v2569
        %v3601 = vunpack.c.l.b16 %v2570
        %v3602 = vunpack.c.l.b16 %v2571
        %v3603 = vunpack.c.l.b16 %v2572
        %v3604 = vunpack.c.l.b16 %v2573
        %v3605 = vunpack.c.l.b16 %v2574
        %v3606 = vunpack.c.l.b16 %v2575
        %v3607 = vunpack.c.l.b16 %v2576
        %v3608 = vunpack.c.l.b16 %v2577
        %v3609 = vunpack.c.l.b16 %v2578
        %v3610 = vunpack.c.l.b16 %v2579
        %v3611 = vunpack.c.l.b16 %v2580
        %v3612 = vunpack.c.l.b16 %v2581
        %v3613 = vunpack.c.l.b16 %v2582
        %v3614 = vunpack.c.l.b16 %v2583
        %v3615 = vunpack.c.l.b16 %v2584
        %v3616 = vunpack.c.l.b16 %v2585
        %v3617 = vunpack.c.l.b16 %v2586
        %v3618 = vunpack.c.l.b16 %v2587
        %v3619 = vunpack.c.l.b16 %v2588
        %v3620 = vunpack.c.l.b16 %v2589
        %v3621 = vunpack.c.l.b16 %v2590
        %v3622 = vunpack.c.l.b16 %v2591
        %v3623 = vunpack.c.l.b16 %v2592
        %v3624 = vunpack.c.l.b16 %v2593
        %v3625 = vunpack.c.l.b16 %v2594
        %v3626 = vunpack.c.l.b16 %v2595
        %v3627 = vunpack.c.l.b16 %v2596
        %v3628 = vunpack.c.l.b16 %v2597
        %v3629 = vunpack.c.l.b16 %v2598
        %v3630 = vunpack.c.l.b16 %v2599
        %v3631 = vunpack.c.l.b16 %v2600
        %v3632 = vunpack.c.l.b16 %v2601
        %v3633 = vunpack.c.l.b16 %v2602
        %v3634 = vunpack.c.l.b16 %v2603
        %v3635 = vunpack.c.l.b16 %v2604
        %v3636 = vunpack.c.l.b16 %v2605
        %v3637 = vunpack.c.l.b16 %v2606
        %v3638 = vunpack.c.l.b16 %v2607
        %v3639 = vunpack.c.l.b16 %v2608
        %v3640 = vunpack.c.l.b16 %v2609
        %v3641 = vunpack.c.l.b16 %v2610
        %v3642 = vunpack.c.l.b16 %v2611
        %v3643 = vunpack.c.l.b16 %v2612
        %v3644 = vunpack.c.l.b16 %v2613
        %v3645 = vunpack.c.l.b16 %v2614
        %v3646 = vunpack.c.l.b16 %v2615
        %v3647 = vunpack.c.l.b16 %v2616
        %v3648 = vunpack.c.l.b16 %v2617
        %v3649 = vunpack.c.l.b16 %v2618
        %v3650 = vunpack.c.l.b16 %v2619
        %v3651 = vunpack.c.l.b16 %v2620
        %v3652 = vunpack.c.l.b16 %v2621
        %v3653 = vunpack.c.l.b16 %v2622
        %v3654 = vunpack.c.l.b16 %v2623
        %v3655 = vunpack.c.l.b16 %v2624
        %v3656 = vunpack.c.l.b16 %v2625
        %v3657 = vunpack.c.l.b16 %v2626
        %v3658 = vunpack.c.l.b16 %v2627
        %v3659 = vunpack.c.l.b16 %v2628
        %v3660 = vunpack.c.l.b16 %v2629
        %v3661 = vunpack.c.l.b16 %v2630
        %v3662 = vunpack.c.l.b16 %v2631
        %v3663 = vunpack.c.l.b16 %v2632
        %v3664 = vunpack.c.l.b16 %v2633
        %v3665 = vunpack.c.l.b16 %v2634
        %v3666 = vunpack.c.l.b16 %v2635
        %v3667 = vunpack.c.l.b16 %v2636
        %v3668 = vunpack.c.l.b16 %v2637
        %v3669 = vunpack.c.l.b16 %v2638
        %v3670 = vunpack.c.l.b16 %v2639
        %v3671 = vunpack.c.l.b16 %v2640
        %v3672 = vunpack.c.l.b16 %v2641
        %v3673 = vunpack.c.l.b16 %v2642
        %v3674 = vunpack.c.l.b16 %v2643
        %v3675 = vunpack.c.l.b16 %v2644
        %v3676 = vunpack.c.l.b16 %v2645
        %v3677 = vunpack.c.l.b16 %v2646
        %v3678 = vunpack.c.l.b16 %v2647
        %v3679 = vunpack.c.l.b16 %v2648
        %v3680 = vunpack.c.l.b16 %v2649
        %v3681 = vunpack.c.l.b16 %v2650
        %v3682 = vunpack.c.l.b16 %v2651
        %v3683 = vunpack.c.l.b16 %v2652
        %v3684 = vunpack.c.l.b16 %v2653
        %v3685 = vunpack.c.l.b16 %v2654
        %v3686 = vunpack.c.l.b16 %v2655
        %v3687 = vunpack.c.l.b16 %v2656
        %v3688 = vunpack.c.l.b16 %v2657
        %v3689 = vunpack.c.l.b16 %v2658
        %v3690 = vunpack.c.l.b16 %v2659
        %v3691 = vunpack.c.l.b16 %v2660
        %v3692 = vunpack.c.l.b16 %v2661
        %v3693 = vunpack.c.l.b16 %v2662
        %v3694 = vunpack.c.l.b16 %v2663
        %v3695 = vunpack.c.l.b16 %v2664
        %v3696 = vunpack.c.l.b16 %v2665
        %v3697 = vunpack.c.l.b16 %v2666
        %v3698 = vunpack.c.l.b16 %v2667
        %v3699 = vunpack.c.l.b16 %v2668
        %v3700 = vunpack.c.l.b16 %v2669
        %v3701 = vunpack.c.l.b16 %v2670
        %v3702 = vunpack.c.l.b16 %v2671
        %v3703 = vunpack.c.l.b16 %v2672
        %v3704 = vunpack.c.l.b16 %v2673
        %v3705 = vunpack.c.l.b16 %v2674
        %v3706 = vunpack.c.l.b16 %v2675
        %v3707 = vunpack.c.l.b16 %v2676
        %v3708 = vunpack.c.l.b16 %v2677
        %v3709 = vunpack.c.l.b16 %v2678
        %v3710 = vunpack.c.l.b16 %v2679
        %v3711 = vunpack.c.l.b16 %v2680
        %v3712 = vunpack.c.l.b16 %v2681
        %v3713 = vunpack.c.l.b16 %v2682
        %v3714 = vunpack.c.l.b16 %v2683
        %v3715 = vunpack.c.l.b16 %v2684
        %v3716 = vunpack.c.l.b16 %v2685
        %v3717 = vunpack.c.l.b16 %v2686
        %v3718 = vunpack.c.l.b16 %v2687
        %v3719 = vunpack.c.l.b16 %v2688
        %v3720 = vunpack.c.l.b16 %v2689
        %v3721 = vunpack.c.l.b16 %v2690
        %v3722 = vunpack.c.l.b16 %v2691
        %v3723 = vunpack.c.l.b16 %v2692
        %v3724 = vunpack.c.l.b16 %v2693
        %v3725 = vunpack.c.l.b16 %v2694
        %v3726 = vunpack.c.l.b16 %v2695
        %v3727 = vunpack.c.l.b16 %v2696
        %v3728 = vunpack.c.l.b16 %v2697
        %v3729 = vunpack.c.l.b16 %v2698
        %v3730 = vunpack.c.l.b16 %v2699
        %v3731 = vunpack.c.l.b16 %v2700
        %v3732 = vunpack.c.l.b16 %v2701
        %v3733 = vunpack.c.l.b16 %v2702
        %v3734 = vunpack.c.l.b16 %v2703
        %v3735 = vunpack.c.l.b16 %v2704
        %v3736 = vunpack.c.l.b16 %v2705
        %v3737 = vunpack.c.l.b16 %v2706
        %v3738 = vunpack.c.l.b16 %v2707
        %v3739 = vunpack.c.l.b16 %v2708
        %v3740 = vunpack.c.l.b16 %v2709
        %v3741 = vunpack.c.l.b16 %v2710
        %v3742 = vunpack.c.l.b16 %v2711
        %v3743 = vunpack.c.l.b16 %v2712
        %v3744 = vunpack.c.l.b16 %v2713
        %v3745 = vunpack.c.l.b16 %v2714
        %v3746 = vunpack.c.l.b16 %v2715
        %v3747 = vunpack.c.l.b16 %v2716
        %v3748 = vunpack.c.l.b16 %v2717
        %v3749 = vunpack.c.l.b16 %v2718
        %v3750 = vunpack.c.l.b16 %v2719
        %v3751 = vunpack.c.l.b16 %v2720
        %v3752 = vunpack.c.l.b16 %v2721
        %v3753 = vunpack.c.l.b16 %v2722
        %v3754 = vunpack.c.l.b16 %v2723
        %v3755 = vunpack.c.l.b16 %v2724
        %v3756 = vunpack.c.l.b16 %v2725
        %v3757 = vunpack.c.l.b16 %v2726
        %v3758 = vunpack.c.l.b16 %v2727
        %v3759 = vunpack.c.l.b16 %v2728
        %v3760 = vunpack.c.l.b16 %v2729
        %v3761 = vunpack.c.l.b16 %v2730
        %v3762 = vunpack.c.l.b16 %v2731
        %v3763 = vunpack.c.l.b16 %v2732
        %v3764 = vunpack.c.l.b16 %v2733
        %v3765 = vunpack.c.l.b16 %v2734
        %v3766 = vunpack.c.l.b16 %v2735
        %v3767 = vunpack.c.l.b16 %v2736
        %v3768 = vunpack.c.l.b16 %v2737
        %v3769 = vunpack.c.l.b16 %v2738
        %v3770 = vunpack.c.l.b16 %v2739
        %v3771 = vunpack.c.l.b16 %v2740
        %v3772 = vunpack.c.l.b16 %v2741
        %v3773 = vunpack.c.l.b16 %v2742
        %v3774 = vunpack.c.l.b16 %v2743
        %v3775 = vunpack.c.l.b16 %v2744
        %v3776 = vunpack.c.l.b16 %v2745
        %v3777 = vunpack.c.l.b16 %v2746
        %v3778 = vunpack.c.l.b16 %v2747
        %v3779 = vunpack.c.l.b16 %v2748
        %v3780 = vunpack.c.l.b16 %v2749
        %v3781 = vunpack.c.l.b16 %v2750
        %v3782 = vunpack.c.l.b16 %v2751
        %v3783 = vunpack.c.l.b16 %v2752
        %v3784 = vunpack.c.l.b16 %v2753
        %v3785 = vunpack.c.l.b16 %v2754
        %v3786 = vunpack.c.l.b16 %v2755
        %v3787 = vunpack.c.l.b16 %v2756
        %v3788 = vunpack.c.l.b16 %v2757
        %v3789 = vunpack.c.l.b16 %v2758
        %v3790 = vunpack.c.l.b16 %v2759
        %v3791 = vunpack.c.l.b16 %v2760
        %v3792 = vunpack.c.l.b16 %v2761
        %v3793 = vunpack.c.l.b16 %v2762
        %v3794 = vunpack.c.l.b16 %v2763
        %v3795 = vunpack.c.l.b16 %v2764
        %v3796 = vunpack.c.l.b16 %v2765
        %v3797 = vunpack.c.l.b16 %v2766
        %v3798 = vunpack.c.l.b16 %v2767
        %v3799 = vunpack.c.l.b16 %v2768
        %v3800 = vunpack.c.l.b16 %v2769
        %v3801 = vunpack.c.l.b16 %v2770
        %v3802 = vunpack.c.l.b16 %v2771
        %v3803 = vunpack.c.l.b16 %v2772
        %v3804 = vunpack.c.l.b16 %v2773
        %v3805 = vunpack.c.l.b16 %v2774
        %v3806 = vunpack.c.l.b16 %v2775
        %v3807 = vunpack.c.l.b16 %v2776
        %v3808 = vunpack.c.l.b16 %v2777
        %v3809 = vunpack.c.l.b16 %v2778
        %v3810 = vunpack.c.l.b16 %v2779
        %v3811 = vunpack.c.l.b16 %v2780
        %v3812 = vunpack.c.l.b16 %v2781
        %v3813 = vunpack.c.l.b16 %v2782
        %v3814 = vunpack.c.l.b16 %v2783
        %v3815 = vunpack.c.l.b16 %v2784
        %v3816 = vunpack.c.l.b16 %v2785
        %v3817 = vunpack.c.l.b16 %v2786
        %v3818 = vunpack.c.l.b16 %v2787
        %v3819 = vunpack.c.l.b16 %v2788
        %v3820 = vunpack.c.l.b16 %v2789
        %v3821 = vunpack.c.l.b16 %v2790
        %v3822 = vunpack.c.l.b16 %v2791
        %v3823 = vunpack.c.l.b16 %v2792
        %v3824 = vunpack.c.l.b16 %v2793
        %v3825 = vunpack.c.l.b16 %v2794
        %v3826 = vunpack.c.l.b16 %v2795
        %v3827 = vunpack.c.l.b16 %v2796
        %v3828 = vunpack.c.l.b16 %v2797
        %v3829 = vunpack.c.l.b16 %v2798
        %v3830 = vunpack.c.l.b16 %v2799
        %v3831 = vunpack.c.l.b16 %v2800
        %v3832 = vunpack.c.l.b16 %v2801
        %v3833 = vunpack.c.l.b16 %v2802
        %v3834 = vunpack.c.l.b16 %v2803
        %v3835 = vunpack.c.l.b16 %v2804
        %v3836 = vunpack.c.l.b16 %v2805
        %v3837 = vunpack.c.l.b16 %v2806
        %v3838 = vunpack.c.l.b16 %v2807
        %v3839 = vunpack.c.l.b16 %v2808
        %v3840 = vunpack.c.l.b16 %v2809
        %v3841 = vunpack.c.l.b16 %v2810
        %v3842 = vunpack.c.l.b16 %v2811
        %v3843 = vunpack.c.l.b16 %v2812
        %v3844 = vunpack.c.l.b16 %v2813
        %v3845 = vunpack.c.l.b16 %v2814
        %v3846 = vunpack.c.l.b16 %v2815
        %v3847 = vunpack.c.l.b16 %v2816
        %v3848 = vunpack.c.l.b16 %v2817
        %v3849 = vunpack.c.l.b16 %v2818
        %v3850 = vunpack.c.l.b16 %v2819
        %v3851 = vunpack.c.l.b16 %v2820
        %v3852 = vunpack.c.l.b16 %v2821
        %v3853 = vunpack.c.l.b16 %v2822
        %v3854 = vunpack.c.l.b16 %v2823
        %v3855 = vunpack.c.l.b16 %v2824
        %v3856 = vunpack.c.l.b16 %v2825
        %v3857 = vunpack.c.l.b16 %v2826
        %v3858 = vunpack.c.l.b16 %v2827
        %v3859 = vunpack.c.l.b16 %v2828
        %v3860 = vunpack.c.l.b16 %v2829
        %v3861 = vunpack.c.l.b16 %v2830
        %v3862 = vunpack.c.l.b16 %v2831
        %v3863 = vunpack.c.l.b16 %v2832
        %v3864 = vunpack.c.l.b16 %v2833
        %v3865 = vunpack.c.l.b16 %v2834
        %v3866 = vunpack.c.l.b16 %v2835
        %v3867 = vunpack.c.l.b16 %v2836
        %v3868 = vunpack.c.l.b16 %v2837
        %v3869 = vunpack.c.l.b16 %v2838
        %v3870 = vunpack.c.l.b16 %v2839
        %v3871 = vunpack.c.l.b16 %v2840
        %v3872 = vunpack.c.l.b16 %v2841
        %v3873 = vunpack.c.l.b16 %v2842
        %v3874 = vunpack.c.l.b16 %v2843
        %v3875 = vunpack.c.l.b16 %v2844
        %v3876 = vunpack.c.l.b16 %v2845
        %v3877 = vunpack.c.l.b16 %v2846
        %v3878 = vunpack.c.l.b16 %v2847
        %v3879 = vunpack.c.l.b16 %v2848
        %v3880 = vunpack.c.l.b16 %v2849
        %v3881 = vunpack.c.l.b16 %v2850
        %v3882 = vunpack.c.l.b16 %v2851
        %v3883 = vunpack.c.l.b16 %v2852
        %v3884 = vunpack.c.l.b16 %v2853
        %v3885 = vunpack.c.l.b16 %v2854
        %v3886 = vunpack.c.l.b16 %v2855
        %v3887 = vunpack.c.l.b16 %v2856
        %v3888 = vunpack.c.l.b16 %v2857
        %v3889 = vunpack.c.l.b16 %v2858
        %v3890 = vunpack.c.l.b16 %v2859
        %v3891 = vunpack.c.l.b16 %v2860
        %v3892 = vunpack.c.l.b16 %v2861
        %v3893 = vunpack.c.l.b16 %v2862
        %v3894 = vunpack.c.l.b16 %v2863
        %v3895 = vunpack.c.l.b16 %v2864
        %v3896 = vunpack.c.l.b16 %v2865
        %v3897 = vunpack.c.l.b16 %v2866
        %v3898 = vunpack.c.l.b16 %v2867
        %v3899 = vunpack.c.l.b16 %v2868
        %v3900 = vunpack.c.l.b16 %v2869
        %v3901 = vunpack.c.l.b16 %v2870
        %v3902 = vunpack.c.l.b16 %v2871
        %v3903 = vunpack.c.l.b16 %v2872
        %v3904 = vunpack.c.l.b16 %v2873
        %v3905 = vunpack.c.l.b16 %v2874
        %v3906 = vunpack.c.l.b16 %v2875
        %v3907 = vunpack.c.l.b16 %v2876
        %v3908 = vunpack.c.l.b16 %v2877
        %v3909 = vunpack.c.l.b16 %v2878
        %v3910 = vunpack.c.l.b16 %v2879
        %v3911 = vunpack.c.l.b16 %v2880
        %v3912 = vunpack.c.l.b16 %v2881
        %v3913 = vunpack.c.l.b16 %v2882
        %v3914 = vunpack.c.l.b16 %v2883
        %v3915 = vunpack.c.l.b16 %v2884
        %v3916 = vunpack.c.l.b16 %v2885
        %v3917 = vunpack.c.l.b16 %v2886
        %v3918 = vunpack.c.l.b16 %v2887
        %v3919 = vunpack.c.l.b16 %v2888
        %v3920 = vunpack.c.l.b16 %v2889
        %v3921 = vunpack.c.l.b16 %v2890
        %v3922 = vunpack.c.l.b16 %v2891
        %v3923 = vunpack.c.l.b16 %v2892
        %v3924 = vunpack.c.l.b16 %v2893
        %v3925 = vunpack.c.l.b16 %v2894
        %v3926 = vunpack.c.l.b16 %v2895
        %v3927 = vunpack.c.l.b16 %v2896
        %v3928 = vunpack.c.l.b16 %v2897
        %v3929 = vunpack.c.l.b16 %v2898
        %v3930 = vunpack.c.l.b16 %v2899
        %v3931 = vunpack.c.l.b16 %v2900
        %v3932 = vpack.c.b16 %v3421, %v3420
        %v3933 = vpack.c.b16 %v3423, %v3422
        %v3934 = vpack.c.b16 %v3425, %v3424
        %v3935 = vpack.c.b16 %v3427, %v3426
        %v3936 = vpack.c.b16 %v3429, %v3428
        %v3937 = vpack.c.b16 %v3431, %v3430
        %v3938 = vpack.c.b16 %v3433, %v3432
        %v3939 = vpack.c.b16 %v3435, %v3434
        %v3940 = vpack.c.b16 %v3437, %v3436
        %v3941 = vpack.c.b16 %v3439, %v3438
        %v3942 = vpack.c.b16 %v3441, %v3440
        %v3943 = vpack.c.b16 %v3443, %v3442
        %v3944 = vpack.c.b16 %v3445, %v3444
        %v3945 = vpack.c.b16 %v3447, %v3446
        %v3946 = vpack.c.b16 %v3449, %v3448
        %v3947 = vpack.c.b16 %v3451, %v3450
        %v3948 = vpack.c.b16 %v3453, %v3452
        %v3949 = vpack.c.b16 %v3455, %v3454
        %v3950 = vpack.c.b16 %v3457, %v3456
        %v3951 = vpack.c.b16 %v3459, %v3458
        %v3952 = vpack.c.b16 %v3461, %v3460
        %v3953 = vpack.c.b16 %v3463, %v3462
        %v3954 = vpack.c.b16 %v3465, %v3464
        %v3955 = vpack.c.b16 %v3467, %v3466
        %v3956 = vpack.c.b16 %v3469, %v3468
        %v3957 = vpack.c.b16 %v3471, %v3470
        %v3958 = vpack.c.b16 %v3473, %v3472
        %v3959 = vpack.c.b16 %v3475, %v3474
        %v3960 = vpack.c.b16 %v3477, %v3476
        %v3961 = vpack.c.b16 %v3479, %v3478
        %v3962 = vpack.c.b16 %v3481, %v3480
        %v3963 = vpack.c.b16 %v3483, %v3482
        %v3964 = vpack.c.b16 %v3485, %v3484
        %v3965 = vpack.c.b16 %v3487, %v3486
        %v3966 = vpack.c.b16 %v3489, %v3488
        %v3967 = vpack.c.b16 %v3491, %v3490
        %v3968 = vpack.c.b16 %v3493, %v3492
        %v3969 = vpack.c.b16 %v3495, %v3494
        %v3970 = vpack.c.b16 %v3497, %v3496
        %v3971 = vpack.c.b16 %v3499, %v3498
        %v3972 = vpack.c.b16 %v3501, %v3500
        %v3973 = vpack.c.b16 %v3503, %v3502
        %v3974 = vpack.c.b16 %v3505, %v3504
        %v3975 = vpack.c.b16 %v3507, %v3506
        %v3976 = vpack.c.b16 %v3509, %v3508
        %v3977 = vpack.c.b16 %v3511, %v3510
        %v3978 = vpack.c.b16 %v3513, %v3512
        %v3979 = vpack.c.b16 %v3515, %v3514
        %v3980 = vpack.c.b16 %v3517, %v3516
        %v3981 = vpack.c.b16 %v3519, %v3518
        %v3982 = vpack.c.b16 %v3521, %v3520
        %v3983 = vpack.c.b16 %v3523, %v3522
        %v3984 = vpack.c.b16 %v3525, %v3524
        %v3985 = vpack.c.b16 %v3527, %v3526
        %v3986 = vpack.c.b16 %v3529, %v3528
        %v3987 = vpack.c.b16 %v3531, %v3530
        %v3988 = vpack.c.b16 %v3533, %v3532
        %v3989 = vpack.c.b16 %v3535, %v3534
        %v3990 = vpack.c.b16 %v3537, %v3536
        %v3991 = vpack.c.b16 %v3539, %v3538
        %v3992 = vpack.c.b16 %v3541, %v3540
        %v3993 = vpack.c.b16 %v3543, %v3542
        %v3994 = vpack.c.b16 %v3545, %v3544
        %v3995 = vpack.c.b16 %v3547, %v3546
        %v3996 = vpack.c.b16 %v3549, %v3548
        %v3997 = vpack.c.b16 %v3551, %v3550
        %v3998 = vpack.c.b16 %v3553, %v3552
        %v3999 = vpack.c.b16 %v3555, %v3554
        %v4000 = vpack.c.b16 %v3557, %v3556
        %v4001 = vpack.c.b16 %v3559, %v3558
        %v4002 = vpack.c.b16 %v3561, %v3560
        %v4003 = vpack.c.b16 %v3563, %v3562
        %v4004 = vpack.c.b16 %v3565, %v3564
        %v4005 = vpack.c.b16 %v3567, %v3566
        %v4006 = vpack.c.b16 %v3569, %v3568
        %v4007 = vpack.c.b16 %v3571, %v3570
        %v4008 = vpack.c.b16 %v3573, %v3572
        %v4009 = vpack.c.b16 %v3575, %v3574
        %v4010 = vpack.c.b16 %v3577, %v3576
        %v4011 = vpack.c.b16 %v3579, %v3578
        %v4012 = vpack.c.b16 %v3581, %v3580
        %v4013 = vpack.c.b16 %v3583, %v3582
        %v4014 = vpack.c.b16 %v3585, %v3584
        %v4015 = vpack.c.b16 %v3587, %v3586
        %v4016 = vpack.c.b16 %v3589, %v3588
        %v4017 = vpack.c.b16 %v3591, %v3590
        %v4018 = vpack.c.b16 %v3593, %v3592
        %v4019 = vpack.c.b16 %v3595, %v3594
        %v4020 = vpack.c.b16 %v3597, %v3596
        %v4021 = vpack.c.b16 %v3599, %v3598
        %v4022 = vpack.c.b16 %v3601, %v3600
        %v4023 = vpack.c.b16 %v3603, %v3602
        %v4024 = vpack.c.b16 %v3605, %v3604
        %v4025 = vpack.c.b16 %v3607, %v3606
        %v4026 = vpack.c.b16 %v3609, %v3608
        %v4027 = vpack.c.b16 %v3611, %v3610
        %v4028 = vpack.c.b16 %v3613, %v3612
        %v4029 = vpack.c.b16 %v3615, %v3614
        %v4030 = vpack.c.b16 %v3617, %v3616
        %v4031 = vpack.c.b16 %v3619, %v3618
        %v4032 = vpack.c.b16 %v3621, %v3620
        %v4033 = vpack.c.b16 %v3623, %v3622
        %v4034 = vpack.c.b16 %v3625, %v3624
        %v4035 = vpack.c.b16 %v3627, %v3626
        %v4036 = vpack.c.b16 %v3629, %v3628
        %v4037 = vpack.c.b16 %v3631, %v3630
        %v4038 = vpack.c.b16 %v3633, %v3632
        %v4039 = vpack.c.b16 %v3635, %v3634
        %v4040 = vpack.c.b16 %v3637, %v3636
        %v4041 = vpack.c.b16 %v3639, %v3638
        %v4042 = vpack.c.b16 %v3641, %v3640
        %v4043 = vpack.c.b16 %v3643, %v3642
        %v4044 = vpack.c.b16 %v3645, %v3644
        %v4045 = vpack.c.b16 %v3647, %v3646
        %v4046 = vpack.c.b16 %v3649, %v3648
        %v4047 = vpack.c.b16 %v3651, %v3650
        %v4048 = vpack.c.b16 %v3653, %v3652
        %v4049 = vpack.c.b16 %v3655, %v3654
        %v4050 = vpack.c.b16 %v3657, %v3656
        %v4051 = vpack.c.b16 %v3659, %v3658
        %v4052 = vpack.c.b16 %v3661, %v3660
        %v4053 = vpack.c.b16 %v3663, %v3662
        %v4054 = vpack.c.b16 %v3665, %v3664
        %v4055 = vpack.c.b16 %v3667, %v3666
        %v4056 = vpack.c.b16 %v3669, %v3668
        %v4057 = vpack.c.b16 %v3671, %v3670
        %v4058 = vpack.c.b16 %v3673, %v3672
        %v4059 = vpack.c.b16 %v3675, %v3674
        %v4060 = vpack.c.b16 %v3677, %v3676
        %v4061 = vpack.c.b16 %v3679, %v3678
        %v4062 = vpack.c.b16 %v3681, %v3680
        %v4063 = vpack.c.b16 %v3683, %v3682
        %v4064 = vpack.c.b16 %v3685, %v3684
        %v4065 = vpack.c.b16 %v3687, %v3686
        %v4066 = vpack.c.b16 %v3689, %v3688
        %v4067 = vpack.c.b16 %v3691, %v3690
        %v4068 = vpack.c.b16 %v3693, %v3692
        %v4069 = vpack.c.b16 %v3695, %v3694
        %v4070 = vpack.c.b16 %v3697, %v3696
        %v4071 = vpack.c.b16 %v3699, %v3698
        %v4072 = vpack.c.b16 %v3701, %v3700
        %v4073 = vpack.c.b16 %v3703, %v3702
        %v4074 = vpack.c.b16 %v3705, %v3704
        %v4075 = vpack.c.b16 %v3707, %v3706
        %v4076 = vpack.c.b16 %v3709, %v3708
        %v4077 = vpack.c.b16 %v3711, %v3710
        %v4078 = vpack.c.b16 %v3713, %v3712
        %v4079 = vpack.c.b16 %v3715, %v3714
        %v4080 = vpack.c.b16 %v3717, %v3716
        %v4081 = vpack.c.b16 %v3719, %v3718
        %v4082 = vpack.c.b16 %v3721, %v3720
        %v4083 = vpack.c.b16 %v3723, %v3722
        %v4084 = vpack.c.b16 %v3725, %v3724
        %v4085 = vpack.c.b16 %v3727, %v3726
        %v4086 = vpack.c.b16 %v3729, %v3728
        %v4087 = vpack.c.b16 %v3731, %v3730
        %v4088 = vpack.c.b16 %v3733, %v3732
        %v4089 = vpack.c.b16 %v3735, %v3734
        %v4090 = vpack.c.b16 %v3737, %v3736
        %v4091 = vpack.c.b16 %v3739, %v3738
        %v4092 = vpack.c.b16 %v3741, %v3740
        %v4093 = vpack.c.b16 %v3743, %v3742
        %v4094 = vpack.c.b16 %v3745, %v3744
        %v4095 = vpack.c.b16 %v3747, %v3746
        %v4096 = vpack.c.b16 %v3749, %v3748
        %v4097 = vpack.c.b16 %v3751, %v3750
        %v4098 = vpack.c.b16 %v3753, %v3752
        %v4099 = vpack.c.b16 %v3755, %v3754
        %v4100 = vpack.c.b16 %v3757, %v3756
        %v4101 = vpack.c.b16 %v3759, %v3758
        %v4102 = vpack.c.b16 %v3761, %v3760
        %v4103 = vpack.c.b16 %v3763, %v3762
        %v4104 = vpack.c.b16 %v3765, %v3764
        %v4105 = vpack.c.b16 %v3767, %v3766
        %v4106 = vpack.c.b16 %v3769, %v3768
        %v4107 = vpack.c.b16 %v3771, %v3770
        %v4108 = vpack.c.b16 %v3773, %v3772
        %v4109 = vpack.c.b16 %v3775, %v3774
        %v4110 = vpack.c.b16 %v3777, %v3776
        %v4111 = vpack.c.b16 %v3779, %v3778
        %v4112 = vpack.c.b16 %v3781, %v3780
        %v4113 = vpack.c.b16 %v3783, %v3782
        %v4114 = vpack.c.b16 %v3785, %v3784
        %v4115 = vpack.c.b16 %v3787, %v3786
        %v4116 = vpack.c.b16 %v3789, %v3788
        %v4117 = vpack.c.b16 %v3791, %v3790
        %v4118 = vpack.c.b16 %v3793, %v3792
        %v4119 = vpack.c.b16 %v3795, %v3794
        %v4120 = vpack.c.b16 %v3797, %v3796
        %v4121 = vpack.c.b16 %v3799, %v3798
        %v4122 = vpack.c.b16 %v3801, %v3800
        %v4123 = vpack.c.b16 %v3803, %v3802
        %v4124 = vpack.c.b16 %v3805, %v3804
        %v4125 = vpack.c.b16 %v3807, %v3806
        %v4126 = vpack.c.b16 %v3809, %v3808
        %v4127 = vpack.c.b16 %v3811, %v3810
        %v4128 = vpack.c.b16 %v3813, %v3812
        %v4129 = vpack.c.b16 %v3815, %v3814
        %v4130 = vpack.c.b16 %v3817, %v3816
        %v4131 = vpack.c.b16 %v3819, %v3818
        %v4132 = vpack.c.b16 %v3821, %v3820
        %v4133 = vpack.c.b16 %v3823, %v3822
        %v4134 = vpack.c.b16 %v3825, %v3824
        %v4135 = vpack.c.b16 %v3827, %v3826
        %v4136 = vpack.c.b16 %v3829, %v3828
        %v4137 = vpack.c.b16 %v3831, %v3830
        %v4138 = vpack.c.b16 %v3833, %v3832
        %v4139 = vpack.c.b16 %v3835, %v3834
        %v4140 = vpack.c.b16 %v3837, %v3836
        %v4141 = vpack.c.b16 %v3839, %v3838
        %v4142 = vpack.c.b16 %v3841, %v3840
        %v4143 = vpack.c.b16 %v3843, %v3842
        %v4144 = vpack.c.b16 %v3845, %v3844
        %v4145 = vpack.c.b16 %v3847, %v3846
        %v4146 = vpack.c.b16 %v3849, %v3848
        %v4147 = vpack.c.b16 %v3851, %v3850
        %v4148 = vpack.c.b16 %v3853, %v3852
        %v4149 = vpack.c.b16 %v3855, %v3854
        %v4150 = vpack.c.b16 %v3857, %v3856
        %v4151 = vpack.c.b16 %v3859, %v3858
        %v4152 = vpack.c.b16 %v3861, %v3860
        %v4153 = vpack.c.b16 %v3863, %v3862
        %v4154 = vpack.c.b16 %v3865, %v3864
        %v4155 = vpack.c.b16 %v3867, %v3866
        %v4156 = vpack.c.b16 %v3869, %v3868
        %v4157 = vpack.c.b16 %v3871, %v3870
        %v4158 = vpack.c.b16 %v3873, %v3872
        %v4159 = vpack.c.b16 %v3875, %v3874
        %v4160 = vpack.c.b16 %v3877, %v3876
        %v4161 = vpack.c.b16 %v3879, %v3878
        %v4162 = vpack.c.b16 %v3881, %v3880
        %v4163 = vpack.c.b16 %v3883, %v3882
        %v4164 = vpack.c.b16 %v3885, %v3884
        %v4165 = vpack.c.b16 %v3887, %v3886
        %v4166 = vpack.c.b16 %v3889, %v3888
        %v4167 = vpack.c.b16 %v3891, %v3890
        %v4168 = vpack.c.b16 %v3893, %v3892
        %v4169 = vpack.c.b16 %v3895, %v3894
        %v4170 = vpack.c.b16 %v3897, %v3896
        %v4171 = vpack.c.b16 %v3899, %v3898
        %v4172 = vpack.c.b16 %v3901, %v3900
        %v4173 = vpack.c.b16 %v3903, %v3902
        %v4174 = vpack.c.b16 %v3905, %v3904
        %v4175 = vpack.c.b16 %v3907, %v3906
        %v4176 = vpack.c.b16 %v3909, %v3908
        %v4177 = vpack.c.b16 %v3911, %v3910
        %v4178 = vpack.c.b16 %v3913, %v3912
        %v4179 = vpack.c.b16 %v3915, %v3914
        %v4180 = vpack.c.b16 %v3917, %v3916
        %v4181 = vpack.c.b16 %v3919, %v3918
        %v4182 = vpack.c.b16 %v3921, %v3920
        %v4183 = vpack.c.b16 %v3923, %v3922
        %v4184 = vpack.c.b16 %v3925, %v3924
        %v4185 = vpack.c.b16 %v3927, %v3926
        %v4186 = vpack.c.b16 %v3929, %v3928
        %v4187 = vpack.c.b16 %v3931, %v3930
        %4444 = vmatprep.subr.bf16.mxu0 0
        %4445 = vmatpush1.bf16.msra.mxu0 %v3939
        %4446 = vmatprep.subr.bf16.mxu0 0
        %4447 = vmatpush1.bf16.msra.mxu0 %v3938
        %4448 = vmatprep.subr.bf16.mxu0 0
        %4449 = vmatpush1.bf16.msra.mxu0 %v3937
        %4450 = vmatprep.subr.bf16.mxu0 0
        %4451 = vmatpush1.bf16.msra.mxu0 %v3936
        %4452 = vmatprep.subr.bf16.mxu0 0
        %4453 = vmatpush1.bf16.msra.mxu0 %v3935
        %4454 = vmatprep.subr.bf16.mxu0 0
        %4455 = vmatpush1.bf16.msra.mxu0 %v3934
        %4456 = vmatprep.subr.bf16.mxu0 0
        %4457 = vmatpush1.bf16.msra.mxu0 %v3933
        %4458 = vmatprep.subr.bf16.mxu0 0
        %4459 = vmatpush1.bf16.msra.mxu0 %v3932
        %4460 = vmatprep.subr.bf16.mxu0 0
        %4461 = vmatpush2.bf16.msra.mxu0 %v3947
        %4462 = vmatprep.subr.bf16.mxu0 0
        %4463 = vmatpush2.bf16.msra.mxu0 %v3946
        %4464 = vmatprep.subr.bf16.mxu0 0
        %4465 = vmatpush2.bf16.msra.mxu0 %v3945
        %4466 = vmatprep.subr.bf16.mxu0 0
        %4467 = vmatpush2.bf16.msra.mxu0 %v3944
        %4468 = vmatprep.subr.bf16.mxu0 0
        %4469 = vmatpush2.bf16.msra.mxu0 %v3943
        %4470 = vmatprep.subr.bf16.mxu0 0
        %4471 = vmatpush2.bf16.msra.mxu0 %v3942
        %4472 = vmatprep.subr.bf16.mxu0 0
        %4473 = vmatpush2.bf16.msra.mxu0 %v3941
        %4474 = vmatprep.subr.bf16.mxu0 0
        %4475 = vmatpush2.bf16.msra.mxu0 %v3940
        %4476 = vmatprep.mubr.bf16.mxu0 %v2267
        %4477 = vmatmul.mubr.bf16.gmra.mxu0 %v2263
        %v4478 = vpop.f32.mrf.mxu0
        %v4479 = vadd.f32 %v2906, %v4478
        %v4480 = vpop.f32.mrf.mxu0
        %v4481 = vpop.f32.mrf.mxu0
        %v4482 = vadd.f32 %v2906, %v4481
        %v4483 = vpop.f32.mrf.mxu0
        %4484 = vdwg.mxu0
        %4485 = vmatprep.subr.bf16.mxu0 0
        %4486 = vmatpush1.bf16.msra.mxu0 %v3955
        %4487 = vmatprep.subr.bf16.mxu0 0
        %4488 = vmatpush1.bf16.msra.mxu0 %v3954
        %4489 = vmatprep.subr.bf16.mxu0 0
        %4490 = vmatpush1.bf16.msra.mxu0 %v3953
        %4491 = vmatprep.subr.bf16.mxu0 0
        %4492 = vmatpush1.bf16.msra.mxu0 %v3952
        %4493 = vmatprep.subr.bf16.mxu0 0
        %4494 = vmatpush1.bf16.msra.mxu0 %v3951
        %4495 = vmatprep.subr.bf16.mxu0 0
        %4496 = vmatpush1.bf16.msra.mxu0 %v3950
        %4497 = vmatprep.subr.bf16.mxu0 0
        %4498 = vmatpush1.bf16.msra.mxu0 %v3949
        %4499 = vmatprep.subr.bf16.mxu0 0
        %4500 = vmatpush1.bf16.msra.mxu0 %v3948
        %4501 = vmatprep.subr.bf16.mxu0 0
        %4502 = vmatpush2.bf16.msra.mxu0 %v3963
        %4503 = vmatprep.subr.bf16.mxu0 0
        %4504 = vmatpush2.bf16.msra.mxu0 %v3962
        %4505 = vmatprep.subr.bf16.mxu0 0
        %4506 = vmatpush2.bf16.msra.mxu0 %v3961
        %4507 = vmatprep.subr.bf16.mxu0 0
        %4508 = vmatpush2.bf16.msra.mxu0 %v3960
        %4509 = vmatprep.subr.bf16.mxu0 0
        %4510 = vmatpush2.bf16.msra.mxu0 %v3959
        %4511 = vmatprep.subr.bf16.mxu0 0
        %4512 = vmatpush2.bf16.msra.mxu0 %v3958
        %4513 = vmatprep.subr.bf16.mxu0 0
        %4514 = vmatpush2.bf16.msra.mxu0 %v3957
        %4515 = vmatprep.subr.bf16.mxu0 0
        %4516 = vmatpush2.bf16.msra.mxu0 %v3956
        %4517 = vmatprep.mubr.bf16.mxu0 %v2275
        %4518 = vmatmul.mubr.bf16.gmra.mxu0 %v2271
        %v4519 = vpop.f32.mrf.mxu0
        %v4520 = vadd.f32 %v4479, %v4519
        %v4521 = vpop.f32.mrf.mxu0
        %v4522 = vpop.f32.mrf.mxu0
        %v4523 = vadd.f32 %v4482, %v4522
        %v4524 = vpop.f32.mrf.mxu0
        %4525 = vdwg.mxu0
        %4526 = vmatprep.subr.bf16.mxu0 0
        %4527 = vmatpush1.bf16.msra.mxu0 %v3971
        %4528 = vmatprep.subr.bf16.mxu0 0
        %4529 = vmatpush1.bf16.msra.mxu0 %v3970
        %4530 = vmatprep.subr.bf16.mxu0 0
        %4531 = vmatpush1.bf16.msra.mxu0 %v3969
        %4532 = vmatprep.subr.bf16.mxu0 0
        %4533 = vmatpush1.bf16.msra.mxu0 %v3968
        %4534 = vmatprep.subr.bf16.mxu0 0
        %4535 = vmatpush1.bf16.msra.mxu0 %v3967
        %4536 = vmatprep.subr.bf16.mxu0 0
        %4537 = vmatpush1.bf16.msra.mxu0 %v3966
        %4538 = vmatprep.subr.bf16.mxu0 0
        %4539 = vmatpush1.bf16.msra.mxu0 %v3965
        %4540 = vmatprep.subr.bf16.mxu0 0
        %4541 = vmatpush1.bf16.msra.mxu0 %v3964
        %4542 = vmatprep.subr.bf16.mxu0 0
        %4543 = vmatpush2.bf16.msra.mxu0 %v3979
        %4544 = vmatprep.subr.bf16.mxu0 0
        %4545 = vmatpush2.bf16.msra.mxu0 %v3978
        %4546 = vmatprep.subr.bf16.mxu0 0
        %4547 = vmatpush2.bf16.msra.mxu0 %v3977
        %4548 = vmatprep.subr.bf16.mxu0 0
        %4549 = vmatpush2.bf16.msra.mxu0 %v3976
        %4550 = vmatprep.subr.bf16.mxu0 0
        %4551 = vmatpush2.bf16.msra.mxu0 %v3975
        %4552 = vmatprep.subr.bf16.mxu0 0
        %4553 = vmatpush2.bf16.msra.mxu0 %v3974
        %4554 = vmatprep.subr.bf16.mxu0 0
        %4555 = vmatpush2.bf16.msra.mxu0 %v3973
        %4556 = vmatprep.subr.bf16.mxu0 0
        %4557 = vmatpush2.bf16.msra.mxu0 %v3972
        %4558 = vmatprep.mubr.bf16.mxu0 %v2283
        %4559 = vmatmul.mubr.bf16.gmra.mxu0 %v2279
        %v4560 = vpop.f32.mrf.mxu0
        %v4561 = vadd.f32 %v4520, %v4560
        %v4562 = vpop.f32.mrf.mxu0
        %v4563 = vpop.f32.mrf.mxu0
        %v4564 = vadd.f32 %v4523, %v4563
        %v4565 = vpop.f32.mrf.mxu0
        %4566 = vdwg.mxu0
        %4567 = vmatprep.subr.bf16.mxu0 0
        %4568 = vmatpush1.bf16.msra.mxu0 %v3987
        %4569 = vmatprep.subr.bf16.mxu0 0
        %4570 = vmatpush1.bf16.msra.mxu0 %v3986
        %4571 = vmatprep.subr.bf16.mxu0 0
        %4572 = vmatpush1.bf16.msra.mxu0 %v3985
        %4573 = vmatprep.subr.bf16.mxu0 0
        %4574 = vmatpush1.bf16.msra.mxu0 %v3984
        %4575 = vmatprep.subr.bf16.mxu0 0
        %4576 = vmatpush1.bf16.msra.mxu0 %v3983
        %4577 = vmatprep.subr.bf16.mxu0 0
        %4578 = vmatpush1.bf16.msra.mxu0 %v3982
        %4579 = vmatprep.subr.bf16.mxu0 0
        %4580 = vmatpush1.bf16.msra.mxu0 %v3981
        %4581 = vmatprep.subr.bf16.mxu0 0
        %4582 = vmatpush1.bf16.msra.mxu0 %v3980
        %4583 = vmatprep.subr.bf16.mxu0 0
        %4584 = vmatpush2.bf16.msra.mxu0 %v3995
        %4585 = vmatprep.subr.bf16.mxu0 0
        %4586 = vmatpush2.bf16.msra.mxu0 %v3994
        %4587 = vmatprep.subr.bf16.mxu0 0
        %4588 = vmatpush2.bf16.msra.mxu0 %v3993
        %4589 = vmatprep.subr.bf16.mxu0 0
        %4590 = vmatpush2.bf16.msra.mxu0 %v3992
        %4591 = vmatprep.subr.bf16.mxu0 0
        %4592 = vmatpush2.bf16.msra.mxu0 %v3991
        %4593 = vmatprep.subr.bf16.mxu0 0
        %4594 = vmatpush2.bf16.msra.mxu0 %v3990
        %4595 = vmatprep.subr.bf16.mxu0 0
        %4596 = vmatpush2.bf16.msra.mxu0 %v3989
        %4597 = vmatprep.subr.bf16.mxu0 0
        %4598 = vmatpush2.bf16.msra.mxu0 %v3988
        %4599 = vmatprep.mubr.bf16.mxu0 %v2291
        %4600 = vmatmul.mubr.bf16.gmra.mxu0 %v2287
        %v4601 = vpop.f32.mrf.mxu0
        %v4602 = vadd.f32 %v4561, %v4601
        %v4603 = vpop.f32.mrf.mxu0
        %v4604 = vpop.f32.mrf.mxu0
        %v4605 = vadd.f32 %v4564, %v4604
        %v4606 = vpop.f32.mrf.mxu0
        %4607 = vdwg.mxu0
        %4608 = vmatprep.subr.bf16.mxu0 0
        %4609 = vmatpush1.bf16.msra.mxu0 %v4003
        %4610 = vmatprep.subr.bf16.mxu0 0
        %4611 = vmatpush1.bf16.msra.mxu0 %v4002
        %4612 = vmatprep.subr.bf16.mxu0 0
        %4613 = vmatpush1.bf16.msra.mxu0 %v4001
        %4614 = vmatprep.subr.bf16.mxu0 0
        %4615 = vmatpush1.bf16.msra.mxu0 %v4000
        %4616 = vmatprep.subr.bf16.mxu0 0
        %4617 = vmatpush1.bf16.msra.mxu0 %v3999
        %4618 = vmatprep.subr.bf16.mxu0 0
        %4619 = vmatpush1.bf16.msra.mxu0 %v3998
        %4620 = vmatprep.subr.bf16.mxu0 0
        %4621 = vmatpush1.bf16.msra.mxu0 %v3997
        %4622 = vmatprep.subr.bf16.mxu0 0
        %4623 = vmatpush1.bf16.msra.mxu0 %v3996
        %4624 = vmatprep.subr.bf16.mxu0 0
        %4625 = vmatpush2.bf16.msra.mxu0 %v4011
        %4626 = vmatprep.subr.bf16.mxu0 0
        %4627 = vmatpush2.bf16.msra.mxu0 %v4010
        %4628 = vmatprep.subr.bf16.mxu0 0
        %4629 = vmatpush2.bf16.msra.mxu0 %v4009
        %4630 = vmatprep.subr.bf16.mxu0 0
        %4631 = vmatpush2.bf16.msra.mxu0 %v4008
        %4632 = vmatprep.subr.bf16.mxu0 0
        %4633 = vmatpush2.bf16.msra.mxu0 %v4007
        %4634 = vmatprep.subr.bf16.mxu0 0
        %4635 = vmatpush2.bf16.msra.mxu0 %v4006
        %4636 = vmatprep.subr.bf16.mxu0 0
        %4637 = vmatpush2.bf16.msra.mxu0 %v4005
        %4638 = vmatprep.subr.bf16.mxu0 0
        %4639 = vmatpush2.bf16.msra.mxu0 %v4004
        %4640 = vmatprep.mubr.bf16.mxu0 %v2299
        %4641 = vmatmul.mubr.bf16.gmra.mxu0 %v2295
        %v4642 = vpop.f32.mrf.mxu0
        %v4643 = vadd.f32 %v4602, %v4642
        %v4644 = vpop.f32.mrf.mxu0
        %v4645 = vpop.f32.mrf.mxu0
        %v4646 = vadd.f32 %v4605, %v4645
        %v4647 = vpop.f32.mrf.mxu0
        %4648 = vdwg.mxu0
        %4649 = vmatprep.subr.bf16.mxu0 0
        %4650 = vmatpush1.bf16.msra.mxu0 %v4019
        %4651 = vmatprep.subr.bf16.mxu0 0
        %4652 = vmatpush1.bf16.msra.mxu0 %v4018
        %4653 = vmatprep.subr.bf16.mxu0 0
        %4654 = vmatpush1.bf16.msra.mxu0 %v4017
        %4655 = vmatprep.subr.bf16.mxu0 0
        %4656 = vmatpush1.bf16.msra.mxu0 %v4016
        %4657 = vmatprep.subr.bf16.mxu0 0
        %4658 = vmatpush1.bf16.msra.mxu0 %v4015
        %4659 = vmatprep.subr.bf16.mxu0 0
        %4660 = vmatpush1.bf16.msra.mxu0 %v4014
        %4661 = vmatprep.subr.bf16.mxu0 0
        %4662 = vmatpush1.bf16.msra.mxu0 %v4013
        %4663 = vmatprep.subr.bf16.mxu0 0
        %4664 = vmatpush1.bf16.msra.mxu0 %v4012
        %4665 = vmatprep.subr.bf16.mxu0 0
        %4666 = vmatpush2.bf16.msra.mxu0 %v4027
        %4667 = vmatprep.subr.bf16.mxu0 0
        %4668 = vmatpush2.bf16.msra.mxu0 %v4026
        %4669 = vmatprep.subr.bf16.mxu0 0
        %4670 = vmatpush2.bf16.msra.mxu0 %v4025
        %4671 = vmatprep.subr.bf16.mxu0 0
        %4672 = vmatpush2.bf16.msra.mxu0 %v4024
        %4673 = vmatprep.subr.bf16.mxu0 0
        %4674 = vmatpush2.bf16.msra.mxu0 %v4023
        %4675 = vmatprep.subr.bf16.mxu0 0
        %4676 = vmatpush2.bf16.msra.mxu0 %v4022
        %4677 = vmatprep.subr.bf16.mxu0 0
        %4678 = vmatpush2.bf16.msra.mxu0 %v4021
        %4679 = vmatprep.subr.bf16.mxu0 0
        %4680 = vmatpush2.bf16.msra.mxu0 %v4020
        %4681 = vmatprep.mubr.bf16.mxu0 %v2307
        %4682 = vmatmul.mubr.bf16.gmra.mxu0 %v2303
        %v4683 = vpop.f32.mrf.mxu0
        %v4684 = vadd.f32 %v4643, %v4683
        %v4685 = vpop.f32.mrf.mxu0
        %v4686 = vpop.f32.mrf.mxu0
        %v4687 = vadd.f32 %v4646, %v4686
        %v4688 = vpop.f32.mrf.mxu0
        %4689 = vdwg.mxu0
        %4690 = vmatprep.subr.bf16.mxu0 0
        %4691 = vmatpush1.bf16.msra.mxu0 %v4035
        %4692 = vmatprep.subr.bf16.mxu0 0
        %4693 = vmatpush1.bf16.msra.mxu0 %v4034
        %4694 = vmatprep.subr.bf16.mxu0 0
        %4695 = vmatpush1.bf16.msra.mxu0 %v4033
        %4696 = vmatprep.subr.bf16.mxu0 0
        %4697 = vmatpush1.bf16.msra.mxu0 %v4032
        %4698 = vmatprep.subr.bf16.mxu0 0
        %4699 = vmatpush1.bf16.msra.mxu0 %v4031
        %4700 = vmatprep.subr.bf16.mxu0 0
        %4701 = vmatpush1.bf16.msra.mxu0 %v4030
        %4702 = vmatprep.subr.bf16.mxu0 0
        %4703 = vmatpush1.bf16.msra.mxu0 %v4029
        %4704 = vmatprep.subr.bf16.mxu0 0
        %4705 = vmatpush1.bf16.msra.mxu0 %v4028
        %4706 = vmatprep.subr.bf16.mxu0 0
        %4707 = vmatpush2.bf16.msra.mxu0 %v4043
        %4708 = vmatprep.subr.bf16.mxu0 0
        %4709 = vmatpush2.bf16.msra.mxu0 %v4042
        %4710 = vmatprep.subr.bf16.mxu0 0
        %4711 = vmatpush2.bf16.msra.mxu0 %v4041
        %4712 = vmatprep.subr.bf16.mxu0 0
        %4713 = vmatpush2.bf16.msra.mxu0 %v4040
        %4714 = vmatprep.subr.bf16.mxu0 0
        %4715 = vmatpush2.bf16.msra.mxu0 %v4039
        %4716 = vmatprep.subr.bf16.mxu0 0
        %4717 = vmatpush2.bf16.msra.mxu0 %v4038
        %4718 = vmatprep.subr.bf16.mxu0 0
        %4719 = vmatpush2.bf16.msra.mxu0 %v4037
        %4720 = vmatprep.subr.bf16.mxu0 0
        %4721 = vmatpush2.bf16.msra.mxu0 %v4036
        %4722 = vmatprep.mubr.bf16.mxu0 %v2315
        %4723 = vmatmul.mubr.bf16.gmra.mxu0 %v2311
        %v4724 = vpop.f32.mrf.mxu0
        %v4725 = vadd.f32 %v4684, %v4724
        %v4726 = vpop.f32.mrf.mxu0
        %v4727 = vpop.f32.mrf.mxu0
        %v4728 = vadd.f32 %v4687, %v4727
        %v4729 = vpop.f32.mrf.mxu0
        %4730 = vdwg.mxu0
        %4731 = vmatprep.subr.bf16.mxu0 0
        %4732 = vmatpush1.bf16.msra.mxu0 %v4051
        %4733 = vmatprep.subr.bf16.mxu0 0
        %4734 = vmatpush1.bf16.msra.mxu0 %v4050
        %4735 = vmatprep.subr.bf16.mxu0 0
        %4736 = vmatpush1.bf16.msra.mxu0 %v4049
        %4737 = vmatprep.subr.bf16.mxu0 0
        %4738 = vmatpush1.bf16.msra.mxu0 %v4048
        %4739 = vmatprep.subr.bf16.mxu0 0
        %4740 = vmatpush1.bf16.msra.mxu0 %v4047
        %4741 = vmatprep.subr.bf16.mxu0 0
        %4742 = vmatpush1.bf16.msra.mxu0 %v4046
        %4743 = vmatprep.subr.bf16.mxu0 0
        %4744 = vmatpush1.bf16.msra.mxu0 %v4045
        %4745 = vmatprep.subr.bf16.mxu0 0
        %4746 = vmatpush1.bf16.msra.mxu0 %v4044
        %4747 = vmatprep.subr.bf16.mxu0 0
        %4748 = vmatpush2.bf16.msra.mxu0 %v4059
        %4749 = vmatprep.subr.bf16.mxu0 0
        %4750 = vmatpush2.bf16.msra.mxu0 %v4058
        %4751 = vmatprep.subr.bf16.mxu0 0
        %4752 = vmatpush2.bf16.msra.mxu0 %v4057
        %4753 = vmatprep.subr.bf16.mxu0 0
        %4754 = vmatpush2.bf16.msra.mxu0 %v4056
        %4755 = vmatprep.subr.bf16.mxu0 0
        %4756 = vmatpush2.bf16.msra.mxu0 %v4055
        %4757 = vmatprep.subr.bf16.mxu0 0
        %4758 = vmatpush2.bf16.msra.mxu0 %v4054
        %4759 = vmatprep.subr.bf16.mxu0 0
        %4760 = vmatpush2.bf16.msra.mxu0 %v4053
        %4761 = vmatprep.subr.bf16.mxu0 0
        %4762 = vmatpush2.bf16.msra.mxu0 %v4052
        %4763 = vmatprep.mubr.bf16.mxu0 %v2323
        %4764 = vmatmul.mubr.bf16.gmra.mxu0 %v2319
        %v4765 = vpop.f32.mrf.mxu0
        %v4766 = vadd.f32 %v4725, %v4765
        %v4767 = vpop.f32.mrf.mxu0
        %v4768 = vpop.f32.mrf.mxu0
        %v4769 = vadd.f32 %v4728, %v4768
        %v4770 = vpop.f32.mrf.mxu0
        %4771 = vdwg.mxu0
        %4772 = vmatprep.subr.bf16.mxu0 0
        %4773 = vmatpush1.bf16.msra.mxu0 %v4067
        %4774 = vmatprep.subr.bf16.mxu0 0
        %4775 = vmatpush1.bf16.msra.mxu0 %v4066
        %4776 = vmatprep.subr.bf16.mxu0 0
        %4777 = vmatpush1.bf16.msra.mxu0 %v4065
        %4778 = vmatprep.subr.bf16.mxu0 0
        %4779 = vmatpush1.bf16.msra.mxu0 %v4064
        %4780 = vmatprep.subr.bf16.mxu0 0
        %4781 = vmatpush1.bf16.msra.mxu0 %v4063
        %4782 = vmatprep.subr.bf16.mxu0 0
        %4783 = vmatpush1.bf16.msra.mxu0 %v4062
        %4784 = vmatprep.subr.bf16.mxu0 0
        %4785 = vmatpush1.bf16.msra.mxu0 %v4061
        %4786 = vmatprep.subr.bf16.mxu0 0
        %4787 = vmatpush1.bf16.msra.mxu0 %v4060
        %4788 = vmatprep.subr.bf16.mxu0 0
        %4789 = vmatpush2.bf16.msra.mxu0 %v4075
        %4790 = vmatprep.subr.bf16.mxu0 0
        %4791 = vmatpush2.bf16.msra.mxu0 %v4074
        %4792 = vmatprep.subr.bf16.mxu0 0
        %4793 = vmatpush2.bf16.msra.mxu0 %v4073
        %4794 = vmatprep.subr.bf16.mxu0 0
        %4795 = vmatpush2.bf16.msra.mxu0 %v4072
        %4796 = vmatprep.subr.bf16.mxu0 0
        %4797 = vmatpush2.bf16.msra.mxu0 %v4071
        %4798 = vmatprep.subr.bf16.mxu0 0
        %4799 = vmatpush2.bf16.msra.mxu0 %v4070
        %4800 = vmatprep.subr.bf16.mxu0 0
        %4801 = vmatpush2.bf16.msra.mxu0 %v4069
        %4802 = vmatprep.subr.bf16.mxu0 0
        %4803 = vmatpush2.bf16.msra.mxu0 %v4068
        %4804 = vmatprep.mubr.bf16.mxu0 %v2331
        %4805 = vmatmul.mubr.bf16.gmra.mxu0 %v2327
        %v4806 = vpop.f32.mrf.mxu0
        %v4807 = vadd.f32 %v4766, %v4806
        %v4808 = vpop.f32.mrf.mxu0
        %v4809 = vpop.f32.mrf.mxu0
        %v4810 = vadd.f32 %v4769, %v4809
        %v4811 = vpop.f32.mrf.mxu0
        %4812 = vdwg.mxu0
        %4813 = vmatprep.subr.bf16.mxu0 0
        %4814 = vmatpush1.bf16.msra.mxu0 %v4083
        %4815 = vmatprep.subr.bf16.mxu0 0
        %4816 = vmatpush1.bf16.msra.mxu0 %v4082
        %4817 = vmatprep.subr.bf16.mxu0 0
        %4818 = vmatpush1.bf16.msra.mxu0 %v4081
        %4819 = vmatprep.subr.bf16.mxu0 0
        %4820 = vmatpush1.bf16.msra.mxu0 %v4080
        %4821 = vmatprep.subr.bf16.mxu0 0
        %4822 = vmatpush1.bf16.msra.mxu0 %v4079
        %4823 = vmatprep.subr.bf16.mxu0 0
        %4824 = vmatpush1.bf16.msra.mxu0 %v4078
        %4825 = vmatprep.subr.bf16.mxu0 0
        %4826 = vmatpush1.bf16.msra.mxu0 %v4077
        %4827 = vmatprep.subr.bf16.mxu0 0
        %4828 = vmatpush1.bf16.msra.mxu0 %v4076
        %4829 = vmatprep.subr.bf16.mxu0 0
        %4830 = vmatpush2.bf16.msra.mxu0 %v4091
        %4831 = vmatprep.subr.bf16.mxu0 0
        %4832 = vmatpush2.bf16.msra.mxu0 %v4090
        %4833 = vmatprep.subr.bf16.mxu0 0
        %4834 = vmatpush2.bf16.msra.mxu0 %v4089
        %4835 = vmatprep.subr.bf16.mxu0 0
        %4836 = vmatpush2.bf16.msra.mxu0 %v4088
        %4837 = vmatprep.subr.bf16.mxu0 0
        %4838 = vmatpush2.bf16.msra.mxu0 %v4087
        %4839 = vmatprep.subr.bf16.mxu0 0
        %4840 = vmatpush2.bf16.msra.mxu0 %v4086
        %4841 = vmatprep.subr.bf16.mxu0 0
        %4842 = vmatpush2.bf16.msra.mxu0 %v4085
        %4843 = vmatprep.subr.bf16.mxu0 0
        %4844 = vmatpush2.bf16.msra.mxu0 %v4084
        %4845 = vmatprep.mubr.bf16.mxu0 %v2339
        %4846 = vmatmul.mubr.bf16.gmra.mxu0 %v2335
        %v4847 = vpop.f32.mrf.mxu0
        %v4848 = vadd.f32 %v4807, %v4847
        %v4849 = vpop.f32.mrf.mxu0
        %v4850 = vpop.f32.mrf.mxu0
        %v4851 = vadd.f32 %v4810, %v4850
        %v4852 = vpop.f32.mrf.mxu0
        %4853 = vdwg.mxu0
        %4854 = vmatprep.subr.bf16.mxu0 0
        %4855 = vmatpush1.bf16.msra.mxu0 %v4099
        %4856 = vmatprep.subr.bf16.mxu0 0
        %4857 = vmatpush1.bf16.msra.mxu0 %v4098
        %4858 = vmatprep.subr.bf16.mxu0 0
        %4859 = vmatpush1.bf16.msra.mxu0 %v4097
        %4860 = vmatprep.subr.bf16.mxu0 0
        %4861 = vmatpush1.bf16.msra.mxu0 %v4096
        %4862 = vmatprep.subr.bf16.mxu0 0
        %4863 = vmatpush1.bf16.msra.mxu0 %v4095
        %4864 = vmatprep.subr.bf16.mxu0 0
        %4865 = vmatpush1.bf16.msra.mxu0 %v4094
        %4866 = vmatprep.subr.bf16.mxu0 0
        %4867 = vmatpush1.bf16.msra.mxu0 %v4093
        %4868 = vmatprep.subr.bf16.mxu0 0
        %4869 = vmatpush1.bf16.msra.mxu0 %v4092
        %4870 = vmatprep.subr.bf16.mxu0 0
        %4871 = vmatpush2.bf16.msra.mxu0 %v4107
        %4872 = vmatprep.subr.bf16.mxu0 0
        %4873 = vmatpush2.bf16.msra.mxu0 %v4106
        %4874 = vmatprep.subr.bf16.mxu0 0
        %4875 = vmatpush2.bf16.msra.mxu0 %v4105
        %4876 = vmatprep.subr.bf16.mxu0 0
        %4877 = vmatpush2.bf16.msra.mxu0 %v4104
        %4878 = vmatprep.subr.bf16.mxu0 0
        %4879 = vmatpush2.bf16.msra.mxu0 %v4103
        %4880 = vmatprep.subr.bf16.mxu0 0
        %4881 = vmatpush2.bf16.msra.mxu0 %v4102
        %4882 = vmatprep.subr.bf16.mxu0 0
        %4883 = vmatpush2.bf16.msra.mxu0 %v4101
        %4884 = vmatprep.subr.bf16.mxu0 0
        %4885 = vmatpush2.bf16.msra.mxu0 %v4100
        %4886 = vmatprep.mubr.bf16.mxu0 %v2347
        %4887 = vmatmul.mubr.bf16.gmra.mxu0 %v2343
        %v4888 = vpop.f32.mrf.mxu0
        %v4889 = vadd.f32 %v4848, %v4888
        %v4890 = vpop.f32.mrf.mxu0
        %v4891 = vpop.f32.mrf.mxu0
        %v4892 = vadd.f32 %v4851, %v4891
        %v4893 = vpop.f32.mrf.mxu0
        %4894 = vdwg.mxu0
        %4895 = vmatprep.subr.bf16.mxu0 0
        %4896 = vmatpush1.bf16.msra.mxu0 %v4115
        %4897 = vmatprep.subr.bf16.mxu0 0
        %4898 = vmatpush1.bf16.msra.mxu0 %v4114
        %4899 = vmatprep.subr.bf16.mxu0 0
        %4900 = vmatpush1.bf16.msra.mxu0 %v4113
        %4901 = vmatprep.subr.bf16.mxu0 0
        %4902 = vmatpush1.bf16.msra.mxu0 %v4112
        %4903 = vmatprep.subr.bf16.mxu0 0
        %4904 = vmatpush1.bf16.msra.mxu0 %v4111
        %4905 = vmatprep.subr.bf16.mxu0 0
        %4906 = vmatpush1.bf16.msra.mxu0 %v4110
        %4907 = vmatprep.subr.bf16.mxu0 0
        %4908 = vmatpush1.bf16.msra.mxu0 %v4109
        %4909 = vmatprep.subr.bf16.mxu0 0
        %4910 = vmatpush1.bf16.msra.mxu0 %v4108
        %4911 = vmatprep.subr.bf16.mxu0 0
        %4912 = vmatpush2.bf16.msra.mxu0 %v4123
        %4913 = vmatprep.subr.bf16.mxu0 0
        %4914 = vmatpush2.bf16.msra.mxu0 %v4122
        %4915 = vmatprep.subr.bf16.mxu0 0
        %4916 = vmatpush2.bf16.msra.mxu0 %v4121
        %4917 = vmatprep.subr.bf16.mxu0 0
        %4918 = vmatpush2.bf16.msra.mxu0 %v4120
        %4919 = vmatprep.subr.bf16.mxu0 0
        %4920 = vmatpush2.bf16.msra.mxu0 %v4119
        %4921 = vmatprep.subr.bf16.mxu0 0
        %4922 = vmatpush2.bf16.msra.mxu0 %v4118
        %4923 = vmatprep.subr.bf16.mxu0 0
        %4924 = vmatpush2.bf16.msra.mxu0 %v4117
        %4925 = vmatprep.subr.bf16.mxu0 0
        %4926 = vmatpush2.bf16.msra.mxu0 %v4116
        %4927 = vmatprep.mubr.bf16.mxu0 %v2355
        %4928 = vmatmul.mubr.bf16.gmra.mxu0 %v2351
        %v4929 = vpop.f32.mrf.mxu0
        %v4930 = vadd.f32 %v4889, %v4929
        %v4931 = vpop.f32.mrf.mxu0
        %v4932 = vpop.f32.mrf.mxu0
        %v4933 = vadd.f32 %v4892, %v4932
        %v4934 = vpop.f32.mrf.mxu0
        %4935 = vdwg.mxu0
        %4936 = vmatprep.subr.bf16.mxu0 0
        %4937 = vmatpush1.bf16.msra.mxu0 %v4131
        %4938 = vmatprep.subr.bf16.mxu0 0
        %4939 = vmatpush1.bf16.msra.mxu0 %v4130
        %4940 = vmatprep.subr.bf16.mxu0 0
        %4941 = vmatpush1.bf16.msra.mxu0 %v4129
        %4942 = vmatprep.subr.bf16.mxu0 0
        %4943 = vmatpush1.bf16.msra.mxu0 %v4128
        %4944 = vmatprep.subr.bf16.mxu0 0
        %4945 = vmatpush1.bf16.msra.mxu0 %v4127
        %4946 = vmatprep.subr.bf16.mxu0 0
        %4947 = vmatpush1.bf16.msra.mxu0 %v4126
        %4948 = vmatprep.subr.bf16.mxu0 0
        %4949 = vmatpush1.bf16.msra.mxu0 %v4125
        %4950 = vmatprep.subr.bf16.mxu0 0
        %4951 = vmatpush1.bf16.msra.mxu0 %v4124
        %4952 = vmatprep.subr.bf16.mxu0 0
        %4953 = vmatpush2.bf16.msra.mxu0 %v4139
        %4954 = vmatprep.subr.bf16.mxu0 0
        %4955 = vmatpush2.bf16.msra.mxu0 %v4138
        %4956 = vmatprep.subr.bf16.mxu0 0
        %4957 = vmatpush2.bf16.msra.mxu0 %v4137
        %4958 = vmatprep.subr.bf16.mxu0 0
        %4959 = vmatpush2.bf16.msra.mxu0 %v4136
        %4960 = vmatprep.subr.bf16.mxu0 0
        %4961 = vmatpush2.bf16.msra.mxu0 %v4135
        %4962 = vmatprep.subr.bf16.mxu0 0
        %4963 = vmatpush2.bf16.msra.mxu0 %v4134
        %4964 = vmatprep.subr.bf16.mxu0 0
        %4965 = vmatpush2.bf16.msra.mxu0 %v4133
        %4966 = vmatprep.subr.bf16.mxu0 0
        %4967 = vmatpush2.bf16.msra.mxu0 %v4132
        %4968 = vmatprep.mubr.bf16.mxu0 %v2363
        %4969 = vmatmul.mubr.bf16.gmra.mxu0 %v2359
        %v4970 = vpop.f32.mrf.mxu0
        %v4971 = vadd.f32 %v4930, %v4970
        %v4972 = vpop.f32.mrf.mxu0
        %v4973 = vpop.f32.mrf.mxu0
        %v4974 = vadd.f32 %v4933, %v4973
        %v4975 = vpop.f32.mrf.mxu0
        %4976 = vdwg.mxu0
        %4977 = vmatprep.subr.bf16.mxu0 0
        %4978 = vmatpush1.bf16.msra.mxu0 %v4147
        %4979 = vmatprep.subr.bf16.mxu0 0
        %4980 = vmatpush1.bf16.msra.mxu0 %v4146
        %4981 = vmatprep.subr.bf16.mxu0 0
        %4982 = vmatpush1.bf16.msra.mxu0 %v4145
        %4983 = vmatprep.subr.bf16.mxu0 0
        %4984 = vmatpush1.bf16.msra.mxu0 %v4144
        %4985 = vmatprep.subr.bf16.mxu0 0
        %4986 = vmatpush1.bf16.msra.mxu0 %v4143
        %4987 = vmatprep.subr.bf16.mxu0 0
        %4988 = vmatpush1.bf16.msra.mxu0 %v4142
        %4989 = vmatprep.subr.bf16.mxu0 0
        %4990 = vmatpush1.bf16.msra.mxu0 %v4141
        %4991 = vmatprep.subr.bf16.mxu0 0
        %4992 = vmatpush1.bf16.msra.mxu0 %v4140
        %4993 = vmatprep.subr.bf16.mxu0 0
        %4994 = vmatpush2.bf16.msra.mxu0 %v4155
        %4995 = vmatprep.subr.bf16.mxu0 0
        %4996 = vmatpush2.bf16.msra.mxu0 %v4154
        %4997 = vmatprep.subr.bf16.mxu0 0
        %4998 = vmatpush2.bf16.msra.mxu0 %v4153
        %4999 = vmatprep.subr.bf16.mxu0 0
        %5000 = vmatpush2.bf16.msra.mxu0 %v4152
        %5001 = vmatprep.subr.bf16.mxu0 0
        %5002 = vmatpush2.bf16.msra.mxu0 %v4151
        %5003 = vmatprep.subr.bf16.mxu0 0
        %5004 = vmatpush2.bf16.msra.mxu0 %v4150
        %5005 = vmatprep.subr.bf16.mxu0 0
        %5006 = vmatpush2.bf16.msra.mxu0 %v4149
        %5007 = vmatprep.subr.bf16.mxu0 0
        %5008 = vmatpush2.bf16.msra.mxu0 %v4148
        %5009 = vmatprep.mubr.bf16.mxu0 %v2371
        %5010 = vmatmul.mubr.bf16.gmra.mxu0 %v2367
        %v5011 = vpop.f32.mrf.mxu0
        %v5012 = vadd.f32 %v4971, %v5011
        %v5013 = vpop.f32.mrf.mxu0
        %v5014 = vpop.f32.mrf.mxu0
        %v5015 = vadd.f32 %v4974, %v5014
        %v5016 = vpop.f32.mrf.mxu0
        %5017 = vdwg.mxu0
        %5018 = vmatprep.subr.bf16.mxu0 0
        %5019 = vmatpush1.bf16.msra.mxu0 %v4163
        %5020 = vmatprep.subr.bf16.mxu0 0
        %5021 = vmatpush1.bf16.msra.mxu0 %v4162
        %5022 = vmatprep.subr.bf16.mxu0 0
        %5023 = vmatpush1.bf16.msra.mxu0 %v4161
        %5024 = vmatprep.subr.bf16.mxu0 0
        %5025 = vmatpush1.bf16.msra.mxu0 %v4160
        %5026 = vmatprep.subr.bf16.mxu0 0
        %5027 = vmatpush1.bf16.msra.mxu0 %v4159
        %5028 = vmatprep.subr.bf16.mxu0 0
        %5029 = vmatpush1.bf16.msra.mxu0 %v4158
        %5030 = vmatprep.subr.bf16.mxu0 0
        %5031 = vmatpush1.bf16.msra.mxu0 %v4157
        %5032 = vmatprep.subr.bf16.mxu0 0
        %5033 = vmatpush1.bf16.msra.mxu0 %v4156
        %5034 = vmatprep.subr.bf16.mxu0 0
        %5035 = vmatpush2.bf16.msra.mxu0 %v4171
        %5036 = vmatprep.subr.bf16.mxu0 0
        %5037 = vmatpush2.bf16.msra.mxu0 %v4170
        %5038 = vmatprep.subr.bf16.mxu0 0
        %5039 = vmatpush2.bf16.msra.mxu0 %v4169
        %5040 = vmatprep.subr.bf16.mxu0 0
        %5041 = vmatpush2.bf16.msra.mxu0 %v4168
        %5042 = vmatprep.subr.bf16.mxu0 0
        %5043 = vmatpush2.bf16.msra.mxu0 %v4167
        %5044 = vmatprep.subr.bf16.mxu0 0
        %5045 = vmatpush2.bf16.msra.mxu0 %v4166
        %5046 = vmatprep.subr.bf16.mxu0 0
        %5047 = vmatpush2.bf16.msra.mxu0 %v4165
        %5048 = vmatprep.subr.bf16.mxu0 0
        %5049 = vmatpush2.bf16.msra.mxu0 %v4164
        %5050 = vmatprep.mubr.bf16.mxu0 %v2379
        %5051 = vmatmul.mubr.bf16.gmra.mxu0 %v2375
        %v5052 = vpop.f32.mrf.mxu0
        %v5053 = vadd.f32 %v5012, %v5052
        %v5054 = vpop.f32.mrf.mxu0
        %v5055 = vpop.f32.mrf.mxu0
        %v5056 = vadd.f32 %v5015, %v5055
        %v5057 = vpop.f32.mrf.mxu0
        %5058 = vdwg.mxu0
        %5059 = vmatprep.subr.bf16.mxu0 0
        %5060 = vmatpush1.bf16.msra.mxu0 %v4179
        %5061 = vmatprep.subr.bf16.mxu0 0
        %5062 = vmatpush1.bf16.msra.mxu0 %v4178
        %5063 = vmatprep.subr.bf16.mxu0 0
        %5064 = vmatpush1.bf16.msra.mxu0 %v4177
        %5065 = vmatprep.subr.bf16.mxu0 0
        %5066 = vmatpush1.bf16.msra.mxu0 %v4176
        %5067 = vmatprep.subr.bf16.mxu0 0
        %5068 = vmatpush1.bf16.msra.mxu0 %v4175
        %5069 = vmatprep.subr.bf16.mxu0 0
        %5070 = vmatpush1.bf16.msra.mxu0 %v4174
        %5071 = vmatprep.subr.bf16.mxu0 0
        %5072 = vmatpush1.bf16.msra.mxu0 %v4173
        %5073 = vmatprep.subr.bf16.mxu0 0
        %5074 = vmatpush1.bf16.msra.mxu0 %v4172
        %5075 = vmatprep.subr.bf16.mxu0 0
        %5076 = vmatpush2.bf16.msra.mxu0 %v4187
        %5077 = vmatprep.subr.bf16.mxu0 0
        %5078 = vmatpush2.bf16.msra.mxu0 %v4186
        %5079 = vmatprep.subr.bf16.mxu0 0
        %5080 = vmatpush2.bf16.msra.mxu0 %v4185
        %5081 = vmatprep.subr.bf16.mxu0 0
        %5082 = vmatpush2.bf16.msra.mxu0 %v4184
        %5083 = vmatprep.subr.bf16.mxu0 0
        %5084 = vmatpush2.bf16.msra.mxu0 %v4183
        %5085 = vmatprep.subr.bf16.mxu0 0
        %5086 = vmatpush2.bf16.msra.mxu0 %v4182
        %5087 = vmatprep.subr.bf16.mxu0 0
        %5088 = vmatpush2.bf16.msra.mxu0 %v4181
        %5089 = vmatprep.subr.bf16.mxu0 0
        %5090 = vmatpush2.bf16.msra.mxu0 %v4180
        %5091 = vmatprep.mubr.bf16.mxu0 %v2387
        %5092 = vmatmul.mubr.bf16.gmra.mxu0 %v2383
        %v5093 = vpop.f32.mrf.mxu0
        %v5094 = vadd.f32 %v5053, %v5093
        %v5095 = vpop.f32.mrf.mxu0
        %v5096 = vpop.f32.mrf.mxu0
        %v5097 = vadd.f32 %v5056, %v5096
        %v5098 = vpop.f32.mrf.mxu0
        %5099 = vdwg.mxu0
        %v5100 = vmax.f32 %v5094, 0.0
        %v5101 = vmax.f32 %v5097, 0.0
        %v5102 = vsel %vm2260, %v5100, 0.0
        %5103 = vadd.xlane.f32.xlu0 %v5102
        %v5104 = vpop.xlane.xlu0 %5103
        %v5105 = vsel %vm2260, %v5101, 0.0
        %5106 = vadd.xlane.f32.xlu0 %v5105
        %v5107 = vpop.xlane.xlu0 %5106
        %v5108 = vrcp.pop 64.0
        %v5109 = vmul.f32 %v5104, %v5108
        %v5110 = vmul.f32 %v5107, %v5108
        %v5111 = vsub.f32 %v5100, %v5109
        %v5112 = vsub.f32 %v5101, %v5110
        %v5113 = vmul.f32 %v5111, %v5111
        %v5114 = vmul.f32 %v5112, %v5112
        %v5115 = vsel %vm2260, %v5113, 0.0
        %5116 = vadd.xlane.f32.xlu0 %v5115
        %v5117 = vpop.xlane.xlu0 %5116
        %v5118 = vsel %vm2260, %v5114, 0.0
        %5119 = vadd.xlane.f32.xlu0 %v5118
        %v5120 = vpop.xlane.xlu0 %5119
        %v5121 = vmul.f32 %v5117, %v5108
        %v5122 = vmul.f32 %v5120, %v5108
        %v5123 = vadd.f32 %v5121, 1e-06
        %v5124 = vadd.f32 %v5122, 1e-06
        %v5125 = vrsqrt.pop %v5123
        %v5126 = vrsqrt.pop %v5124
        %v5127 = vmul.f32 %v5111, %v5125
        %v5128 = vmul.f32 %v5112, %v5126
        %v5129 = vld [vmem:[%s3] sm:$0x1]
        %v5131 = vlaneseq
        %v5132 = vshrl.u32 %v5131, 7
        %v5133 = vsub.s32 0, %v5132
        %v5134 = vrot.slane %v5129, %v5133
        %v5136 = vmul.f32 %v5127, %v5134
        %v5137 = vmul.f32 %v5128, %v5134
        %v5138 = vld [vmem:[%s4] sm:$0x1]
        %v5140 = vlaneseq
        %v5141 = vshrl.u32 %v5140, 7
        %v5142 = vsub.s32 0, %v5141
        %v5143 = vrot.slane %v5138, %v5142
        %v5145 = vadd.f32 %v5136, %v5143
        %v5146 = vadd.f32 %v5137, %v5143
        %v5147 = vld [vmem:[%s5] sm:$0xf]
        %v5148 = vld [vmem:[%s5 + $0x4] sm:$0xf]
        %v5149 = vld [vmem:[%s5 + $0x8] sm:$0xf]
        %v5150 = vld [vmem:[%s5 + $0xc] sm:$0xf]
        %v5151 = vld [vmem:[%s5 + $0x10] sm:$0xf]
        %v5152 = vld [vmem:[%s5 + $0x14] sm:$0xf]
        %v5153 = vld [vmem:[%s5 + $0x18] sm:$0xf]
        %v5154 = vld [vmem:[%s5 + $0x1c] sm:$0xf]
        %v5283 = vunpack.c.l.b16 %v404
        %v5284 = vunpack.c.l.b16 %v405
        %v5285 = vunpack.c.l.b16 %v406
        %v5286 = vunpack.c.l.b16 %v407
        %v5287 = vunpack.c.l.b16 %v408
        %v5288 = vunpack.c.l.b16 %v409
        %v5289 = vunpack.c.l.b16 %v410
        %v5290 = vunpack.c.l.b16 %v411
        %v5291 = vunpack.c.l.b16 %v412
        %v5292 = vunpack.c.l.b16 %v413
        %v5293 = vunpack.c.l.b16 %v414
        %v5294 = vunpack.c.l.b16 %v415
        %v5295 = vunpack.c.l.b16 %v416
        %v5296 = vunpack.c.l.b16 %v417
        %v5297 = vunpack.c.l.b16 %v418
        %v5298 = vunpack.c.l.b16 %v419
        %v5299 = vunpack.c.l.b16 %v420
        %v5300 = vunpack.c.l.b16 %v421
        %v5301 = vunpack.c.l.b16 %v422
        %v5302 = vunpack.c.l.b16 %v423
        %v5303 = vunpack.c.l.b16 %v424
        %v5304 = vunpack.c.l.b16 %v425
        %v5305 = vunpack.c.l.b16 %v426
        %v5306 = vunpack.c.l.b16 %v427
        %v5307 = vunpack.c.l.b16 %v428
        %v5308 = vunpack.c.l.b16 %v429
        %v5309 = vunpack.c.l.b16 %v430
        %v5310 = vunpack.c.l.b16 %v431
        %v5311 = vunpack.c.l.b16 %v432
        %v5312 = vunpack.c.l.b16 %v433
        %v5313 = vunpack.c.l.b16 %v434
        %v5314 = vunpack.c.l.b16 %v435
        %v5315 = vunpack.c.l.b16 %v436
        %v5316 = vunpack.c.l.b16 %v437
        %v5317 = vunpack.c.l.b16 %v438
        %v5318 = vunpack.c.l.b16 %v439
        %v5319 = vunpack.c.l.b16 %v440
        %v5320 = vunpack.c.l.b16 %v441
        %v5321 = vunpack.c.l.b16 %v442
        %v5322 = vunpack.c.l.b16 %v443
        %v5323 = vunpack.c.l.b16 %v444
        %v5324 = vunpack.c.l.b16 %v445
        %v5325 = vunpack.c.l.b16 %v446
        %v5326 = vunpack.c.l.b16 %v447
        %v5327 = vunpack.c.l.b16 %v448
        %v5328 = vunpack.c.l.b16 %v449
        %v5329 = vunpack.c.l.b16 %v450
        %v5330 = vunpack.c.l.b16 %v451
        %v5331 = vunpack.c.l.b16 %v452
        %v5332 = vunpack.c.l.b16 %v453
        %v5333 = vunpack.c.l.b16 %v454
        %v5334 = vunpack.c.l.b16 %v455
        %v5335 = vunpack.c.l.b16 %v456
        %v5336 = vunpack.c.l.b16 %v457
        %v5337 = vunpack.c.l.b16 %v458
        %v5338 = vunpack.c.l.b16 %v459
        %v5339 = vunpack.c.l.b16 %v460
        %v5340 = vunpack.c.l.b16 %v461
        %v5341 = vunpack.c.l.b16 %v462
        %v5342 = vunpack.c.l.b16 %v463
        %v5343 = vunpack.c.l.b16 %v464
        %v5344 = vunpack.c.l.b16 %v465
        %v5345 = vunpack.c.l.b16 %v466
        %v5346 = vunpack.c.l.b16 %v467
        %v5347 = vunpack.c.l.b16 %v468
        %v5348 = vunpack.c.l.b16 %v469
        %v5349 = vunpack.c.l.b16 %v470
        %v5350 = vunpack.c.l.b16 %v471
        %v5351 = vunpack.c.l.b16 %v472
        %v5352 = vunpack.c.l.b16 %v473
        %v5353 = vunpack.c.l.b16 %v474
        %v5354 = vunpack.c.l.b16 %v475
        %v5355 = vunpack.c.l.b16 %v476
        %v5356 = vunpack.c.l.b16 %v477
        %v5357 = vunpack.c.l.b16 %v478
        %v5358 = vunpack.c.l.b16 %v479
        %v5359 = vunpack.c.l.b16 %v480
        %v5360 = vunpack.c.l.b16 %v481
        %v5361 = vunpack.c.l.b16 %v482
        %v5362 = vunpack.c.l.b16 %v483
        %v5363 = vunpack.c.l.b16 %v484
        %v5364 = vunpack.c.l.b16 %v485
        %v5365 = vunpack.c.l.b16 %v486
        %v5366 = vunpack.c.l.b16 %v487
        %v5367 = vunpack.c.l.b16 %v488
        %v5368 = vunpack.c.l.b16 %v489
        %v5369 = vunpack.c.l.b16 %v490
        %v5370 = vunpack.c.l.b16 %v491
        %v5371 = vunpack.c.l.b16 %v492
        %v5372 = vunpack.c.l.b16 %v493
        %v5373 = vunpack.c.l.b16 %v494
        %v5374 = vunpack.c.l.b16 %v495
        %v5375 = vunpack.c.l.b16 %v496
        %v5376 = vunpack.c.l.b16 %v497
        %v5377 = vunpack.c.l.b16 %v498
        %v5378 = vunpack.c.l.b16 %v499
        %v5379 = vunpack.c.l.b16 %v500
        %v5380 = vunpack.c.l.b16 %v501
        %v5381 = vunpack.c.l.b16 %v502
        %v5382 = vunpack.c.l.b16 %v503
        %v5383 = vunpack.c.l.b16 %v504
        %v5384 = vunpack.c.l.b16 %v505
        %v5385 = vunpack.c.l.b16 %v506
        %v5386 = vunpack.c.l.b16 %v507
        %v5387 = vunpack.c.l.b16 %v508
        %v5388 = vunpack.c.l.b16 %v509
        %v5389 = vunpack.c.l.b16 %v510
        %v5390 = vunpack.c.l.b16 %v511
        %v5391 = vunpack.c.l.b16 %v512
        %v5392 = vunpack.c.l.b16 %v513
        %v5393 = vunpack.c.l.b16 %v514
        %v5394 = vunpack.c.l.b16 %v515
        %v5395 = vunpack.c.l.b16 %v516
        %v5396 = vunpack.c.l.b16 %v517
        %v5397 = vunpack.c.l.b16 %v518
        %v5398 = vunpack.c.l.b16 %v519
        %v5399 = vunpack.c.l.b16 %v520
        %v5400 = vunpack.c.l.b16 %v521
        %v5401 = vunpack.c.l.b16 %v522
        %v5402 = vunpack.c.l.b16 %v523
        %v5403 = vunpack.c.l.b16 %v524
        %v5404 = vunpack.c.l.b16 %v525
        %v5405 = vunpack.c.l.b16 %v526
        %v5406 = vunpack.c.l.b16 %v527
        %v5407 = vunpack.c.l.b16 %v528
        %v5408 = vunpack.c.l.b16 %v529
        %v5409 = vunpack.c.l.b16 %v530
        %v5410 = vunpack.c.l.b16 %v531
        %v5411 = vpack.c.b16 %v5284, %v5283
        %v5412 = vpack.c.b16 %v5286, %v5285
        %v5413 = vpack.c.b16 %v5288, %v5287
        %v5414 = vpack.c.b16 %v5290, %v5289
        %v5415 = vpack.c.b16 %v5292, %v5291
        %v5416 = vpack.c.b16 %v5294, %v5293
        %v5417 = vpack.c.b16 %v5296, %v5295
        %v5418 = vpack.c.b16 %v5298, %v5297
        %v5419 = vpack.c.b16 %v5300, %v5299
        %v5420 = vpack.c.b16 %v5302, %v5301
        %v5421 = vpack.c.b16 %v5304, %v5303
        %v5422 = vpack.c.b16 %v5306, %v5305
        %v5423 = vpack.c.b16 %v5308, %v5307
        %v5424 = vpack.c.b16 %v5310, %v5309
        %v5425 = vpack.c.b16 %v5312, %v5311
        %v5426 = vpack.c.b16 %v5314, %v5313
        %v5427 = vpack.c.b16 %v5316, %v5315
        %v5428 = vpack.c.b16 %v5318, %v5317
        %v5429 = vpack.c.b16 %v5320, %v5319
        %v5430 = vpack.c.b16 %v5322, %v5321
        %v5431 = vpack.c.b16 %v5324, %v5323
        %v5432 = vpack.c.b16 %v5326, %v5325
        %v5433 = vpack.c.b16 %v5328, %v5327
        %v5434 = vpack.c.b16 %v5330, %v5329
        %v5435 = vpack.c.b16 %v5332, %v5331
        %v5436 = vpack.c.b16 %v5334, %v5333
        %v5437 = vpack.c.b16 %v5336, %v5335
        %v5438 = vpack.c.b16 %v5338, %v5337
        %v5439 = vpack.c.b16 %v5340, %v5339
        %v5440 = vpack.c.b16 %v5342, %v5341
        %v5441 = vpack.c.b16 %v5344, %v5343
        %v5442 = vpack.c.b16 %v5346, %v5345
        %v5443 = vpack.c.b16 %v5348, %v5347
        %v5444 = vpack.c.b16 %v5350, %v5349
        %v5445 = vpack.c.b16 %v5352, %v5351
        %v5446 = vpack.c.b16 %v5354, %v5353
        %v5447 = vpack.c.b16 %v5356, %v5355
        %v5448 = vpack.c.b16 %v5358, %v5357
        %v5449 = vpack.c.b16 %v5360, %v5359
        %v5450 = vpack.c.b16 %v5362, %v5361
        %v5451 = vpack.c.b16 %v5364, %v5363
        %v5452 = vpack.c.b16 %v5366, %v5365
        %v5453 = vpack.c.b16 %v5368, %v5367
        %v5454 = vpack.c.b16 %v5370, %v5369
        %v5455 = vpack.c.b16 %v5372, %v5371
        %v5456 = vpack.c.b16 %v5374, %v5373
        %v5457 = vpack.c.b16 %v5376, %v5375
        %v5458 = vpack.c.b16 %v5378, %v5377
        %v5459 = vpack.c.b16 %v5380, %v5379
        %v5460 = vpack.c.b16 %v5382, %v5381
        %v5461 = vpack.c.b16 %v5384, %v5383
        %v5462 = vpack.c.b16 %v5386, %v5385
        %v5463 = vpack.c.b16 %v5388, %v5387
        %v5464 = vpack.c.b16 %v5390, %v5389
        %v5465 = vpack.c.b16 %v5392, %v5391
        %v5466 = vpack.c.b16 %v5394, %v5393
        %v5467 = vpack.c.b16 %v5396, %v5395
        %v5468 = vpack.c.b16 %v5398, %v5397
        %v5469 = vpack.c.b16 %v5400, %v5399
        %v5470 = vpack.c.b16 %v5402, %v5401
        %v5471 = vpack.c.b16 %v5404, %v5403
        %v5472 = vpack.c.b16 %v5406, %v5405
        %v5473 = vpack.c.b16 %v5408, %v5407
        %v5474 = vpack.c.b16 %v5410, %v5409
        %v5483 = vunpack.c.l.b16 %v5147
        %v5484 = vunpack.c.l.b16 %v5148
        %v5485 = vunpack.c.l.b16 %v5149
        %v5486 = vunpack.c.l.b16 %v5150
        %v5487 = vunpack.c.l.b16 %v5151
        %v5488 = vunpack.c.l.b16 %v5152
        %v5489 = vunpack.c.l.b16 %v5153
        %v5490 = vunpack.c.l.b16 %v5154
        %v5491 = vpack.c.b16 %v5484, %v5483
        %v5492 = vpack.c.b16 %v5486, %v5485
        %v5493 = vpack.c.b16 %v5488, %v5487
        %v5494 = vpack.c.b16 %v5490, %v5489
        %v5500 = vsel %vm2260, %v5411, 0
        %v5503 = vsel %vm2260, %v5412, 0
        %v5506 = vsel %vm2260, %v5413, 0
        %v5509 = vsel %vm2260, %v5414, 0
        %v5512 = vsel %vm2260, %v5415, 0
        %v5515 = vsel %vm2260, %v5416, 0
        %v5518 = vsel %vm2260, %v5417, 0
        %v5521 = vsel %vm2260, %v5418, 0
        %v5524 = vsel %vm2260, %v5419, 0
        %v5527 = vsel %vm2260, %v5420, 0
        %v5530 = vsel %vm2260, %v5421, 0
        %v5533 = vsel %vm2260, %v5422, 0
        %v5536 = vsel %vm2260, %v5423, 0
        %v5539 = vsel %vm2260, %v5424, 0
        %v5542 = vsel %vm2260, %v5425, 0
        %v5545 = vsel %vm2260, %v5426, 0
        %v5548 = vsel %vm2260, %v5427, 0
        %v5551 = vsel %vm2260, %v5428, 0
        %v5554 = vsel %vm2260, %v5429, 0
        %v5557 = vsel %vm2260, %v5430, 0
        %v5560 = vsel %vm2260, %v5431, 0
        %v5563 = vsel %vm2260, %v5432, 0
        %v5566 = vsel %vm2260, %v5433, 0
        %v5569 = vsel %vm2260, %v5434, 0
        %v5572 = vsel %vm2260, %v5435, 0
        %v5575 = vsel %vm2260, %v5436, 0
        %v5578 = vsel %vm2260, %v5437, 0
        %v5581 = vsel %vm2260, %v5438, 0
        %v5584 = vsel %vm2260, %v5439, 0
        %v5587 = vsel %vm2260, %v5440, 0
        %v5590 = vsel %vm2260, %v5441, 0
        %v5593 = vsel %vm2260, %v5442, 0
        %v5596 = vsel %vm2260, %v5443, 0
        %v5599 = vsel %vm2260, %v5444, 0
        %v5602 = vsel %vm2260, %v5445, 0
        %v5605 = vsel %vm2260, %v5446, 0
        %v5608 = vsel %vm2260, %v5447, 0
        %v5611 = vsel %vm2260, %v5448, 0
        %v5614 = vsel %vm2260, %v5449, 0
        %v5617 = vsel %vm2260, %v5450, 0
        %v5620 = vsel %vm2260, %v5451, 0
        %v5623 = vsel %vm2260, %v5452, 0
        %v5626 = vsel %vm2260, %v5453, 0
        %v5629 = vsel %vm2260, %v5454, 0
        %v5632 = vsel %vm2260, %v5455, 0
        %v5635 = vsel %vm2260, %v5456, 0
        %v5638 = vsel %vm2260, %v5457, 0
        %v5641 = vsel %vm2260, %v5458, 0
        %v5644 = vsel %vm2260, %v5459, 0
        %v5647 = vsel %vm2260, %v5460, 0
        %v5650 = vsel %vm2260, %v5461, 0
        %v5653 = vsel %vm2260, %v5462, 0
        %v5656 = vsel %vm2260, %v5463, 0
        %v5659 = vsel %vm2260, %v5464, 0
        %v5662 = vsel %vm2260, %v5465, 0
        %v5665 = vsel %vm2260, %v5466, 0
        %v5668 = vsel %vm2260, %v5467, 0
        %v5671 = vsel %vm2260, %v5468, 0
        %v5674 = vsel %vm2260, %v5469, 0
        %v5677 = vsel %vm2260, %v5470, 0
        %v5680 = vsel %vm2260, %v5471, 0
        %v5683 = vsel %vm2260, %v5472, 0
        %v5686 = vsel %vm2260, %v5473, 0
        %v5689 = vsel %vm2260, %v5474, 0
        %5691 = vmatprep.subr.bf16.mxu0 0
        %5692 = vmatpush1.bf16.msra.mxu0 0
        %5693 = vmatprep.subr.bf16.mxu0 0
        %5694 = vmatpush1.bf16.msra.mxu0 0
        %5695 = vmatprep.subr.bf16.mxu0 0
        %5696 = vmatpush1.bf16.msra.mxu0 0
        %5697 = vmatprep.subr.bf16.mxu0 0
        %5698 = vmatpush1.bf16.msra.mxu0 0
        %5699 = vmatprep.subr.bf16.mxu0 0
        %5700 = vmatpush1.bf16.msra.mxu0 %v5494
        %5701 = vmatprep.subr.bf16.mxu0 0
        %5702 = vmatpush1.bf16.msra.mxu0 %v5493
        %5703 = vmatprep.subr.bf16.mxu0 0
        %5704 = vmatpush1.bf16.msra.mxu0 %v5492
        %5705 = vmatprep.subr.bf16.mxu0 0
        %5706 = vmatpush1.bf16.msra.mxu0 %v5491
        %5707 = vmatprep.subr.bf16.mxu0 0
        %5708 = vmatpush2.bf16.msra.mxu0 0
        %5709 = vmatprep.subr.bf16.mxu0 0
        %5710 = vmatpush2.bf16.msra.mxu0 0
        %5711 = vmatprep.subr.bf16.mxu0 0
        %5712 = vmatpush2.bf16.msra.mxu0 0
        %5713 = vmatprep.subr.bf16.mxu0 0
        %5714 = vmatpush2.bf16.msra.mxu0 0
        %5715 = vmatprep.subr.bf16.mxu0 0
        %5716 = vmatpush2.bf16.msra.mxu0 0
        %5717 = vmatprep.subr.bf16.mxu0 0
        %5718 = vmatpush2.bf16.msra.mxu0 0
        %5719 = vmatprep.subr.bf16.mxu0 0
        %5720 = vmatpush2.bf16.msra.mxu0 0
        %5721 = vmatprep.subr.bf16.mxu0 0
        %5722 = vmatpush2.bf16.msra.mxu0 0
        %5723 = vmatprep.mubr.bf16.mxu0 0
        %5724 = vmatmul.mubr.bf16.gmra.mxu0 %v5500
        %v5725 = vpop.f32.mrf.mxu0
        %v5726 = vadd.f32 0.0, %v5725
        %v5727 = vpop.f32.mrf.mxu0
        %v5728 = vpop.f32.mrf.mxu0
        %v5729 = vadd.f32 0.0, %v5728
        %v5730 = vpop.f32.mrf.mxu0
        %5731 = vmatprep.mubr.bf16.mxu0 0
        %5732 = vmatmul.mubr.bf16.gmra.mxu0 %v5503
        %v5733 = vpop.f32.mrf.mxu0
        %v5734 = vadd.f32 0.0, %v5733
        %v5735 = vpop.f32.mrf.mxu0
        %v5736 = vpop.f32.mrf.mxu0
        %v5737 = vadd.f32 0.0, %v5736
        %v5738 = vpop.f32.mrf.mxu0
        %5739 = vmatprep.mubr.bf16.mxu0 0
        %5740 = vmatmul.mubr.bf16.gmra.mxu0 %v5506
        %v5741 = vpop.f32.mrf.mxu0
        %v5742 = vadd.f32 0.0, %v5741
        %v5743 = vpop.f32.mrf.mxu0
        %v5744 = vpop.f32.mrf.mxu0
        %v5745 = vadd.f32 0.0, %v5744
        %v5746 = vpop.f32.mrf.mxu0
        %5747 = vmatprep.mubr.bf16.mxu0 0
        %5748 = vmatmul.mubr.bf16.gmra.mxu0 %v5509
        %v5749 = vpop.f32.mrf.mxu0
        %v5750 = vadd.f32 0.0, %v5749
        %v5751 = vpop.f32.mrf.mxu0
        %v5752 = vpop.f32.mrf.mxu0
        %v5753 = vadd.f32 0.0, %v5752
        %v5754 = vpop.f32.mrf.mxu0
        %5755 = vmatprep.mubr.bf16.mxu0 0
        %5756 = vmatmul.mubr.bf16.gmra.mxu0 %v5512
        %v5757 = vpop.f32.mrf.mxu0
        %v5758 = vadd.f32 0.0, %v5757
        %v5759 = vpop.f32.mrf.mxu0
        %v5760 = vpop.f32.mrf.mxu0
        %v5761 = vadd.f32 0.0, %v5760
        %v5762 = vpop.f32.mrf.mxu0
        %5763 = vmatprep.mubr.bf16.mxu0 0
        %5764 = vmatmul.mubr.bf16.gmra.mxu0 %v5515
        %v5765 = vpop.f32.mrf.mxu0
        %v5766 = vadd.f32 0.0, %v5765
        %v5767 = vpop.f32.mrf.mxu0
        %v5768 = vpop.f32.mrf.mxu0
        %v5769 = vadd.f32 0.0, %v5768
        %v5770 = vpop.f32.mrf.mxu0
        %5771 = vmatprep.mubr.bf16.mxu0 0
        %5772 = vmatmul.mubr.bf16.gmra.mxu0 %v5518
        %v5773 = vpop.f32.mrf.mxu0
        %v5774 = vadd.f32 0.0, %v5773
        %v5775 = vpop.f32.mrf.mxu0
        %v5776 = vpop.f32.mrf.mxu0
        %v5777 = vadd.f32 0.0, %v5776
        %v5778 = vpop.f32.mrf.mxu0
        %5779 = vmatprep.mubr.bf16.mxu0 0
        %5780 = vmatmul.mubr.bf16.gmra.mxu0 %v5521
        %v5781 = vpop.f32.mrf.mxu0
        %v5782 = vadd.f32 0.0, %v5781
        %v5783 = vpop.f32.mrf.mxu0
        %v5784 = vpop.f32.mrf.mxu0
        %v5785 = vadd.f32 0.0, %v5784
        %v5786 = vpop.f32.mrf.mxu0
        %5787 = vmatprep.mubr.bf16.mxu0 0
        %5788 = vmatmul.mubr.bf16.gmra.mxu0 %v5524
        %v5789 = vpop.f32.mrf.mxu0
        %v5790 = vadd.f32 0.0, %v5789
        %v5791 = vpop.f32.mrf.mxu0
        %v5792 = vpop.f32.mrf.mxu0
        %v5793 = vadd.f32 0.0, %v5792
        %v5794 = vpop.f32.mrf.mxu0
        %5795 = vmatprep.mubr.bf16.mxu0 0
        %5796 = vmatmul.mubr.bf16.gmra.mxu0 %v5527
        %v5797 = vpop.f32.mrf.mxu0
        %v5798 = vadd.f32 0.0, %v5797
        %v5799 = vpop.f32.mrf.mxu0
        %v5800 = vpop.f32.mrf.mxu0
        %v5801 = vadd.f32 0.0, %v5800
        %v5802 = vpop.f32.mrf.mxu0
        %5803 = vmatprep.mubr.bf16.mxu0 0
        %5804 = vmatmul.mubr.bf16.gmra.mxu0 %v5530
        %v5805 = vpop.f32.mrf.mxu0
        %v5806 = vadd.f32 0.0, %v5805
        %v5807 = vpop.f32.mrf.mxu0
        %v5808 = vpop.f32.mrf.mxu0
        %v5809 = vadd.f32 0.0, %v5808
        %v5810 = vpop.f32.mrf.mxu0
        %5811 = vmatprep.mubr.bf16.mxu0 0
        %5812 = vmatmul.mubr.bf16.gmra.mxu0 %v5533
        %v5813 = vpop.f32.mrf.mxu0
        %v5814 = vadd.f32 0.0, %v5813
        %v5815 = vpop.f32.mrf.mxu0
        %v5816 = vpop.f32.mrf.mxu0
        %v5817 = vadd.f32 0.0, %v5816
        %v5818 = vpop.f32.mrf.mxu0
        %5819 = vmatprep.mubr.bf16.mxu0 0
        %5820 = vmatmul.mubr.bf16.gmra.mxu0 %v5536
        %v5821 = vpop.f32.mrf.mxu0
        %v5822 = vadd.f32 0.0, %v5821
        %v5823 = vpop.f32.mrf.mxu0
        %v5824 = vpop.f32.mrf.mxu0
        %v5825 = vadd.f32 0.0, %v5824
        %v5826 = vpop.f32.mrf.mxu0
        %5827 = vmatprep.mubr.bf16.mxu0 0
        %5828 = vmatmul.mubr.bf16.gmra.mxu0 %v5539
        %v5829 = vpop.f32.mrf.mxu0
        %v5830 = vadd.f32 0.0, %v5829
        %v5831 = vpop.f32.mrf.mxu0
        %v5832 = vpop.f32.mrf.mxu0
        %v5833 = vadd.f32 0.0, %v5832
        %v5834 = vpop.f32.mrf.mxu0
        %5835 = vmatprep.mubr.bf16.mxu0 0
        %5836 = vmatmul.mubr.bf16.gmra.mxu0 %v5542
        %v5837 = vpop.f32.mrf.mxu0
        %v5838 = vadd.f32 0.0, %v5837
        %v5839 = vpop.f32.mrf.mxu0
        %v5840 = vpop.f32.mrf.mxu0
        %v5841 = vadd.f32 0.0, %v5840
        %v5842 = vpop.f32.mrf.mxu0
        %5843 = vmatprep.mubr.bf16.mxu0 0
        %5844 = vmatmul.mubr.bf16.gmra.mxu0 %v5545
        %v5845 = vpop.f32.mrf.mxu0
        %v5846 = vadd.f32 0.0, %v5845
        %v5847 = vpop.f32.mrf.mxu0
        %v5848 = vpop.f32.mrf.mxu0
        %v5849 = vadd.f32 0.0, %v5848
        %v5850 = vpop.f32.mrf.mxu0
        %5851 = vmatprep.mubr.bf16.mxu0 0
        %5852 = vmatmul.mubr.bf16.gmra.mxu0 %v5548
        %v5853 = vpop.f32.mrf.mxu0
        %v5854 = vadd.f32 0.0, %v5853
        %v5855 = vpop.f32.mrf.mxu0
        %v5856 = vpop.f32.mrf.mxu0
        %v5857 = vadd.f32 0.0, %v5856
        %v5858 = vpop.f32.mrf.mxu0
        %5859 = vmatprep.mubr.bf16.mxu0 0
        %5860 = vmatmul.mubr.bf16.gmra.mxu0 %v5551
        %v5861 = vpop.f32.mrf.mxu0
        %v5862 = vadd.f32 0.0, %v5861
        %v5863 = vpop.f32.mrf.mxu0
        %v5864 = vpop.f32.mrf.mxu0
        %v5865 = vadd.f32 0.0, %v5864
        %v5866 = vpop.f32.mrf.mxu0
        %5867 = vmatprep.mubr.bf16.mxu0 0
        %5868 = vmatmul.mubr.bf16.gmra.mxu0 %v5554
        %v5869 = vpop.f32.mrf.mxu0
        %v5870 = vadd.f32 0.0, %v5869
        %v5871 = vpop.f32.mrf.mxu0
        %v5872 = vpop.f32.mrf.mxu0
        %v5873 = vadd.f32 0.0, %v5872
        %v5874 = vpop.f32.mrf.mxu0
        %5875 = vmatprep.mubr.bf16.mxu0 0
        %5876 = vmatmul.mubr.bf16.gmra.mxu0 %v5557
        %v5877 = vpop.f32.mrf.mxu0
        %v5878 = vadd.f32 0.0, %v5877
        %v5879 = vpop.f32.mrf.mxu0
        %v5880 = vpop.f32.mrf.mxu0
        %v5881 = vadd.f32 0.0, %v5880
        %v5882 = vpop.f32.mrf.mxu0
        %5883 = vmatprep.mubr.bf16.mxu0 0
        %5884 = vmatmul.mubr.bf16.gmra.mxu0 %v5560
        %v5885 = vpop.f32.mrf.mxu0
        %v5886 = vadd.f32 0.0, %v5885
        %v5887 = vpop.f32.mrf.mxu0
        %v5888 = vpop.f32.mrf.mxu0
        %v5889 = vadd.f32 0.0, %v5888
        %v5890 = vpop.f32.mrf.mxu0
        %5891 = vmatprep.mubr.bf16.mxu0 0
        %5892 = vmatmul.mubr.bf16.gmra.mxu0 %v5563
        %v5893 = vpop.f32.mrf.mxu0
        %v5894 = vadd.f32 0.0, %v5893
        %v5895 = vpop.f32.mrf.mxu0
        %v5896 = vpop.f32.mrf.mxu0
        %v5897 = vadd.f32 0.0, %v5896
        %v5898 = vpop.f32.mrf.mxu0
        %5899 = vmatprep.mubr.bf16.mxu0 0
        %5900 = vmatmul.mubr.bf16.gmra.mxu0 %v5566
        %v5901 = vpop.f32.mrf.mxu0
        %v5902 = vadd.f32 0.0, %v5901
        %v5903 = vpop.f32.mrf.mxu0
        %v5904 = vpop.f32.mrf.mxu0
        %v5905 = vadd.f32 0.0, %v5904
        %v5906 = vpop.f32.mrf.mxu0
        %5907 = vmatprep.mubr.bf16.mxu0 0
        %5908 = vmatmul.mubr.bf16.gmra.mxu0 %v5569
        %v5909 = vpop.f32.mrf.mxu0
        %v5910 = vadd.f32 0.0, %v5909
        %v5911 = vpop.f32.mrf.mxu0
        %v5912 = vpop.f32.mrf.mxu0
        %v5913 = vadd.f32 0.0, %v5912
        %v5914 = vpop.f32.mrf.mxu0
        %5915 = vmatprep.mubr.bf16.mxu0 0
        %5916 = vmatmul.mubr.bf16.gmra.mxu0 %v5572
        %v5917 = vpop.f32.mrf.mxu0
        %v5918 = vadd.f32 0.0, %v5917
        %v5919 = vpop.f32.mrf.mxu0
        %v5920 = vpop.f32.mrf.mxu0
        %v5921 = vadd.f32 0.0, %v5920
        %v5922 = vpop.f32.mrf.mxu0
        %5923 = vmatprep.mubr.bf16.mxu0 0
        %5924 = vmatmul.mubr.bf16.gmra.mxu0 %v5575
        %v5925 = vpop.f32.mrf.mxu0
        %v5926 = vadd.f32 0.0, %v5925
        %v5927 = vpop.f32.mrf.mxu0
        %v5928 = vpop.f32.mrf.mxu0
        %v5929 = vadd.f32 0.0, %v5928
        %v5930 = vpop.f32.mrf.mxu0
        %5931 = vmatprep.mubr.bf16.mxu0 0
        %5932 = vmatmul.mubr.bf16.gmra.mxu0 %v5578
        %v5933 = vpop.f32.mrf.mxu0
        %v5934 = vadd.f32 0.0, %v5933
        %v5935 = vpop.f32.mrf.mxu0
        %v5936 = vpop.f32.mrf.mxu0
        %v5937 = vadd.f32 0.0, %v5936
        %v5938 = vpop.f32.mrf.mxu0
        %5939 = vmatprep.mubr.bf16.mxu0 0
        %5940 = vmatmul.mubr.bf16.gmra.mxu0 %v5581
        %v5941 = vpop.f32.mrf.mxu0
        %v5942 = vadd.f32 0.0, %v5941
        %v5943 = vpop.f32.mrf.mxu0
        %v5944 = vpop.f32.mrf.mxu0
        %v5945 = vadd.f32 0.0, %v5944
        %v5946 = vpop.f32.mrf.mxu0
        %5947 = vmatprep.mubr.bf16.mxu0 0
        %5948 = vmatmul.mubr.bf16.gmra.mxu0 %v5584
        %v5949 = vpop.f32.mrf.mxu0
        %v5950 = vadd.f32 0.0, %v5949
        %v5951 = vpop.f32.mrf.mxu0
        %v5952 = vpop.f32.mrf.mxu0
        %v5953 = vadd.f32 0.0, %v5952
        %v5954 = vpop.f32.mrf.mxu0
        %5955 = vmatprep.mubr.bf16.mxu0 0
        %5956 = vmatmul.mubr.bf16.gmra.mxu0 %v5587
        %v5957 = vpop.f32.mrf.mxu0
        %v5958 = vadd.f32 0.0, %v5957
        %v5959 = vpop.f32.mrf.mxu0
        %v5960 = vpop.f32.mrf.mxu0
        %v5961 = vadd.f32 0.0, %v5960
        %v5962 = vpop.f32.mrf.mxu0
        %5963 = vmatprep.mubr.bf16.mxu0 0
        %5964 = vmatmul.mubr.bf16.gmra.mxu0 %v5590
        %v5965 = vpop.f32.mrf.mxu0
        %v5966 = vadd.f32 0.0, %v5965
        %v5967 = vpop.f32.mrf.mxu0
        %v5968 = vpop.f32.mrf.mxu0
        %v5969 = vadd.f32 0.0, %v5968
        %v5970 = vpop.f32.mrf.mxu0
        %5971 = vmatprep.mubr.bf16.mxu0 0
        %5972 = vmatmul.mubr.bf16.gmra.mxu0 %v5593
        %v5973 = vpop.f32.mrf.mxu0
        %v5974 = vadd.f32 0.0, %v5973
        %v5975 = vpop.f32.mrf.mxu0
        %v5976 = vpop.f32.mrf.mxu0
        %v5977 = vadd.f32 0.0, %v5976
        %v5978 = vpop.f32.mrf.mxu0
        %5979 = vmatprep.mubr.bf16.mxu0 0
        %5980 = vmatmul.mubr.bf16.gmra.mxu0 %v5596
        %v5981 = vpop.f32.mrf.mxu0
        %v5982 = vadd.f32 0.0, %v5981
        %v5983 = vpop.f32.mrf.mxu0
        %v5984 = vpop.f32.mrf.mxu0
        %v5985 = vadd.f32 0.0, %v5984
        %v5986 = vpop.f32.mrf.mxu0
        %5987 = vmatprep.mubr.bf16.mxu0 0
        %5988 = vmatmul.mubr.bf16.gmra.mxu0 %v5599
        %v5989 = vpop.f32.mrf.mxu0
        %v5990 = vadd.f32 0.0, %v5989
        %v5991 = vpop.f32.mrf.mxu0
        %v5992 = vpop.f32.mrf.mxu0
        %v5993 = vadd.f32 0.0, %v5992
        %v5994 = vpop.f32.mrf.mxu0
        %5995 = vmatprep.mubr.bf16.mxu0 0
        %5996 = vmatmul.mubr.bf16.gmra.mxu0 %v5602
        %v5997 = vpop.f32.mrf.mxu0
        %v5998 = vadd.f32 0.0, %v5997
        %v5999 = vpop.f32.mrf.mxu0
        %v6000 = vpop.f32.mrf.mxu0
        %v6001 = vadd.f32 0.0, %v6000
        %v6002 = vpop.f32.mrf.mxu0
        %6003 = vmatprep.mubr.bf16.mxu0 0
        %6004 = vmatmul.mubr.bf16.gmra.mxu0 %v5605
        %v6005 = vpop.f32.mrf.mxu0
        %v6006 = vadd.f32 0.0, %v6005
        %v6007 = vpop.f32.mrf.mxu0
        %v6008 = vpop.f32.mrf.mxu0
        %v6009 = vadd.f32 0.0, %v6008
        %v6010 = vpop.f32.mrf.mxu0
        %6011 = vmatprep.mubr.bf16.mxu0 0
        %6012 = vmatmul.mubr.bf16.gmra.mxu0 %v5608
        %v6013 = vpop.f32.mrf.mxu0
        %v6014 = vadd.f32 0.0, %v6013
        %v6015 = vpop.f32.mrf.mxu0
        %v6016 = vpop.f32.mrf.mxu0
        %v6017 = vadd.f32 0.0, %v6016
        %v6018 = vpop.f32.mrf.mxu0
        %6019 = vmatprep.mubr.bf16.mxu0 0
        %6020 = vmatmul.mubr.bf16.gmra.mxu0 %v5611
        %v6021 = vpop.f32.mrf.mxu0
        %v6022 = vadd.f32 0.0, %v6021
        %v6023 = vpop.f32.mrf.mxu0
        %v6024 = vpop.f32.mrf.mxu0
        %v6025 = vadd.f32 0.0, %v6024
        %v6026 = vpop.f32.mrf.mxu0
        %6027 = vmatprep.mubr.bf16.mxu0 0
        %6028 = vmatmul.mubr.bf16.gmra.mxu0 %v5614
        %v6029 = vpop.f32.mrf.mxu0
        %v6030 = vadd.f32 0.0, %v6029
        %v6031 = vpop.f32.mrf.mxu0
        %v6032 = vpop.f32.mrf.mxu0
        %v6033 = vadd.f32 0.0, %v6032
        %v6034 = vpop.f32.mrf.mxu0
        %6035 = vmatprep.mubr.bf16.mxu0 0
        %6036 = vmatmul.mubr.bf16.gmra.mxu0 %v5617
        %v6037 = vpop.f32.mrf.mxu0
        %v6038 = vadd.f32 0.0, %v6037
        %v6039 = vpop.f32.mrf.mxu0
        %v6040 = vpop.f32.mrf.mxu0
        %v6041 = vadd.f32 0.0, %v6040
        %v6042 = vpop.f32.mrf.mxu0
        %6043 = vmatprep.mubr.bf16.mxu0 0
        %6044 = vmatmul.mubr.bf16.gmra.mxu0 %v5620
        %v6045 = vpop.f32.mrf.mxu0
        %v6046 = vadd.f32 0.0, %v6045
        %v6047 = vpop.f32.mrf.mxu0
        %v6048 = vpop.f32.mrf.mxu0
        %v6049 = vadd.f32 0.0, %v6048
        %v6050 = vpop.f32.mrf.mxu0
        %6051 = vmatprep.mubr.bf16.mxu0 0
        %6052 = vmatmul.mubr.bf16.gmra.mxu0 %v5623
        %v6053 = vpop.f32.mrf.mxu0
        %v6054 = vadd.f32 0.0, %v6053
        %v6055 = vpop.f32.mrf.mxu0
        %v6056 = vpop.f32.mrf.mxu0
        %v6057 = vadd.f32 0.0, %v6056
        %v6058 = vpop.f32.mrf.mxu0
        %6059 = vmatprep.mubr.bf16.mxu0 0
        %6060 = vmatmul.mubr.bf16.gmra.mxu0 %v5626
        %v6061 = vpop.f32.mrf.mxu0
        %v6062 = vadd.f32 0.0, %v6061
        %v6063 = vpop.f32.mrf.mxu0
        %v6064 = vpop.f32.mrf.mxu0
        %v6065 = vadd.f32 0.0, %v6064
        %v6066 = vpop.f32.mrf.mxu0
        %6067 = vmatprep.mubr.bf16.mxu0 0
        %6068 = vmatmul.mubr.bf16.gmra.mxu0 %v5629
        %v6069 = vpop.f32.mrf.mxu0
        %v6070 = vadd.f32 0.0, %v6069
        %v6071 = vpop.f32.mrf.mxu0
        %v6072 = vpop.f32.mrf.mxu0
        %v6073 = vadd.f32 0.0, %v6072
        %v6074 = vpop.f32.mrf.mxu0
        %6075 = vmatprep.mubr.bf16.mxu0 0
        %6076 = vmatmul.mubr.bf16.gmra.mxu0 %v5632
        %v6077 = vpop.f32.mrf.mxu0
        %v6078 = vadd.f32 0.0, %v6077
        %v6079 = vpop.f32.mrf.mxu0
        %v6080 = vpop.f32.mrf.mxu0
        %v6081 = vadd.f32 0.0, %v6080
        %v6082 = vpop.f32.mrf.mxu0
        %6083 = vmatprep.mubr.bf16.mxu0 0
        %6084 = vmatmul.mubr.bf16.gmra.mxu0 %v5635
        %v6085 = vpop.f32.mrf.mxu0
        %v6086 = vadd.f32 0.0, %v6085
        %v6087 = vpop.f32.mrf.mxu0
        %v6088 = vpop.f32.mrf.mxu0
        %v6089 = vadd.f32 0.0, %v6088
        %v6090 = vpop.f32.mrf.mxu0
        %6091 = vmatprep.mubr.bf16.mxu0 0
        %6092 = vmatmul.mubr.bf16.gmra.mxu0 %v5638
        %v6093 = vpop.f32.mrf.mxu0
        %v6094 = vadd.f32 0.0, %v6093
        %v6095 = vpop.f32.mrf.mxu0
        %v6096 = vpop.f32.mrf.mxu0
        %v6097 = vadd.f32 0.0, %v6096
        %v6098 = vpop.f32.mrf.mxu0
        %6099 = vmatprep.mubr.bf16.mxu0 0
        %6100 = vmatmul.mubr.bf16.gmra.mxu0 %v5641
        %v6101 = vpop.f32.mrf.mxu0
        %v6102 = vadd.f32 0.0, %v6101
        %v6103 = vpop.f32.mrf.mxu0
        %v6104 = vpop.f32.mrf.mxu0
        %v6105 = vadd.f32 0.0, %v6104
        %v6106 = vpop.f32.mrf.mxu0
        %6107 = vmatprep.mubr.bf16.mxu0 0
        %6108 = vmatmul.mubr.bf16.gmra.mxu0 %v5644
        %v6109 = vpop.f32.mrf.mxu0
        %v6110 = vadd.f32 0.0, %v6109
        %v6111 = vpop.f32.mrf.mxu0
        %v6112 = vpop.f32.mrf.mxu0
        %v6113 = vadd.f32 0.0, %v6112
        %v6114 = vpop.f32.mrf.mxu0
        %6115 = vmatprep.mubr.bf16.mxu0 0
        %6116 = vmatmul.mubr.bf16.gmra.mxu0 %v5647
        %v6117 = vpop.f32.mrf.mxu0
        %v6118 = vadd.f32 0.0, %v6117
        %v6119 = vpop.f32.mrf.mxu0
        %v6120 = vpop.f32.mrf.mxu0
        %v6121 = vadd.f32 0.0, %v6120
        %v6122 = vpop.f32.mrf.mxu0
        %6123 = vmatprep.mubr.bf16.mxu0 0
        %6124 = vmatmul.mubr.bf16.gmra.mxu0 %v5650
        %v6125 = vpop.f32.mrf.mxu0
        %v6126 = vadd.f32 0.0, %v6125
        %v6127 = vpop.f32.mrf.mxu0
        %v6128 = vpop.f32.mrf.mxu0
        %v6129 = vadd.f32 0.0, %v6128
        %v6130 = vpop.f32.mrf.mxu0
        %6131 = vmatprep.mubr.bf16.mxu0 0
        %6132 = vmatmul.mubr.bf16.gmra.mxu0 %v5653
        %v6133 = vpop.f32.mrf.mxu0
        %v6134 = vadd.f32 0.0, %v6133
        %v6135 = vpop.f32.mrf.mxu0
        %v6136 = vpop.f32.mrf.mxu0
        %v6137 = vadd.f32 0.0, %v6136
        %v6138 = vpop.f32.mrf.mxu0
        %6139 = vmatprep.mubr.bf16.mxu0 0
        %6140 = vmatmul.mubr.bf16.gmra.mxu0 %v5656
        %v6141 = vpop.f32.mrf.mxu0
        %v6142 = vadd.f32 0.0, %v6141
        %v6143 = vpop.f32.mrf.mxu0
        %v6144 = vpop.f32.mrf.mxu0
        %v6145 = vadd.f32 0.0, %v6144
        %v6146 = vpop.f32.mrf.mxu0
        %6147 = vmatprep.mubr.bf16.mxu0 0
        %6148 = vmatmul.mubr.bf16.gmra.mxu0 %v5659
        %v6149 = vpop.f32.mrf.mxu0
        %v6150 = vadd.f32 0.0, %v6149
        %v6151 = vpop.f32.mrf.mxu0
        %v6152 = vpop.f32.mrf.mxu0
        %v6153 = vadd.f32 0.0, %v6152
        %v6154 = vpop.f32.mrf.mxu0
        %6155 = vmatprep.mubr.bf16.mxu0 0
        %6156 = vmatmul.mubr.bf16.gmra.mxu0 %v5662
        %v6157 = vpop.f32.mrf.mxu0
        %v6158 = vadd.f32 0.0, %v6157
        %v6159 = vpop.f32.mrf.mxu0
        %v6160 = vpop.f32.mrf.mxu0
        %v6161 = vadd.f32 0.0, %v6160
        %v6162 = vpop.f32.mrf.mxu0
        %6163 = vmatprep.mubr.bf16.mxu0 0
        %6164 = vmatmul.mubr.bf16.gmra.mxu0 %v5665
        %v6165 = vpop.f32.mrf.mxu0
        %v6166 = vadd.f32 0.0, %v6165
        %v6167 = vpop.f32.mrf.mxu0
        %v6168 = vpop.f32.mrf.mxu0
        %v6169 = vadd.f32 0.0, %v6168
        %v6170 = vpop.f32.mrf.mxu0
        %6171 = vmatprep.mubr.bf16.mxu0 0
        %6172 = vmatmul.mubr.bf16.gmra.mxu0 %v5668
        %v6173 = vpop.f32.mrf.mxu0
        %v6174 = vadd.f32 0.0, %v6173
        %v6175 = vpop.f32.mrf.mxu0
        %v6176 = vpop.f32.mrf.mxu0
        %v6177 = vadd.f32 0.0, %v6176
        %v6178 = vpop.f32.mrf.mxu0
        %6179 = vmatprep.mubr.bf16.mxu0 0
        %6180 = vmatmul.mubr.bf16.gmra.mxu0 %v5671
        %v6181 = vpop.f32.mrf.mxu0
        %v6182 = vadd.f32 0.0, %v6181
        %v6183 = vpop.f32.mrf.mxu0
        %v6184 = vpop.f32.mrf.mxu0
        %v6185 = vadd.f32 0.0, %v6184
        %v6186 = vpop.f32.mrf.mxu0
        %6187 = vmatprep.mubr.bf16.mxu0 0
        %6188 = vmatmul.mubr.bf16.gmra.mxu0 %v5674
        %v6189 = vpop.f32.mrf.mxu0
        %v6190 = vadd.f32 0.0, %v6189
        %v6191 = vpop.f32.mrf.mxu0
        %v6192 = vpop.f32.mrf.mxu0
        %v6193 = vadd.f32 0.0, %v6192
        %v6194 = vpop.f32.mrf.mxu0
        %6195 = vmatprep.mubr.bf16.mxu0 0
        %6196 = vmatmul.mubr.bf16.gmra.mxu0 %v5677
        %v6197 = vpop.f32.mrf.mxu0
        %v6198 = vadd.f32 0.0, %v6197
        %v6199 = vpop.f32.mrf.mxu0
        %v6200 = vpop.f32.mrf.mxu0
        %v6201 = vadd.f32 0.0, %v6200
        %v6202 = vpop.f32.mrf.mxu0
        %6203 = vmatprep.mubr.bf16.mxu0 0
        %6204 = vmatmul.mubr.bf16.gmra.mxu0 %v5680
        %v6205 = vpop.f32.mrf.mxu0
        %v6206 = vadd.f32 0.0, %v6205
        %v6207 = vpop.f32.mrf.mxu0
        %v6208 = vpop.f32.mrf.mxu0
        %v6209 = vadd.f32 0.0, %v6208
        %v6210 = vpop.f32.mrf.mxu0
        %6211 = vmatprep.mubr.bf16.mxu0 0
        %6212 = vmatmul.mubr.bf16.gmra.mxu0 %v5683
        %v6213 = vpop.f32.mrf.mxu0
        %v6214 = vadd.f32 0.0, %v6213
        %v6215 = vpop.f32.mrf.mxu0
        %v6216 = vpop.f32.mrf.mxu0
        %v6217 = vadd.f32 0.0, %v6216
        %v6218 = vpop.f32.mrf.mxu0
        %6219 = vmatprep.mubr.bf16.mxu0 0
        %6220 = vmatmul.mubr.bf16.gmra.mxu0 %v5686
        %v6221 = vpop.f32.mrf.mxu0
        %v6222 = vadd.f32 0.0, %v6221
        %v6223 = vpop.f32.mrf.mxu0
        %v6224 = vpop.f32.mrf.mxu0
        %v6225 = vadd.f32 0.0, %v6224
        %v6226 = vpop.f32.mrf.mxu0
        %6227 = vmatprep.mubr.bf16.mxu0 0
        %6228 = vmatmul.mubr.bf16.gmra.mxu0 %v5689
        %v6229 = vpop.f32.mrf.mxu0
        %v6230 = vadd.f32 0.0, %v6229
        %v6231 = vpop.f32.mrf.mxu0
        %v6232 = vpop.f32.mrf.mxu0
        %v6233 = vadd.f32 0.0, %v6232
        %v6234 = vpop.f32.mrf.mxu0
        %6235 = vdwg.mxu0
        %v6236 = vpack.c.bf16 %v5146, %v5145
        %v6237 = vld [vmem:[%s6] sm:$0xf]
        %v6238 = vld [vmem:[%s6 + $0x4] sm:$0xf]
        %v6239 = vld [vmem:[%s6 + $0x8] sm:$0xf]
        %v6240 = vld [vmem:[%s6 + $0xc] sm:$0xf]
        %v6241 = vld [vmem:[%s6 + $0x10] sm:$0xf]
        %v6242 = vld [vmem:[%s6 + $0x14] sm:$0xf]
        %v6243 = vld [vmem:[%s6 + $0x18] sm:$0xf]
        %v6244 = vld [vmem:[%s6 + $0x1c] sm:$0xf]
        %v6253 = vunpack.c.l.b16 %v6237
        %v6254 = vunpack.c.l.b16 %v6238
        %v6255 = vunpack.c.l.b16 %v6239
        %v6256 = vunpack.c.l.b16 %v6240
        %v6257 = vunpack.c.l.b16 %v6241
        %v6258 = vunpack.c.l.b16 %v6242
        %v6259 = vunpack.c.l.b16 %v6243
        %v6260 = vunpack.c.l.b16 %v6244
        %v6261 = vpack.c.b16 %v6254, %v6253
        %v6262 = vpack.c.b16 %v6256, %v6255
        %v6263 = vpack.c.b16 %v6258, %v6257
        %v6264 = vpack.c.b16 %v6260, %v6259
        %v6270 = vsel %vm2260, %v6236, 0
        %6272 = vmatprep.subr.bf16.mxu0 0
        %6273 = vmatpush1.bf16.msra.mxu0 0
        %6274 = vmatprep.subr.bf16.mxu0 0
        %6275 = vmatpush1.bf16.msra.mxu0 0
        %6276 = vmatprep.subr.bf16.mxu0 0
        %6277 = vmatpush1.bf16.msra.mxu0 0
        %6278 = vmatprep.subr.bf16.mxu0 0
        %6279 = vmatpush1.bf16.msra.mxu0 0
        %6280 = vmatprep.subr.bf16.mxu0 0
        %6281 = vmatpush1.bf16.msra.mxu0 %v6264
        %6282 = vmatprep.subr.bf16.mxu0 0
        %6283 = vmatpush1.bf16.msra.mxu0 %v6263
        %6284 = vmatprep.subr.bf16.mxu0 0
        %6285 = vmatpush1.bf16.msra.mxu0 %v6262
        %6286 = vmatprep.subr.bf16.mxu0 0
        %6287 = vmatpush1.bf16.msra.mxu0 %v6261
        %6288 = vmatprep.subr.bf16.mxu0 0
        %6289 = vmatpush2.bf16.msra.mxu0 0
        %6290 = vmatprep.subr.bf16.mxu0 0
        %6291 = vmatpush2.bf16.msra.mxu0 0
        %6292 = vmatprep.subr.bf16.mxu0 0
        %6293 = vmatpush2.bf16.msra.mxu0 0
        %6294 = vmatprep.subr.bf16.mxu0 0
        %6295 = vmatpush2.bf16.msra.mxu0 0
        %6296 = vmatprep.subr.bf16.mxu0 0
        %6297 = vmatpush2.bf16.msra.mxu0 0
        %6298 = vmatprep.subr.bf16.mxu0 0
        %6299 = vmatpush2.bf16.msra.mxu0 0
        %6300 = vmatprep.subr.bf16.mxu0 0
        %6301 = vmatpush2.bf16.msra.mxu0 0
        %6302 = vmatprep.subr.bf16.mxu0 0
        %6303 = vmatpush2.bf16.msra.mxu0 0
        %6304 = vmatprep.mubr.bf16.mxu0 0
        %6305 = vmatmul.mubr.bf16.gmra.mxu0 %v6270
        %v6306 = vpop.f32.mrf.mxu0
        %v6307 = vadd.f32 0.0, %v6306
        %v6308 = vpop.f32.mrf.mxu0
        %v6309 = vpop.f32.mrf.mxu0
        %v6310 = vadd.f32 0.0, %v6309
        %v6311 = vpop.f32.mrf.mxu0
        %6312 = vdwg.mxu0
        %v6315 = vcombine.high %v6307, %v6307
        %v6317 = vunpack.c.l.s4 1966171168
        %v6318 = vunpack.c.0.s8 %v6317
        %v6319 = vlaneseq
        %v6320 = vshrl.u32 %v6319, 7
        %v6321 = vsub.s32 %v6318, %v6320
        %v6322 = vrot.slane %v6307, %v6321
        %v6324 = vunpack.c.l.s4 1966171168
        %v6325 = vunpack.c.0.s8 %v6324
        %v6326 = vlaneseq
        %v6327 = vshrl.u32 %v6326, 7
        %v6328 = vsub.s32 %v6325, %v6327
        %v6329 = vrot.slane %v6315, %v6328
        %v6330 = vcombine.high %v6322, %v6322
        %v6331 = vcombine.high %v6329, %v6329
        %v6333 = vunpack.c.l.s4 1966171168
        %v6334 = vunpack.c.0.s8 %v6333
        %v6335 = vlaneseq
        %v6336 = vshrl.u32 %v6335, 7
        %v6337 = vsub.s32 %v6334, %v6336
        %v6338 = vrot.slane %v6322, %v6337
        %v6340 = vunpack.c.l.s4 1966171168
        %v6341 = vunpack.c.0.s8 %v6340
        %v6342 = vlaneseq
        %v6343 = vshrl.u32 %v6342, 7
        %v6344 = vsub.s32 %v6341, %v6343
        %v6345 = vrot.slane %v6329, %v6344
        %v6347 = vunpack.c.l.s4 1966171168
        %v6348 = vunpack.c.0.s8 %v6347
        %v6349 = vlaneseq
        %v6350 = vshrl.u32 %v6349, 7
        %v6351 = vsub.s32 %v6348, %v6350
        %v6352 = vrot.slane %v6330, %v6351
        %v6354 = vunpack.c.l.s4 1966171168
        %v6355 = vunpack.c.0.s8 %v6354
        %v6356 = vlaneseq
        %v6357 = vshrl.u32 %v6356, 7
        %v6358 = vsub.s32 %v6355, %v6357
        %v6359 = vrot.slane %v6331, %v6358
        %v6360 = vcombine.high %v6338, %v6338
        %v6361 = vcombine.high %v6345, %v6345
        %v6362 = vcombine.high %v6352, %v6352
        %v6363 = vcombine.high %v6359, %v6359
        %v6364 = vcombine.high %v6310, %v6310
        %v6366 = vunpack.c.l.s4 1966171168
        %v6367 = vunpack.c.0.s8 %v6366
        %v6368 = vlaneseq
        %v6369 = vshrl.u32 %v6368, 7
        %v6370 = vsub.s32 %v6367, %v6369
        %v6371 = vrot.slane %v6310, %v6370
        %v6373 = vunpack.c.l.s4 1966171168
        %v6374 = vunpack.c.0.s8 %v6373
        %v6375 = vlaneseq
        %v6376 = vshrl.u32 %v6375, 7
        %v6377 = vsub.s32 %v6374, %v6376
        %v6378 = vrot.slane %v6364, %v6377
        %v6379 = vcombine.high %v6371, %v6371
        %v6380 = vcombine.high %v6378, %v6378
        %v6382 = vunpack.c.l.s4 1966171168
        %v6383 = vunpack.c.0.s8 %v6382
        %v6384 = vlaneseq
        %v6385 = vshrl.u32 %v6384, 7
        %v6386 = vsub.s32 %v6383, %v6385
        %v6387 = vrot.slane %v6371, %v6386
        %v6389 = vunpack.c.l.s4 1966171168
        %v6390 = vunpack.c.0.s8 %v6389
        %v6391 = vlaneseq
        %v6392 = vshrl.u32 %v6391, 7
        %v6393 = vsub.s32 %v6390, %v6392
        %v6394 = vrot.slane %v6378, %v6393
        %v6396 = vunpack.c.l.s4 1966171168
        %v6397 = vunpack.c.0.s8 %v6396
        %v6398 = vlaneseq
        %v6399 = vshrl.u32 %v6398, 7
        %v6400 = vsub.s32 %v6397, %v6399
        %v6401 = vrot.slane %v6379, %v6400
        %v6403 = vunpack.c.l.s4 1966171168
        %v6404 = vunpack.c.0.s8 %v6403
        %v6405 = vlaneseq
        %v6406 = vshrl.u32 %v6405, 7
        %v6407 = vsub.s32 %v6404, %v6406
        %v6408 = vrot.slane %v6380, %v6407
        %v6409 = vcombine.high %v6387, %v6387
        %v6410 = vcombine.high %v6394, %v6394
        %v6411 = vcombine.high %v6401, %v6401
        %v6412 = vcombine.high %v6408, %v6408
        %v6413 = vlaneseq
        %v6414 = vshrl.u32 %v6413, 7
        %v6415 = vsub.s32 0, %v6414
        %v6416 = vrot.slane %v6338, %v6415
        %v6417 = vlaneseq
        %v6418 = vshrl.u32 %v6417, 7
        %v6419 = vsub.s32 0, %v6418
        %v6420 = vrot.slane %v6352, %v6419
        %v6421 = vlaneseq
        %v6422 = vshrl.u32 %v6421, 7
        %v6423 = vsub.s32 0, %v6422
        %v6424 = vrot.slane %v6360, %v6423
        %v6425 = vlaneseq
        %v6426 = vshrl.u32 %v6425, 7
        %v6427 = vsub.s32 0, %v6426
        %v6428 = vrot.slane %v6362, %v6427
        %v6429 = vlaneseq
        %v6430 = vshrl.u32 %v6429, 7
        %v6431 = vsub.s32 0, %v6430
        %v6432 = vrot.slane %v6345, %v6431
        %v6433 = vlaneseq
        %v6434 = vshrl.u32 %v6433, 7
        %v6435 = vsub.s32 0, %v6434
        %v6436 = vrot.slane %v6359, %v6435
        %v6437 = vlaneseq
        %v6438 = vshrl.u32 %v6437, 7
        %v6439 = vsub.s32 0, %v6438
        %v6440 = vrot.slane %v6361, %v6439
        %v6441 = vlaneseq
        %v6442 = vshrl.u32 %v6441, 7
        %v6443 = vsub.s32 0, %v6442
        %v6444 = vrot.slane %v6363, %v6443
        %v6445 = vlaneseq
        %v6446 = vshrl.u32 %v6445, 7
        %v6447 = vsub.s32 0, %v6446
        %v6448 = vrot.slane %v6387, %v6447
        %v6449 = vlaneseq
        %v6450 = vshrl.u32 %v6449, 7
        %v6451 = vsub.s32 0, %v6450
        %v6452 = vrot.slane %v6401, %v6451
        %v6453 = vlaneseq
        %v6454 = vshrl.u32 %v6453, 7
        %v6455 = vsub.s32 0, %v6454
        %v6456 = vrot.slane %v6409, %v6455
        %v6457 = vlaneseq
        %v6458 = vshrl.u32 %v6457, 7
        %v6459 = vsub.s32 0, %v6458
        %v6460 = vrot.slane %v6411, %v6459
        %v6461 = vlaneseq
        %v6462 = vshrl.u32 %v6461, 7
        %v6463 = vsub.s32 0, %v6462
        %v6464 = vrot.slane %v6394, %v6463
        %v6465 = vlaneseq
        %v6466 = vshrl.u32 %v6465, 7
        %v6467 = vsub.s32 0, %v6466
        %v6468 = vrot.slane %v6408, %v6467
        %v6469 = vlaneseq
        %v6470 = vshrl.u32 %v6469, 7
        %v6471 = vsub.s32 0, %v6470
        %v6472 = vrot.slane %v6410, %v6471
        %v6473 = vlaneseq
        %v6474 = vshrl.u32 %v6473, 7
        %v6475 = vsub.s32 0, %v6474
        %v6476 = vrot.slane %v6412, %v6475
        %v6493 = vadd.f32 %v5726, %v6416
        %v6494 = vadd.f32 %v5729, %v6416
        %v6495 = vadd.f32 %v5734, %v6416
        %v6496 = vadd.f32 %v5737, %v6416
        %v6497 = vadd.f32 %v5742, %v6416
        %v6498 = vadd.f32 %v5745, %v6416
        %v6499 = vadd.f32 %v5750, %v6416
        %v6500 = vadd.f32 %v5753, %v6416
        %v6501 = vadd.f32 %v5758, %v6420
        %v6502 = vadd.f32 %v5761, %v6420
        %v6503 = vadd.f32 %v5766, %v6420
        %v6504 = vadd.f32 %v5769, %v6420
        %v6505 = vadd.f32 %v5774, %v6420
        %v6506 = vadd.f32 %v5777, %v6420
        %v6507 = vadd.f32 %v5782, %v6420
        %v6508 = vadd.f32 %v5785, %v6420
        %v6509 = vadd.f32 %v5790, %v6424
        %v6510 = vadd.f32 %v5793, %v6424
        %v6511 = vadd.f32 %v5798, %v6424
        %v6512 = vadd.f32 %v5801, %v6424
        %v6513 = vadd.f32 %v5806, %v6424
        %v6514 = vadd.f32 %v5809, %v6424
        %v6515 = vadd.f32 %v5814, %v6424
        %v6516 = vadd.f32 %v5817, %v6424
        %v6517 = vadd.f32 %v5822, %v6428
        %v6518 = vadd.f32 %v5825, %v6428
        %v6519 = vadd.f32 %v5830, %v6428
        %v6520 = vadd.f32 %v5833, %v6428
        %v6521 = vadd.f32 %v5838, %v6428
        %v6522 = vadd.f32 %v5841, %v6428
        %v6523 = vadd.f32 %v5846, %v6428
        %v6524 = vadd.f32 %v5849, %v6428
        %v6525 = vadd.f32 %v5854, %v6432
        %v6526 = vadd.f32 %v5857, %v6432
        %v6527 = vadd.f32 %v5862, %v6432
        %v6528 = vadd.f32 %v5865, %v6432
        %v6529 = vadd.f32 %v5870, %v6432
        %v6530 = vadd.f32 %v5873, %v6432
        %v6531 = vadd.f32 %v5878, %v6432
        %v6532 = vadd.f32 %v5881, %v6432
        %v6533 = vadd.f32 %v5886, %v6436
        %v6534 = vadd.f32 %v5889, %v6436
        %v6535 = vadd.f32 %v5894, %v6436
        %v6536 = vadd.f32 %v5897, %v6436
        %v6537 = vadd.f32 %v5902, %v6436
        %v6538 = vadd.f32 %v5905, %v6436
        %v6539 = vadd.f32 %v5910, %v6436
        %v6540 = vadd.f32 %v5913, %v6436
        %v6541 = vadd.f32 %v5918, %v6440
        %v6542 = vadd.f32 %v5921, %v6440
        %v6543 = vadd.f32 %v5926, %v6440
        %v6544 = vadd.f32 %v5929, %v6440
        %v6545 = vadd.f32 %v5934, %v6440
        %v6546 = vadd.f32 %v5937, %v6440
        %v6547 = vadd.f32 %v5942, %v6440
        %v6548 = vadd.f32 %v5945, %v6440
        %v6549 = vadd.f32 %v5950, %v6444
        %v6550 = vadd.f32 %v5953, %v6444
        %v6551 = vadd.f32 %v5958, %v6444
        %v6552 = vadd.f32 %v5961, %v6444
        %v6553 = vadd.f32 %v5966, %v6444
        %v6554 = vadd.f32 %v5969, %v6444
        %v6555 = vadd.f32 %v5974, %v6444
        %v6556 = vadd.f32 %v5977, %v6444
        %v6557 = vadd.f32 %v5982, %v6448
        %v6558 = vadd.f32 %v5985, %v6448
        %v6559 = vadd.f32 %v5990, %v6448
        %v6560 = vadd.f32 %v5993, %v6448
        %v6561 = vadd.f32 %v5998, %v6448
        %v6562 = vadd.f32 %v6001, %v6448
        %v6563 = vadd.f32 %v6006, %v6448
        %v6564 = vadd.f32 %v6009, %v6448
        %v6565 = vadd.f32 %v6014, %v6452
        %v6566 = vadd.f32 %v6017, %v6452
        %v6567 = vadd.f32 %v6022, %v6452
        %v6568 = vadd.f32 %v6025, %v6452
        %v6569 = vadd.f32 %v6030, %v6452
        %v6570 = vadd.f32 %v6033, %v6452
        %v6571 = vadd.f32 %v6038, %v6452
        %v6572 = vadd.f32 %v6041, %v6452
        %v6573 = vadd.f32 %v6046, %v6456
        %v6574 = vadd.f32 %v6049, %v6456
        %v6575 = vadd.f32 %v6054, %v6456
        %v6576 = vadd.f32 %v6057, %v6456
        %v6577 = vadd.f32 %v6062, %v6456
        %v6578 = vadd.f32 %v6065, %v6456
        %v6579 = vadd.f32 %v6070, %v6456
        %v6580 = vadd.f32 %v6073, %v6456
        %v6581 = vadd.f32 %v6078, %v6460
        %v6582 = vadd.f32 %v6081, %v6460
        %v6583 = vadd.f32 %v6086, %v6460
        %v6584 = vadd.f32 %v6089, %v6460
        %v6585 = vadd.f32 %v6094, %v6460
        %v6586 = vadd.f32 %v6097, %v6460
        %v6587 = vadd.f32 %v6102, %v6460
        %v6588 = vadd.f32 %v6105, %v6460
        %v6589 = vadd.f32 %v6110, %v6464
        %v6590 = vadd.f32 %v6113, %v6464
        %v6591 = vadd.f32 %v6118, %v6464
        %v6592 = vadd.f32 %v6121, %v6464
        %v6593 = vadd.f32 %v6126, %v6464
        %v6594 = vadd.f32 %v6129, %v6464
        %v6595 = vadd.f32 %v6134, %v6464
        %v6596 = vadd.f32 %v6137, %v6464
        %v6597 = vadd.f32 %v6142, %v6468
        %v6598 = vadd.f32 %v6145, %v6468
        %v6599 = vadd.f32 %v6150, %v6468
        %v6600 = vadd.f32 %v6153, %v6468
        %v6601 = vadd.f32 %v6158, %v6468
        %v6602 = vadd.f32 %v6161, %v6468
        %v6603 = vadd.f32 %v6166, %v6468
        %v6604 = vadd.f32 %v6169, %v6468
        %v6605 = vadd.f32 %v6174, %v6472
        %v6606 = vadd.f32 %v6177, %v6472
        %v6607 = vadd.f32 %v6182, %v6472
        %v6608 = vadd.f32 %v6185, %v6472
        %v6609 = vadd.f32 %v6190, %v6472
        %v6610 = vadd.f32 %v6193, %v6472
        %v6611 = vadd.f32 %v6198, %v6472
        %v6612 = vadd.f32 %v6201, %v6472
        %v6613 = vadd.f32 %v6206, %v6476
        %v6614 = vadd.f32 %v6209, %v6476
        %v6615 = vadd.f32 %v6214, %v6476
        %v6616 = vadd.f32 %v6217, %v6476
        %v6617 = vadd.f32 %v6222, %v6476
        %v6618 = vadd.f32 %v6225, %v6476
        %v6619 = vadd.f32 %v6230, %v6476
        %v6620 = vadd.f32 %v6233, %v6476
        %v6621 = vld [vmem:[%s7] sm:$0x1]
        %v6623 = vlaneseq
        %v6624 = vshrl.u32 %v6623, 7
        %v6625 = vsub.s32 0, %v6624
        %v6626 = vrot.slane %v6621, %v6625
        %v6628 = vadd.f32 %v6493, %v6626
        %v6629 = vadd.f32 %v6494, %v6626
        %v6630 = vadd.f32 %v6495, %v6626
        %v6631 = vadd.f32 %v6496, %v6626
        %v6632 = vadd.f32 %v6497, %v6626
        %v6633 = vadd.f32 %v6498, %v6626
        %v6634 = vadd.f32 %v6499, %v6626
        %v6635 = vadd.f32 %v6500, %v6626
        %v6636 = vadd.f32 %v6501, %v6626
        %v6637 = vadd.f32 %v6502, %v6626
        %v6638 = vadd.f32 %v6503, %v6626
        %v6639 = vadd.f32 %v6504, %v6626
        %v6640 = vadd.f32 %v6505, %v6626
        %v6641 = vadd.f32 %v6506, %v6626
        %v6642 = vadd.f32 %v6507, %v6626
        %v6643 = vadd.f32 %v6508, %v6626
        %v6644 = vadd.f32 %v6509, %v6626
        %v6645 = vadd.f32 %v6510, %v6626
        %v6646 = vadd.f32 %v6511, %v6626
        %v6647 = vadd.f32 %v6512, %v6626
        %v6648 = vadd.f32 %v6513, %v6626
        %v6649 = vadd.f32 %v6514, %v6626
        %v6650 = vadd.f32 %v6515, %v6626
        %v6651 = vadd.f32 %v6516, %v6626
        %v6652 = vadd.f32 %v6517, %v6626
        %v6653 = vadd.f32 %v6518, %v6626
        %v6654 = vadd.f32 %v6519, %v6626
        %v6655 = vadd.f32 %v6520, %v6626
        %v6656 = vadd.f32 %v6521, %v6626
        %v6657 = vadd.f32 %v6522, %v6626
        %v6658 = vadd.f32 %v6523, %v6626
        %v6659 = vadd.f32 %v6524, %v6626
        %v6660 = vadd.f32 %v6525, %v6626
        %v6661 = vadd.f32 %v6526, %v6626
        %v6662 = vadd.f32 %v6527, %v6626
        %v6663 = vadd.f32 %v6528, %v6626
        %v6664 = vadd.f32 %v6529, %v6626
        %v6665 = vadd.f32 %v6530, %v6626
        %v6666 = vadd.f32 %v6531, %v6626
        %v6667 = vadd.f32 %v6532, %v6626
        %v6668 = vadd.f32 %v6533, %v6626
        %v6669 = vadd.f32 %v6534, %v6626
        %v6670 = vadd.f32 %v6535, %v6626
        %v6671 = vadd.f32 %v6536, %v6626
        %v6672 = vadd.f32 %v6537, %v6626
        %v6673 = vadd.f32 %v6538, %v6626
        %v6674 = vadd.f32 %v6539, %v6626
        %v6675 = vadd.f32 %v6540, %v6626
        %v6676 = vadd.f32 %v6541, %v6626
        %v6677 = vadd.f32 %v6542, %v6626
        %v6678 = vadd.f32 %v6543, %v6626
        %v6679 = vadd.f32 %v6544, %v6626
        %v6680 = vadd.f32 %v6545, %v6626
        %v6681 = vadd.f32 %v6546, %v6626
        %v6682 = vadd.f32 %v6547, %v6626
        %v6683 = vadd.f32 %v6548, %v6626
        %v6684 = vadd.f32 %v6549, %v6626
        %v6685 = vadd.f32 %v6550, %v6626
        %v6686 = vadd.f32 %v6551, %v6626
        %v6687 = vadd.f32 %v6552, %v6626
        %v6688 = vadd.f32 %v6553, %v6626
        %v6689 = vadd.f32 %v6554, %v6626
        %v6690 = vadd.f32 %v6555, %v6626
        %v6691 = vadd.f32 %v6556, %v6626
        %v6692 = vadd.f32 %v6557, %v6626
        %v6693 = vadd.f32 %v6558, %v6626
        %v6694 = vadd.f32 %v6559, %v6626
        %v6695 = vadd.f32 %v6560, %v6626
        %v6696 = vadd.f32 %v6561, %v6626
        %v6697 = vadd.f32 %v6562, %v6626
        %v6698 = vadd.f32 %v6563, %v6626
        %v6699 = vadd.f32 %v6564, %v6626
        %v6700 = vadd.f32 %v6565, %v6626
        %v6701 = vadd.f32 %v6566, %v6626
        %v6702 = vadd.f32 %v6567, %v6626
        %v6703 = vadd.f32 %v6568, %v6626
        %v6704 = vadd.f32 %v6569, %v6626
        %v6705 = vadd.f32 %v6570, %v6626
        %v6706 = vadd.f32 %v6571, %v6626
        %v6707 = vadd.f32 %v6572, %v6626
        %v6708 = vadd.f32 %v6573, %v6626
        %v6709 = vadd.f32 %v6574, %v6626
        %v6710 = vadd.f32 %v6575, %v6626
        %v6711 = vadd.f32 %v6576, %v6626
        %v6712 = vadd.f32 %v6577, %v6626
        %v6713 = vadd.f32 %v6578, %v6626
        %v6714 = vadd.f32 %v6579, %v6626
        %v6715 = vadd.f32 %v6580, %v6626
        %v6716 = vadd.f32 %v6581, %v6626
        %v6717 = vadd.f32 %v6582, %v6626
        %v6718 = vadd.f32 %v6583, %v6626
        %v6719 = vadd.f32 %v6584, %v6626
        %v6720 = vadd.f32 %v6585, %v6626
        %v6721 = vadd.f32 %v6586, %v6626
        %v6722 = vadd.f32 %v6587, %v6626
        %v6723 = vadd.f32 %v6588, %v6626
        %v6724 = vadd.f32 %v6589, %v6626
        %v6725 = vadd.f32 %v6590, %v6626
        %v6726 = vadd.f32 %v6591, %v6626
        %v6727 = vadd.f32 %v6592, %v6626
        %v6728 = vadd.f32 %v6593, %v6626
        %v6729 = vadd.f32 %v6594, %v6626
        %v6730 = vadd.f32 %v6595, %v6626
        %v6731 = vadd.f32 %v6596, %v6626
        %v6732 = vadd.f32 %v6597, %v6626
        %v6733 = vadd.f32 %v6598, %v6626
        %v6734 = vadd.f32 %v6599, %v6626
        %v6735 = vadd.f32 %v6600, %v6626
        %v6736 = vadd.f32 %v6601, %v6626
        %v6737 = vadd.f32 %v6602, %v6626
        %v6738 = vadd.f32 %v6603, %v6626
        %v6739 = vadd.f32 %v6604, %v6626
        %v6740 = vadd.f32 %v6605, %v6626
        %v6741 = vadd.f32 %v6606, %v6626
        %v6742 = vadd.f32 %v6607, %v6626
        %v6743 = vadd.f32 %v6608, %v6626
        %v6744 = vadd.f32 %v6609, %v6626
        %v6745 = vadd.f32 %v6610, %v6626
        %v6746 = vadd.f32 %v6611, %v6626
        %v6747 = vadd.f32 %v6612, %v6626
        %v6748 = vadd.f32 %v6613, %v6626
        %v6749 = vadd.f32 %v6614, %v6626
        %v6750 = vadd.f32 %v6615, %v6626
        %v6751 = vadd.f32 %v6616, %v6626
        %v6752 = vadd.f32 %v6617, %v6626
        %v6753 = vadd.f32 %v6618, %v6626
        %v6754 = vadd.f32 %v6619, %v6626
        %v6755 = vadd.f32 %v6620, %v6626
        %v6756 = vmax.f32 %v6628, 0.0
        %v6757 = vmax.f32 %v6629, 0.0
        %v6758 = vmax.f32 %v6630, 0.0
        %v6759 = vmax.f32 %v6631, 0.0
        %v6760 = vmax.f32 %v6632, 0.0
        %v6761 = vmax.f32 %v6633, 0.0
        %v6762 = vmax.f32 %v6634, 0.0
        %v6763 = vmax.f32 %v6635, 0.0
        %v6764 = vmax.f32 %v6636, 0.0
        %v6765 = vmax.f32 %v6637, 0.0
        %v6766 = vmax.f32 %v6638, 0.0
        %v6767 = vmax.f32 %v6639, 0.0
        %v6768 = vmax.f32 %v6640, 0.0
        %v6769 = vmax.f32 %v6641, 0.0
        %v6770 = vmax.f32 %v6642, 0.0
        %v6771 = vmax.f32 %v6643, 0.0
        %v6772 = vmax.f32 %v6644, 0.0
        %v6773 = vmax.f32 %v6645, 0.0
        %v6774 = vmax.f32 %v6646, 0.0
        %v6775 = vmax.f32 %v6647, 0.0
        %v6776 = vmax.f32 %v6648, 0.0
        %v6777 = vmax.f32 %v6649, 0.0
        %v6778 = vmax.f32 %v6650, 0.0
        %v6779 = vmax.f32 %v6651, 0.0
        %v6780 = vmax.f32 %v6652, 0.0
        %v6781 = vmax.f32 %v6653, 0.0
        %v6782 = vmax.f32 %v6654, 0.0
        %v6783 = vmax.f32 %v6655, 0.0
        %v6784 = vmax.f32 %v6656, 0.0
        %v6785 = vmax.f32 %v6657, 0.0
        %v6786 = vmax.f32 %v6658, 0.0
        %v6787 = vmax.f32 %v6659, 0.0
        %v6788 = vmax.f32 %v6660, 0.0
        %v6789 = vmax.f32 %v6661, 0.0
        %v6790 = vmax.f32 %v6662, 0.0
        %v6791 = vmax.f32 %v6663, 0.0
        %v6792 = vmax.f32 %v6664, 0.0
        %v6793 = vmax.f32 %v6665, 0.0
        %v6794 = vmax.f32 %v6666, 0.0
        %v6795 = vmax.f32 %v6667, 0.0
        %v6796 = vmax.f32 %v6668, 0.0
        %v6797 = vmax.f32 %v6669, 0.0
        %v6798 = vmax.f32 %v6670, 0.0
        %v6799 = vmax.f32 %v6671, 0.0
        %v6800 = vmax.f32 %v6672, 0.0
        %v6801 = vmax.f32 %v6673, 0.0
        %v6802 = vmax.f32 %v6674, 0.0
        %v6803 = vmax.f32 %v6675, 0.0
        %v6804 = vmax.f32 %v6676, 0.0
        %v6805 = vmax.f32 %v6677, 0.0
        %v6806 = vmax.f32 %v6678, 0.0
        %v6807 = vmax.f32 %v6679, 0.0
        %v6808 = vmax.f32 %v6680, 0.0
        %v6809 = vmax.f32 %v6681, 0.0
        %v6810 = vmax.f32 %v6682, 0.0
        %v6811 = vmax.f32 %v6683, 0.0
        %v6812 = vmax.f32 %v6684, 0.0
        %v6813 = vmax.f32 %v6685, 0.0
        %v6814 = vmax.f32 %v6686, 0.0
        %v6815 = vmax.f32 %v6687, 0.0
        %v6816 = vmax.f32 %v6688, 0.0
        %v6817 = vmax.f32 %v6689, 0.0
        %v6818 = vmax.f32 %v6690, 0.0
        %v6819 = vmax.f32 %v6691, 0.0
        %v6820 = vmax.f32 %v6692, 0.0
        %v6821 = vmax.f32 %v6693, 0.0
        %v6822 = vmax.f32 %v6694, 0.0
        %v6823 = vmax.f32 %v6695, 0.0
        %v6824 = vmax.f32 %v6696, 0.0
        %v6825 = vmax.f32 %v6697, 0.0
        %v6826 = vmax.f32 %v6698, 0.0
        %v6827 = vmax.f32 %v6699, 0.0
        %v6828 = vmax.f32 %v6700, 0.0
        %v6829 = vmax.f32 %v6701, 0.0
        %v6830 = vmax.f32 %v6702, 0.0
        %v6831 = vmax.f32 %v6703, 0.0
        %v6832 = vmax.f32 %v6704, 0.0
        %v6833 = vmax.f32 %v6705, 0.0
        %v6834 = vmax.f32 %v6706, 0.0
        %v6835 = vmax.f32 %v6707, 0.0
        %v6836 = vmax.f32 %v6708, 0.0
        %v6837 = vmax.f32 %v6709, 0.0
        %v6838 = vmax.f32 %v6710, 0.0
        %v6839 = vmax.f32 %v6711, 0.0
        %v6840 = vmax.f32 %v6712, 0.0
        %v6841 = vmax.f32 %v6713, 0.0
        %v6842 = vmax.f32 %v6714, 0.0
        %v6843 = vmax.f32 %v6715, 0.0
        %v6844 = vmax.f32 %v6716, 0.0
        %v6845 = vmax.f32 %v6717, 0.0
        %v6846 = vmax.f32 %v6718, 0.0
        %v6847 = vmax.f32 %v6719, 0.0
        %v6848 = vmax.f32 %v6720, 0.0
        %v6849 = vmax.f32 %v6721, 0.0
        %v6850 = vmax.f32 %v6722, 0.0
        %v6851 = vmax.f32 %v6723, 0.0
        %v6852 = vmax.f32 %v6724, 0.0
        %v6853 = vmax.f32 %v6725, 0.0
        %v6854 = vmax.f32 %v6726, 0.0
        %v6855 = vmax.f32 %v6727, 0.0
        %v6856 = vmax.f32 %v6728, 0.0
        %v6857 = vmax.f32 %v6729, 0.0
        %v6858 = vmax.f32 %v6730, 0.0
        %v6859 = vmax.f32 %v6731, 0.0
        %v6860 = vmax.f32 %v6732, 0.0
        %v6861 = vmax.f32 %v6733, 0.0
        %v6862 = vmax.f32 %v6734, 0.0
        %v6863 = vmax.f32 %v6735, 0.0
        %v6864 = vmax.f32 %v6736, 0.0
        %v6865 = vmax.f32 %v6737, 0.0
        %v6866 = vmax.f32 %v6738, 0.0
        %v6867 = vmax.f32 %v6739, 0.0
        %v6868 = vmax.f32 %v6740, 0.0
        %v6869 = vmax.f32 %v6741, 0.0
        %v6870 = vmax.f32 %v6742, 0.0
        %v6871 = vmax.f32 %v6743, 0.0
        %v6872 = vmax.f32 %v6744, 0.0
        %v6873 = vmax.f32 %v6745, 0.0
        %v6874 = vmax.f32 %v6746, 0.0
        %v6875 = vmax.f32 %v6747, 0.0
        %v6876 = vmax.f32 %v6748, 0.0
        %v6877 = vmax.f32 %v6749, 0.0
        %v6878 = vmax.f32 %v6750, 0.0
        %v6879 = vmax.f32 %v6751, 0.0
        %v6880 = vmax.f32 %v6752, 0.0
        %v6881 = vmax.f32 %v6753, 0.0
        %v6882 = vmax.f32 %v6754, 0.0
        %v6883 = vmax.f32 %v6755, 0.0
        %v6884 = vpack.c.bf16 %v6757, %v6756
        %v6885 = vpack.c.bf16 %v6759, %v6758
        %v6886 = vpack.c.bf16 %v6761, %v6760
        %v6887 = vpack.c.bf16 %v6763, %v6762
        %v6888 = vpack.c.bf16 %v6765, %v6764
        %v6889 = vpack.c.bf16 %v6767, %v6766
        %v6890 = vpack.c.bf16 %v6769, %v6768
        %v6891 = vpack.c.bf16 %v6771, %v6770
        %v6892 = vpack.c.bf16 %v6773, %v6772
        %v6893 = vpack.c.bf16 %v6775, %v6774
        %v6894 = vpack.c.bf16 %v6777, %v6776
        %v6895 = vpack.c.bf16 %v6779, %v6778
        %v6896 = vpack.c.bf16 %v6781, %v6780
        %v6897 = vpack.c.bf16 %v6783, %v6782
        %v6898 = vpack.c.bf16 %v6785, %v6784
        %v6899 = vpack.c.bf16 %v6787, %v6786
        %v6900 = vpack.c.bf16 %v6789, %v6788
        %v6901 = vpack.c.bf16 %v6791, %v6790
        %v6902 = vpack.c.bf16 %v6793, %v6792
        %v6903 = vpack.c.bf16 %v6795, %v6794
        %v6904 = vpack.c.bf16 %v6797, %v6796
        %v6905 = vpack.c.bf16 %v6799, %v6798
        %v6906 = vpack.c.bf16 %v6801, %v6800
        %v6907 = vpack.c.bf16 %v6803, %v6802
        %v6908 = vpack.c.bf16 %v6805, %v6804
        %v6909 = vpack.c.bf16 %v6807, %v6806
        %v6910 = vpack.c.bf16 %v6809, %v6808
        %v6911 = vpack.c.bf16 %v6811, %v6810
        %v6912 = vpack.c.bf16 %v6813, %v6812
        %v6913 = vpack.c.bf16 %v6815, %v6814
        %v6914 = vpack.c.bf16 %v6817, %v6816
        %v6915 = vpack.c.bf16 %v6819, %v6818
        %v6916 = vpack.c.bf16 %v6821, %v6820
        %v6917 = vpack.c.bf16 %v6823, %v6822
        %v6918 = vpack.c.bf16 %v6825, %v6824
        %v6919 = vpack.c.bf16 %v6827, %v6826
        %v6920 = vpack.c.bf16 %v6829, %v6828
        %v6921 = vpack.c.bf16 %v6831, %v6830
        %v6922 = vpack.c.bf16 %v6833, %v6832
        %v6923 = vpack.c.bf16 %v6835, %v6834
        %v6924 = vpack.c.bf16 %v6837, %v6836
        %v6925 = vpack.c.bf16 %v6839, %v6838
        %v6926 = vpack.c.bf16 %v6841, %v6840
        %v6927 = vpack.c.bf16 %v6843, %v6842
        %v6928 = vpack.c.bf16 %v6845, %v6844
        %v6929 = vpack.c.bf16 %v6847, %v6846
        %v6930 = vpack.c.bf16 %v6849, %v6848
        %v6931 = vpack.c.bf16 %v6851, %v6850
        %v6932 = vpack.c.bf16 %v6853, %v6852
        %v6933 = vpack.c.bf16 %v6855, %v6854
        %v6934 = vpack.c.bf16 %v6857, %v6856
        %v6935 = vpack.c.bf16 %v6859, %v6858
        %v6936 = vpack.c.bf16 %v6861, %v6860
        %v6937 = vpack.c.bf16 %v6863, %v6862
        %v6938 = vpack.c.bf16 %v6865, %v6864
        %v6939 = vpack.c.bf16 %v6867, %v6866
        %v6940 = vpack.c.bf16 %v6869, %v6868
        %v6941 = vpack.c.bf16 %v6871, %v6870
        %v6942 = vpack.c.bf16 %v6873, %v6872
        %v6943 = vpack.c.bf16 %v6875, %v6874
        %v6944 = vpack.c.bf16 %v6877, %v6876
        %v6945 = vpack.c.bf16 %v6879, %v6878
        %v6946 = vpack.c.bf16 %v6881, %v6880
        %v6947 = vpack.c.bf16 %v6883, %v6882
        %v7012 = vunpack.c.l.b16 %v6884
        %v7013 = vunpack.c.h.b16 %v6884
        %v7014 = vunpack.c.l.b16 %v6885
        %v7015 = vunpack.c.h.b16 %v6885
        %v7016 = vunpack.c.l.b16 %v6886
        %v7017 = vunpack.c.h.b16 %v6886
        %v7018 = vunpack.c.l.b16 %v6887
        %v7019 = vunpack.c.h.b16 %v6887
        %v7020 = vunpack.c.l.b16 %v6888
        %v7021 = vunpack.c.h.b16 %v6888
        %v7022 = vunpack.c.l.b16 %v6889
        %v7023 = vunpack.c.h.b16 %v6889
        %v7024 = vunpack.c.l.b16 %v6890
        %v7025 = vunpack.c.h.b16 %v6890
        %v7026 = vunpack.c.l.b16 %v6891
        %v7027 = vunpack.c.h.b16 %v6891
        %v7028 = vunpack.c.l.b16 %v6892
        %v7029 = vunpack.c.h.b16 %v6892
        %v7030 = vunpack.c.l.b16 %v6893
        %v7031 = vunpack.c.h.b16 %v6893
        %v7032 = vunpack.c.l.b16 %v6894
        %v7033 = vunpack.c.h.b16 %v6894
        %v7034 = vunpack.c.l.b16 %v6895
        %v7035 = vunpack.c.h.b16 %v6895
        %v7036 = vunpack.c.l.b16 %v6896
        %v7037 = vunpack.c.h.b16 %v6896
        %v7038 = vunpack.c.l.b16 %v6897
        %v7039 = vunpack.c.h.b16 %v6897
        %v7040 = vunpack.c.l.b16 %v6898
        %v7041 = vunpack.c.h.b16 %v6898
        %v7042 = vunpack.c.l.b16 %v6899
        %v7043 = vunpack.c.h.b16 %v6899
        %v7044 = vunpack.c.l.b16 %v6900
        %v7045 = vunpack.c.h.b16 %v6900
        %v7046 = vunpack.c.l.b16 %v6901
        %v7047 = vunpack.c.h.b16 %v6901
        %v7048 = vunpack.c.l.b16 %v6902
        %v7049 = vunpack.c.h.b16 %v6902
        %v7050 = vunpack.c.l.b16 %v6903
        %v7051 = vunpack.c.h.b16 %v6903
        %v7052 = vunpack.c.l.b16 %v6904
        %v7053 = vunpack.c.h.b16 %v6904
        %v7054 = vunpack.c.l.b16 %v6905
        %v7055 = vunpack.c.h.b16 %v6905
        %v7056 = vunpack.c.l.b16 %v6906
        %v7057 = vunpack.c.h.b16 %v6906
        %v7058 = vunpack.c.l.b16 %v6907
        %v7059 = vunpack.c.h.b16 %v6907
        %v7060 = vunpack.c.l.b16 %v6908
        %v7061 = vunpack.c.h.b16 %v6908
        %v7062 = vunpack.c.l.b16 %v6909
        %v7063 = vunpack.c.h.b16 %v6909
        %v7064 = vunpack.c.l.b16 %v6910
        %v7065 = vunpack.c.h.b16 %v6910
        %v7066 = vunpack.c.l.b16 %v6911
        %v7067 = vunpack.c.h.b16 %v6911
        %v7068 = vunpack.c.l.b16 %v6912
        %v7069 = vunpack.c.h.b16 %v6912
        %v7070 = vunpack.c.l.b16 %v6913
        %v7071 = vunpack.c.h.b16 %v6913
        %v7072 = vunpack.c.l.b16 %v6914
        %v7073 = vunpack.c.h.b16 %v6914
        %v7074 = vunpack.c.l.b16 %v6915
        %v7075 = vunpack.c.h.b16 %v6915
        %v7076 = vunpack.c.l.b16 %v6916
        %v7077 = vunpack.c.h.b16 %v6916
        %v7078 = vunpack.c.l.b16 %v6917
        %v7079 = vunpack.c.h.b16 %v6917
        %v7080 = vunpack.c.l.b16 %v6918
        %v7081 = vunpack.c.h.b16 %v6918
        %v7082 = vunpack.c.l.b16 %v6919
        %v7083 = vunpack.c.h.b16 %v6919
        %v7084 = vunpack.c.l.b16 %v6920
        %v7085 = vunpack.c.h.b16 %v6920
        %v7086 = vunpack.c.l.b16 %v6921
        %v7087 = vunpack.c.h.b16 %v6921
        %v7088 = vunpack.c.l.b16 %v6922
        %v7089 = vunpack.c.h.b16 %v6922
        %v7090 = vunpack.c.l.b16 %v6923
        %v7091 = vunpack.c.h.b16 %v6923
        %v7092 = vunpack.c.l.b16 %v6924
        %v7093 = vunpack.c.h.b16 %v6924
        %v7094 = vunpack.c.l.b16 %v6925
        %v7095 = vunpack.c.h.b16 %v6925
        %v7096 = vunpack.c.l.b16 %v6926
        %v7097 = vunpack.c.h.b16 %v6926
        %v7098 = vunpack.c.l.b16 %v6927
        %v7099 = vunpack.c.h.b16 %v6927
        %v7100 = vunpack.c.l.b16 %v6928
        %v7101 = vunpack.c.h.b16 %v6928
        %v7102 = vunpack.c.l.b16 %v6929
        %v7103 = vunpack.c.h.b16 %v6929
        %v7104 = vunpack.c.l.b16 %v6930
        %v7105 = vunpack.c.h.b16 %v6930
        %v7106 = vunpack.c.l.b16 %v6931
        %v7107 = vunpack.c.h.b16 %v6931
        %v7108 = vunpack.c.l.b16 %v6932
        %v7109 = vunpack.c.h.b16 %v6932
        %v7110 = vunpack.c.l.b16 %v6933
        %v7111 = vunpack.c.h.b16 %v6933
        %v7112 = vunpack.c.l.b16 %v6934
        %v7113 = vunpack.c.h.b16 %v6934
        %v7114 = vunpack.c.l.b16 %v6935
        %v7115 = vunpack.c.h.b16 %v6935
        %v7116 = vunpack.c.l.b16 %v6936
        %v7117 = vunpack.c.h.b16 %v6936
        %v7118 = vunpack.c.l.b16 %v6937
        %v7119 = vunpack.c.h.b16 %v6937
        %v7120 = vunpack.c.l.b16 %v6938
        %v7121 = vunpack.c.h.b16 %v6938
        %v7122 = vunpack.c.l.b16 %v6939
        %v7123 = vunpack.c.h.b16 %v6939
        %v7124 = vunpack.c.l.b16 %v6940
        %v7125 = vunpack.c.h.b16 %v6940
        %v7126 = vunpack.c.l.b16 %v6941
        %v7127 = vunpack.c.h.b16 %v6941
        %v7128 = vunpack.c.l.b16 %v6942
        %v7129 = vunpack.c.h.b16 %v6942
        %v7130 = vunpack.c.l.b16 %v6943
        %v7131 = vunpack.c.h.b16 %v6943
        %v7132 = vunpack.c.l.b16 %v6944
        %v7133 = vunpack.c.h.b16 %v6944
        %v7134 = vunpack.c.l.b16 %v6945
        %v7135 = vunpack.c.h.b16 %v6945
        %v7136 = vunpack.c.l.b16 %v6946
        %v7137 = vunpack.c.h.b16 %v6946
        %v7138 = vunpack.c.l.b16 %v6947
        %v7139 = vunpack.c.h.b16 %v6947
        %v7140 = vpack.c.b16 %v7012, %v7012
        %v7141 = vpack.c.b16 %v7013, %v7013
        %v7142 = vpack.c.b16 %v7014, %v7014
        %v7143 = vpack.c.b16 %v7015, %v7015
        %v7144 = vpack.c.b16 %v7016, %v7016
        %v7145 = vpack.c.b16 %v7017, %v7017
        %v7146 = vpack.c.b16 %v7018, %v7018
        %v7147 = vpack.c.b16 %v7019, %v7019
        %v7148 = vpack.c.b16 %v7020, %v7020
        %v7149 = vpack.c.b16 %v7021, %v7021
        %v7150 = vpack.c.b16 %v7022, %v7022
        %v7151 = vpack.c.b16 %v7023, %v7023
        %v7152 = vpack.c.b16 %v7024, %v7024
        %v7153 = vpack.c.b16 %v7025, %v7025
        %v7154 = vpack.c.b16 %v7026, %v7026
        %v7155 = vpack.c.b16 %v7027, %v7027
        %v7156 = vpack.c.b16 %v7028, %v7028
        %v7157 = vpack.c.b16 %v7029, %v7029
        %v7158 = vpack.c.b16 %v7030, %v7030
        %v7159 = vpack.c.b16 %v7031, %v7031
        %v7160 = vpack.c.b16 %v7032, %v7032
        %v7161 = vpack.c.b16 %v7033, %v7033
        %v7162 = vpack.c.b16 %v7034, %v7034
        %v7163 = vpack.c.b16 %v7035, %v7035
        %v7164 = vpack.c.b16 %v7036, %v7036
        %v7165 = vpack.c.b16 %v7037, %v7037
        %v7166 = vpack.c.b16 %v7038, %v7038
        %v7167 = vpack.c.b16 %v7039, %v7039
        %v7168 = vpack.c.b16 %v7040, %v7040
        %v7169 = vpack.c.b16 %v7041, %v7041
        %v7170 = vpack.c.b16 %v7042, %v7042
        %v7171 = vpack.c.b16 %v7043, %v7043
        %v7172 = vpack.c.b16 %v7044, %v7044
        %v7173 = vpack.c.b16 %v7045, %v7045
        %v7174 = vpack.c.b16 %v7046, %v7046
        %v7175 = vpack.c.b16 %v7047, %v7047
        %v7176 = vpack.c.b16 %v7048, %v7048
        %v7177 = vpack.c.b16 %v7049, %v7049
        %v7178 = vpack.c.b16 %v7050, %v7050
        %v7179 = vpack.c.b16 %v7051, %v7051
        %v7180 = vpack.c.b16 %v7052, %v7052
        %v7181 = vpack.c.b16 %v7053, %v7053
        %v7182 = vpack.c.b16 %v7054, %v7054
        %v7183 = vpack.c.b16 %v7055, %v7055
        %v7184 = vpack.c.b16 %v7056, %v7056
        %v7185 = vpack.c.b16 %v7057, %v7057
        %v7186 = vpack.c.b16 %v7058, %v7058
        %v7187 = vpack.c.b16 %v7059, %v7059
        %v7188 = vpack.c.b16 %v7060, %v7060
        %v7189 = vpack.c.b16 %v7061, %v7061
        %v7190 = vpack.c.b16 %v7062, %v7062
        %v7191 = vpack.c.b16 %v7063, %v7063
        %v7192 = vpack.c.b16 %v7064, %v7064
        %v7193 = vpack.c.b16 %v7065, %v7065
        %v7194 = vpack.c.b16 %v7066, %v7066
        %v7195 = vpack.c.b16 %v7067, %v7067
        %v7196 = vpack.c.b16 %v7068, %v7068
        %v7197 = vpack.c.b16 %v7069, %v7069
        %v7198 = vpack.c.b16 %v7070, %v7070
        %v7199 = vpack.c.b16 %v7071, %v7071
        %v7200 = vpack.c.b16 %v7072, %v7072
        %v7201 = vpack.c.b16 %v7073, %v7073
        %v7202 = vpack.c.b16 %v7074, %v7074
        %v7203 = vpack.c.b16 %v7075, %v7075
        %v7204 = vpack.c.b16 %v7076, %v7076
        %v7205 = vpack.c.b16 %v7077, %v7077
        %v7206 = vpack.c.b16 %v7078, %v7078
        %v7207 = vpack.c.b16 %v7079, %v7079
        %v7208 = vpack.c.b16 %v7080, %v7080
        %v7209 = vpack.c.b16 %v7081, %v7081
        %v7210 = vpack.c.b16 %v7082, %v7082
        %v7211 = vpack.c.b16 %v7083, %v7083
        %v7212 = vpack.c.b16 %v7084, %v7084
        %v7213 = vpack.c.b16 %v7085, %v7085
        %v7214 = vpack.c.b16 %v7086, %v7086
        %v7215 = vpack.c.b16 %v7087, %v7087
        %v7216 = vpack.c.b16 %v7088, %v7088
        %v7217 = vpack.c.b16 %v7089, %v7089
        %v7218 = vpack.c.b16 %v7090, %v7090
        %v7219 = vpack.c.b16 %v7091, %v7091
        %v7220 = vpack.c.b16 %v7092, %v7092
        %v7221 = vpack.c.b16 %v7093, %v7093
        %v7222 = vpack.c.b16 %v7094, %v7094
        %v7223 = vpack.c.b16 %v7095, %v7095
        %v7224 = vpack.c.b16 %v7096, %v7096
        %v7225 = vpack.c.b16 %v7097, %v7097
        %v7226 = vpack.c.b16 %v7098, %v7098
        %v7227 = vpack.c.b16 %v7099, %v7099
        %v7228 = vpack.c.b16 %v7100, %v7100
        %v7229 = vpack.c.b16 %v7101, %v7101
        %v7230 = vpack.c.b16 %v7102, %v7102
        %v7231 = vpack.c.b16 %v7103, %v7103
        %v7232 = vpack.c.b16 %v7104, %v7104
        %v7233 = vpack.c.b16 %v7105, %v7105
        %v7234 = vpack.c.b16 %v7106, %v7106
        %v7235 = vpack.c.b16 %v7107, %v7107
        %v7236 = vpack.c.b16 %v7108, %v7108
        %v7237 = vpack.c.b16 %v7109, %v7109
        %v7238 = vpack.c.b16 %v7110, %v7110
        %v7239 = vpack.c.b16 %v7111, %v7111
        %v7240 = vpack.c.b16 %v7112, %v7112
        %v7241 = vpack.c.b16 %v7113, %v7113
        %v7242 = vpack.c.b16 %v7114, %v7114
        %v7243 = vpack.c.b16 %v7115, %v7115
        %v7244 = vpack.c.b16 %v7116, %v7116
        %v7245 = vpack.c.b16 %v7117, %v7117
        %v7246 = vpack.c.b16 %v7118, %v7118
        %v7247 = vpack.c.b16 %v7119, %v7119
        %v7248 = vpack.c.b16 %v7120, %v7120
        %v7249 = vpack.c.b16 %v7121, %v7121
        %v7250 = vpack.c.b16 %v7122, %v7122
        %v7251 = vpack.c.b16 %v7123, %v7123
        %v7252 = vpack.c.b16 %v7124, %v7124
        %v7253 = vpack.c.b16 %v7125, %v7125
        %v7254 = vpack.c.b16 %v7126, %v7126
        %v7255 = vpack.c.b16 %v7127, %v7127
        %v7256 = vpack.c.b16 %v7128, %v7128
        %v7257 = vpack.c.b16 %v7129, %v7129
        %v7258 = vpack.c.b16 %v7130, %v7130
        %v7259 = vpack.c.b16 %v7131, %v7131
        %v7260 = vpack.c.b16 %v7132, %v7132
        %v7261 = vpack.c.b16 %v7133, %v7133
        %v7262 = vpack.c.b16 %v7134, %v7134
        %v7263 = vpack.c.b16 %v7135, %v7135
        %v7264 = vpack.c.b16 %v7136, %v7136
        %v7265 = vpack.c.b16 %v7137, %v7137
        %v7266 = vpack.c.b16 %v7138, %v7138
        %v7267 = vpack.c.b16 %v7139, %v7139
        %7396 = vst [vmem:[%s386] sm:$0xf] %v7140
        %7397 = vst [vmem:[%s386 + $0x4] sm:$0xf] %v7141
        %7398 = vst [vmem:[%s386 + $0x8] sm:$0xf] %v7142
        %7399 = vst [vmem:[%s386 + $0xc] sm:$0xf] %v7143
        %7400 = vst [vmem:[%s386 + $0x10] sm:$0xf] %v7144
        %7401 = vst [vmem:[%s386 + $0x14] sm:$0xf] %v7145
        %7402 = vst [vmem:[%s386 + $0x18] sm:$0xf] %v7146
        %7403 = vst [vmem:[%s386 + $0x1c] sm:$0xf] %v7147
        %7404 = vst [vmem:[%s386 + $0x20] sm:$0xf] %v7148
        %7405 = vst [vmem:[%s386 + $0x24] sm:$0xf] %v7149
        %7406 = vst [vmem:[%s386 + $0x28] sm:$0xf] %v7150
        %7407 = vst [vmem:[%s386 + $0x2c] sm:$0xf] %v7151
        %7408 = vst [vmem:[%s386 + $0x30] sm:$0xf] %v7152
        %7409 = vst [vmem:[%s386 + $0x34] sm:$0xf] %v7153
        %7410 = vst [vmem:[%s386 + $0x38] sm:$0xf] %v7154
        %7411 = vst [vmem:[%s386 + $0x3c] sm:$0xf] %v7155
        %7412 = vst [vmem:[%s386 + $0x40] sm:$0xf] %v7156
        %7413 = vst [vmem:[%s386 + $0x44] sm:$0xf] %v7157
        %7414 = vst [vmem:[%s386 + $0x48] sm:$0xf] %v7158
        %7415 = vst [vmem:[%s386 + $0x4c] sm:$0xf] %v7159
        %7416 = vst [vmem:[%s386 + $0x50] sm:$0xf] %v7160
        %7417 = vst [vmem:[%s386 + $0x54] sm:$0xf] %v7161
        %7418 = vst [vmem:[%s386 + $0x58] sm:$0xf] %v7162
        %7419 = vst [vmem:[%s386 + $0x5c] sm:$0xf] %v7163
        %7420 = vst [vmem:[%s386 + $0x60] sm:$0xf] %v7164
        %7421 = vst [vmem:[%s386 + $0x64] sm:$0xf] %v7165
        %7422 = vst [vmem:[%s386 + $0x68] sm:$0xf] %v7166
        %7423 = vst [vmem:[%s386 + $0x6c] sm:$0xf] %v7167
        %7424 = vst [vmem:[%s386 + $0x70] sm:$0xf] %v7168
        %7425 = vst [vmem:[%s386 + $0x74] sm:$0xf] %v7169
        %7426 = vst [vmem:[%s386 + $0x78] sm:$0xf] %v7170
        %7427 = vst [vmem:[%s386 + $0x7c] sm:$0xf] %v7171
        %7428 = vst [vmem:[%s386 + $0x80] sm:$0xf] %v7172
        %7429 = vst [vmem:[%s386 + $0x84] sm:$0xf] %v7173
        %7430 = vst [vmem:[%s386 + $0x88] sm:$0xf] %v7174
        %7431 = vst [vmem:[%s386 + $0x8c] sm:$0xf] %v7175
        %7432 = vst [vmem:[%s386 + $0x90] sm:$0xf] %v7176
        %7433 = vst [vmem:[%s386 + $0x94] sm:$0xf] %v7177
        %7434 = vst [vmem:[%s386 + $0x98] sm:$0xf] %v7178
        %7435 = vst [vmem:[%s386 + $0x9c] sm:$0xf] %v7179
        %7436 = vst [vmem:[%s386 + $0xa0] sm:$0xf] %v7180
        %7437 = vst [vmem:[%s386 + $0xa4] sm:$0xf] %v7181
        %7438 = vst [vmem:[%s386 + $0xa8] sm:$0xf] %v7182
        %7439 = vst [vmem:[%s386 + $0xac] sm:$0xf] %v7183
        %7440 = vst [vmem:[%s386 + $0xb0] sm:$0xf] %v7184
        %7441 = vst [vmem:[%s386 + $0xb4] sm:$0xf] %v7185
        %7442 = vst [vmem:[%s386 + $0xb8] sm:$0xf] %v7186
        %7443 = vst [vmem:[%s386 + $0xbc] sm:$0xf] %v7187
        %7444 = vst [vmem:[%s386 + $0xc0] sm:$0xf] %v7188
        %7445 = vst [vmem:[%s386 + $0xc4] sm:$0xf] %v7189
        %7446 = vst [vmem:[%s386 + $0xc8] sm:$0xf] %v7190
        %7447 = vst [vmem:[%s386 + $0xcc] sm:$0xf] %v7191
        %7448 = vst [vmem:[%s386 + $0xd0] sm:$0xf] %v7192
        %7449 = vst [vmem:[%s386 + $0xd4] sm:$0xf] %v7193
        %7450 = vst [vmem:[%s386 + $0xd8] sm:$0xf] %v7194
        %7451 = vst [vmem:[%s386 + $0xdc] sm:$0xf] %v7195
        %7452 = vst [vmem:[%s386 + $0xe0] sm:$0xf] %v7196
        %7453 = vst [vmem:[%s386 + $0xe4] sm:$0xf] %v7197
        %7454 = vst [vmem:[%s386 + $0xe8] sm:$0xf] %v7198
        %7455 = vst [vmem:[%s386 + $0xec] sm:$0xf] %v7199
        %7456 = vst [vmem:[%s386 + $0xf0] sm:$0xf] %v7200
        %7457 = vst [vmem:[%s386 + $0xf4] sm:$0xf] %v7201
        %7458 = vst [vmem:[%s386 + $0xf8] sm:$0xf] %v7202
        %7459 = vst [vmem:[%s386 + $0xfc] sm:$0xf] %v7203
        %7460 = vst [vmem:[%s386 + $0x100] sm:$0xf] %v7204
        %7461 = vst [vmem:[%s386 + $0x104] sm:$0xf] %v7205
        %7462 = vst [vmem:[%s386 + $0x108] sm:$0xf] %v7206
        %7463 = vst [vmem:[%s386 + $0x10c] sm:$0xf] %v7207
        %7464 = vst [vmem:[%s386 + $0x110] sm:$0xf] %v7208
        %7465 = vst [vmem:[%s386 + $0x114] sm:$0xf] %v7209
        %7466 = vst [vmem:[%s386 + $0x118] sm:$0xf] %v7210
        %7467 = vst [vmem:[%s386 + $0x11c] sm:$0xf] %v7211
        %7468 = vst [vmem:[%s386 + $0x120] sm:$0xf] %v7212
        %7469 = vst [vmem:[%s386 + $0x124] sm:$0xf] %v7213
        %7470 = vst [vmem:[%s386 + $0x128] sm:$0xf] %v7214
        %7471 = vst [vmem:[%s386 + $0x12c] sm:$0xf] %v7215
        %7472 = vst [vmem:[%s386 + $0x130] sm:$0xf] %v7216
        %7473 = vst [vmem:[%s386 + $0x134] sm:$0xf] %v7217
        %7474 = vst [vmem:[%s386 + $0x138] sm:$0xf] %v7218
        %7475 = vst [vmem:[%s386 + $0x13c] sm:$0xf] %v7219
        %7476 = vst [vmem:[%s386 + $0x140] sm:$0xf] %v7220
        %7477 = vst [vmem:[%s386 + $0x144] sm:$0xf] %v7221
        %7478 = vst [vmem:[%s386 + $0x148] sm:$0xf] %v7222
        %7479 = vst [vmem:[%s386 + $0x14c] sm:$0xf] %v7223
        %7480 = vst [vmem:[%s386 + $0x150] sm:$0xf] %v7224
        %7481 = vst [vmem:[%s386 + $0x154] sm:$0xf] %v7225
        %7482 = vst [vmem:[%s386 + $0x158] sm:$0xf] %v7226
        %7483 = vst [vmem:[%s386 + $0x15c] sm:$0xf] %v7227
        %7484 = vst [vmem:[%s386 + $0x160] sm:$0xf] %v7228
        %7485 = vst [vmem:[%s386 + $0x164] sm:$0xf] %v7229
        %7486 = vst [vmem:[%s386 + $0x168] sm:$0xf] %v7230
        %7487 = vst [vmem:[%s386 + $0x16c] sm:$0xf] %v7231
        %7488 = vst [vmem:[%s386 + $0x170] sm:$0xf] %v7232
        %7489 = vst [vmem:[%s386 + $0x174] sm:$0xf] %v7233
        %7490 = vst [vmem:[%s386 + $0x178] sm:$0xf] %v7234
        %7491 = vst [vmem:[%s386 + $0x17c] sm:$0xf] %v7235
        %7492 = vst [vmem:[%s386 + $0x180] sm:$0xf] %v7236
        %7493 = vst [vmem:[%s386 + $0x184] sm:$0xf] %v7237
        %7494 = vst [vmem:[%s386 + $0x188] sm:$0xf] %v7238
        %7495 = vst [vmem:[%s386 + $0x18c] sm:$0xf] %v7239
        %7496 = vst [vmem:[%s386 + $0x190] sm:$0xf] %v7240
        %7497 = vst [vmem:[%s386 + $0x194] sm:$0xf] %v7241
        %7498 = vst [vmem:[%s386 + $0x198] sm:$0xf] %v7242
        %7499 = vst [vmem:[%s386 + $0x19c] sm:$0xf] %v7243
        %7500 = vst [vmem:[%s386 + $0x1a0] sm:$0xf] %v7244
        %7501 = vst [vmem:[%s386 + $0x1a4] sm:$0xf] %v7245
        %7502 = vst [vmem:[%s386 + $0x1a8] sm:$0xf] %v7246
        %7503 = vst [vmem:[%s386 + $0x1ac] sm:$0xf] %v7247
        %7504 = vst [vmem:[%s386 + $0x1b0] sm:$0xf] %v7248
        %7505 = vst [vmem:[%s386 + $0x1b4] sm:$0xf] %v7249
        %7506 = vst [vmem:[%s386 + $0x1b8] sm:$0xf] %v7250
        %7507 = vst [vmem:[%s386 + $0x1bc] sm:$0xf] %v7251
        %7508 = vst [vmem:[%s386 + $0x1c0] sm:$0xf] %v7252
        %7509 = vst [vmem:[%s386 + $0x1c4] sm:$0xf] %v7253
        %7510 = vst [vmem:[%s386 + $0x1c8] sm:$0xf] %v7254
        %7511 = vst [vmem:[%s386 + $0x1cc] sm:$0xf] %v7255
        %7512 = vst [vmem:[%s386 + $0x1d0] sm:$0xf] %v7256
        %7513 = vst [vmem:[%s386 + $0x1d4] sm:$0xf] %v7257
        %7514 = vst [vmem:[%s386 + $0x1d8] sm:$0xf] %v7258
        %7515 = vst [vmem:[%s386 + $0x1dc] sm:$0xf] %v7259
        %7516 = vst [vmem:[%s386 + $0x1e0] sm:$0xf] %v7260
        %7517 = vst [vmem:[%s386 + $0x1e4] sm:$0xf] %v7261
        %7518 = vst [vmem:[%s386 + $0x1e8] sm:$0xf] %v7262
        %7519 = vst [vmem:[%s386 + $0x1ec] sm:$0xf] %v7263
        %7520 = vst [vmem:[%s386 + $0x1f0] sm:$0xf] %v7264
        %7521 = vst [vmem:[%s386 + $0x1f4] sm:$0xf] %v7265
        %7522 = vst [vmem:[%s386 + $0x1f8] sm:$0xf] %v7266
        %7523 = vst [vmem:[%s386 + $0x1fc] sm:$0xf] %v7267
        %v7524 = vld [vmem:[%s8] sm:$0xf]
        %v7525 = vld [vmem:[%s8 + $0x4] sm:$0xf]
        %v7526 = vld [vmem:[%s8 + $0x8] sm:$0xf]
        %v7527 = vld [vmem:[%s8 + $0xc] sm:$0xf]
        %v7528 = vld [vmem:[%s8 + $0x10] sm:$0xf]
        %v7529 = vld [vmem:[%s8 + $0x14] sm:$0xf]
        %v7530 = vld [vmem:[%s8 + $0x18] sm:$0xf]
        %v7531 = vld [vmem:[%s8 + $0x1c] sm:$0xf]
        %v7532 = vld [vmem:[%s8 + $0x20] sm:$0xf]
        %v7533 = vld [vmem:[%s8 + $0x24] sm:$0xf]
        %v7534 = vld [vmem:[%s8 + $0x28] sm:$0xf]
        %v7535 = vld [vmem:[%s8 + $0x2c] sm:$0xf]
        %v7536 = vld [vmem:[%s8 + $0x30] sm:$0xf]
        %v7537 = vld [vmem:[%s8 + $0x34] sm:$0xf]
        %v7538 = vld [vmem:[%s8 + $0x38] sm:$0xf]
        %v7539 = vld [vmem:[%s8 + $0x3c] sm:$0xf]
        %v7556 = vunpack.c.l.b16 %v7524
        %v7557 = vunpack.c.l.b16 %v7525
        %v7558 = vunpack.c.l.b16 %v7526
        %v7559 = vunpack.c.l.b16 %v7527
        %v7560 = vunpack.c.l.b16 %v7528
        %v7561 = vunpack.c.l.b16 %v7529
        %v7562 = vunpack.c.l.b16 %v7530
        %v7563 = vunpack.c.l.b16 %v7531
        %v7564 = vunpack.c.l.b16 %v7532
        %v7565 = vunpack.c.l.b16 %v7533
        %v7566 = vunpack.c.l.b16 %v7534
        %v7567 = vunpack.c.l.b16 %v7535
        %v7568 = vunpack.c.l.b16 %v7536
        %v7569 = vunpack.c.l.b16 %v7537
        %v7570 = vunpack.c.l.b16 %v7538
        %v7571 = vunpack.c.l.b16 %v7539
        %v7572 = vpack.c.b16 %v7557, %v7556
        %v7573 = vpack.c.b16 %v7559, %v7558
        %v7574 = vpack.c.b16 %v7561, %v7560
        %v7575 = vpack.c.b16 %v7563, %v7562
        %v7576 = vpack.c.b16 %v7565, %v7564
        %v7577 = vpack.c.b16 %v7567, %v7566
        %v7578 = vpack.c.b16 %v7569, %v7568
        %v7579 = vpack.c.b16 %v7571, %v7570
        %7588 = vmatprep.subr.bf16.mxu0 0
        %7589 = vmatpush1.bf16.msra.mxu0 %v7579
        %7590 = vmatprep.subr.bf16.mxu0 0
        %7591 = vmatpush1.bf16.msra.mxu0 %v7578
        %7592 = vmatprep.subr.bf16.mxu0 0
        %7593 = vmatpush1.bf16.msra.mxu0 %v7577
        %7594 = vmatprep.subr.bf16.mxu0 0
        %7595 = vmatpush1.bf16.msra.mxu0 %v7576
        %7596 = vmatprep.subr.bf16.mxu0 0
        %7597 = vmatpush1.bf16.msra.mxu0 %v7575
        %7598 = vmatprep.subr.bf16.mxu0 0
        %7599 = vmatpush1.bf16.msra.mxu0 %v7574
        %7600 = vmatprep.subr.bf16.mxu0 0
        %7601 = vmatpush1.bf16.msra.mxu0 %v7573
        %7602 = vmatprep.subr.bf16.mxu0 0
        %7603 = vmatpush1.bf16.msra.mxu0 %v7572
        %7604 = vmatprep.subr.bf16.mxu0 0
        %7605 = vmatpush2.bf16.msra.mxu0 0
        %7606 = vmatprep.subr.bf16.mxu0 0
        %7607 = vmatpush2.bf16.msra.mxu0 0
        %7608 = vmatprep.subr.bf16.mxu0 0
        %7609 = vmatpush2.bf16.msra.mxu0 0
        %7610 = vmatprep.subr.bf16.mxu0 0
        %7611 = vmatpush2.bf16.msra.mxu0 0
        %7612 = vmatprep.subr.bf16.mxu0 0
        %7613 = vmatpush2.bf16.msra.mxu0 0
        %7614 = vmatprep.subr.bf16.mxu0 0
        %7615 = vmatpush2.bf16.msra.mxu0 0
        %7616 = vmatprep.subr.bf16.mxu0 0
        %7617 = vmatpush2.bf16.msra.mxu0 0
        %7618 = vmatprep.subr.bf16.mxu0 0
        %7619 = vmatpush2.bf16.msra.mxu0 0
        %7620 = vmatprep.mubr.bf16.mxu0 0
        %7621 = vmatmul.mubr.bf16.gmra.mxu0 %v6884
        %v7622 = vpop.f32.mrf.mxu0
        %v7623 = vadd.f32 0.0, %v7622
        %v7624 = vpop.f32.mrf.mxu0
        %v7625 = vpop.f32.mrf.mxu0
        %v7626 = vadd.f32 0.0, %v7625
        %v7627 = vpop.f32.mrf.mxu0
        %7628 = vmatprep.mubr.bf16.mxu0 0
        %7629 = vmatmul.mubr.bf16.gmra.mxu0 %v6885
        %v7630 = vpop.f32.mrf.mxu0
        %v7631 = vadd.f32 0.0, %v7630
        %v7632 = vpop.f32.mrf.mxu0
        %v7633 = vpop.f32.mrf.mxu0
        %v7634 = vadd.f32 0.0, %v7633
        %v7635 = vpop.f32.mrf.mxu0
        %7636 = vmatprep.mubr.bf16.mxu0 0
        %7637 = vmatmul.mubr.bf16.gmra.mxu0 %v6886
        %v7638 = vpop.f32.mrf.mxu0
        %v7639 = vadd.f32 0.0, %v7638
        %v7640 = vpop.f32.mrf.mxu0
        %v7641 = vpop.f32.mrf.mxu0
        %v7642 = vadd.f32 0.0, %v7641
        %v7643 = vpop.f32.mrf.mxu0
        %7644 = vmatprep.mubr.bf16.mxu0 0
        %7645 = vmatmul.mubr.bf16.gmra.mxu0 %v6887
        %v7646 = vpop.f32.mrf.mxu0
        %v7647 = vadd.f32 0.0, %v7646
        %v7648 = vpop.f32.mrf.mxu0
        %v7649 = vpop.f32.mrf.mxu0
        %v7650 = vadd.f32 0.0, %v7649
        %v7651 = vpop.f32.mrf.mxu0
        %7652 = vmatprep.mubr.bf16.mxu0 0
        %7653 = vmatmul.mubr.bf16.gmra.mxu0 %v6888
        %v7654 = vpop.f32.mrf.mxu0
        %v7655 = vadd.f32 0.0, %v7654
        %v7656 = vpop.f32.mrf.mxu0
        %v7657 = vpop.f32.mrf.mxu0
        %v7658 = vadd.f32 0.0, %v7657
        %v7659 = vpop.f32.mrf.mxu0
        %7660 = vmatprep.mubr.bf16.mxu0 0
        %7661 = vmatmul.mubr.bf16.gmra.mxu0 %v6889
        %v7662 = vpop.f32.mrf.mxu0
        %v7663 = vadd.f32 0.0, %v7662
        %v7664 = vpop.f32.mrf.mxu0
        %v7665 = vpop.f32.mrf.mxu0
        %v7666 = vadd.f32 0.0, %v7665
        %v7667 = vpop.f32.mrf.mxu0
        %7668 = vmatprep.mubr.bf16.mxu0 0
        %7669 = vmatmul.mubr.bf16.gmra.mxu0 %v6890
        %v7670 = vpop.f32.mrf.mxu0
        %v7671 = vadd.f32 0.0, %v7670
        %v7672 = vpop.f32.mrf.mxu0
        %v7673 = vpop.f32.mrf.mxu0
        %v7674 = vadd.f32 0.0, %v7673
        %v7675 = vpop.f32.mrf.mxu0
        %7676 = vmatprep.mubr.bf16.mxu0 0
        %7677 = vmatmul.mubr.bf16.gmra.mxu0 %v6891
        %v7678 = vpop.f32.mrf.mxu0
        %v7679 = vadd.f32 0.0, %v7678
        %v7680 = vpop.f32.mrf.mxu0
        %v7681 = vpop.f32.mrf.mxu0
        %v7682 = vadd.f32 0.0, %v7681
        %v7683 = vpop.f32.mrf.mxu0
        %7684 = vmatprep.mubr.bf16.mxu0 0
        %7685 = vmatmul.mubr.bf16.gmra.mxu0 %v6892
        %v7686 = vpop.f32.mrf.mxu0
        %v7687 = vadd.f32 0.0, %v7686
        %v7688 = vpop.f32.mrf.mxu0
        %v7689 = vpop.f32.mrf.mxu0
        %v7690 = vadd.f32 0.0, %v7689
        %v7691 = vpop.f32.mrf.mxu0
        %7692 = vmatprep.mubr.bf16.mxu0 0
        %7693 = vmatmul.mubr.bf16.gmra.mxu0 %v6893
        %v7694 = vpop.f32.mrf.mxu0
        %v7695 = vadd.f32 0.0, %v7694
        %v7696 = vpop.f32.mrf.mxu0
        %v7697 = vpop.f32.mrf.mxu0
        %v7698 = vadd.f32 0.0, %v7697
        %v7699 = vpop.f32.mrf.mxu0
        %7700 = vmatprep.mubr.bf16.mxu0 0
        %7701 = vmatmul.mubr.bf16.gmra.mxu0 %v6894
        %v7702 = vpop.f32.mrf.mxu0
        %v7703 = vadd.f32 0.0, %v7702
        %v7704 = vpop.f32.mrf.mxu0
        %v7705 = vpop.f32.mrf.mxu0
        %v7706 = vadd.f32 0.0, %v7705
        %v7707 = vpop.f32.mrf.mxu0
        %7708 = vmatprep.mubr.bf16.mxu0 0
        %7709 = vmatmul.mubr.bf16.gmra.mxu0 %v6895
        %v7710 = vpop.f32.mrf.mxu0
        %v7711 = vadd.f32 0.0, %v7710
        %v7712 = vpop.f32.mrf.mxu0
        %v7713 = vpop.f32.mrf.mxu0
        %v7714 = vadd.f32 0.0, %v7713
        %v7715 = vpop.f32.mrf.mxu0
        %7716 = vmatprep.mubr.bf16.mxu0 0
        %7717 = vmatmul.mubr.bf16.gmra.mxu0 %v6896
        %v7718 = vpop.f32.mrf.mxu0
        %v7719 = vadd.f32 0.0, %v7718
        %v7720 = vpop.f32.mrf.mxu0
        %v7721 = vpop.f32.mrf.mxu0
        %v7722 = vadd.f32 0.0, %v7721
        %v7723 = vpop.f32.mrf.mxu0
        %7724 = vmatprep.mubr.bf16.mxu0 0
        %7725 = vmatmul.mubr.bf16.gmra.mxu0 %v6897
        %v7726 = vpop.f32.mrf.mxu0
        %v7727 = vadd.f32 0.0, %v7726
        %v7728 = vpop.f32.mrf.mxu0
        %v7729 = vpop.f32.mrf.mxu0
        %v7730 = vadd.f32 0.0, %v7729
        %v7731 = vpop.f32.mrf.mxu0
        %7732 = vmatprep.mubr.bf16.mxu0 0
        %7733 = vmatmul.mubr.bf16.gmra.mxu0 %v6898
        %v7734 = vpop.f32.mrf.mxu0
        %v7735 = vadd.f32 0.0, %v7734
        %v7736 = vpop.f32.mrf.mxu0
        %v7737 = vpop.f32.mrf.mxu0
        %v7738 = vadd.f32 0.0, %v7737
        %v7739 = vpop.f32.mrf.mxu0
        %7740 = vmatprep.mubr.bf16.mxu0 0
        %7741 = vmatmul.mubr.bf16.gmra.mxu0 %v6899
        %v7742 = vpop.f32.mrf.mxu0
        %v7743 = vadd.f32 0.0, %v7742
        %v7744 = vpop.f32.mrf.mxu0
        %v7745 = vpop.f32.mrf.mxu0
        %v7746 = vadd.f32 0.0, %v7745
        %v7747 = vpop.f32.mrf.mxu0
        %7748 = vmatprep.mubr.bf16.mxu0 0
        %7749 = vmatmul.mubr.bf16.gmra.mxu0 %v6900
        %v7750 = vpop.f32.mrf.mxu0
        %v7751 = vadd.f32 0.0, %v7750
        %v7752 = vpop.f32.mrf.mxu0
        %v7753 = vpop.f32.mrf.mxu0
        %v7754 = vadd.f32 0.0, %v7753
        %v7755 = vpop.f32.mrf.mxu0
        %7756 = vmatprep.mubr.bf16.mxu0 0
        %7757 = vmatmul.mubr.bf16.gmra.mxu0 %v6901
        %v7758 = vpop.f32.mrf.mxu0
        %v7759 = vadd.f32 0.0, %v7758
        %v7760 = vpop.f32.mrf.mxu0
        %v7761 = vpop.f32.mrf.mxu0
        %v7762 = vadd.f32 0.0, %v7761
        %v7763 = vpop.f32.mrf.mxu0
        %7764 = vmatprep.mubr.bf16.mxu0 0
        %7765 = vmatmul.mubr.bf16.gmra.mxu0 %v6902
        %v7766 = vpop.f32.mrf.mxu0
        %v7767 = vadd.f32 0.0, %v7766
        %v7768 = vpop.f32.mrf.mxu0
        %v7769 = vpop.f32.mrf.mxu0
        %v7770 = vadd.f32 0.0, %v7769
        %v7771 = vpop.f32.mrf.mxu0
        %7772 = vmatprep.mubr.bf16.mxu0 0
        %7773 = vmatmul.mubr.bf16.gmra.mxu0 %v6903
        %v7774 = vpop.f32.mrf.mxu0
        %v7775 = vadd.f32 0.0, %v7774
        %v7776 = vpop.f32.mrf.mxu0
        %v7777 = vpop.f32.mrf.mxu0
        %v7778 = vadd.f32 0.0, %v7777
        %v7779 = vpop.f32.mrf.mxu0
        %7780 = vmatprep.mubr.bf16.mxu0 0
        %7781 = vmatmul.mubr.bf16.gmra.mxu0 %v6904
        %v7782 = vpop.f32.mrf.mxu0
        %v7783 = vadd.f32 0.0, %v7782
        %v7784 = vpop.f32.mrf.mxu0
        %v7785 = vpop.f32.mrf.mxu0
        %v7786 = vadd.f32 0.0, %v7785
        %v7787 = vpop.f32.mrf.mxu0
        %7788 = vmatprep.mubr.bf16.mxu0 0
        %7789 = vmatmul.mubr.bf16.gmra.mxu0 %v6905
        %v7790 = vpop.f32.mrf.mxu0
        %v7791 = vadd.f32 0.0, %v7790
        %v7792 = vpop.f32.mrf.mxu0
        %v7793 = vpop.f32.mrf.mxu0
        %v7794 = vadd.f32 0.0, %v7793
        %v7795 = vpop.f32.mrf.mxu0
        %7796 = vmatprep.mubr.bf16.mxu0 0
        %7797 = vmatmul.mubr.bf16.gmra.mxu0 %v6906
        %v7798 = vpop.f32.mrf.mxu0
        %v7799 = vadd.f32 0.0, %v7798
        %v7800 = vpop.f32.mrf.mxu0
        %v7801 = vpop.f32.mrf.mxu0
        %v7802 = vadd.f32 0.0, %v7801
        %v7803 = vpop.f32.mrf.mxu0
        %7804 = vmatprep.mubr.bf16.mxu0 0
        %7805 = vmatmul.mubr.bf16.gmra.mxu0 %v6907
        %v7806 = vpop.f32.mrf.mxu0
        %v7807 = vadd.f32 0.0, %v7806
        %v7808 = vpop.f32.mrf.mxu0
        %v7809 = vpop.f32.mrf.mxu0
        %v7810 = vadd.f32 0.0, %v7809
        %v7811 = vpop.f32.mrf.mxu0
        %7812 = vmatprep.mubr.bf16.mxu0 0
        %7813 = vmatmul.mubr.bf16.gmra.mxu0 %v6908
        %v7814 = vpop.f32.mrf.mxu0
        %v7815 = vadd.f32 0.0, %v7814
        %v7816 = vpop.f32.mrf.mxu0
        %v7817 = vpop.f32.mrf.mxu0
        %v7818 = vadd.f32 0.0, %v7817
        %v7819 = vpop.f32.mrf.mxu0
        %7820 = vmatprep.mubr.bf16.mxu0 0
        %7821 = vmatmul.mubr.bf16.gmra.mxu0 %v6909
        %v7822 = vpop.f32.mrf.mxu0
        %v7823 = vadd.f32 0.0, %v7822
        %v7824 = vpop.f32.mrf.mxu0
        %v7825 = vpop.f32.mrf.mxu0
        %v7826 = vadd.f32 0.0, %v7825
        %v7827 = vpop.f32.mrf.mxu0
        %7828 = vmatprep.mubr.bf16.mxu0 0
        %7829 = vmatmul.mubr.bf16.gmra.mxu0 %v6910
        %v7830 = vpop.f32.mrf.mxu0
        %v7831 = vadd.f32 0.0, %v7830
        %v7832 = vpop.f32.mrf.mxu0
        %v7833 = vpop.f32.mrf.mxu0
        %v7834 = vadd.f32 0.0, %v7833
        %v7835 = vpop.f32.mrf.mxu0
        %7836 = vmatprep.mubr.bf16.mxu0 0
        %7837 = vmatmul.mubr.bf16.gmra.mxu0 %v6911
        %v7838 = vpop.f32.mrf.mxu0
        %v7839 = vadd.f32 0.0, %v7838
        %v7840 = vpop.f32.mrf.mxu0
        %v7841 = vpop.f32.mrf.mxu0
        %v7842 = vadd.f32 0.0, %v7841
        %v7843 = vpop.f32.mrf.mxu0
        %7844 = vmatprep.mubr.bf16.mxu0 0
        %7845 = vmatmul.mubr.bf16.gmra.mxu0 %v6912
        %v7846 = vpop.f32.mrf.mxu0
        %v7847 = vadd.f32 0.0, %v7846
        %v7848 = vpop.f32.mrf.mxu0
        %v7849 = vpop.f32.mrf.mxu0
        %v7850 = vadd.f32 0.0, %v7849
        %v7851 = vpop.f32.mrf.mxu0
        %7852 = vmatprep.mubr.bf16.mxu0 0
        %7853 = vmatmul.mubr.bf16.gmra.mxu0 %v6913
        %v7854 = vpop.f32.mrf.mxu0
        %v7855 = vadd.f32 0.0, %v7854
        %v7856 = vpop.f32.mrf.mxu0
        %v7857 = vpop.f32.mrf.mxu0
        %v7858 = vadd.f32 0.0, %v7857
        %v7859 = vpop.f32.mrf.mxu0
        %7860 = vmatprep.mubr.bf16.mxu0 0
        %7861 = vmatmul.mubr.bf16.gmra.mxu0 %v6914
        %v7862 = vpop.f32.mrf.mxu0
        %v7863 = vadd.f32 0.0, %v7862
        %v7864 = vpop.f32.mrf.mxu0
        %v7865 = vpop.f32.mrf.mxu0
        %v7866 = vadd.f32 0.0, %v7865
        %v7867 = vpop.f32.mrf.mxu0
        %7868 = vmatprep.mubr.bf16.mxu0 0
        %7869 = vmatmul.mubr.bf16.gmra.mxu0 %v6915
        %v7870 = vpop.f32.mrf.mxu0
        %v7871 = vadd.f32 0.0, %v7870
        %v7872 = vpop.f32.mrf.mxu0
        %v7873 = vpop.f32.mrf.mxu0
        %v7874 = vadd.f32 0.0, %v7873
        %v7875 = vpop.f32.mrf.mxu0
        %7876 = vmatprep.mubr.bf16.mxu0 0
        %7877 = vmatmul.mubr.bf16.gmra.mxu0 %v6916
        %v7878 = vpop.f32.mrf.mxu0
        %v7879 = vadd.f32 0.0, %v7878
        %v7880 = vpop.f32.mrf.mxu0
        %v7881 = vpop.f32.mrf.mxu0
        %v7882 = vadd.f32 0.0, %v7881
        %v7883 = vpop.f32.mrf.mxu0
        %7884 = vmatprep.mubr.bf16.mxu0 0
        %7885 = vmatmul.mubr.bf16.gmra.mxu0 %v6917
        %v7886 = vpop.f32.mrf.mxu0
        %v7887 = vadd.f32 0.0, %v7886
        %v7888 = vpop.f32.mrf.mxu0
        %v7889 = vpop.f32.mrf.mxu0
        %v7890 = vadd.f32 0.0, %v7889
        %v7891 = vpop.f32.mrf.mxu0
        %7892 = vmatprep.mubr.bf16.mxu0 0
        %7893 = vmatmul.mubr.bf16.gmra.mxu0 %v6918
        %v7894 = vpop.f32.mrf.mxu0
        %v7895 = vadd.f32 0.0, %v7894
        %v7896 = vpop.f32.mrf.mxu0
        %v7897 = vpop.f32.mrf.mxu0
        %v7898 = vadd.f32 0.0, %v7897
        %v7899 = vpop.f32.mrf.mxu0
        %7900 = vmatprep.mubr.bf16.mxu0 0
        %7901 = vmatmul.mubr.bf16.gmra.mxu0 %v6919
        %v7902 = vpop.f32.mrf.mxu0
        %v7903 = vadd.f32 0.0, %v7902
        %v7904 = vpop.f32.mrf.mxu0
        %v7905 = vpop.f32.mrf.mxu0
        %v7906 = vadd.f32 0.0, %v7905
        %v7907 = vpop.f32.mrf.mxu0
        %7908 = vmatprep.mubr.bf16.mxu0 0
        %7909 = vmatmul.mubr.bf16.gmra.mxu0 %v6920
        %v7910 = vpop.f32.mrf.mxu0
        %v7911 = vadd.f32 0.0, %v7910
        %v7912 = vpop.f32.mrf.mxu0
        %v7913 = vpop.f32.mrf.mxu0
        %v7914 = vadd.f32 0.0, %v7913
        %v7915 = vpop.f32.mrf.mxu0
        %7916 = vmatprep.mubr.bf16.mxu0 0
        %7917 = vmatmul.mubr.bf16.gmra.mxu0 %v6921
        %v7918 = vpop.f32.mrf.mxu0
        %v7919 = vadd.f32 0.0, %v7918
        %v7920 = vpop.f32.mrf.mxu0
        %v7921 = vpop.f32.mrf.mxu0
        %v7922 = vadd.f32 0.0, %v7921
        %v7923 = vpop.f32.mrf.mxu0
        %7924 = vmatprep.mubr.bf16.mxu0 0
        %7925 = vmatmul.mubr.bf16.gmra.mxu0 %v6922
        %v7926 = vpop.f32.mrf.mxu0
        %v7927 = vadd.f32 0.0, %v7926
        %v7928 = vpop.f32.mrf.mxu0
        %v7929 = vpop.f32.mrf.mxu0
        %v7930 = vadd.f32 0.0, %v7929
        %v7931 = vpop.f32.mrf.mxu0
        %7932 = vmatprep.mubr.bf16.mxu0 0
        %7933 = vmatmul.mubr.bf16.gmra.mxu0 %v6923
        %v7934 = vpop.f32.mrf.mxu0
        %v7935 = vadd.f32 0.0, %v7934
        %v7936 = vpop.f32.mrf.mxu0
        %v7937 = vpop.f32.mrf.mxu0
        %v7938 = vadd.f32 0.0, %v7937
        %v7939 = vpop.f32.mrf.mxu0
        %7940 = vmatprep.mubr.bf16.mxu0 0
        %7941 = vmatmul.mubr.bf16.gmra.mxu0 %v6924
        %v7942 = vpop.f32.mrf.mxu0
        %v7943 = vadd.f32 0.0, %v7942
        %v7944 = vpop.f32.mrf.mxu0
        %v7945 = vpop.f32.mrf.mxu0
        %v7946 = vadd.f32 0.0, %v7945
        %v7947 = vpop.f32.mrf.mxu0
        %7948 = vmatprep.mubr.bf16.mxu0 0
        %7949 = vmatmul.mubr.bf16.gmra.mxu0 %v6925
        %v7950 = vpop.f32.mrf.mxu0
        %v7951 = vadd.f32 0.0, %v7950
        %v7952 = vpop.f32.mrf.mxu0
        %v7953 = vpop.f32.mrf.mxu0
        %v7954 = vadd.f32 0.0, %v7953
        %v7955 = vpop.f32.mrf.mxu0
        %7956 = vmatprep.mubr.bf16.mxu0 0
        %7957 = vmatmul.mubr.bf16.gmra.mxu0 %v6926
        %v7958 = vpop.f32.mrf.mxu0
        %v7959 = vadd.f32 0.0, %v7958
        %v7960 = vpop.f32.mrf.mxu0
        %v7961 = vpop.f32.mrf.mxu0
        %v7962 = vadd.f32 0.0, %v7961
        %v7963 = vpop.f32.mrf.mxu0
        %7964 = vmatprep.mubr.bf16.mxu0 0
        %7965 = vmatmul.mubr.bf16.gmra.mxu0 %v6927
        %v7966 = vpop.f32.mrf.mxu0
        %v7967 = vadd.f32 0.0, %v7966
        %v7968 = vpop.f32.mrf.mxu0
        %v7969 = vpop.f32.mrf.mxu0
        %v7970 = vadd.f32 0.0, %v7969
        %v7971 = vpop.f32.mrf.mxu0
        %7972 = vmatprep.mubr.bf16.mxu0 0
        %7973 = vmatmul.mubr.bf16.gmra.mxu0 %v6928
        %v7974 = vpop.f32.mrf.mxu0
        %v7975 = vadd.f32 0.0, %v7974
        %v7976 = vpop.f32.mrf.mxu0
        %v7977 = vpop.f32.mrf.mxu0
        %v7978 = vadd.f32 0.0, %v7977
        %v7979 = vpop.f32.mrf.mxu0
        %7980 = vmatprep.mubr.bf16.mxu0 0
        %7981 = vmatmul.mubr.bf16.gmra.mxu0 %v6929
        %v7982 = vpop.f32.mrf.mxu0
        %v7983 = vadd.f32 0.0, %v7982
        %v7984 = vpop.f32.mrf.mxu0
        %v7985 = vpop.f32.mrf.mxu0
        %v7986 = vadd.f32 0.0, %v7985
        %v7987 = vpop.f32.mrf.mxu0
        %7988 = vmatprep.mubr.bf16.mxu0 0
        %7989 = vmatmul.mubr.bf16.gmra.mxu0 %v6930
        %v7990 = vpop.f32.mrf.mxu0
        %v7991 = vadd.f32 0.0, %v7990
        %v7992 = vpop.f32.mrf.mxu0
        %v7993 = vpop.f32.mrf.mxu0
        %v7994 = vadd.f32 0.0, %v7993
        %v7995 = vpop.f32.mrf.mxu0
        %7996 = vmatprep.mubr.bf16.mxu0 0
        %7997 = vmatmul.mubr.bf16.gmra.mxu0 %v6931
        %v7998 = vpop.f32.mrf.mxu0
        %v7999 = vadd.f32 0.0, %v7998
        %v8000 = vpop.f32.mrf.mxu0
        %v8001 = vpop.f32.mrf.mxu0
        %v8002 = vadd.f32 0.0, %v8001
        %v8003 = vpop.f32.mrf.mxu0
        %8004 = vmatprep.mubr.bf16.mxu0 0
        %8005 = vmatmul.mubr.bf16.gmra.mxu0 %v6932
        %v8006 = vpop.f32.mrf.mxu0
        %v8007 = vadd.f32 0.0, %v8006
        %v8008 = vpop.f32.mrf.mxu0
        %v8009 = vpop.f32.mrf.mxu0
        %v8010 = vadd.f32 0.0, %v8009
        %v8011 = vpop.f32.mrf.mxu0
        %8012 = vmatprep.mubr.bf16.mxu0 0
        %8013 = vmatmul.mubr.bf16.gmra.mxu0 %v6933
        %v8014 = vpop.f32.mrf.mxu0
        %v8015 = vadd.f32 0.0, %v8014
        %v8016 = vpop.f32.mrf.mxu0
        %v8017 = vpop.f32.mrf.mxu0
        %v8018 = vadd.f32 0.0, %v8017
        %v8019 = vpop.f32.mrf.mxu0
        %8020 = vmatprep.mubr.bf16.mxu0 0
        %8021 = vmatmul.mubr.bf16.gmra.mxu0 %v6934
        %v8022 = vpop.f32.mrf.mxu0
        %v8023 = vadd.f32 0.0, %v8022
        %v8024 = vpop.f32.mrf.mxu0
        %v8025 = vpop.f32.mrf.mxu0
        %v8026 = vadd.f32 0.0, %v8025
        %v8027 = vpop.f32.mrf.mxu0
        %8028 = vmatprep.mubr.bf16.mxu0 0
        %8029 = vmatmul.mubr.bf16.gmra.mxu0 %v6935
        %v8030 = vpop.f32.mrf.mxu0
        %v8031 = vadd.f32 0.0, %v8030
        %v8032 = vpop.f32.mrf.mxu0
        %v8033 = vpop.f32.mrf.mxu0
        %v8034 = vadd.f32 0.0, %v8033
        %v8035 = vpop.f32.mrf.mxu0
        %8036 = vmatprep.mubr.bf16.mxu0 0
        %8037 = vmatmul.mubr.bf16.gmra.mxu0 %v6936
        %v8038 = vpop.f32.mrf.mxu0
        %v8039 = vadd.f32 0.0, %v8038
        %v8040 = vpop.f32.mrf.mxu0
        %v8041 = vpop.f32.mrf.mxu0
        %v8042 = vadd.f32 0.0, %v8041
        %v8043 = vpop.f32.mrf.mxu0
        %8044 = vmatprep.mubr.bf16.mxu0 0
        %8045 = vmatmul.mubr.bf16.gmra.mxu0 %v6937
        %v8046 = vpop.f32.mrf.mxu0
        %v8047 = vadd.f32 0.0, %v8046
        %v8048 = vpop.f32.mrf.mxu0
        %v8049 = vpop.f32.mrf.mxu0
        %v8050 = vadd.f32 0.0, %v8049
        %v8051 = vpop.f32.mrf.mxu0
        %8052 = vmatprep.mubr.bf16.mxu0 0
        %8053 = vmatmul.mubr.bf16.gmra.mxu0 %v6938
        %v8054 = vpop.f32.mrf.mxu0
        %v8055 = vadd.f32 0.0, %v8054
        %v8056 = vpop.f32.mrf.mxu0
        %v8057 = vpop.f32.mrf.mxu0
        %v8058 = vadd.f32 0.0, %v8057
        %v8059 = vpop.f32.mrf.mxu0
        %8060 = vmatprep.mubr.bf16.mxu0 0
        %8061 = vmatmul.mubr.bf16.gmra.mxu0 %v6939
        %v8062 = vpop.f32.mrf.mxu0
        %v8063 = vadd.f32 0.0, %v8062
        %v8064 = vpop.f32.mrf.mxu0
        %v8065 = vpop.f32.mrf.mxu0
        %v8066 = vadd.f32 0.0, %v8065
        %v8067 = vpop.f32.mrf.mxu0
        %8068 = vmatprep.mubr.bf16.mxu0 0
        %8069 = vmatmul.mubr.bf16.gmra.mxu0 %v6940
        %v8070 = vpop.f32.mrf.mxu0
        %v8071 = vadd.f32 0.0, %v8070
        %v8072 = vpop.f32.mrf.mxu0
        %v8073 = vpop.f32.mrf.mxu0
        %v8074 = vadd.f32 0.0, %v8073
        %v8075 = vpop.f32.mrf.mxu0
        %8076 = vmatprep.mubr.bf16.mxu0 0
        %8077 = vmatmul.mubr.bf16.gmra.mxu0 %v6941
        %v8078 = vpop.f32.mrf.mxu0
        %v8079 = vadd.f32 0.0, %v8078
        %v8080 = vpop.f32.mrf.mxu0
        %v8081 = vpop.f32.mrf.mxu0
        %v8082 = vadd.f32 0.0, %v8081
        %v8083 = vpop.f32.mrf.mxu0
        %8084 = vmatprep.mubr.bf16.mxu0 0
        %8085 = vmatmul.mubr.bf16.gmra.mxu0 %v6942
        %v8086 = vpop.f32.mrf.mxu0
        %v8087 = vadd.f32 0.0, %v8086
        %v8088 = vpop.f32.mrf.mxu0
        %v8089 = vpop.f32.mrf.mxu0
        %v8090 = vadd.f32 0.0, %v8089
        %v8091 = vpop.f32.mrf.mxu0
        %8092 = vmatprep.mubr.bf16.mxu0 0
        %8093 = vmatmul.mubr.bf16.gmra.mxu0 %v6943
        %v8094 = vpop.f32.mrf.mxu0
        %v8095 = vadd.f32 0.0, %v8094
        %v8096 = vpop.f32.mrf.mxu0
        %v8097 = vpop.f32.mrf.mxu0
        %v8098 = vadd.f32 0.0, %v8097
        %v8099 = vpop.f32.mrf.mxu0
        %8100 = vmatprep.mubr.bf16.mxu0 0
        %8101 = vmatmul.mubr.bf16.gmra.mxu0 %v6944
        %v8102 = vpop.f32.mrf.mxu0
        %v8103 = vadd.f32 0.0, %v8102
        %v8104 = vpop.f32.mrf.mxu0
        %v8105 = vpop.f32.mrf.mxu0
        %v8106 = vadd.f32 0.0, %v8105
        %v8107 = vpop.f32.mrf.mxu0
        %8108 = vmatprep.mubr.bf16.mxu0 0
        %8109 = vmatmul.mubr.bf16.gmra.mxu0 %v6945
        %v8110 = vpop.f32.mrf.mxu0
        %v8111 = vadd.f32 0.0, %v8110
        %v8112 = vpop.f32.mrf.mxu0
        %v8113 = vpop.f32.mrf.mxu0
        %v8114 = vadd.f32 0.0, %v8113
        %v8115 = vpop.f32.mrf.mxu0
        %8116 = vmatprep.mubr.bf16.mxu0 0
        %8117 = vmatmul.mubr.bf16.gmra.mxu0 %v6946
        %v8118 = vpop.f32.mrf.mxu0
        %v8119 = vadd.f32 0.0, %v8118
        %v8120 = vpop.f32.mrf.mxu0
        %v8121 = vpop.f32.mrf.mxu0
        %v8122 = vadd.f32 0.0, %v8121
        %v8123 = vpop.f32.mrf.mxu0
        %8124 = vmatprep.mubr.bf16.mxu0 0
        %8125 = vmatmul.mubr.bf16.gmra.mxu0 %v6947
        %v8126 = vpop.f32.mrf.mxu0
        %v8127 = vadd.f32 0.0, %v8126
        %v8128 = vpop.f32.mrf.mxu0
        %v8129 = vpop.f32.mrf.mxu0
        %v8130 = vadd.f32 0.0, %v8129
        %v8131 = vpop.f32.mrf.mxu0
        %8132 = vdwg.mxu0
        %v8133 = vld [vmem:[%s9] sm:$0x1]
        %v8135 = vlaneseq
        %v8136 = vshrl.u32 %v8135, 7
        %v8137 = vsub.s32 0, %v8136
        %v8138 = vrot.slane %v8133, %v8137
        %v8140 = vadd.f32 %v7623, %v8138
        %v8141 = vadd.f32 %v7626, %v8138
        %v8142 = vadd.f32 %v7631, %v8138
        %v8143 = vadd.f32 %v7634, %v8138
        %v8144 = vadd.f32 %v7639, %v8138
        %v8145 = vadd.f32 %v7642, %v8138
        %v8146 = vadd.f32 %v7647, %v8138
        %v8147 = vadd.f32 %v7650, %v8138
        %v8148 = vadd.f32 %v7655, %v8138
        %v8149 = vadd.f32 %v7658, %v8138
        %v8150 = vadd.f32 %v7663, %v8138
        %v8151 = vadd.f32 %v7666, %v8138
        %v8152 = vadd.f32 %v7671, %v8138
        %v8153 = vadd.f32 %v7674, %v8138
        %v8154 = vadd.f32 %v7679, %v8138
        %v8155 = vadd.f32 %v7682, %v8138
        %v8156 = vadd.f32 %v7687, %v8138
        %v8157 = vadd.f32 %v7690, %v8138
        %v8158 = vadd.f32 %v7695, %v8138
        %v8159 = vadd.f32 %v7698, %v8138
        %v8160 = vadd.f32 %v7703, %v8138
        %v8161 = vadd.f32 %v7706, %v8138
        %v8162 = vadd.f32 %v7711, %v8138
        %v8163 = vadd.f32 %v7714, %v8138
        %v8164 = vadd.f32 %v7719, %v8138
        %v8165 = vadd.f32 %v7722, %v8138
        %v8166 = vadd.f32 %v7727, %v8138
        %v8167 = vadd.f32 %v7730, %v8138
        %v8168 = vadd.f32 %v7735, %v8138
        %v8169 = vadd.f32 %v7738, %v8138
        %v8170 = vadd.f32 %v7743, %v8138
        %v8171 = vadd.f32 %v7746, %v8138
        %v8172 = vadd.f32 %v7751, %v8138
        %v8173 = vadd.f32 %v7754, %v8138
        %v8174 = vadd.f32 %v7759, %v8138
        %v8175 = vadd.f32 %v7762, %v8138
        %v8176 = vadd.f32 %v7767, %v8138
        %v8177 = vadd.f32 %v7770, %v8138
        %v8178 = vadd.f32 %v7775, %v8138
        %v8179 = vadd.f32 %v7778, %v8138
        %v8180 = vadd.f32 %v7783, %v8138
        %v8181 = vadd.f32 %v7786, %v8138
        %v8182 = vadd.f32 %v7791, %v8138
        %v8183 = vadd.f32 %v7794, %v8138
        %v8184 = vadd.f32 %v7799, %v8138
        %v8185 = vadd.f32 %v7802, %v8138
        %v8186 = vadd.f32 %v7807, %v8138
        %v8187 = vadd.f32 %v7810, %v8138
        %v8188 = vadd.f32 %v7815, %v8138
        %v8189 = vadd.f32 %v7818, %v8138
        %v8190 = vadd.f32 %v7823, %v8138
        %v8191 = vadd.f32 %v7826, %v8138
        %v8192 = vadd.f32 %v7831, %v8138
        %v8193 = vadd.f32 %v7834, %v8138
        %v8194 = vadd.f32 %v7839, %v8138
        %v8195 = vadd.f32 %v7842, %v8138
        %v8196 = vadd.f32 %v7847, %v8138
        %v8197 = vadd.f32 %v7850, %v8138
        %v8198 = vadd.f32 %v7855, %v8138
        %v8199 = vadd.f32 %v7858, %v8138
        %v8200 = vadd.f32 %v7863, %v8138
        %v8201 = vadd.f32 %v7866, %v8138
        %v8202 = vadd.f32 %v7871, %v8138
        %v8203 = vadd.f32 %v7874, %v8138
        %v8204 = vadd.f32 %v7879, %v8138
        %v8205 = vadd.f32 %v7882, %v8138
        %v8206 = vadd.f32 %v7887, %v8138
        %v8207 = vadd.f32 %v7890, %v8138
        %v8208 = vadd.f32 %v7895, %v8138
        %v8209 = vadd.f32 %v7898, %v8138
        %v8210 = vadd.f32 %v7903, %v8138
        %v8211 = vadd.f32 %v7906, %v8138
        %v8212 = vadd.f32 %v7911, %v8138
        %v8213 = vadd.f32 %v7914, %v8138
        %v8214 = vadd.f32 %v7919, %v8138
        %v8215 = vadd.f32 %v7922, %v8138
        %v8216 = vadd.f32 %v7927, %v8138
        %v8217 = vadd.f32 %v7930, %v8138
        %v8218 = vadd.f32 %v7935, %v8138
        %v8219 = vadd.f32 %v7938, %v8138
        %v8220 = vadd.f32 %v7943, %v8138
        %v8221 = vadd.f32 %v7946, %v8138
        %v8222 = vadd.f32 %v7951, %v8138
        %v8223 = vadd.f32 %v7954, %v8138
        %v8224 = vadd.f32 %v7959, %v8138
        %v8225 = vadd.f32 %v7962, %v8138
        %v8226 = vadd.f32 %v7967, %v8138
        %v8227 = vadd.f32 %v7970, %v8138
        %v8228 = vadd.f32 %v7975, %v8138
        %v8229 = vadd.f32 %v7978, %v8138
        %v8230 = vadd.f32 %v7983, %v8138
        %v8231 = vadd.f32 %v7986, %v8138
        %v8232 = vadd.f32 %v7991, %v8138
        %v8233 = vadd.f32 %v7994, %v8138
        %v8234 = vadd.f32 %v7999, %v8138
        %v8235 = vadd.f32 %v8002, %v8138
        %v8236 = vadd.f32 %v8007, %v8138
        %v8237 = vadd.f32 %v8010, %v8138
        %v8238 = vadd.f32 %v8015, %v8138
        %v8239 = vadd.f32 %v8018, %v8138
        %v8240 = vadd.f32 %v8023, %v8138
        %v8241 = vadd.f32 %v8026, %v8138
        %v8242 = vadd.f32 %v8031, %v8138
        %v8243 = vadd.f32 %v8034, %v8138
        %v8244 = vadd.f32 %v8039, %v8138
        %v8245 = vadd.f32 %v8042, %v8138
        %v8246 = vadd.f32 %v8047, %v8138
        %v8247 = vadd.f32 %v8050, %v8138
        %v8248 = vadd.f32 %v8055, %v8138
        %v8249 = vadd.f32 %v8058, %v8138
        %v8250 = vadd.f32 %v8063, %v8138
        %v8251 = vadd.f32 %v8066, %v8138
        %v8252 = vadd.f32 %v8071, %v8138
        %v8253 = vadd.f32 %v8074, %v8138
        %v8254 = vadd.f32 %v8079, %v8138
        %v8255 = vadd.f32 %v8082, %v8138
        %v8256 = vadd.f32 %v8087, %v8138
        %v8257 = vadd.f32 %v8090, %v8138
        %v8258 = vadd.f32 %v8095, %v8138
        %v8259 = vadd.f32 %v8098, %v8138
        %v8260 = vadd.f32 %v8103, %v8138
        %v8261 = vadd.f32 %v8106, %v8138
        %v8262 = vadd.f32 %v8111, %v8138
        %v8263 = vadd.f32 %v8114, %v8138
        %v8264 = vadd.f32 %v8119, %v8138
        %v8265 = vadd.f32 %v8122, %v8138
        %v8266 = vadd.f32 %v8127, %v8138
        %v8267 = vadd.f32 %v8130, %v8138
        %v8268 = vpack.c.bf16 %v8141, %v8140
        %v8269 = vpack.c.bf16 %v8143, %v8142
        %v8270 = vpack.c.bf16 %v8145, %v8144
        %v8271 = vpack.c.bf16 %v8147, %v8146
        %v8272 = vpack.c.bf16 %v8149, %v8148
        %v8273 = vpack.c.bf16 %v8151, %v8150
        %v8274 = vpack.c.bf16 %v8153, %v8152
        %v8275 = vpack.c.bf16 %v8155, %v8154
        %v8276 = vpack.c.bf16 %v8157, %v8156
        %v8277 = vpack.c.bf16 %v8159, %v8158
        %v8278 = vpack.c.bf16 %v8161, %v8160
        %v8279 = vpack.c.bf16 %v8163, %v8162
        %v8280 = vpack.c.bf16 %v8165, %v8164
        %v8281 = vpack.c.bf16 %v8167, %v8166
        %v8282 = vpack.c.bf16 %v8169, %v8168
        %v8283 = vpack.c.bf16 %v8171, %v8170
        %v8284 = vpack.c.bf16 %v8173, %v8172
        %v8285 = vpack.c.bf16 %v8175, %v8174
        %v8286 = vpack.c.bf16 %v8177, %v8176
        %v8287 = vpack.c.bf16 %v8179, %v8178
        %v8288 = vpack.c.bf16 %v8181, %v8180
        %v8289 = vpack.c.bf16 %v8183, %v8182
        %v8290 = vpack.c.bf16 %v8185, %v8184
        %v8291 = vpack.c.bf16 %v8187, %v8186
        %v8292 = vpack.c.bf16 %v8189, %v8188
        %v8293 = vpack.c.bf16 %v8191, %v8190
        %v8294 = vpack.c.bf16 %v8193, %v8192
        %v8295 = vpack.c.bf16 %v8195, %v8194
        %v8296 = vpack.c.bf16 %v8197, %v8196
        %v8297 = vpack.c.bf16 %v8199, %v8198
        %v8298 = vpack.c.bf16 %v8201, %v8200
        %v8299 = vpack.c.bf16 %v8203, %v8202
        %v8300 = vpack.c.bf16 %v8205, %v8204
        %v8301 = vpack.c.bf16 %v8207, %v8206
        %v8302 = vpack.c.bf16 %v8209, %v8208
        %v8303 = vpack.c.bf16 %v8211, %v8210
        %v8304 = vpack.c.bf16 %v8213, %v8212
        %v8305 = vpack.c.bf16 %v8215, %v8214
        %v8306 = vpack.c.bf16 %v8217, %v8216
        %v8307 = vpack.c.bf16 %v8219, %v8218
        %v8308 = vpack.c.bf16 %v8221, %v8220
        %v8309 = vpack.c.bf16 %v8223, %v8222
        %v8310 = vpack.c.bf16 %v8225, %v8224
        %v8311 = vpack.c.bf16 %v8227, %v8226
        %v8312 = vpack.c.bf16 %v8229, %v8228
        %v8313 = vpack.c.bf16 %v8231, %v8230
        %v8314 = vpack.c.bf16 %v8233, %v8232
        %v8315 = vpack.c.bf16 %v8235, %v8234
        %v8316 = vpack.c.bf16 %v8237, %v8236
        %v8317 = vpack.c.bf16 %v8239, %v8238
        %v8318 = vpack.c.bf16 %v8241, %v8240
        %v8319 = vpack.c.bf16 %v8243, %v8242
        %v8320 = vpack.c.bf16 %v8245, %v8244
        %v8321 = vpack.c.bf16 %v8247, %v8246
        %v8322 = vpack.c.bf16 %v8249, %v8248
        %v8323 = vpack.c.bf16 %v8251, %v8250
        %v8324 = vpack.c.bf16 %v8253, %v8252
        %v8325 = vpack.c.bf16 %v8255, %v8254
        %v8326 = vpack.c.bf16 %v8257, %v8256
        %v8327 = vpack.c.bf16 %v8259, %v8258
        %v8328 = vpack.c.bf16 %v8261, %v8260
        %v8329 = vpack.c.bf16 %v8263, %v8262
        %v8330 = vpack.c.bf16 %v8265, %v8264
        %v8331 = vpack.c.bf16 %v8267, %v8266
        %v8396 = vunpack.c.l.b16 %v8268
        %v8397 = vunpack.c.h.b16 %v8268
        %v8398 = vunpack.c.l.b16 %v8269
        %v8399 = vunpack.c.h.b16 %v8269
        %v8400 = vunpack.c.l.b16 %v8270
        %v8401 = vunpack.c.h.b16 %v8270
        %v8402 = vunpack.c.l.b16 %v8271
        %v8403 = vunpack.c.h.b16 %v8271
        %v8404 = vunpack.c.l.b16 %v8272
        %v8405 = vunpack.c.h.b16 %v8272
        %v8406 = vunpack.c.l.b16 %v8273
        %v8407 = vunpack.c.h.b16 %v8273
        %v8408 = vunpack.c.l.b16 %v8274
        %v8409 = vunpack.c.h.b16 %v8274
        %v8410 = vunpack.c.l.b16 %v8275
        %v8411 = vunpack.c.h.b16 %v8275
        %v8412 = vunpack.c.l.b16 %v8276
        %v8413 = vunpack.c.h.b16 %v8276
        %v8414 = vunpack.c.l.b16 %v8277
        %v8415 = vunpack.c.h.b16 %v8277
        %v8416 = vunpack.c.l.b16 %v8278
        %v8417 = vunpack.c.h.b16 %v8278
        %v8418 = vunpack.c.l.b16 %v8279
        %v8419 = vunpack.c.h.b16 %v8279
        %v8420 = vunpack.c.l.b16 %v8280
        %v8421 = vunpack.c.h.b16 %v8280
        %v8422 = vunpack.c.l.b16 %v8281
        %v8423 = vunpack.c.h.b16 %v8281
        %v8424 = vunpack.c.l.b16 %v8282
        %v8425 = vunpack.c.h.b16 %v8282
        %v8426 = vunpack.c.l.b16 %v8283
        %v8427 = vunpack.c.h.b16 %v8283
        %v8428 = vunpack.c.l.b16 %v8284
        %v8429 = vunpack.c.h.b16 %v8284
        %v8430 = vunpack.c.l.b16 %v8285
        %v8431 = vunpack.c.h.b16 %v8285
        %v8432 = vunpack.c.l.b16 %v8286
        %v8433 = vunpack.c.h.b16 %v8286
        %v8434 = vunpack.c.l.b16 %v8287
        %v8435 = vunpack.c.h.b16 %v8287
        %v8436 = vunpack.c.l.b16 %v8288
        %v8437 = vunpack.c.h.b16 %v8288
        %v8438 = vunpack.c.l.b16 %v8289
        %v8439 = vunpack.c.h.b16 %v8289
        %v8440 = vunpack.c.l.b16 %v8290
        %v8441 = vunpack.c.h.b16 %v8290
        %v8442 = vunpack.c.l.b16 %v8291
        %v8443 = vunpack.c.h.b16 %v8291
        %v8444 = vunpack.c.l.b16 %v8292
        %v8445 = vunpack.c.h.b16 %v8292
        %v8446 = vunpack.c.l.b16 %v8293
        %v8447 = vunpack.c.h.b16 %v8293
        %v8448 = vunpack.c.l.b16 %v8294
        %v8449 = vunpack.c.h.b16 %v8294
        %v8450 = vunpack.c.l.b16 %v8295
        %v8451 = vunpack.c.h.b16 %v8295
        %v8452 = vunpack.c.l.b16 %v8296
        %v8453 = vunpack.c.h.b16 %v8296
        %v8454 = vunpack.c.l.b16 %v8297
        %v8455 = vunpack.c.h.b16 %v8297
        %v8456 = vunpack.c.l.b16 %v8298
        %v8457 = vunpack.c.h.b16 %v8298
        %v8458 = vunpack.c.l.b16 %v8299
        %v8459 = vunpack.c.h.b16 %v8299
        %v8460 = vunpack.c.l.b16 %v8300
        %v8461 = vunpack.c.h.b16 %v8300
        %v8462 = vunpack.c.l.b16 %v8301
        %v8463 = vunpack.c.h.b16 %v8301
        %v8464 = vunpack.c.l.b16 %v8302
        %v8465 = vunpack.c.h.b16 %v8302
        %v8466 = vunpack.c.l.b16 %v8303
        %v8467 = vunpack.c.h.b16 %v8303
        %v8468 = vunpack.c.l.b16 %v8304
        %v8469 = vunpack.c.h.b16 %v8304
        %v8470 = vunpack.c.l.b16 %v8305
        %v8471 = vunpack.c.h.b16 %v8305
        %v8472 = vunpack.c.l.b16 %v8306
        %v8473 = vunpack.c.h.b16 %v8306
        %v8474 = vunpack.c.l.b16 %v8307
        %v8475 = vunpack.c.h.b16 %v8307
        %v8476 = vunpack.c.l.b16 %v8308
        %v8477 = vunpack.c.h.b16 %v8308
        %v8478 = vunpack.c.l.b16 %v8309
        %v8479 = vunpack.c.h.b16 %v8309
        %v8480 = vunpack.c.l.b16 %v8310
        %v8481 = vunpack.c.h.b16 %v8310
        %v8482 = vunpack.c.l.b16 %v8311
        %v8483 = vunpack.c.h.b16 %v8311
        %v8484 = vunpack.c.l.b16 %v8312
        %v8485 = vunpack.c.h.b16 %v8312
        %v8486 = vunpack.c.l.b16 %v8313
        %v8487 = vunpack.c.h.b16 %v8313
        %v8488 = vunpack.c.l.b16 %v8314
        %v8489 = vunpack.c.h.b16 %v8314
        %v8490 = vunpack.c.l.b16 %v8315
        %v8491 = vunpack.c.h.b16 %v8315
        %v8492 = vunpack.c.l.b16 %v8316
        %v8493 = vunpack.c.h.b16 %v8316
        %v8494 = vunpack.c.l.b16 %v8317
        %v8495 = vunpack.c.h.b16 %v8317
        %v8496 = vunpack.c.l.b16 %v8318
        %v8497 = vunpack.c.h.b16 %v8318
        %v8498 = vunpack.c.l.b16 %v8319
        %v8499 = vunpack.c.h.b16 %v8319
        %v8500 = vunpack.c.l.b16 %v8320
        %v8501 = vunpack.c.h.b16 %v8320
        %v8502 = vunpack.c.l.b16 %v8321
        %v8503 = vunpack.c.h.b16 %v8321
        %v8504 = vunpack.c.l.b16 %v8322
        %v8505 = vunpack.c.h.b16 %v8322
        %v8506 = vunpack.c.l.b16 %v8323
        %v8507 = vunpack.c.h.b16 %v8323
        %v8508 = vunpack.c.l.b16 %v8324
        %v8509 = vunpack.c.h.b16 %v8324
        %v8510 = vunpack.c.l.b16 %v8325
        %v8511 = vunpack.c.h.b16 %v8325
        %v8512 = vunpack.c.l.b16 %v8326
        %v8513 = vunpack.c.h.b16 %v8326
        %v8514 = vunpack.c.l.b16 %v8327
        %v8515 = vunpack.c.h.b16 %v8327
        %v8516 = vunpack.c.l.b16 %v8328
        %v8517 = vunpack.c.h.b16 %v8328
        %v8518 = vunpack.c.l.b16 %v8329
        %v8519 = vunpack.c.h.b16 %v8329
        %v8520 = vunpack.c.l.b16 %v8330
        %v8521 = vunpack.c.h.b16 %v8330
        %v8522 = vunpack.c.l.b16 %v8331
        %v8523 = vunpack.c.h.b16 %v8331
        %v8524 = vpack.c.b16 %v8396, %v8396
        %v8525 = vpack.c.b16 %v8397, %v8397
        %v8526 = vpack.c.b16 %v8398, %v8398
        %v8527 = vpack.c.b16 %v8399, %v8399
        %v8528 = vpack.c.b16 %v8400, %v8400
        %v8529 = vpack.c.b16 %v8401, %v8401
        %v8530 = vpack.c.b16 %v8402, %v8402
        %v8531 = vpack.c.b16 %v8403, %v8403
        %v8532 = vpack.c.b16 %v8404, %v8404
        %v8533 = vpack.c.b16 %v8405, %v8405
        %v8534 = vpack.c.b16 %v8406, %v8406
        %v8535 = vpack.c.b16 %v8407, %v8407
        %v8536 = vpack.c.b16 %v8408, %v8408
        %v8537 = vpack.c.b16 %v8409, %v8409
        %v8538 = vpack.c.b16 %v8410, %v8410
        %v8539 = vpack.c.b16 %v8411, %v8411
        %v8540 = vpack.c.b16 %v8412, %v8412
        %v8541 = vpack.c.b16 %v8413, %v8413
        %v8542 = vpack.c.b16 %v8414, %v8414
        %v8543 = vpack.c.b16 %v8415, %v8415
        %v8544 = vpack.c.b16 %v8416, %v8416
        %v8545 = vpack.c.b16 %v8417, %v8417
        %v8546 = vpack.c.b16 %v8418, %v8418
        %v8547 = vpack.c.b16 %v8419, %v8419
        %v8548 = vpack.c.b16 %v8420, %v8420
        %v8549 = vpack.c.b16 %v8421, %v8421
        %v8550 = vpack.c.b16 %v8422, %v8422
        %v8551 = vpack.c.b16 %v8423, %v8423
        %v8552 = vpack.c.b16 %v8424, %v8424
        %v8553 = vpack.c.b16 %v8425, %v8425
        %v8554 = vpack.c.b16 %v8426, %v8426
        %v8555 = vpack.c.b16 %v8427, %v8427
        %v8556 = vpack.c.b16 %v8428, %v8428
        %v8557 = vpack.c.b16 %v8429, %v8429
        %v8558 = vpack.c.b16 %v8430, %v8430
        %v8559 = vpack.c.b16 %v8431, %v8431
        %v8560 = vpack.c.b16 %v8432, %v8432
        %v8561 = vpack.c.b16 %v8433, %v8433
        %v8562 = vpack.c.b16 %v8434, %v8434
        %v8563 = vpack.c.b16 %v8435, %v8435
        %v8564 = vpack.c.b16 %v8436, %v8436
        %v8565 = vpack.c.b16 %v8437, %v8437
        %v8566 = vpack.c.b16 %v8438, %v8438
        %v8567 = vpack.c.b16 %v8439, %v8439
        %v8568 = vpack.c.b16 %v8440, %v8440
        %v8569 = vpack.c.b16 %v8441, %v8441
        %v8570 = vpack.c.b16 %v8442, %v8442
        %v8571 = vpack.c.b16 %v8443, %v8443
        %v8572 = vpack.c.b16 %v8444, %v8444
        %v8573 = vpack.c.b16 %v8445, %v8445
        %v8574 = vpack.c.b16 %v8446, %v8446
        %v8575 = vpack.c.b16 %v8447, %v8447
        %v8576 = vpack.c.b16 %v8448, %v8448
        %v8577 = vpack.c.b16 %v8449, %v8449
        %v8578 = vpack.c.b16 %v8450, %v8450
        %v8579 = vpack.c.b16 %v8451, %v8451
        %v8580 = vpack.c.b16 %v8452, %v8452
        %v8581 = vpack.c.b16 %v8453, %v8453
        %v8582 = vpack.c.b16 %v8454, %v8454
        %v8583 = vpack.c.b16 %v8455, %v8455
        %v8584 = vpack.c.b16 %v8456, %v8456
        %v8585 = vpack.c.b16 %v8457, %v8457
        %v8586 = vpack.c.b16 %v8458, %v8458
        %v8587 = vpack.c.b16 %v8459, %v8459
        %v8588 = vpack.c.b16 %v8460, %v8460
        %v8589 = vpack.c.b16 %v8461, %v8461
        %v8590 = vpack.c.b16 %v8462, %v8462
        %v8591 = vpack.c.b16 %v8463, %v8463
        %v8592 = vpack.c.b16 %v8464, %v8464
        %v8593 = vpack.c.b16 %v8465, %v8465
        %v8594 = vpack.c.b16 %v8466, %v8466
        %v8595 = vpack.c.b16 %v8467, %v8467
        %v8596 = vpack.c.b16 %v8468, %v8468
        %v8597 = vpack.c.b16 %v8469, %v8469
        %v8598 = vpack.c.b16 %v8470, %v8470
        %v8599 = vpack.c.b16 %v8471, %v8471
        %v8600 = vpack.c.b16 %v8472, %v8472
        %v8601 = vpack.c.b16 %v8473, %v8473
        %v8602 = vpack.c.b16 %v8474, %v8474
        %v8603 = vpack.c.b16 %v8475, %v8475
        %v8604 = vpack.c.b16 %v8476, %v8476
        %v8605 = vpack.c.b16 %v8477, %v8477
        %v8606 = vpack.c.b16 %v8478, %v8478
        %v8607 = vpack.c.b16 %v8479, %v8479
        %v8608 = vpack.c.b16 %v8480, %v8480
        %v8609 = vpack.c.b16 %v8481, %v8481
        %v8610 = vpack.c.b16 %v8482, %v8482
        %v8611 = vpack.c.b16 %v8483, %v8483
        %v8612 = vpack.c.b16 %v8484, %v8484
        %v8613 = vpack.c.b16 %v8485, %v8485
        %v8614 = vpack.c.b16 %v8486, %v8486
        %v8615 = vpack.c.b16 %v8487, %v8487
        %v8616 = vpack.c.b16 %v8488, %v8488
        %v8617 = vpack.c.b16 %v8489, %v8489
        %v8618 = vpack.c.b16 %v8490, %v8490
        %v8619 = vpack.c.b16 %v8491, %v8491
        %v8620 = vpack.c.b16 %v8492, %v8492
        %v8621 = vpack.c.b16 %v8493, %v8493
        %v8622 = vpack.c.b16 %v8494, %v8494
        %v8623 = vpack.c.b16 %v8495, %v8495
        %v8624 = vpack.c.b16 %v8496, %v8496
        %v8625 = vpack.c.b16 %v8497, %v8497
        %v8626 = vpack.c.b16 %v8498, %v8498
        %v8627 = vpack.c.b16 %v8499, %v8499
        %v8628 = vpack.c.b16 %v8500, %v8500
        %v8629 = vpack.c.b16 %v8501, %v8501
        %v8630 = vpack.c.b16 %v8502, %v8502
        %v8631 = vpack.c.b16 %v8503, %v8503
        %v8632 = vpack.c.b16 %v8504, %v8504
        %v8633 = vpack.c.b16 %v8505, %v8505
        %v8634 = vpack.c.b16 %v8506, %v8506
        %v8635 = vpack.c.b16 %v8507, %v8507
        %v8636 = vpack.c.b16 %v8508, %v8508
        %v8637 = vpack.c.b16 %v8509, %v8509
        %v8638 = vpack.c.b16 %v8510, %v8510
        %v8639 = vpack.c.b16 %v8511, %v8511
        %v8640 = vpack.c.b16 %v8512, %v8512
        %v8641 = vpack.c.b16 %v8513, %v8513
        %v8642 = vpack.c.b16 %v8514, %v8514
        %v8643 = vpack.c.b16 %v8515, %v8515
        %v8644 = vpack.c.b16 %v8516, %v8516
        %v8645 = vpack.c.b16 %v8517, %v8517
        %v8646 = vpack.c.b16 %v8518, %v8518
        %v8647 = vpack.c.b16 %v8519, %v8519
        %v8648 = vpack.c.b16 %v8520, %v8520
        %v8649 = vpack.c.b16 %v8521, %v8521
        %v8650 = vpack.c.b16 %v8522, %v8522
        %v8651 = vpack.c.b16 %v8523, %v8523
        %vm8780 = vcmask 519168
        %8781 = vst.msk [vmem:[%s393] sm:$0xf] %vm8780, %v8524
        %8782 = vst.msk [vmem:[%s393 + $0x4] sm:$0xf] %vm8780, %v8525
        %8783 = vst.msk [vmem:[%s393 + $0x8] sm:$0xf] %vm8780, %v8526
        %8784 = vst.msk [vmem:[%s393 + $0xc] sm:$0xf] %vm8780, %v8527
        %8785 = vst.msk [vmem:[%s393 + $0x10] sm:$0xf] %vm8780, %v8528
        %8786 = vst.msk [vmem:[%s393 + $0x14] sm:$0xf] %vm8780, %v8529
        %8787 = vst.msk [vmem:[%s393 + $0x18] sm:$0xf] %vm8780, %v8530
        %8788 = vst.msk [vmem:[%s393 + $0x1c] sm:$0xf] %vm8780, %v8531
        %8789 = vst.msk [vmem:[%s393 + $0x20] sm:$0xf] %vm8780, %v8532
        %8790 = vst.msk [vmem:[%s393 + $0x24] sm:$0xf] %vm8780, %v8533
        %8791 = vst.msk [vmem:[%s393 + $0x28] sm:$0xf] %vm8780, %v8534
        %8792 = vst.msk [vmem:[%s393 + $0x2c] sm:$0xf] %vm8780, %v8535
        %8793 = vst.msk [vmem:[%s393 + $0x30] sm:$0xf] %vm8780, %v8536
        %8794 = vst.msk [vmem:[%s393 + $0x34] sm:$0xf] %vm8780, %v8537
        %8795 = vst.msk [vmem:[%s393 + $0x38] sm:$0xf] %vm8780, %v8538
        %8796 = vst.msk [vmem:[%s393 + $0x3c] sm:$0xf] %vm8780, %v8539
        %8797 = vst.msk [vmem:[%s393 + $0x40] sm:$0xf] %vm8780, %v8540
        %8798 = vst.msk [vmem:[%s393 + $0x44] sm:$0xf] %vm8780, %v8541
        %8799 = vst.msk [vmem:[%s393 + $0x48] sm:$0xf] %vm8780, %v8542
        %8800 = vst.msk [vmem:[%s393 + $0x4c] sm:$0xf] %vm8780, %v8543
        %8801 = vst.msk [vmem:[%s393 + $0x50] sm:$0xf] %vm8780, %v8544
        %8802 = vst.msk [vmem:[%s393 + $0x54] sm:$0xf] %vm8780, %v8545
        %8803 = vst.msk [vmem:[%s393 + $0x58] sm:$0xf] %vm8780, %v8546
        %8804 = vst.msk [vmem:[%s393 + $0x5c] sm:$0xf] %vm8780, %v8547
        %8805 = vst.msk [vmem:[%s393 + $0x60] sm:$0xf] %vm8780, %v8548
        %8806 = vst.msk [vmem:[%s393 + $0x64] sm:$0xf] %vm8780, %v8549
        %8807 = vst.msk [vmem:[%s393 + $0x68] sm:$0xf] %vm8780, %v8550
        %8808 = vst.msk [vmem:[%s393 + $0x6c] sm:$0xf] %vm8780, %v8551
        %8809 = vst.msk [vmem:[%s393 + $0x70] sm:$0xf] %vm8780, %v8552
        %8810 = vst.msk [vmem:[%s393 + $0x74] sm:$0xf] %vm8780, %v8553
        %8811 = vst.msk [vmem:[%s393 + $0x78] sm:$0xf] %vm8780, %v8554
        %8812 = vst.msk [vmem:[%s393 + $0x7c] sm:$0xf] %vm8780, %v8555
        %8813 = vst.msk [vmem:[%s393 + $0x80] sm:$0xf] %vm8780, %v8556
        %8814 = vst.msk [vmem:[%s393 + $0x84] sm:$0xf] %vm8780, %v8557
        %8815 = vst.msk [vmem:[%s393 + $0x88] sm:$0xf] %vm8780, %v8558
        %8816 = vst.msk [vmem:[%s393 + $0x8c] sm:$0xf] %vm8780, %v8559
        %8817 = vst.msk [vmem:[%s393 + $0x90] sm:$0xf] %vm8780, %v8560
        %8818 = vst.msk [vmem:[%s393 + $0x94] sm:$0xf] %vm8780, %v8561
        %8819 = vst.msk [vmem:[%s393 + $0x98] sm:$0xf] %vm8780, %v8562
        %8820 = vst.msk [vmem:[%s393 + $0x9c] sm:$0xf] %vm8780, %v8563
        %8821 = vst.msk [vmem:[%s393 + $0xa0] sm:$0xf] %vm8780, %v8564
        %8822 = vst.msk [vmem:[%s393 + $0xa4] sm:$0xf] %vm8780, %v8565
        %8823 = vst.msk [vmem:[%s393 + $0xa8] sm:$0xf] %vm8780, %v8566
        %8824 = vst.msk [vmem:[%s393 + $0xac] sm:$0xf] %vm8780, %v8567
        %8825 = vst.msk [vmem:[%s393 + $0xb0] sm:$0xf] %vm8780, %v8568
        %8826 = vst.msk [vmem:[%s393 + $0xb4] sm:$0xf] %vm8780, %v8569
        %8827 = vst.msk [vmem:[%s393 + $0xb8] sm:$0xf] %vm8780, %v8570
        %8828 = vst.msk [vmem:[%s393 + $0xbc] sm:$0xf] %vm8780, %v8571
        %8829 = vst.msk [vmem:[%s393 + $0xc0] sm:$0xf] %vm8780, %v8572
        %8830 = vst.msk [vmem:[%s393 + $0xc4] sm:$0xf] %vm8780, %v8573
        %8831 = vst.msk [vmem:[%s393 + $0xc8] sm:$0xf] %vm8780, %v8574
        %8832 = vst.msk [vmem:[%s393 + $0xcc] sm:$0xf] %vm8780, %v8575
        %8833 = vst.msk [vmem:[%s393 + $0xd0] sm:$0xf] %vm8780, %v8576
        %8834 = vst.msk [vmem:[%s393 + $0xd4] sm:$0xf] %vm8780, %v8577
        %8835 = vst.msk [vmem:[%s393 + $0xd8] sm:$0xf] %vm8780, %v8578
        %8836 = vst.msk [vmem:[%s393 + $0xdc] sm:$0xf] %vm8780, %v8579
        %8837 = vst.msk [vmem:[%s393 + $0xe0] sm:$0xf] %vm8780, %v8580
        %8838 = vst.msk [vmem:[%s393 + $0xe4] sm:$0xf] %vm8780, %v8581
        %8839 = vst.msk [vmem:[%s393 + $0xe8] sm:$0xf] %vm8780, %v8582
        %8840 = vst.msk [vmem:[%s393 + $0xec] sm:$0xf] %vm8780, %v8583
        %8841 = vst.msk [vmem:[%s393 + $0xf0] sm:$0xf] %vm8780, %v8584
        %8842 = vst.msk [vmem:[%s393 + $0xf4] sm:$0xf] %vm8780, %v8585
        %8843 = vst.msk [vmem:[%s393 + $0xf8] sm:$0xf] %vm8780, %v8586
        %8844 = vst.msk [vmem:[%s393 + $0xfc] sm:$0xf] %vm8780, %v8587
        %8845 = vst.msk [vmem:[%s393 + $0x100] sm:$0xf] %vm8780, %v8588
        %8846 = vst.msk [vmem:[%s393 + $0x104] sm:$0xf] %vm8780, %v8589
        %8847 = vst.msk [vmem:[%s393 + $0x108] sm:$0xf] %vm8780, %v8590
        %8848 = vst.msk [vmem:[%s393 + $0x10c] sm:$0xf] %vm8780, %v8591
        %8849 = vst.msk [vmem:[%s393 + $0x110] sm:$0xf] %vm8780, %v8592
        %8850 = vst.msk [vmem:[%s393 + $0x114] sm:$0xf] %vm8780, %v8593
        %8851 = vst.msk [vmem:[%s393 + $0x118] sm:$0xf] %vm8780, %v8594
        %8852 = vst.msk [vmem:[%s393 + $0x11c] sm:$0xf] %vm8780, %v8595
        %8853 = vst.msk [vmem:[%s393 + $0x120] sm:$0xf] %vm8780, %v8596
        %8854 = vst.msk [vmem:[%s393 + $0x124] sm:$0xf] %vm8780, %v8597
        %8855 = vst.msk [vmem:[%s393 + $0x128] sm:$0xf] %vm8780, %v8598
        %8856 = vst.msk [vmem:[%s393 + $0x12c] sm:$0xf] %vm8780, %v8599
        %8857 = vst.msk [vmem:[%s393 + $0x130] sm:$0xf] %vm8780, %v8600
        %8858 = vst.msk [vmem:[%s393 + $0x134] sm:$0xf] %vm8780, %v8601
        %8859 = vst.msk [vmem:[%s393 + $0x138] sm:$0xf] %vm8780, %v8602
        %8860 = vst.msk [vmem:[%s393 + $0x13c] sm:$0xf] %vm8780, %v8603
        %8861 = vst.msk [vmem:[%s393 + $0x140] sm:$0xf] %vm8780, %v8604
        %8862 = vst.msk [vmem:[%s393 + $0x144] sm:$0xf] %vm8780, %v8605
        %8863 = vst.msk [vmem:[%s393 + $0x148] sm:$0xf] %vm8780, %v8606
        %8864 = vst.msk [vmem:[%s393 + $0x14c] sm:$0xf] %vm8780, %v8607
        %8865 = vst.msk [vmem:[%s393 + $0x150] sm:$0xf] %vm8780, %v8608
        %8866 = vst.msk [vmem:[%s393 + $0x154] sm:$0xf] %vm8780, %v8609
        %8867 = vst.msk [vmem:[%s393 + $0x158] sm:$0xf] %vm8780, %v8610
        %8868 = vst.msk [vmem:[%s393 + $0x15c] sm:$0xf] %vm8780, %v8611
        %8869 = vst.msk [vmem:[%s393 + $0x160] sm:$0xf] %vm8780, %v8612
        %8870 = vst.msk [vmem:[%s393 + $0x164] sm:$0xf] %vm8780, %v8613
        %8871 = vst.msk [vmem:[%s393 + $0x168] sm:$0xf] %vm8780, %v8614
        %8872 = vst.msk [vmem:[%s393 + $0x16c] sm:$0xf] %vm8780, %v8615
        %8873 = vst.msk [vmem:[%s393 + $0x170] sm:$0xf] %vm8780, %v8616
        %8874 = vst.msk [vmem:[%s393 + $0x174] sm:$0xf] %vm8780, %v8617
        %8875 = vst.msk [vmem:[%s393 + $0x178] sm:$0xf] %vm8780, %v8618
        %8876 = vst.msk [vmem:[%s393 + $0x17c] sm:$0xf] %vm8780, %v8619
        %8877 = vst.msk [vmem:[%s393 + $0x180] sm:$0xf] %vm8780, %v8620
        %8878 = vst.msk [vmem:[%s393 + $0x184] sm:$0xf] %vm8780, %v8621
        %8879 = vst.msk [vmem:[%s393 + $0x188] sm:$0xf] %vm8780, %v8622
        %8880 = vst.msk [vmem:[%s393 + $0x18c] sm:$0xf] %vm8780, %v8623
        %8881 = vst.msk [vmem:[%s393 + $0x190] sm:$0xf] %vm8780, %v8624
        %8882 = vst.msk [vmem:[%s393 + $0x194] sm:$0xf] %vm8780, %v8625
        %8883 = vst.msk [vmem:[%s393 + $0x198] sm:$0xf] %vm8780, %v8626
        %8884 = vst.msk [vmem:[%s393 + $0x19c] sm:$0xf] %vm8780, %v8627
        %8885 = vst.msk [vmem:[%s393 + $0x1a0] sm:$0xf] %vm8780, %v8628
        %8886 = vst.msk [vmem:[%s393 + $0x1a4] sm:$0xf] %vm8780, %v8629
        %8887 = vst.msk [vmem:[%s393 + $0x1a8] sm:$0xf] %vm8780, %v8630
        %8888 = vst.msk [vmem:[%s393 + $0x1ac] sm:$0xf] %vm8780, %v8631
        %8889 = vst.msk [vmem:[%s393 + $0x1b0] sm:$0xf] %vm8780, %v8632
        %8890 = vst.msk [vmem:[%s393 + $0x1b4] sm:$0xf] %vm8780, %v8633
        %8891 = vst.msk [vmem:[%s393 + $0x1b8] sm:$0xf] %vm8780, %v8634
        %8892 = vst.msk [vmem:[%s393 + $0x1bc] sm:$0xf] %vm8780, %v8635
        %8893 = vst.msk [vmem:[%s393 + $0x1c0] sm:$0xf] %vm8780, %v8636
        %8894 = vst.msk [vmem:[%s393 + $0x1c4] sm:$0xf] %vm8780, %v8637
        %8895 = vst.msk [vmem:[%s393 + $0x1c8] sm:$0xf] %vm8780, %v8638
        %8896 = vst.msk [vmem:[%s393 + $0x1cc] sm:$0xf] %vm8780, %v8639
        %8897 = vst.msk [vmem:[%s393 + $0x1d0] sm:$0xf] %vm8780, %v8640
        %8898 = vst.msk [vmem:[%s393 + $0x1d4] sm:$0xf] %vm8780, %v8641
        %8899 = vst.msk [vmem:[%s393 + $0x1d8] sm:$0xf] %vm8780, %v8642
        %8900 = vst.msk [vmem:[%s393 + $0x1dc] sm:$0xf] %vm8780, %v8643
        %8901 = vst.msk [vmem:[%s393 + $0x1e0] sm:$0xf] %vm8780, %v8644
        %8902 = vst.msk [vmem:[%s393 + $0x1e4] sm:$0xf] %vm8780, %v8645
        %8903 = vst.msk [vmem:[%s393 + $0x1e8] sm:$0xf] %vm8780, %v8646
        %8904 = vst.msk [vmem:[%s393 + $0x1ec] sm:$0xf] %vm8780, %v8647
        %8905 = vst.msk [vmem:[%s393 + $0x1f0] sm:$0xf] %vm8780, %v8648
        %8906 = vst.msk [vmem:[%s393 + $0x1f4] sm:$0xf] %vm8780, %v8649
        %8907 = vst.msk [vmem:[%s393 + $0x1f8] sm:$0xf] %vm8780, %v8650
        %8908 = vst.msk [vmem:[%s393 + $0x1fc] sm:$0xf] %vm8780, %v8651
        %s8909 = sand.u32 %s252, 1
        %s8910 = scalar_lea.sflag [#allocation3], %s8909
        %s8911 = sand.u32 %s252, 1
        %s8912 = smul.addr %s8911, 512
        %s8913 = scalar_lea.vmem [#allocation2], %s8912
        %s8914 = sand.u32 %s278, 1
        %s8915 = scalar_lea.sflag [#allocation5], %s8914
        %s8916 = sand.u32 %s278, 1
        %s8917 = smul.addr %s8916, 512
        %s8918 = scalar_lea.vmem [#allocation4], %s8917
        // Predicated region
        $region61: #{mlp2_forward.1} parent=59 // pred_check
          %p8919 = pneg %p262
        $region62: #{mlp2_forward.1} parent=59 // pred_check_branch
          %8921 = sbr.rel (%p8919) target = $region64
        $region63: #{mlp2_forward.1} parent=59 // pred_region
          %s8922 = smul.u32 16, %s29
          %s8924 = ssub.s32 8192, 8192
          %8925 = vsyncadd %s8910, %s8924
          %s8926 = smul.addr %s8922, 8
          %s8927 = smul.addr %s8926, 64
          %s8928 = scalar_lea.hbm %s10, %s8927
          %s8929 = sshll.u32 %s8913, 4
          %s8930 = int_to_ptr.vmem [resolvable:$true] %s8929
          %8935 = dma.vmem_to_hbm [thread:$0]  %s8930, 8192, %s8928, %s8910, 64, 64, 4
        $region64: #{mlp2_forward.1} parent=59 // pred_fallthru
          _
        // Predicated region
        $region65: #{mlp2_forward.1} parent=59 // pred_check
          %p8936 = pneg %p288
        $region66: #{mlp2_forward.1} parent=59 // pred_check_branch
          %8938 = sbr.rel (%p8936) target = $region68
        $region67: #{mlp2_forward.1} parent=59 // pred_region
          %s8939 = smul.u32 16, %s29
          %s8941 = ssub.s32 8192, 8192
          %8942 = vsyncadd %s8915, %s8941
          %s8943 = smul.addr %s8939, 8
          %s8944 = smul.addr %s8943, 64
          %s8945 = scalar_lea.hbm %s11, %s8944
          %s8946 = sshll.u32 %s8918, 4
          %s8947 = int_to_ptr.vmem [resolvable:$true] %s8946
          %8952 = dma.vmem_to_hbm [thread:$0]  %s8947, 8192, %s8945, %s8915, 64, 64, 4
        $region68: #{mlp2_forward.1} parent=59 // pred_fallthru
          _
      $region60: #{mlp2_forward.1} parent=5 // pred_fallthru
        _
      %p8953 = scmp.le.s32.totalorder 2, %s24
      // Predicated region
      $region69: #{mlp2_forward.1} parent=5 // pred_check
        %p8954 = pneg %p8953
      $region70: #{mlp2_forward.1} parent=5 // pred_check_branch
        %8956 = sbr.rel (%p8954) target = $region72
      $region71: #{mlp2_forward.1} parent=5 // pred_region
        %s8957 = ssub.s32 %s24, 2
        // Predicated region
        $region73: #{mlp2_forward.1} parent=71 // pred_check
          %p8958 = pneg %p268
        $region74: #{mlp2_forward.1} parent=71 // pred_check_branch
          %8960 = sbr.rel (%p8958) target = $region76
        $region75: #{mlp2_forward.1} parent=71 // pred_region
          %s8961 = sand.u32 %s253, 1
          %s8962 = scalar_lea.sflag [#allocation3], %s8961
          %s8963 = sand.u32 %s253, 1
          %s8964 = smul.addr %s8963, 512
          %s8965 = scalar_lea.vmem [#allocation2], %s8964
          %8966 = dma.done %s8962, 8192
        $region76: #{mlp2_forward.1} parent=71 // pred_fallthru
          _
        // Predicated region
        $region77: #{mlp2_forward.1} parent=71 // pred_check
          %p8967 = pneg %p294
        $region78: #{mlp2_forward.1} parent=71 // pred_check_branch
          %8969 = sbr.rel (%p8967) target = $region80
        $region79: #{mlp2_forward.1} parent=71 // pred_region
          %s8970 = sand.u32 %s279, 1
          %s8971 = scalar_lea.sflag [#allocation5], %s8970
          %s8972 = sand.u32 %s279, 1
          %s8973 = smul.addr %s8972, 512
          %s8974 = scalar_lea.vmem [#allocation4], %s8973
          %8975 = dma.done %s8971, 8192
        $region80: #{mlp2_forward.1} parent=71 // pred_fallthru
          _
      $region72: #{mlp2_forward.1} parent=5 // pred_fallthru
        _
    $region6: #{mlp2_forward.1} parent=1 // loop_footer
      %s28 = sadd.s32 1, %s24
    $region7: #{mlp2_forward.1} parent=1 // loop_footer_branch
      %23 = sbr.rel target = $region3
    $region8: #{mlp2_forward.1} parent=1 // loop_exit
      _
    %8976 = vsyncpa [#allocation3], 1
    %s8977 = scalar_lea.sflag [#allocation3], 1
    %8978 = vsyncpa %s8977, 1
    %8979 = vsyncpa [#allocation5], 1
    %s8980 = scalar_lea.sflag [#allocation5], 1
    %8981 = vsyncpa %s8980, 1

</llo_original>
